<compile_context>
chip_gen: v6e
topology: v6e:2x2x1
jax: 0.10.0
libtpu: 0.0.40
codegen_flags: <defaults>
</compile_context>

<pallas_src>
import jax
import jax.numpy as jnp
from jax.experimental import pallas as pl
from jax.experimental.pallas import tpu as pltpu


def _vmem():
    return pl.BlockSpec(memory_space=pltpu.MemorySpace.VMEM)


# ----------------------------------------------------------------------------
# Fused forward kernel
# ----------------------------------------------------------------------------
def _fused_forward_kernel(
    p_ref,                                   # [B*4, 27] f32 shared im2col patches
    wc1_ref, sh1_ref,                        # branch-1 conv (BN scale pre-folded): [27,C1] bf16, [1,C1] f32
    wc2_ref, sh2_ref,                        # branch-2 conv (+ folded BN, ReLU)
    pool_ref,                                # [B, B*4] f32 per-batch spatial selector (0/1)
    a1w1_ref, a1b1_ref, a1w2_ref, a1b2_ref, dw1_ref, dwb1_ref,   # NFAP (C1=1664)
    a2w1_ref, a2b1_ref, a2w2_ref, a2b2_ref, dw2_ref, dwb2_ref,   # NFAP (C2=32)
    fw1a_ref, fw1b_ref, fb1_ref, fw2_ref, fb2_ref,               # fc head
    o_ref,                                   # [B, num_classes] f32
):
    p_bf = p_ref[...].astype(jnp.bfloat16)
    sel = pool_ref[...]                      # 1.0 on the 4 spatial rows of each batch element

    def conv_branch(wc_ref, sh_ref, relu):
        # BN / bias scale already folded into wc columns; epilogue is shift (+ReLU).
        y = jnp.dot(p_bf, wc_ref[...], preferred_element_type=jnp.float32)
        y = y + sh_ref[...]
        return jnp.maximum(y, 0.0) if relu else y            # [B*4, C] channel-last

    def nfap_branch(feat, aw1_ref, ab1_ref, aw2_ref, ab2_ref, dwt_ref, dwb_ref):
        # AdaptiveAvgPool2d(1): spatial sum via selector matmul; the 1/4 mean
        # factor is folded into aw1 host-side.
        ssum = jnp.dot(sel, feat, preferred_element_type=jnp.float32)            # [B, C]
        # 1x1-conv squeeze/excite attention (GEMMs on the MXU, bf16 operands).
        z = jnp.dot(ssum.astype(jnp.bfloat16), aw1_ref[...],
                    preferred_element_type=jnp.float32) + ab1_ref[...]
        z = jnp.maximum(z, 0.0)
        a = jnp.dot(z.astype(jnp.bfloat16), aw2_ref[...],
                    preferred_element_type=jnp.float32) + ab2_ref[...]
        attn = jax.nn.sigmoid(a)                                                  # [B, C]
        # depthwise 2x2 / stride-2 conv on a 2x2 map == per-channel weighted
        # spatial sum; attn is spatially constant so it factors out of the sum:
        #   dw(x * attn) = attn * dw(x) + bias
        spatial = jnp.dot(sel, feat * dwt_ref[...], preferred_element_type=jnp.float32)
        return attn * spatial + dwb_ref[...]                                      # [B, C]

    feat1 = conv_branch(wc1_ref, sh1_ref, relu=False)   # [B*4, C1] (densenet stand-in)
    feat2 = conv_branch(wc2_ref, sh2_ref, relu=True)    # [B*4, C2] (inception stem)

    pooled1 = nfap_branch(feat1, a1w1_ref, a1b1_ref, a1w2_ref, a1b2_ref, dw1_ref, dwb1_ref)
    pooled2 = nfap_branch(feat2, a2w1_ref, a2b1_ref, a2w2_ref, a2b2_ref, dw2_ref, dwb2_ref)

    # fc head: torch.cat + Linear(1696, 512) == two dots against split w1 blocks.
    h = (jnp.dot(pooled1.astype(jnp.bfloat16), fw1a_ref[...], preferred_element_type=jnp.float32)
         + jnp.dot(pooled2.astype(jnp.bfloat16), fw1b_ref[...], preferred_element_type=jnp.float32)
         + fb1_ref[...])
    h = jnp.maximum(h, 0.0)
    # nn.Dropout(0.3) is the identity in eval mode.
    out = jnp.dot(h.astype(jnp.bfloat16), fw2_ref[...],
                  preferred_element_type=jnp.float32) + fb2_ref[...]
    o_ref[...] = out.astype(o_ref.dtype)


# ----------------------------------------------------------------------------
# Host-side glue
# ----------------------------------------------------------------------------
def _im2col_3x3_s2(x):
    """Shared 3x3 / stride-2 im2col. Columns ordered (cin, kh, kw) to match
    PyTorch's weight.reshape(Cout, Cin*kh*kw)."""
    B, Cin, H, W = x.shape
    OH = (H - 3) // 2 + 1
    OW = (W - 3) // 2 + 1
    cols = []
    for di in range(3):
        for dj in range(3):
            cols.append(x[:, :, di:di + 2 * OH:2, dj:dj + 2 * OW:2])
    p = jnp.stack(cols, axis=0)              # [9, B, Cin, OH, OW]
    p = p.transpose(1, 3, 4, 2, 0)           # [B, OH, OW, Cin, 9]
    return p.reshape(B * OH * OW, Cin * 9), OH, OW


def dual_transfer_forward(x, kp):
    B = x.shape[0]
    p, OH, OW = _im2col_3x3_s2(x)
    assert OH == 2 and OW == 2, "fc head requires 2x2 backbone feature maps (6x6 input)"
    assert kp["pool"].shape == (B, B * 4), "params were prepared for a different batch size"
    num_classes = kp["fb2"].shape[1]

    return pl.pallas_call(
        _fused_forward_kernel,
        out_shape=jax.ShapeDtypeStruct((B, num_classes), jnp.float32),
        in_specs=[_vmem()] * 23,
        out_specs=_vmem(),
    )(p,
      kp["wc1"], kp["sh1"],
      kp["wc2"], kp["sh2"],
      kp["pool"],
      kp["nfap1"]["aw1"], kp["nfap1"]["ab1"], kp["nfap1"]["aw2"], kp["nfap1"]["ab2"],
      kp["nfap1"]["dwt"], kp["nfap1"]["dwb"],
      kp["nfap2"]["aw1"], kp["nfap2"]["ab1"], kp["nfap2"]["aw2"], kp["nfap2"]["ab2"],
      kp["nfap2"]["dwt"], kp["nfap2"]["dwb"],
      kp["fw1a"], kp["fw1b"], kp["fb1"], kp["fw2"], kp["fb2"])


# ----------------------------------------------------------------------------
# Parameter construction (deterministic, synthetic, PyTorch layouts) and a
# one-time repack into the fused kernel's layout (hoists every transpose /
# reshape / BN fold / dtype cast / constant fold out of the hot path).
# ----------------------------------------------------------------------------
def _randn(key, shape, scale=0.05):
    return scale * jax.random.normal(key, shape, dtype=jnp.float32)


def init_params(key, num_classes=3):
    C1, C2 = 1664, 32
    ks = iter(jax.random.split(key, 32))
    p = {}

    # TODO(synk): torchvision densenet169(pretrained=True).features (169-layer
    # pretrained backbone) is not reimplemented; a deterministic 3x3/stride-2
    # conv producing 1664 channels stands in so pool1 / fc shapes match.
    p["b1_w"] = _randn(next(ks), (C1, 3, 3, 3))
    p["b1_scale"] = jnp.ones((C1,), jnp.float32)
    p["b1_shift"] = _randn(next(ks), (C1,))

    # backbone2 = inception_v3 Conv2d_1a_3x3 = Conv2d(3,32,3,s=2,bias=False)+BN(eps=1e-3)+ReLU
    p["b2_w"] = _randn(next(ks), (C2, 3, 3, 3))
    gamma = 1.0 + _randn(next(ks), (C2,))
    beta = _randn(next(ks), (C2,))
    rmean = _randn(next(ks), (C2,))
    rvar = 1.0 + 0.1 * jnp.abs(jax.random.normal(next(ks), (C2,), jnp.float32))
    scale = gamma / jnp.sqrt(rvar + 1e-3)
    p["b2_scale"] = scale
    p["b2_shift"] = beta - rmean * scale

    def nfap_params(C):
        Cr = C // 8
        return {
            "attn_w1": _randn(next(ks), (Cr, C, 1, 1)),
            "attn_b1": _randn(next(ks), (Cr,)),
            "attn_w2": _randn(next(ks), (C, Cr, 1, 1)),
            "attn_b2": _randn(next(ks), (C,)),
            "dw_w": _randn(next(ks), (C, 1, 2, 2)),
            "dw_b": _randn(next(ks), (C,)),
        }

    p["pool1"] = nfap_params(C1)
    p["pool2"] = nfap_params(C2)

    p["fc"] = {
        "w1": _randn(next(ks), (512, C1 + C2)),
        "b1": _randn(next(ks), (512,)),
        "w2": _randn(next(ks), (num_classes, 512)),
        "b2": _randn(next(ks), (num_classes,)),
    }
    return p


def prepare_params(p, batch_size):
    """One-time repack: transposed bf16 matmul operands (BN scale folded into
    conv weights, 1/4 avg-pool factor folded into attention w1), f32 epilogue
    vectors, selector matrix for the 2x2 spatial reductions, tiled depthwise
    weights."""
    hw = 4                                    # 2x2 feature map
    C1 = p["b1_w"].shape[0]
    C2 = p["b2_w"].shape[0]

    def conv_pack(w, scale, shift):
        cout = w.shape[0]
        w2d = w.reshape(cout, -1) * scale[:, None]           # fold BN scale into weight
        return (w2d.T.astype(jnp.bfloat16),                   # [27, Cout]
                shift.reshape(1, cout).astype(jnp.float32))

    def nfap_pack(q):
        C = q["attn_w2"].shape[0]
        Cr = q["attn_w1"].shape[0]
        dw_pos = q["dw_w"].reshape(C, hw).T                                # [4, C]
        return dict(
            aw1=(0.25 * q["attn_w1"].reshape(Cr, C).T).astype(jnp.bfloat16),  # [C, Cr], 1/4 folded
            ab1=q["attn_b1"].reshape(1, Cr).astype(jnp.float32),
            aw2=q["attn_w2"].reshape(C, Cr).T.astype(jnp.bfloat16),           # [Cr, C]
            ab2=q["attn_b2"].reshape(1, C).astype(jnp.float32),
            dwt=jnp.tile(dw_pos, (batch_size, 1)).astype(jnp.float32),        # [B*4, C]
            dwb=q["dw_b"].reshape(1, C).astype(jnp.float32),
        )

    wc1, sh1 = conv_pack(p["b1_w"], p["b1_scale"], p["b1_shift"])
    wc2, sh2 = conv_pack(p["b2_w"], p["b2_scale"], p["b2_shift"])

    rows = batch_size * hw
    pool = (jnp.arange(rows)[None, :] // hw
            == jnp.arange(batch_size)[:, None]).astype(jnp.float32)       # [B, B*4]

    fw1 = p["fc"]["w1"]                                                   # [512, C1+C2]
    return dict(
        wc1=wc1, sh1=sh1,
        wc2=wc2, sh2=sh2,
        pool=pool,
        nfap1=nfap_pack(p["pool1"]),
        nfap2=nfap_pack(p["pool2"]),
        fw1a=fw1[:, :C1].T.astype(jnp.bfloat16),                          # [C1, 512]
        fw1b=fw1[:, C1:].T.astype(jnp.bfloat16),                          # [C2, 512]
        fb1=p["fc"]["b1"].reshape(1, -1).astype(jnp.float32),
        fw2=p["fc"]["w2"].T.astype(jnp.bfloat16),                         # [512, num_classes]
        fb2=p["fc"]["b2"].reshape(1, -1).astype(jnp.float32),
    )


if __name__ == "__main__":
    key = jax.random.PRNGKey(0)
    kx, kparam = jax.random.split(key)
    x = jax.random.normal(kx, (2, 3, 6, 6), dtype=jnp.float32)            # NCHW input
    raw_params = init_params(kparam, num_classes=3)
    kparams = prepare_params(raw_params, batch_size=x.shape[0])

    fwd = jax.jit(dual_transfer_forward)
    out = jax.block_until_ready(fwd(x, kparams))
    assert out.shape == (2, 3) and out.dtype == jnp.float32
    print("KERNEL_OK")
</pallas_src>

<mosaic_0001>
module attributes {stable_mosaic.version = 11 : i64} {
  func.func @_fused_forward_kernel(%arg0: memref<8x27xf32, #tpu.memory_space<vmem>>, %arg1: memref<27x1664xbf16, #tpu.memory_space<vmem>>, %arg2: memref<1x1664xf32, #tpu.memory_space<vmem>>, %arg3: memref<27x32xbf16, #tpu.memory_space<vmem>>, %arg4: memref<1x32xf32, #tpu.memory_space<vmem>>, %arg5: memref<2x8xf32, #tpu.memory_space<vmem>>, %arg6: memref<1664x208xbf16, #tpu.memory_space<vmem>>, %arg7: memref<1x208xf32, #tpu.memory_space<vmem>>, %arg8: memref<208x1664xbf16, #tpu.memory_space<vmem>>, %arg9: memref<1x1664xf32, #tpu.memory_space<vmem>>, %arg10: memref<8x1664xf32, #tpu.memory_space<vmem>>, %arg11: memref<1x1664xf32, #tpu.memory_space<vmem>>, %arg12: memref<32x4xbf16, #tpu.memory_space<vmem>>, %arg13: memref<1x4xf32, #tpu.memory_space<vmem>>, %arg14: memref<4x32xbf16, #tpu.memory_space<vmem>>, %arg15: memref<1x32xf32, #tpu.memory_space<vmem>>, %arg16: memref<8x32xf32, #tpu.memory_space<vmem>>, %arg17: memref<1x32xf32, #tpu.memory_space<vmem>>, %arg18: memref<1664x512xbf16, #tpu.memory_space<vmem>>, %arg19: memref<32x512xbf16, #tpu.memory_space<vmem>>, %arg20: memref<1x512xf32, #tpu.memory_space<vmem>>, %arg21: memref<512x3xbf16, #tpu.memory_space<vmem>>, %arg22: memref<1x3xf32, #tpu.memory_space<vmem>>, %arg23: memref<2x3xf32, #tpu.memory_space<vmem>>) attributes {dimension_semantics = [], scalar_prefetch = 0 : i64, scratch_operands = 0 : i64, tpu.core_type = #tpu.core_type<tc>} {
    %c0 = arith.constant 0 : index
    %c0_0 = arith.constant 0 : index
    %0 = vector.load %arg0[%c0, %c0_0] : memref<8x27xf32, #tpu.memory_space<vmem>>, vector<8x27xf32>
    %1 = arith.truncf %0 : vector<8x27xf32> to vector<8x27xbf16>
    %c0_1 = arith.constant 0 : index
    %c0_2 = arith.constant 0 : index
    %2 = vector.load %arg5[%c0_1, %c0_2] : memref<2x8xf32, #tpu.memory_space<vmem>>, vector<2x8xf32>
    %c0_3 = arith.constant 0 : index
    %c0_4 = arith.constant 0 : index
    %3 = vector.load %arg1[%c0_3, %c0_4] : memref<27x1664xbf16, #tpu.memory_space<vmem>>, vector<27x1664xbf16>
    %cst = arith.constant dense<0.000000e+00> : vector<8x1664xf32>
    %4 = tpu.matmul %1, %3, %cst {dimension_numbers = #tpu.dot_dimension_numbers<[1], [0], [0], [1], [0, 0, 1, 1], [], []>} : vector<8x27xbf16>, vector<27x1664xbf16>, vector<8x1664xf32> -> vector<8x1664xf32>
    %c0_5 = arith.constant 0 : index
    %c0_6 = arith.constant 0 : index
    %5 = vector.load %arg2[%c0_5, %c0_6] : memref<1x1664xf32, #tpu.memory_space<vmem>>, vector<1x1664xf32>
    %6 = vector.broadcast %5 : vector<1x1664xf32> to vector<8x1664xf32>
    %7 = arith.addf %4, %6 : vector<8x1664xf32>
    %c0_7 = arith.constant 0 : index
    %c0_8 = arith.constant 0 : index
    %8 = vector.load %arg3[%c0_7, %c0_8] : memref<27x32xbf16, #tpu.memory_space<vmem>>, vector<27x32xbf16>
    %cst_9 = arith.constant dense<0.000000e+00> : vector<8x32xf32>
    %9 = tpu.matmul %1, %8, %cst_9 {dimension_numbers = #tpu.dot_dimension_numbers<[1], [0], [0], [1], [0, 0, 1, 1], [], []>} : vector<8x27xbf16>, vector<27x32xbf16>, vector<8x32xf32> -> vector<8x32xf32>
    %c0_10 = arith.constant 0 : index
    %c0_11 = arith.constant 0 : index
    %10 = vector.load %arg4[%c0_10, %c0_11] : memref<1x32xf32, #tpu.memory_space<vmem>>, vector<1x32xf32>
    %11 = vector.broadcast %10 : vector<1x32xf32> to vector<8x32xf32>
    %12 = arith.addf %9, %11 : vector<8x32xf32>
    %cst_12 = arith.constant 0.000000e+00 : f32
    %13 = vector.broadcast %cst_12 : f32 to vector<8x32xf32>
    %14 = arith.maximumf %12, %13 : vector<8x32xf32>
    %cst_13 = arith.constant dense<0.000000e+00> : vector<2x1664xf32>
    %15 = tpu.matmul %2, %7, %cst_13 {dimension_numbers = #tpu.dot_dimension_numbers<[1], [0], [0], [1], [0, 0, 1, 1], [], []>} : vector<2x8xf32>, vector<8x1664xf32>, vector<2x1664xf32> -> vector<2x1664xf32>
    %16 = arith.truncf %15 : vector<2x1664xf32> to vector<2x1664xbf16>
    %c0_14 = arith.constant 0 : index
    %c0_15 = arith.constant 0 : index
    %17 = vector.load %arg6[%c0_14, %c0_15] : memref<1664x208xbf16, #tpu.memory_space<vmem>>, vector<1664x208xbf16>
    %cst_16 = arith.constant dense<0.000000e+00> : vector<2x208xf32>
    %18 = tpu.matmul %16, %17, %cst_16 {dimension_numbers = #tpu.dot_dimension_numbers<[1], [0], [0], [1], [0, 0, 1, 1], [], []>} : vector<2x1664xbf16>, vector<1664x208xbf16>, vector<2x208xf32> -> vector<2x208xf32>
    %c0_17 = arith.constant 0 : index
    %c0_18 = arith.constant 0 : index
    %19 = vector.load %arg7[%c0_17, %c0_18] : memref<1x208xf32, #tpu.memory_space<vmem>>, vector<1x208xf32>
    %20 = vector.broadcast %19 : vector<1x208xf32> to vector<2x208xf32>
    %21 = arith.addf %18, %20 : vector<2x208xf32>
    %cst_19 = arith.constant 0.000000e+00 : f32
    %22 = vector.broadcast %cst_19 : f32 to vector<2x208xf32>
    %23 = arith.maximumf %21, %22 : vector<2x208xf32>
    %24 = arith.truncf %23 : vector<2x208xf32> to vector<2x208xbf16>
    %c0_20 = arith.constant 0 : index
    %c0_21 = arith.constant 0 : index
    %25 = vector.load %arg8[%c0_20, %c0_21] : memref<208x1664xbf16, #tpu.memory_space<vmem>>, vector<208x1664xbf16>
    %cst_22 = arith.constant dense<0.000000e+00> : vector<2x1664xf32>
    %26 = tpu.matmul %24, %25, %cst_22 {dimension_numbers = #tpu.dot_dimension_numbers<[1], [0], [0], [1], [0, 0, 1, 1], [], []>} : vector<2x208xbf16>, vector<208x1664xbf16>, vector<2x1664xf32> -> vector<2x1664xf32>
    %c0_23 = arith.constant 0 : index
    %c0_24 = arith.constant 0 : index
    %27 = vector.load %arg9[%c0_23, %c0_24] : memref<1x1664xf32, #tpu.memory_space<vmem>>, vector<1x1664xf32>
    %28 = vector.broadcast %27 : vector<1x1664xf32> to vector<2x1664xf32>
    %29 = arith.addf %26, %28 : vector<2x1664xf32>
    %30 = arith.negf %29 : vector<2x1664xf32>
    %31 = math.exp %30 : vector<2x1664xf32>
    %cst_25 = arith.constant 1.000000e+00 : f32
    %32 = vector.broadcast %cst_25 : f32 to vector<2x1664xf32>
    %33 = arith.addf %32, %31 : vector<2x1664xf32>
    %34 = arith.divf %32, %33 : vector<2x1664xf32>
    %c0_26 = arith.constant 0 : index
    %c0_27 = arith.constant 0 : index
    %35 = vector.load %arg10[%c0_26, %c0_27] : memref<8x1664xf32, #tpu.memory_space<vmem>>, vector<8x1664xf32>
    %36 = arith.mulf %7, %35 : vector<8x1664xf32>
    %cst_28 = arith.constant dense<0.000000e+00> : vector<2x1664xf32>
    %37 = tpu.matmul %2, %36, %cst_28 {dimension_numbers = #tpu.dot_dimension_numbers<[1], [0], [0], [1], [0, 0, 1, 1], [], []>} : vector<2x8xf32>, vector<8x1664xf32>, vector<2x1664xf32> -> vector<2x1664xf32>
    %38 = arith.mulf %34, %37 : vector<2x1664xf32>
    %c0_29 = arith.constant 0 : index
    %c0_30 = arith.constant 0 : index
    %39 = vector.load %arg11[%c0_29, %c0_30] : memref<1x1664xf32, #tpu.memory_space<vmem>>, vector<1x1664xf32>
    %40 = vector.broadcast %39 : vector<1x1664xf32> to vector<2x1664xf32>
    %41 = arith.addf %38, %40 : vector<2x1664xf32>
    %cst_31 = arith.constant dense<0.000000e+00> : vector<2x32xf32>
    %42 = tpu.matmul %2, %14, %cst_31 {dimension_numbers = #tpu.dot_dimension_numbers<[1], [0], [0], [1], [0, 0, 1, 1], [], []>} : vector<2x8xf32>, vector<8x32xf32>, vector<2x32xf32> -> vector<2x32xf32>
    %43 = arith.truncf %42 : vector<2x32xf32> to vector<2x32xbf16>
    %c0_32 = arith.constant 0 : index
    %c0_33 = arith.constant 0 : index
    %44 = vector.load %arg12[%c0_32, %c0_33] : memref<32x4xbf16, #tpu.memory_space<vmem>>, vector<32x4xbf16>
    %cst_34 = arith.constant dense<0.000000e+00> : vector<2x4xf32>
    %45 = tpu.matmul %43, %44, %cst_34 {dimension_numbers = #tpu.dot_dimension_numbers<[1], [0], [0], [1], [0, 0, 1, 1], [], []>} : vector<2x32xbf16>, vector<32x4xbf16>, vector<2x4xf32> -> vector<2x4xf32>
    %c0_35 = arith.constant 0 : index
    %c0_36 = arith.constant 0 : index
    %46 = vector.load %arg13[%c0_35, %c0_36] : memref<1x4xf32, #tpu.memory_space<vmem>>, vector<1x4xf32>
    %47 = vector.broadcast %46 : vector<1x4xf32> to vector<2x4xf32>
    %48 = arith.addf %45, %47 : vector<2x4xf32>
    %cst_37 = arith.constant 0.000000e+00 : f32
    %49 = vector.broadcast %cst_37 : f32 to vector<2x4xf32>
    %50 = arith.maximumf %48, %49 : vector<2x4xf32>
    %51 = arith.truncf %50 : vector<2x4xf32> to vector<2x4xbf16>
    %c0_38 = arith.constant 0 : index
    %c0_39 = arith.constant 0 : index
    %52 = vector.load %arg14[%c0_38, %c0_39] : memref<4x32xbf16, #tpu.memory_space<vmem>>, vector<4x32xbf16>
    %cst_40 = arith.constant dense<0.000000e+00> : vector<2x32xf32>
    %53 = tpu.matmul %51, %52, %cst_40 {dimension_numbers = #tpu.dot_dimension_numbers<[1], [0], [0], [1], [0, 0, 1, 1], [], []>} : vector<2x4xbf16>, vector<4x32xbf16>, vector<2x32xf32> -> vector<2x32xf32>
    %c0_41 = arith.constant 0 : index
    %c0_42 = arith.constant 0 : index
    %54 = vector.load %arg15[%c0_41, %c0_42] : memref<1x32xf32, #tpu.memory_space<vmem>>, vector<1x32xf32>
    %55 = vector.broadcast %54 : vector<1x32xf32> to vector<2x32xf32>
    %56 = arith.addf %53, %55 : vector<2x32xf32>
    %57 = arith.negf %56 : vector<2x32xf32>
    %58 = math.exp %57 : vector<2x32xf32>
    %cst_43 = arith.constant 1.000000e+00 : f32
    %59 = vector.broadcast %cst_43 : f32 to vector<2x32xf32>
    %60 = arith.addf %59, %58 : vector<2x32xf32>
    %61 = arith.divf %59, %60 : vector<2x32xf32>
    %c0_44 = arith.constant 0 : index
    %c0_45 = arith.constant 0 : index
    %62 = vector.load %arg16[%c0_44, %c0_45] : memref<8x32xf32, #tpu.memory_space<vmem>>, vector<8x32xf32>
    %63 = arith.mulf %14, %62 : vector<8x32xf32>
    %cst_46 = arith.constant dense<0.000000e+00> : vector<2x32xf32>
    %64 = tpu.matmul %2, %63, %cst_46 {dimension_numbers = #tpu.dot_dimension_numbers<[1], [0], [0], [1], [0, 0, 1, 1], [], []>} : vector<2x8xf32>, vector<8x32xf32>, vector<2x32xf32> -> vector<2x32xf32>
    %65 = arith.mulf %61, %64 : vector<2x32xf32>
    %c0_47 = arith.constant 0 : index
    %c0_48 = arith.constant 0 : index
    %66 = vector.load %arg17[%c0_47, %c0_48] : memref<1x32xf32, #tpu.memory_space<vmem>>, vector<1x32xf32>
    %67 = vector.broadcast %66 : vector<1x32xf32> to vector<2x32xf32>
    %68 = arith.addf %65, %67 : vector<2x32xf32>
    %69 = arith.truncf %41 : vector<2x1664xf32> to vector<2x1664xbf16>
    %c0_49 = arith.constant 0 : index
    %c0_50 = arith.constant 0 : index
    %70 = vector.load %arg18[%c0_49, %c0_50] : memref<1664x512xbf16, #tpu.memory_space<vmem>>, vector<1664x512xbf16>
    %cst_51 = arith.constant dense<0.000000e+00> : vector<2x512xf32>
    %71 = tpu.matmul %69, %70, %cst_51 {dimension_numbers = #tpu.dot_dimension_numbers<[1], [0], [0], [1], [0, 0, 1, 1], [], []>} : vector<2x1664xbf16>, vector<1664x512xbf16>, vector<2x512xf32> -> vector<2x512xf32>
    %72 = arith.truncf %68 : vector<2x32xf32> to vector<2x32xbf16>
    %c0_52 = arith.constant 0 : index
    %c0_53 = arith.constant 0 : index
    %73 = vector.load %arg19[%c0_52, %c0_53] : memref<32x512xbf16, #tpu.memory_space<vmem>>, vector<32x512xbf16>
    %cst_54 = arith.constant dense<0.000000e+00> : vector<2x512xf32>
    %74 = tpu.matmul %72, %73, %cst_54 {dimension_numbers = #tpu.dot_dimension_numbers<[1], [0], [0], [1], [0, 0, 1, 1], [], []>} : vector<2x32xbf16>, vector<32x512xbf16>, vector<2x512xf32> -> vector<2x512xf32>
    %75 = arith.addf %71, %74 : vector<2x512xf32>
    %c0_55 = arith.constant 0 : index
    %c0_56 = arith.constant 0 : index
    %76 = vector.load %arg20[%c0_55, %c0_56] : memref<1x512xf32, #tpu.memory_space<vmem>>, vector<1x512xf32>
    %77 = vector.broadcast %76 : vector<1x512xf32> to vector<2x512xf32>
    %78 = arith.addf %75, %77 : vector<2x512xf32>
    %cst_57 = arith.constant 0.000000e+00 : f32
    %79 = vector.broadcast %cst_57 : f32 to vector<2x512xf32>
    %80 = arith.maximumf %78, %79 : vector<2x512xf32>
    %81 = arith.truncf %80 : vector<2x512xf32> to vector<2x512xbf16>
    %c0_58 = arith.constant 0 : index
    %c0_59 = arith.constant 0 : index
    %82 = vector.load %arg21[%c0_58, %c0_59] : memref<512x3xbf16, #tpu.memory_space<vmem>>, vector<512x3xbf16>
    %cst_60 = arith.constant dense<0.000000e+00> : vector<2x3xf32>
    %83 = tpu.matmul %81, %82, %cst_60 {dimension_numbers = #tpu.dot_dimension_numbers<[1], [0], [0], [1], [0, 0, 1, 1], [], []>} : vector<2x512xbf16>, vector<512x3xbf16>, vector<2x3xf32> -> vector<2x3xf32>
    %c0_61 = arith.constant 0 : index
    %c0_62 = arith.constant 0 : index
    %84 = vector.load %arg22[%c0_61, %c0_62] : memref<1x3xf32, #tpu.memory_space<vmem>>, vector<1x3xf32>
    %85 = vector.broadcast %84 : vector<1x3xf32> to vector<2x3xf32>
    %86 = arith.addf %83, %85 : vector<2x3xf32>
    %c0_63 = arith.constant 0 : index
    %c0_64 = arith.constant 0 : index
    %87 = vector.load %arg23[%c0_63, %c0_64] : memref<2x3xf32, #tpu.memory_space<vmem>>, vector<2x3xf32>
    tpu.vector_store %arg23[%c0_63, %c0_64], %86 {strides = array<i32>} : memref<2x3xf32, #tpu.memory_space<vmem>>, vector<2x3xf32>,
    return
  }
}

</mosaic_0001>

<llo_original>
// kernel: dual_transfer_forward.1
$region0: #{dual_transfer_forward.1}
  #allocation0 [shape = 'u32[]', space=smem, size = 0x4, offset = 0x4, fixed_abs, tag = 'smem constant byte address 0x4 - core index']
  #allocation1 [shape = 'u32[144,128]{1,0:T(1,128)}', space=vmem, size = 0x12000, scoped, tag = 'internal scratch']
  %s0 = inlined_call_operand.vmem [shape: f32[8,27], index: 0, kind: input, shape index: {}]
  %s1 = inlined_call_operand.vmem [shape: bf16[27,1664], index: 1, kind: input, shape index: {}]
  %s2 = inlined_call_operand.vmem [shape: f32[1,1664], index: 2, kind: input, shape index: {}]
  %s3 = inlined_call_operand.vmem [shape: bf16[27,32], index: 3, kind: input, shape index: {}]
  %s4 = inlined_call_operand.vmem [shape: f32[1,32], index: 4, kind: input, shape index: {}]
  %s5 = inlined_call_operand.vmem [shape: f32[2,8], index: 5, kind: input, shape index: {}]
  %s6 = inlined_call_operand.vmem [shape: bf16[1664,208], index: 6, kind: input, shape index: {}]
  %s7 = inlined_call_operand.vmem [shape: f32[1,208], index: 7, kind: input, shape index: {}]
  %s8 = inlined_call_operand.hbm [shape: bf16[208,1664], index: 8, kind: input, shape index: {}]
  %s9 = inlined_call_operand.vmem [shape: f32[1,1664], index: 9, kind: input, shape index: {}]
  %s10 = inlined_call_operand.vmem [shape: f32[8,1664], index: 10, kind: input, shape index: {}]
  %s11 = inlined_call_operand.vmem [shape: f32[1,1664], index: 11, kind: input, shape index: {}]
  %s12 = inlined_call_operand.vmem [shape: bf16[32,4], index: 12, kind: input, shape index: {}]
  %s13 = inlined_call_operand.vmem [shape: f32[1,4], index: 13, kind: input, shape index: {}]
  %s14 = inlined_call_operand.vmem [shape: bf16[4,32], index: 14, kind: input, shape index: {}]
  %s15 = inlined_call_operand.vmem [shape: f32[1,32], index: 15, kind: input, shape index: {}]
  %s16 = inlined_call_operand.vmem [shape: f32[8,32], index: 16, kind: input, shape index: {}]
  %s17 = inlined_call_operand.vmem [shape: f32[1,32], index: 17, kind: input, shape index: {}]
  %s18 = inlined_call_operand.vmem [shape: bf16[1664,512], index: 18, kind: input, shape index: {}]
  %s19 = inlined_call_operand.vmem [shape: bf16[32,512], index: 19, kind: input, shape index: {}]
  %s20 = inlined_call_operand.vmem [shape: f32[1,512], index: 20, kind: input, shape index: {}]
  %s21 = inlined_call_operand.vmem [shape: bf16[512,3], index: 21, kind: input, shape index: {}]
  %s22 = inlined_call_operand.vmem [shape: f32[1,3], index: 22, kind: input, shape index: {}]
  %s23 = inlined_call_operand.hbm [shape: f32[2,3], index: 23, kind: output, shape index: {}]
  %s24 = sld [smem:[#allocation0]]
  $region106: #{dual_transfer_forward.1} parent=0
    _
  %s26 = ssub.s32 1, %s24
  %s27 = scalar_select 0, %s26, %s24
  $region1: #{dual_transfer_forward.1} parent=0
    #allocation2 [shape = 'u8[692224]{0}', space=vmem, size = 0xa9000, scoped, tag = 'input window, operand 8, single buffered']
    #allocation3 [shape = 's32[1]{0}', space=sflag, size = 0x4, scoped, tag = 'scoped memory for dual_transfer_forward.1']
    #allocation4 [shape = 's32[1]{0}', space=sflag, size = 0x4, scoped, tag = 'scoped memory for dual_transfer_forward.1']
    #allocation5 [shape = 'u8[1024]{0}', space=vmem, size = 0x400, scoped, tag = 'output window, operand 0, single buffered']
    %28 = vsyncpa [#allocation3], 0
    %29 = vsyncpa [#allocation4], 0
    // Predicated region
    $region2: #{dual_transfer_forward.1} parent=1 // pred_check
      _
    $region3: #{dual_transfer_forward.1} parent=1 // pred_check_branch
      %31 = sbr.rel (0) target = $region5
    $region4: #{dual_transfer_forward.1} parent=1 // pred_region
      _
    $region5: #{dual_transfer_forward.1} parent=1 // pred_fallthru
      _
    // Predicated region
    $region6: #{dual_transfer_forward.1} parent=1 // pred_check
      _
    $region7: #{dual_transfer_forward.1} parent=1 // pred_check_branch
      %33 = sbr.rel (0) target = $region9
    $region8: #{dual_transfer_forward.1} parent=1 // pred_region
      _
    $region9: #{dual_transfer_forward.1} parent=1 // pred_fallthru
      _
    // Predicated region
    $region10: #{dual_transfer_forward.1} parent=1 // pred_check
      _
    $region11: #{dual_transfer_forward.1} parent=1 // pred_check_branch
      %35 = sbr.rel (0) target = $region13
    $region12: #{dual_transfer_forward.1} parent=1 // pred_region
      _
    $region13: #{dual_transfer_forward.1} parent=1 // pred_fallthru
      _
    // Predicated region
    $region14: #{dual_transfer_forward.1} parent=1 // pred_check
      _
    $region15: #{dual_transfer_forward.1} parent=1 // pred_check_branch
      %37 = sbr.rel (0) target = $region17
    $region16: #{dual_transfer_forward.1} parent=1 // pred_region
      _
    $region17: #{dual_transfer_forward.1} parent=1 // pred_fallthru
      _
    // Predicated region
    $region18: #{dual_transfer_forward.1} parent=1 // pred_check
      _
    $region19: #{dual_transfer_forward.1} parent=1 // pred_check_branch
      %39 = sbr.rel (0) target = $region21
    $region20: #{dual_transfer_forward.1} parent=1 // pred_region
      _
    $region21: #{dual_transfer_forward.1} parent=1 // pred_fallthru
      _
    // Predicated region
    $region22: #{dual_transfer_forward.1} parent=1 // pred_check
      _
    $region23: #{dual_transfer_forward.1} parent=1 // pred_check_branch
      %41 = sbr.rel (0) target = $region25
    $region24: #{dual_transfer_forward.1} parent=1 // pred_region
      _
    $region25: #{dual_transfer_forward.1} parent=1 // pred_fallthru
      _
    // Predicated region
    $region26: #{dual_transfer_forward.1} parent=1 // pred_check
      _
    $region27: #{dual_transfer_forward.1} parent=1 // pred_check_branch
      %43 = sbr.rel (0) target = $region29
    $region28: #{dual_transfer_forward.1} parent=1 // pred_region
      _
    $region29: #{dual_transfer_forward.1} parent=1 // pred_fallthru
      _
    // Predicated region
    $region30: #{dual_transfer_forward.1} parent=1 // pred_check
      _
    $region31: #{dual_transfer_forward.1} parent=1 // pred_check_branch
      %45 = sbr.rel (0) target = $region33
    $region32: #{dual_transfer_forward.1} parent=1 // pred_region
      _
    $region33: #{dual_transfer_forward.1} parent=1 // pred_fallthru
      _
    // Predicated region
    $region34: #{dual_transfer_forward.1} parent=1 // pred_check
      _
    $region35: #{dual_transfer_forward.1} parent=1 // pred_check_branch
      %47 = sbr.rel (0) target = $region37
    $region36: #{dual_transfer_forward.1} parent=1 // pred_region
      %s49 = ssub.s32 21632, 21632
      %50 = vsyncadd [#allocation3], %s49
      %s51 = sshll.u32 [#allocation2], 4
      %s52 = int_to_ptr.vmem [resolvable:$true] %s51
      %57 = dma.hbm_to_vmem [thread:$0]  %s8, 21632, %s52, [#allocation3], 832, 832, 52
    $region37: #{dual_transfer_forward.1} parent=1 // pred_fallthru
      _
    // Predicated region
    $region38: #{dual_transfer_forward.1} parent=1 // pred_check
      _
    $region39: #{dual_transfer_forward.1} parent=1 // pred_check_branch
      %59 = sbr.rel (0) target = $region41
    $region40: #{dual_transfer_forward.1} parent=1 // pred_region
      _
    $region41: #{dual_transfer_forward.1} parent=1 // pred_fallthru
      _
    // Predicated region
    $region42: #{dual_transfer_forward.1} parent=1 // pred_check
      _
    $region43: #{dual_transfer_forward.1} parent=1 // pred_check_branch
      %61 = sbr.rel (0) target = $region45
    $region44: #{dual_transfer_forward.1} parent=1 // pred_region
      _
    $region45: #{dual_transfer_forward.1} parent=1 // pred_fallthru
      _
    // Predicated region
    $region46: #{dual_transfer_forward.1} parent=1 // pred_check
      _
    $region47: #{dual_transfer_forward.1} parent=1 // pred_check_branch
      %63 = sbr.rel (0) target = $region49
    $region48: #{dual_transfer_forward.1} parent=1 // pred_region
      _
    $region49: #{dual_transfer_forward.1} parent=1 // pred_fallthru
      _
    // Predicated region
    $region50: #{dual_transfer_forward.1} parent=1 // pred_check
      _
    $region51: #{dual_transfer_forward.1} parent=1 // pred_check_branch
      %65 = sbr.rel (0) target = $region53
    $region52: #{dual_transfer_forward.1} parent=1 // pred_region
      _
    $region53: #{dual_transfer_forward.1} parent=1 // pred_fallthru
      _
    // Predicated region
    $region54: #{dual_transfer_forward.1} parent=1 // pred_check
      _
    $region55: #{dual_transfer_forward.1} parent=1 // pred_check_branch
      %67 = sbr.rel (0) target = $region57
    $region56: #{dual_transfer_forward.1} parent=1 // pred_region
      _
    $region57: #{dual_transfer_forward.1} parent=1 // pred_fallthru
      _
    // Predicated region
    $region58: #{dual_transfer_forward.1} parent=1 // pred_check
      _
    $region59: #{dual_transfer_forward.1} parent=1 // pred_check_branch
      %69 = sbr.rel (0) target = $region61
    $region60: #{dual_transfer_forward.1} parent=1 // pred_region
      _
    $region61: #{dual_transfer_forward.1} parent=1 // pred_fallthru
      _
    // Predicated region
    $region62: #{dual_transfer_forward.1} parent=1 // pred_check
      _
    $region63: #{dual_transfer_forward.1} parent=1 // pred_check_branch
      %71 = sbr.rel (0) target = $region65
    $region64: #{dual_transfer_forward.1} parent=1 // pred_region
      _
    $region65: #{dual_transfer_forward.1} parent=1 // pred_fallthru
      _
    // Predicated region
    $region66: #{dual_transfer_forward.1} parent=1 // pred_check
      _
    $region67: #{dual_transfer_forward.1} parent=1 // pred_check_branch
      %73 = sbr.rel (0) target = $region69
    $region68: #{dual_transfer_forward.1} parent=1 // pred_region
      _
    $region69: #{dual_transfer_forward.1} parent=1 // pred_fallthru
      _
    // Predicated region
    $region70: #{dual_transfer_forward.1} parent=1 // pred_check
      _
    $region71: #{dual_transfer_forward.1} parent=1 // pred_check_branch
      %75 = sbr.rel (0) target = $region73
    $region72: #{dual_transfer_forward.1} parent=1 // pred_region
      _
    $region73: #{dual_transfer_forward.1} parent=1 // pred_fallthru
      _
    // Predicated region
    $region74: #{dual_transfer_forward.1} parent=1 // pred_check
      _
    $region75: #{dual_transfer_forward.1} parent=1 // pred_check_branch
      %77 = sbr.rel (0) target = $region77
    $region76: #{dual_transfer_forward.1} parent=1 // pred_region
      _
    $region77: #{dual_transfer_forward.1} parent=1 // pred_fallthru
      _
    // Predicated region
    $region78: #{dual_transfer_forward.1} parent=1 // pred_check
      _
    $region79: #{dual_transfer_forward.1} parent=1 // pred_check_branch
      %79 = sbr.rel (0) target = $region81
    $region80: #{dual_transfer_forward.1} parent=1 // pred_region
      _
    $region81: #{dual_transfer_forward.1} parent=1 // pred_fallthru
      _
    // Predicated region
    $region82: #{dual_transfer_forward.1} parent=1 // pred_check
      _
    $region83: #{dual_transfer_forward.1} parent=1 // pred_check_branch
      %81 = sbr.rel (0) target = $region85
    $region84: #{dual_transfer_forward.1} parent=1 // pred_region
      _
    $region85: #{dual_transfer_forward.1} parent=1 // pred_fallthru
      _
    // Predicated region
    $region86: #{dual_transfer_forward.1} parent=1 // pred_check
      _
    $region87: #{dual_transfer_forward.1} parent=1 // pred_check_branch
      %83 = sbr.rel (0) target = $region89
    $region88: #{dual_transfer_forward.1} parent=1 // pred_region
      _
    $region89: #{dual_transfer_forward.1} parent=1 // pred_fallthru
      _
    // Predicated region
    $region90: #{dual_transfer_forward.1} parent=1 // pred_check
      _
    $region91: #{dual_transfer_forward.1} parent=1 // pred_check_branch
      %85 = sbr.rel (0) target = $region93
    $region92: #{dual_transfer_forward.1} parent=1 // pred_region
      _
    $region93: #{dual_transfer_forward.1} parent=1 // pred_fallthru
      _
    // Predicated region
    $region94: #{dual_transfer_forward.1} parent=1 // pred_check
      _
    $region95: #{dual_transfer_forward.1} parent=1 // pred_check_branch
      %87 = sbr.rel (0) target = $region97
    $region96: #{dual_transfer_forward.1} parent=1 // pred_region
      %88 = dma.done [#allocation3], 21632
    $region97: #{dual_transfer_forward.1} parent=1 // pred_fallthru
      _
    %v90 = vld [vmem:[%s0] sm:$0xff]
    %v91 = vpack.c.bf16 %v90, %v90
    %v92 = vld [vmem:[%s5] sm:$0x3]
    %v93 = vld [vmem:[%s1] sm:$0xff]
    %v94 = vld [vmem:[%s1 + $0x8] sm:$0xff]
    %v95 = vld [vmem:[%s1 + $0x10] sm:$0xff]
    %v96 = vld [vmem:[%s1 + $0x18] sm:$0xff]
    %v97 = vld [vmem:[%s1 + $0x20] sm:$0xff]
    %v98 = vld [vmem:[%s1 + $0x28] sm:$0xff]
    %v99 = vld [vmem:[%s1 + $0x30] sm:$0xf]
    %v100 = vld [vmem:[%s1 + $0x34] sm:$0xff]
    %v101 = vld [vmem:[%s1 + $0x3c] sm:$0xff]
    %v102 = vld [vmem:[%s1 + $0x44] sm:$0xff]
    %v103 = vld [vmem:[%s1 + $0x4c] sm:$0xff]
    %v104 = vld [vmem:[%s1 + $0x54] sm:$0xff]
    %v105 = vld [vmem:[%s1 + $0x5c] sm:$0xff]
    %v106 = vld [vmem:[%s1 + $0x64] sm:$0xf]
    %v107 = vld [vmem:[%s1 + $0x68] sm:$0xff]
    %v108 = vld [vmem:[%s1 + $0x70] sm:$0xff]
    %v109 = vld [vmem:[%s1 + $0x78] sm:$0xff]
    %v110 = vld [vmem:[%s1 + $0x80] sm:$0xff]
    %v111 = vld [vmem:[%s1 + $0x88] sm:$0xff]
    %v112 = vld [vmem:[%s1 + $0x90] sm:$0xff]
    %v113 = vld [vmem:[%s1 + $0x98] sm:$0xf]
    %v114 = vld [vmem:[%s1 + $0x9c] sm:$0x33]
    %v115 = vld [vmem:[%s1 + $0xa4] sm:$0x33]
    %v116 = vld [vmem:[%s1 + $0xac] sm:$0x33]
    %v117 = vld [vmem:[%s1 + $0xb4] sm:$0x33]
    %v118 = vld [vmem:[%s1 + $0xbc] sm:$0x33]
    %v119 = vld [vmem:[%s1 + $0xc4] sm:$0x33]
    %v120 = vld [vmem:[%s1 + $0xcc] sm:$0x3]
    %v121 = vld [vmem:[%s2] sm:$0xff]
    %v122 = vld [vmem:[%s2 + $0x8] sm:$0x1f]
    %v125 = vlaneseq
    %v126 = vshrl.u32 %v125, 7
    %v127 = vsub.s32 0, %v126
    %v128 = vrot.slane %v121, %v127
    %v129 = vlaneseq
    %v130 = vshrl.u32 %v129, 7
    %v131 = vsub.s32 1, %v130
    %v132 = vrot.slane %v121, %v131
    %v133 = vlaneseq
    %v134 = vshrl.u32 %v133, 7
    %v135 = vsub.s32 2, %v134
    %v136 = vrot.slane %v121, %v135
    %v137 = vlaneseq
    %v138 = vshrl.u32 %v137, 7
    %v139 = vsub.s32 3, %v138
    %v140 = vrot.slane %v121, %v139
    %v141 = vlaneseq
    %v142 = vshrl.u32 %v141, 7
    %v143 = vsub.s32 4, %v142
    %v144 = vrot.slane %v121, %v143
    %v145 = vlaneseq
    %v146 = vshrl.u32 %v145, 7
    %v147 = vsub.s32 5, %v146
    %v148 = vrot.slane %v121, %v147
    %v149 = vlaneseq
    %v150 = vshrl.u32 %v149, 7
    %v151 = vsub.s32 6, %v150
    %v152 = vrot.slane %v121, %v151
    %v153 = vlaneseq
    %v154 = vshrl.u32 %v153, 7
    %v155 = vsub.s32 7, %v154
    %v156 = vrot.slane %v121, %v155
    %v157 = vlaneseq
    %v158 = vshrl.u32 %v157, 7
    %v159 = vsub.s32 0, %v158
    %v160 = vrot.slane %v122, %v159
    %v161 = vlaneseq
    %v162 = vshrl.u32 %v161, 7
    %v163 = vsub.s32 1, %v162
    %v164 = vrot.slane %v122, %v163
    %v165 = vlaneseq
    %v166 = vshrl.u32 %v165, 7
    %v167 = vsub.s32 2, %v166
    %v168 = vrot.slane %v122, %v167
    %v169 = vlaneseq
    %v170 = vshrl.u32 %v169, 7
    %v171 = vsub.s32 3, %v170
    %v172 = vrot.slane %v122, %v171
    %v173 = vlaneseq
    %v174 = vshrl.u32 %v173, 7
    %v175 = vsub.s32 4, %v174
    %v176 = vrot.slane %v122, %v175
    %v218 = vunpack.c.l.b16 %v93
    %v219 = vunpack.c.h.b16 %v93
    %v220 = vunpack.c.l.b16 %v94
    %v221 = vunpack.c.h.b16 %v94
    %v222 = vunpack.c.l.b16 %v95
    %v223 = vunpack.c.h.b16 %v95
    %v224 = vunpack.c.l.b16 %v96
    %v225 = vunpack.c.h.b16 %v96
    %v226 = vunpack.c.l.b16 %v97
    %v227 = vunpack.c.h.b16 %v97
    %v228 = vunpack.c.l.b16 %v98
    %v229 = vunpack.c.h.b16 %v98
    %v230 = vunpack.c.l.b16 %v99
    %v231 = vunpack.c.l.b16 %v100
    %v232 = vunpack.c.h.b16 %v100
    %v233 = vunpack.c.l.b16 %v101
    %v234 = vunpack.c.h.b16 %v101
    %v235 = vunpack.c.l.b16 %v102
    %v236 = vunpack.c.h.b16 %v102
    %v237 = vunpack.c.l.b16 %v103
    %v238 = vunpack.c.h.b16 %v103
    %v239 = vunpack.c.l.b16 %v104
    %v240 = vunpack.c.h.b16 %v104
    %v241 = vunpack.c.l.b16 %v105
    %v242 = vunpack.c.h.b16 %v105
    %v243 = vunpack.c.l.b16 %v106
    %v244 = vunpack.c.l.b16 %v107
    %v245 = vunpack.c.h.b16 %v107
    %v246 = vunpack.c.l.b16 %v108
    %v247 = vunpack.c.h.b16 %v108
    %v248 = vunpack.c.l.b16 %v109
    %v249 = vunpack.c.h.b16 %v109
    %v250 = vunpack.c.l.b16 %v110
    %v251 = vunpack.c.h.b16 %v110
    %v252 = vunpack.c.l.b16 %v111
    %v253 = vunpack.c.h.b16 %v111
    %v254 = vunpack.c.l.b16 %v112
    %v255 = vunpack.c.h.b16 %v112
    %v256 = vunpack.c.l.b16 %v113
    %v257 = vunpack.c.l.b16 %v114
    %v258 = vunpack.c.h.b16 %v114
    %v259 = vunpack.c.l.b16 %v115
    %v260 = vunpack.c.h.b16 %v115
    %v261 = vunpack.c.l.b16 %v116
    %v262 = vunpack.c.h.b16 %v116
    %v263 = vunpack.c.l.b16 %v117
    %v264 = vunpack.c.h.b16 %v117
    %v265 = vunpack.c.l.b16 %v118
    %v266 = vunpack.c.h.b16 %v118
    %v267 = vunpack.c.l.b16 %v119
    %v268 = vunpack.c.h.b16 %v119
    %v269 = vunpack.c.l.b16 %v120
    %v270 = vpack.c.b16 %v231, %v218
    %v271 = vpack.c.b16 %v232, %v219
    %v272 = vpack.c.b16 %v233, %v220
    %v273 = vpack.c.b16 %v234, %v221
    %v274 = vpack.c.b16 %v235, %v222
    %v275 = vpack.c.b16 %v236, %v223
    %v276 = vpack.c.b16 %v237, %v224
    %v277 = vpack.c.b16 %v238, %v225
    %v278 = vpack.c.b16 %v239, %v226
    %v279 = vpack.c.b16 %v240, %v227
    %v280 = vpack.c.b16 %v241, %v228
    %v281 = vpack.c.b16 %v242, %v229
    %v282 = vpack.c.b16 %v243, %v230
    %v283 = vpack.c.b16 %v257, %v244
    %v284 = vpack.c.b16 %v258, %v245
    %v285 = vpack.c.b16 %v259, %v246
    %v286 = vpack.c.b16 %v260, %v247
    %v287 = vpack.c.b16 %v261, %v248
    %v288 = vpack.c.b16 %v262, %v249
    %v289 = vpack.c.b16 %v263, %v250
    %v290 = vpack.c.b16 %v264, %v251
    %v291 = vpack.c.b16 %v265, %v252
    %v292 = vpack.c.b16 %v266, %v253
    %v293 = vpack.c.b16 %v267, %v254
    %v294 = vpack.c.b16 %v268, %v255
    %v295 = vpack.c.b16 %v269, %v256
    %vm309 = vcmask 220160
    %v311 = vsel %vm309, %v91, 0
    %vm313 = vcmask 1044480
    %vm314 = vcmask 1045504
    %v315 = vsel %vm313, 4294967295, 65535
    %v316 = vsel %vm314, %v315, 0
    %v318 = vand.u32 %v283, %v316
    %v321 = vand.u32 %v284, %v316
    %v324 = vand.u32 %v285, %v316
    %v327 = vand.u32 %v286, %v316
    %v330 = vand.u32 %v287, %v316
    %v333 = vand.u32 %v288, %v316
    %v336 = vand.u32 %v289, %v316
    %v339 = vand.u32 %v290, %v316
    %v342 = vand.u32 %v291, %v316
    %v345 = vand.u32 %v292, %v316
    %v348 = vand.u32 %v293, %v316
    %v351 = vand.u32 %v294, %v316
    %v354 = vand.u32 %v295, %v316
    %356 = vmatprep.subr.bf16.mxu0 0
    %357 = vmatpush1.bf16.msra.mxu0 0
    %358 = vmatprep.subr.bf16.mxu0 0
    %359 = vmatpush1.bf16.msra.mxu0 0
    %360 = vmatprep.subr.bf16.mxu0 0
    %361 = vmatpush1.bf16.msra.mxu0 0
    %362 = vmatprep.subr.bf16.mxu0 0
    %363 = vmatpush1.bf16.msra.mxu0 0
    %364 = vmatprep.subr.bf16.mxu0 0
    %365 = vmatpush1.bf16.msra.mxu0 0
    %366 = vmatprep.subr.bf16.mxu0 0
    %367 = vmatpush1.bf16.msra.mxu0 0
    %368 = vmatprep.subr.bf16.mxu0 %v321
    %369 = vmatpush1.bf16.msra.mxu0 %v318
    %370 = vmatprep.subr.bf16.mxu0 %v271
    %371 = vmatpush1.bf16.msra.mxu0 %v270
    %372 = vmatprep.subr.bf16.mxu0 0
    %373 = vmatpush2.bf16.msra.mxu0 0
    %374 = vmatprep.subr.bf16.mxu0 0
    %375 = vmatpush2.bf16.msra.mxu0 0
    %376 = vmatprep.subr.bf16.mxu0 0
    %377 = vmatpush2.bf16.msra.mxu0 0
    %378 = vmatprep.subr.bf16.mxu0 0
    %379 = vmatpush2.bf16.msra.mxu0 0
    %380 = vmatprep.subr.bf16.mxu0 0
    %381 = vmatpush2.bf16.msra.mxu0 0
    %382 = vmatprep.subr.bf16.mxu0 0
    %383 = vmatpush2.bf16.msra.mxu0 0
    %384 = vmatprep.subr.bf16.mxu0 0
    %385 = vmatpush2.bf16.msra.mxu0 0
    %386 = vmatprep.subr.bf16.mxu0 0
    %387 = vmatpush2.bf16.msra.mxu0 0
    %388 = vmatprep.mubr.bf16.mxu0 0
    %389 = vmatmul.mubr.bf16.gmra.mxu0 %v311
    %v390 = vpop.f32.mrf.mxu0
    %v391 = vadd.f32 %v128, %v390
    %v392 = vpop.f32.mrf.mxu0
    %v393 = vadd.f32 %v132, %v392
    %v394 = vpop.f32.mrf.mxu0
    %v395 = vpop.f32.mrf.mxu0
    %396 = vdwg.mxu0
    %397 = vmatprep.subr.bf16.mxu0 0
    %398 = vmatpush1.bf16.msra.mxu0 0
    %399 = vmatprep.subr.bf16.mxu0 0
    %400 = vmatpush1.bf16.msra.mxu0 0
    %401 = vmatprep.subr.bf16.mxu0 0
    %402 = vmatpush1.bf16.msra.mxu0 0
    %403 = vmatprep.subr.bf16.mxu0 0
    %404 = vmatpush1.bf16.msra.mxu0 0
    %405 = vmatprep.subr.bf16.mxu0 0
    %406 = vmatpush1.bf16.msra.mxu0 0
    %407 = vmatprep.subr.bf16.mxu0 0
    %408 = vmatpush1.bf16.msra.mxu0 0
    %409 = vmatprep.subr.bf16.mxu0 %v327
    %410 = vmatpush1.bf16.msra.mxu0 %v324
    %411 = vmatprep.subr.bf16.mxu0 %v273
    %412 = vmatpush1.bf16.msra.mxu0 %v272
    %413 = vmatprep.subr.bf16.mxu0 0
    %414 = vmatpush2.bf16.msra.mxu0 0
    %415 = vmatprep.subr.bf16.mxu0 0
    %416 = vmatpush2.bf16.msra.mxu0 0
    %417 = vmatprep.subr.bf16.mxu0 0
    %418 = vmatpush2.bf16.msra.mxu0 0
    %419 = vmatprep.subr.bf16.mxu0 0
    %420 = vmatpush2.bf16.msra.mxu0 0
    %421 = vmatprep.subr.bf16.mxu0 0
    %422 = vmatpush2.bf16.msra.mxu0 0
    %423 = vmatprep.subr.bf16.mxu0 0
    %424 = vmatpush2.bf16.msra.mxu0 0
    %425 = vmatprep.subr.bf16.mxu0 0
    %426 = vmatpush2.bf16.msra.mxu0 0
    %427 = vmatprep.subr.bf16.mxu0 0
    %428 = vmatpush2.bf16.msra.mxu0 0
    %429 = vmatprep.mubr.bf16.mxu0 0
    %430 = vmatmul.mubr.bf16.gmra.mxu0 %v311
    %v431 = vpop.f32.mrf.mxu0
    %v432 = vadd.f32 %v136, %v431
    %v433 = vpop.f32.mrf.mxu0
    %v434 = vadd.f32 %v140, %v433
    %v435 = vpop.f32.mrf.mxu0
    %v436 = vpop.f32.mrf.mxu0
    %437 = vdwg.mxu0
    %438 = vmatprep.subr.bf16.mxu0 0
    %439 = vmatpush1.bf16.msra.mxu0 0
    %440 = vmatprep.subr.bf16.mxu0 0
    %441 = vmatpush1.bf16.msra.mxu0 0
    %442 = vmatprep.subr.bf16.mxu0 0
    %443 = vmatpush1.bf16.msra.mxu0 0
    %444 = vmatprep.subr.bf16.mxu0 0
    %445 = vmatpush1.bf16.msra.mxu0 0
    %446 = vmatprep.subr.bf16.mxu0 0
    %447 = vmatpush1.bf16.msra.mxu0 0
    %448 = vmatprep.subr.bf16.mxu0 0
    %449 = vmatpush1.bf16.msra.mxu0 0
    %450 = vmatprep.subr.bf16.mxu0 %v333
    %451 = vmatpush1.bf16.msra.mxu0 %v330
    %452 = vmatprep.subr.bf16.mxu0 %v275
    %453 = vmatpush1.bf16.msra.mxu0 %v274
    %454 = vmatprep.subr.bf16.mxu0 0
    %455 = vmatpush2.bf16.msra.mxu0 0
    %456 = vmatprep.subr.bf16.mxu0 0
    %457 = vmatpush2.bf16.msra.mxu0 0
    %458 = vmatprep.subr.bf16.mxu0 0
    %459 = vmatpush2.bf16.msra.mxu0 0
    %460 = vmatprep.subr.bf16.mxu0 0
    %461 = vmatpush2.bf16.msra.mxu0 0
    %462 = vmatprep.subr.bf16.mxu0 0
    %463 = vmatpush2.bf16.msra.mxu0 0
    %464 = vmatprep.subr.bf16.mxu0 0
    %465 = vmatpush2.bf16.msra.mxu0 0
    %466 = vmatprep.subr.bf16.mxu0 0
    %467 = vmatpush2.bf16.msra.mxu0 0
    %468 = vmatprep.subr.bf16.mxu0 0
    %469 = vmatpush2.bf16.msra.mxu0 0
    %470 = vmatprep.mubr.bf16.mxu0 0
    %471 = vmatmul.mubr.bf16.gmra.mxu0 %v311
    %v472 = vpop.f32.mrf.mxu0
    %v473 = vadd.f32 %v144, %v472
    %v474 = vpop.f32.mrf.mxu0
    %v475 = vadd.f32 %v148, %v474
    %v476 = vpop.f32.mrf.mxu0
    %v477 = vpop.f32.mrf.mxu0
    %478 = vdwg.mxu0
    %479 = vmatprep.subr.bf16.mxu0 0
    %480 = vmatpush1.bf16.msra.mxu0 0
    %481 = vmatprep.subr.bf16.mxu0 0
    %482 = vmatpush1.bf16.msra.mxu0 0
    %483 = vmatprep.subr.bf16.mxu0 0
    %484 = vmatpush1.bf16.msra.mxu0 0
    %485 = vmatprep.subr.bf16.mxu0 0
    %486 = vmatpush1.bf16.msra.mxu0 0
    %487 = vmatprep.subr.bf16.mxu0 0
    %488 = vmatpush1.bf16.msra.mxu0 0
    %489 = vmatprep.subr.bf16.mxu0 0
    %490 = vmatpush1.bf16.msra.mxu0 0
    %491 = vmatprep.subr.bf16.mxu0 %v339
    %492 = vmatpush1.bf16.msra.mxu0 %v336
    %493 = vmatprep.subr.bf16.mxu0 %v277
    %494 = vmatpush1.bf16.msra.mxu0 %v276
    %495 = vmatprep.subr.bf16.mxu0 0
    %496 = vmatpush2.bf16.msra.mxu0 0
    %497 = vmatprep.subr.bf16.mxu0 0
    %498 = vmatpush2.bf16.msra.mxu0 0
    %499 = vmatprep.subr.bf16.mxu0 0
    %500 = vmatpush2.bf16.msra.mxu0 0
    %501 = vmatprep.subr.bf16.mxu0 0
    %502 = vmatpush2.bf16.msra.mxu0 0
    %503 = vmatprep.subr.bf16.mxu0 0
    %504 = vmatpush2.bf16.msra.mxu0 0
    %505 = vmatprep.subr.bf16.mxu0 0
    %506 = vmatpush2.bf16.msra.mxu0 0
    %507 = vmatprep.subr.bf16.mxu0 0
    %508 = vmatpush2.bf16.msra.mxu0 0
    %509 = vmatprep.subr.bf16.mxu0 0
    %510 = vmatpush2.bf16.msra.mxu0 0
    %511 = vmatprep.mubr.bf16.mxu0 0
    %512 = vmatmul.mubr.bf16.gmra.mxu0 %v311
    %v513 = vpop.f32.mrf.mxu0
    %v514 = vadd.f32 %v152, %v513
    %v515 = vpop.f32.mrf.mxu0
    %v516 = vadd.f32 %v156, %v515
    %v517 = vpop.f32.mrf.mxu0
    %v518 = vpop.f32.mrf.mxu0
    %519 = vdwg.mxu0
    %520 = vmatprep.subr.bf16.mxu0 0
    %521 = vmatpush1.bf16.msra.mxu0 0
    %522 = vmatprep.subr.bf16.mxu0 0
    %523 = vmatpush1.bf16.msra.mxu0 0
    %524 = vmatprep.subr.bf16.mxu0 0
    %525 = vmatpush1.bf16.msra.mxu0 0
    %526 = vmatprep.subr.bf16.mxu0 0
    %527 = vmatpush1.bf16.msra.mxu0 0
    %528 = vmatprep.subr.bf16.mxu0 0
    %529 = vmatpush1.bf16.msra.mxu0 0
    %530 = vmatprep.subr.bf16.mxu0 0
    %531 = vmatpush1.bf16.msra.mxu0 0
    %532 = vmatprep.subr.bf16.mxu0 %v345
    %533 = vmatpush1.bf16.msra.mxu0 %v342
    %534 = vmatprep.subr.bf16.mxu0 %v279
    %535 = vmatpush1.bf16.msra.mxu0 %v278
    %536 = vmatprep.subr.bf16.mxu0 0
    %537 = vmatpush2.bf16.msra.mxu0 0
    %538 = vmatprep.subr.bf16.mxu0 0
    %539 = vmatpush2.bf16.msra.mxu0 0
    %540 = vmatprep.subr.bf16.mxu0 0
    %541 = vmatpush2.bf16.msra.mxu0 0
    %542 = vmatprep.subr.bf16.mxu0 0
    %543 = vmatpush2.bf16.msra.mxu0 0
    %544 = vmatprep.subr.bf16.mxu0 0
    %545 = vmatpush2.bf16.msra.mxu0 0
    %546 = vmatprep.subr.bf16.mxu0 0
    %547 = vmatpush2.bf16.msra.mxu0 0
    %548 = vmatprep.subr.bf16.mxu0 0
    %549 = vmatpush2.bf16.msra.mxu0 0
    %550 = vmatprep.subr.bf16.mxu0 0
    %551 = vmatpush2.bf16.msra.mxu0 0
    %552 = vmatprep.mubr.bf16.mxu0 0
    %553 = vmatmul.mubr.bf16.gmra.mxu0 %v311
    %v554 = vpop.f32.mrf.mxu0
    %v555 = vadd.f32 %v160, %v554
    %v556 = vpop.f32.mrf.mxu0
    %v557 = vadd.f32 %v164, %v556
    %v558 = vpop.f32.mrf.mxu0
    %v559 = vpop.f32.mrf.mxu0
    %560 = vdwg.mxu0
    %561 = vmatprep.subr.bf16.mxu0 0
    %562 = vmatpush1.bf16.msra.mxu0 0
    %563 = vmatprep.subr.bf16.mxu0 0
    %564 = vmatpush1.bf16.msra.mxu0 0
    %565 = vmatprep.subr.bf16.mxu0 0
    %566 = vmatpush1.bf16.msra.mxu0 0
    %567 = vmatprep.subr.bf16.mxu0 0
    %568 = vmatpush1.bf16.msra.mxu0 0
    %569 = vmatprep.subr.bf16.mxu0 0
    %570 = vmatpush1.bf16.msra.mxu0 0
    %571 = vmatprep.subr.bf16.mxu0 0
    %572 = vmatpush1.bf16.msra.mxu0 0
    %573 = vmatprep.subr.bf16.mxu0 %v351
    %574 = vmatpush1.bf16.msra.mxu0 %v348
    %575 = vmatprep.subr.bf16.mxu0 %v281
    %576 = vmatpush1.bf16.msra.mxu0 %v280
    %577 = vmatprep.subr.bf16.mxu0 0
    %578 = vmatpush2.bf16.msra.mxu0 0
    %579 = vmatprep.subr.bf16.mxu0 0
    %580 = vmatpush2.bf16.msra.mxu0 0
    %581 = vmatprep.subr.bf16.mxu0 0
    %582 = vmatpush2.bf16.msra.mxu0 0
    %583 = vmatprep.subr.bf16.mxu0 0
    %584 = vmatpush2.bf16.msra.mxu0 0
    %585 = vmatprep.subr.bf16.mxu0 0
    %586 = vmatpush2.bf16.msra.mxu0 0
    %587 = vmatprep.subr.bf16.mxu0 0
    %588 = vmatpush2.bf16.msra.mxu0 0
    %589 = vmatprep.subr.bf16.mxu0 0
    %590 = vmatpush2.bf16.msra.mxu0 0
    %591 = vmatprep.subr.bf16.mxu0 0
    %592 = vmatpush2.bf16.msra.mxu0 0
    %593 = vmatprep.mubr.bf16.mxu0 0
    %594 = vmatmul.mubr.bf16.gmra.mxu0 %v311
    %v595 = vpop.f32.mrf.mxu0
    %v596 = vadd.f32 %v168, %v595
    %v597 = vpop.f32.mrf.mxu0
    %v598 = vadd.f32 %v172, %v597
    %v599 = vpop.f32.mrf.mxu0
    %v600 = vpop.f32.mrf.mxu0
    %601 = vdwg.mxu0
    %602 = vmatprep.subr.bf16.mxu0 0
    %603 = vmatpush1.bf16.msra.mxu0 0
    %604 = vmatprep.subr.bf16.mxu0 0
    %605 = vmatpush1.bf16.msra.mxu0 0
    %606 = vmatprep.subr.bf16.mxu0 0
    %607 = vmatpush1.bf16.msra.mxu0 0
    %608 = vmatprep.subr.bf16.mxu0 0
    %609 = vmatpush1.bf16.msra.mxu0 0
    %610 = vmatprep.subr.bf16.mxu0 0
    %611 = vmatpush1.bf16.msra.mxu0 0
    %612 = vmatprep.subr.bf16.mxu0 0
    %613 = vmatpush1.bf16.msra.mxu0 0
    %614 = vmatprep.subr.bf16.mxu0 0
    %615 = vmatpush1.bf16.msra.mxu0 %v354
    %616 = vmatprep.subr.bf16.mxu0 0
    %617 = vmatpush1.bf16.msra.mxu0 %v282
    %618 = vmatprep.subr.bf16.mxu0 0
    %619 = vmatpush2.bf16.msra.mxu0 0
    %620 = vmatprep.subr.bf16.mxu0 0
    %621 = vmatpush2.bf16.msra.mxu0 0
    %622 = vmatprep.subr.bf16.mxu0 0
    %623 = vmatpush2.bf16.msra.mxu0 0
    %624 = vmatprep.subr.bf16.mxu0 0
    %625 = vmatpush2.bf16.msra.mxu0 0
    %626 = vmatprep.subr.bf16.mxu0 0
    %627 = vmatpush2.bf16.msra.mxu0 0
    %628 = vmatprep.subr.bf16.mxu0 0
    %629 = vmatpush2.bf16.msra.mxu0 0
    %630 = vmatprep.subr.bf16.mxu0 0
    %631 = vmatpush2.bf16.msra.mxu0 0
    %632 = vmatprep.subr.bf16.mxu0 0
    %633 = vmatpush2.bf16.msra.mxu0 0
    %634 = vmatprep.mubr.bf16.mxu0 0
    %635 = vmatmul.mubr.bf16.gmra.mxu0 %v311
    %v636 = vpop.f32.mrf.mxu0
    %v637 = vadd.f32 %v176, %v636
    %v638 = vpop.f32.mrf.mxu0
    %v639 = vpop.f32.mrf.mxu0
    %v640 = vpop.f32.mrf.mxu0
    %641 = vdwg.mxu0
    %v642 = vld [vmem:[%s3] sm:$0xf]
    %v643 = vld [vmem:[%s3 + $0x4] sm:$0xf]
    %v644 = vld [vmem:[%s3 + $0x8] sm:$0xf]
    %v645 = vld [vmem:[%s3 + $0xc] sm:$0x3]
    %v646 = vld [vmem:[%s4] sm:$0x1]
    %v648 = vlaneseq
    %v649 = vshrl.u32 %v648, 7
    %v650 = vsub.s32 0, %v649
    %v651 = vrot.slane %v646, %v650
    %v657 = vunpack.c.l.b16 %v642
    %v658 = vunpack.c.l.b16 %v643
    %v659 = vunpack.c.l.b16 %v644
    %v660 = vunpack.c.l.b16 %v645
    %v661 = vpack.c.b16 %v658, %v657
    %v662 = vpack.c.b16 %v660, %v659
    %v665 = vand.u32 %v662, %v316
    %667 = vmatprep.subr.bf16.mxu0 0
    %668 = vmatpush1.bf16.msra.mxu0 0
    %669 = vmatprep.subr.bf16.mxu0 0
    %670 = vmatpush1.bf16.msra.mxu0 0
    %671 = vmatprep.subr.bf16.mxu0 0
    %672 = vmatpush1.bf16.msra.mxu0 0
    %673 = vmatprep.subr.bf16.mxu0 0
    %674 = vmatpush1.bf16.msra.mxu0 0
    %675 = vmatprep.subr.bf16.mxu0 0
    %676 = vmatpush1.bf16.msra.mxu0 0
    %677 = vmatprep.subr.bf16.mxu0 0
    %678 = vmatpush1.bf16.msra.mxu0 0
    %679 = vmatprep.subr.bf16.mxu0 0
    %680 = vmatpush1.bf16.msra.mxu0 %v665
    %681 = vmatprep.subr.bf16.mxu0 0
    %682 = vmatpush1.bf16.msra.mxu0 %v661
    %683 = vmatprep.subr.bf16.mxu0 0
    %684 = vmatpush2.bf16.msra.mxu0 0
    %685 = vmatprep.subr.bf16.mxu0 0
    %686 = vmatpush2.bf16.msra.mxu0 0
    %687 = vmatprep.subr.bf16.mxu0 0
    %688 = vmatpush2.bf16.msra.mxu0 0
    %689 = vmatprep.subr.bf16.mxu0 0
    %690 = vmatpush2.bf16.msra.mxu0 0
    %691 = vmatprep.subr.bf16.mxu0 0
    %692 = vmatpush2.bf16.msra.mxu0 0
    %693 = vmatprep.subr.bf16.mxu0 0
    %694 = vmatpush2.bf16.msra.mxu0 0
    %695 = vmatprep.subr.bf16.mxu0 0
    %696 = vmatpush2.bf16.msra.mxu0 0
    %697 = vmatprep.subr.bf16.mxu0 0
    %698 = vmatpush2.bf16.msra.mxu0 0
    %699 = vmatprep.mubr.bf16.mxu0 0
    %700 = vmatmul.mubr.bf16.gmra.mxu0 %v311
    %v701 = vpop.f32.mrf.mxu0
    %v702 = vadd.f32 %v651, %v701
    %v703 = vpop.f32.mrf.mxu0
    %v704 = vpop.f32.mrf.mxu0
    %v705 = vpop.f32.mrf.mxu0
    %706 = vdwg.mxu0
    %v707 = vmax.f32 %v702, 0.0
    %vm708 = vcmask 64512
    %v710 = vsel %vm708, %v92, 0
    %712 = vmatprep.subr.mxu0 0.0
    %713 = vmatpush1.msra.mxu0 0.0
    %714 = vmatprep.subr.mxu0 0.0
    %715 = vmatpush1.msra.mxu0 0.0
    %716 = vmatprep.subr.mxu0 0.0
    %717 = vmatpush1.msra.mxu0 0.0
    %718 = vmatprep.subr.mxu0 0.0
    %719 = vmatpush1.msra.mxu0 0.0
    %720 = vmatprep.subr.mxu0 0.0
    %721 = vmatpush1.msra.mxu0 0.0
    %722 = vmatprep.subr.mxu0 0.0
    %723 = vmatpush1.msra.mxu0 0.0
    %724 = vmatprep.subr.mxu0 0.0
    %725 = vmatpush1.msra.mxu0 0.0
    %726 = vmatprep.subr.mxu0 0.0
    %727 = vmatpush1.msra.mxu0 0.0
    %728 = vmatprep.subr.mxu0 0.0
    %729 = vmatpush1.msra.mxu0 0.0
    %730 = vmatprep.subr.mxu0 0.0
    %731 = vmatpush1.msra.mxu0 0.0
    %732 = vmatprep.subr.mxu0 0.0
    %733 = vmatpush1.msra.mxu0 0.0
    %734 = vmatprep.subr.mxu0 0.0
    %735 = vmatpush1.msra.mxu0 0.0
    %736 = vmatprep.subr.mxu0 0.0
    %737 = vmatpush1.msra.mxu0 0.0
    %738 = vmatprep.subr.mxu0 0.0
    %739 = vmatpush1.msra.mxu0 0.0
    %740 = vmatprep.subr.mxu0 0.0
    %741 = vmatpush1.msra.mxu0 0.0
    %742 = vmatprep.subr.mxu0 %v393
    %743 = vmatpush1.msra.mxu0 %v391
    %744 = vmatprep.subr.mxu0 0.0
    %745 = vmatpush2.msra.mxu0 0.0
    %746 = vmatprep.subr.mxu0 0.0
    %747 = vmatpush2.msra.mxu0 0.0
    %748 = vmatprep.subr.mxu0 0.0
    %749 = vmatpush2.msra.mxu0 0.0
    %750 = vmatprep.subr.mxu0 0.0
    %751 = vmatpush2.msra.mxu0 0.0
    %752 = vmatprep.subr.mxu0 0.0
    %753 = vmatpush2.msra.mxu0 0.0
    %754 = vmatprep.subr.mxu0 0.0
    %755 = vmatpush2.msra.mxu0 0.0
    %756 = vmatprep.subr.mxu0 0.0
    %757 = vmatpush2.msra.mxu0 0.0
    %758 = vmatprep.subr.mxu0 0.0
    %759 = vmatpush2.msra.mxu0 0.0
    %760 = vmatprep.subr.mxu0 0.0
    %761 = vmatpush2.msra.mxu0 0.0
    %762 = vmatprep.subr.mxu0 0.0
    %763 = vmatpush2.msra.mxu0 0.0
    %764 = vmatprep.subr.mxu0 0.0
    %765 = vmatpush2.msra.mxu0 0.0
    %766 = vmatprep.subr.mxu0 0.0
    %767 = vmatpush2.msra.mxu0 0.0
    %768 = vmatprep.subr.mxu0 0.0
    %769 = vmatpush2.msra.mxu0 0.0
    %770 = vmatprep.subr.mxu0 0.0
    %771 = vmatpush2.msra.mxu0 0.0
    %772 = vmatprep.subr.mxu0 0.0
    %773 = vmatpush2.msra.mxu0 0.0
    %774 = vmatprep.subr.mxu0 0.0
    %775 = vmatpush2.msra.mxu0 0.0
    %776 = vmatprep.mubr.f32.mxu0 0.0
    %777 = vmatmul.mubr.f32.gmra.mxu0 %v710
    %v778 = vpop.f32.mrf.mxu0
    %v779 = vadd.f32 0.0, %v778
    %v780 = vpop.f32.mrf.mxu0
    %v781 = vadd.f32 0.0, %v780
    %782 = vdwg.mxu0
    %783 = vmatprep.subr.mxu0 0.0
    %784 = vmatpush1.msra.mxu0 0.0
    %785 = vmatprep.subr.mxu0 0.0
    %786 = vmatpush1.msra.mxu0 0.0
    %787 = vmatprep.subr.mxu0 0.0
    %788 = vmatpush1.msra.mxu0 0.0
    %789 = vmatprep.subr.mxu0 0.0
    %790 = vmatpush1.msra.mxu0 0.0
    %791 = vmatprep.subr.mxu0 0.0
    %792 = vmatpush1.msra.mxu0 0.0
    %793 = vmatprep.subr.mxu0 0.0
    %794 = vmatpush1.msra.mxu0 0.0
    %795 = vmatprep.subr.mxu0 0.0
    %796 = vmatpush1.msra.mxu0 0.0
    %797 = vmatprep.subr.mxu0 0.0
    %798 = vmatpush1.msra.mxu0 0.0
    %799 = vmatprep.subr.mxu0 0.0
    %800 = vmatpush1.msra.mxu0 0.0
    %801 = vmatprep.subr.mxu0 0.0
    %802 = vmatpush1.msra.mxu0 0.0
    %803 = vmatprep.subr.mxu0 0.0
    %804 = vmatpush1.msra.mxu0 0.0
    %805 = vmatprep.subr.mxu0 0.0
    %806 = vmatpush1.msra.mxu0 0.0
    %807 = vmatprep.subr.mxu0 0.0
    %808 = vmatpush1.msra.mxu0 0.0
    %809 = vmatprep.subr.mxu0 0.0
    %810 = vmatpush1.msra.mxu0 0.0
    %811 = vmatprep.subr.mxu0 0.0
    %812 = vmatpush1.msra.mxu0 0.0
    %813 = vmatprep.subr.mxu0 %v434
    %814 = vmatpush1.msra.mxu0 %v432
    %815 = vmatprep.subr.mxu0 0.0
    %816 = vmatpush2.msra.mxu0 0.0
    %817 = vmatprep.subr.mxu0 0.0
    %818 = vmatpush2.msra.mxu0 0.0
    %819 = vmatprep.subr.mxu0 0.0
    %820 = vmatpush2.msra.mxu0 0.0
    %821 = vmatprep.subr.mxu0 0.0
    %822 = vmatpush2.msra.mxu0 0.0
    %823 = vmatprep.subr.mxu0 0.0
    %824 = vmatpush2.msra.mxu0 0.0
    %825 = vmatprep.subr.mxu0 0.0
    %826 = vmatpush2.msra.mxu0 0.0
    %827 = vmatprep.subr.mxu0 0.0
    %828 = vmatpush2.msra.mxu0 0.0
    %829 = vmatprep.subr.mxu0 0.0
    %830 = vmatpush2.msra.mxu0 0.0
    %831 = vmatprep.subr.mxu0 0.0
    %832 = vmatpush2.msra.mxu0 0.0
    %833 = vmatprep.subr.mxu0 0.0
    %834 = vmatpush2.msra.mxu0 0.0
    %835 = vmatprep.subr.mxu0 0.0
    %836 = vmatpush2.msra.mxu0 0.0
    %837 = vmatprep.subr.mxu0 0.0
    %838 = vmatpush2.msra.mxu0 0.0
    %839 = vmatprep.subr.mxu0 0.0
    %840 = vmatpush2.msra.mxu0 0.0
    %841 = vmatprep.subr.mxu0 0.0
    %842 = vmatpush2.msra.mxu0 0.0
    %843 = vmatprep.subr.mxu0 0.0
    %844 = vmatpush2.msra.mxu0 0.0
    %845 = vmatprep.subr.mxu0 0.0
    %846 = vmatpush2.msra.mxu0 0.0
    %847 = vmatprep.mubr.f32.mxu0 0.0
    %848 = vmatmul.mubr.f32.gmra.mxu0 %v710
    %v849 = vpop.f32.mrf.mxu0
    %v850 = vadd.f32 0.0, %v849
    %v851 = vpop.f32.mrf.mxu0
    %v852 = vadd.f32 0.0, %v851
    %853 = vdwg.mxu0
    %854 = vmatprep.subr.mxu0 0.0
    %855 = vmatpush1.msra.mxu0 0.0
    %856 = vmatprep.subr.mxu0 0.0
    %857 = vmatpush1.msra.mxu0 0.0
    %858 = vmatprep.subr.mxu0 0.0
    %859 = vmatpush1.msra.mxu0 0.0
    %860 = vmatprep.subr.mxu0 0.0
    %861 = vmatpush1.msra.mxu0 0.0
    %862 = vmatprep.subr.mxu0 0.0
    %863 = vmatpush1.msra.mxu0 0.0
    %864 = vmatprep.subr.mxu0 0.0
    %865 = vmatpush1.msra.mxu0 0.0
    %866 = vmatprep.subr.mxu0 0.0
    %867 = vmatpush1.msra.mxu0 0.0
    %868 = vmatprep.subr.mxu0 0.0
    %869 = vmatpush1.msra.mxu0 0.0
    %870 = vmatprep.subr.mxu0 0.0
    %871 = vmatpush1.msra.mxu0 0.0
    %872 = vmatprep.subr.mxu0 0.0
    %873 = vmatpush1.msra.mxu0 0.0
    %874 = vmatprep.subr.mxu0 0.0
    %875 = vmatpush1.msra.mxu0 0.0
    %876 = vmatprep.subr.mxu0 0.0
    %877 = vmatpush1.msra.mxu0 0.0
    %878 = vmatprep.subr.mxu0 0.0
    %879 = vmatpush1.msra.mxu0 0.0
    %880 = vmatprep.subr.mxu0 0.0
    %881 = vmatpush1.msra.mxu0 0.0
    %882 = vmatprep.subr.mxu0 0.0
    %883 = vmatpush1.msra.mxu0 0.0
    %884 = vmatprep.subr.mxu0 %v475
    %885 = vmatpush1.msra.mxu0 %v473
    %886 = vmatprep.subr.mxu0 0.0
    %887 = vmatpush2.msra.mxu0 0.0
    %888 = vmatprep.subr.mxu0 0.0
    %889 = vmatpush2.msra.mxu0 0.0
    %890 = vmatprep.subr.mxu0 0.0
    %891 = vmatpush2.msra.mxu0 0.0
    %892 = vmatprep.subr.mxu0 0.0
    %893 = vmatpush2.msra.mxu0 0.0
    %894 = vmatprep.subr.mxu0 0.0
    %895 = vmatpush2.msra.mxu0 0.0
    %896 = vmatprep.subr.mxu0 0.0
    %897 = vmatpush2.msra.mxu0 0.0
    %898 = vmatprep.subr.mxu0 0.0
    %899 = vmatpush2.msra.mxu0 0.0
    %900 = vmatprep.subr.mxu0 0.0
    %901 = vmatpush2.msra.mxu0 0.0
    %902 = vmatprep.subr.mxu0 0.0
    %903 = vmatpush2.msra.mxu0 0.0
    %904 = vmatprep.subr.mxu0 0.0
    %905 = vmatpush2.msra.mxu0 0.0
    %906 = vmatprep.subr.mxu0 0.0
    %907 = vmatpush2.msra.mxu0 0.0
    %908 = vmatprep.subr.mxu0 0.0
    %909 = vmatpush2.msra.mxu0 0.0
    %910 = vmatprep.subr.mxu0 0.0
    %911 = vmatpush2.msra.mxu0 0.0
    %912 = vmatprep.subr.mxu0 0.0
    %913 = vmatpush2.msra.mxu0 0.0
    %914 = vmatprep.subr.mxu0 0.0
    %915 = vmatpush2.msra.mxu0 0.0
    %916 = vmatprep.subr.mxu0 0.0
    %917 = vmatpush2.msra.mxu0 0.0
    %918 = vmatprep.mubr.f32.mxu0 0.0
    %919 = vmatmul.mubr.f32.gmra.mxu0 %v710
    %v920 = vpop.f32.mrf.mxu0
    %v921 = vadd.f32 0.0, %v920
    %v922 = vpop.f32.mrf.mxu0
    %v923 = vadd.f32 0.0, %v922
    %924 = vdwg.mxu0
    %925 = vmatprep.subr.mxu0 0.0
    %926 = vmatpush1.msra.mxu0 0.0
    %927 = vmatprep.subr.mxu0 0.0
    %928 = vmatpush1.msra.mxu0 0.0
    %929 = vmatprep.subr.mxu0 0.0
    %930 = vmatpush1.msra.mxu0 0.0
    %931 = vmatprep.subr.mxu0 0.0
    %932 = vmatpush1.msra.mxu0 0.0
    %933 = vmatprep.subr.mxu0 0.0
    %934 = vmatpush1.msra.mxu0 0.0
    %935 = vmatprep.subr.mxu0 0.0
    %936 = vmatpush1.msra.mxu0 0.0
    %937 = vmatprep.subr.mxu0 0.0
    %938 = vmatpush1.msra.mxu0 0.0
    %939 = vmatprep.subr.mxu0 0.0
    %940 = vmatpush1.msra.mxu0 0.0
    %941 = vmatprep.subr.mxu0 0.0
    %942 = vmatpush1.msra.mxu0 0.0
    %943 = vmatprep.subr.mxu0 0.0
    %944 = vmatpush1.msra.mxu0 0.0
    %945 = vmatprep.subr.mxu0 0.0
    %946 = vmatpush1.msra.mxu0 0.0
    %947 = vmatprep.subr.mxu0 0.0
    %948 = vmatpush1.msra.mxu0 0.0
    %949 = vmatprep.subr.mxu0 0.0
    %950 = vmatpush1.msra.mxu0 0.0
    %951 = vmatprep.subr.mxu0 0.0
    %952 = vmatpush1.msra.mxu0 0.0
    %953 = vmatprep.subr.mxu0 0.0
    %954 = vmatpush1.msra.mxu0 0.0
    %955 = vmatprep.subr.mxu0 %v516
    %956 = vmatpush1.msra.mxu0 %v514
    %957 = vmatprep.subr.mxu0 0.0
    %958 = vmatpush2.msra.mxu0 0.0
    %959 = vmatprep.subr.mxu0 0.0
    %960 = vmatpush2.msra.mxu0 0.0
    %961 = vmatprep.subr.mxu0 0.0
    %962 = vmatpush2.msra.mxu0 0.0
    %963 = vmatprep.subr.mxu0 0.0
    %964 = vmatpush2.msra.mxu0 0.0
    %965 = vmatprep.subr.mxu0 0.0
    %966 = vmatpush2.msra.mxu0 0.0
    %967 = vmatprep.subr.mxu0 0.0
    %968 = vmatpush2.msra.mxu0 0.0
    %969 = vmatprep.subr.mxu0 0.0
    %970 = vmatpush2.msra.mxu0 0.0
    %971 = vmatprep.subr.mxu0 0.0
    %972 = vmatpush2.msra.mxu0 0.0
    %973 = vmatprep.subr.mxu0 0.0
    %974 = vmatpush2.msra.mxu0 0.0
    %975 = vmatprep.subr.mxu0 0.0
    %976 = vmatpush2.msra.mxu0 0.0
    %977 = vmatprep.subr.mxu0 0.0
    %978 = vmatpush2.msra.mxu0 0.0
    %979 = vmatprep.subr.mxu0 0.0
    %980 = vmatpush2.msra.mxu0 0.0
    %981 = vmatprep.subr.mxu0 0.0
    %982 = vmatpush2.msra.mxu0 0.0
    %983 = vmatprep.subr.mxu0 0.0
    %984 = vmatpush2.msra.mxu0 0.0
    %985 = vmatprep.subr.mxu0 0.0
    %986 = vmatpush2.msra.mxu0 0.0
    %987 = vmatprep.subr.mxu0 0.0
    %988 = vmatpush2.msra.mxu0 0.0
    %989 = vmatprep.mubr.f32.mxu0 0.0
    %990 = vmatmul.mubr.f32.gmra.mxu0 %v710
    %v991 = vpop.f32.mrf.mxu0
    %v992 = vadd.f32 0.0, %v991
    %v993 = vpop.f32.mrf.mxu0
    %v994 = vadd.f32 0.0, %v993
    %995 = vdwg.mxu0
    %996 = vmatprep.subr.mxu0 0.0
    %997 = vmatpush1.msra.mxu0 0.0
    %998 = vmatprep.subr.mxu0 0.0
    %999 = vmatpush1.msra.mxu0 0.0
    %1000 = vmatprep.subr.mxu0 0.0
    %1001 = vmatpush1.msra.mxu0 0.0
    %1002 = vmatprep.subr.mxu0 0.0
    %1003 = vmatpush1.msra.mxu0 0.0
    %1004 = vmatprep.subr.mxu0 0.0
    %1005 = vmatpush1.msra.mxu0 0.0
    %1006 = vmatprep.subr.mxu0 0.0
    %1007 = vmatpush1.msra.mxu0 0.0
    %1008 = vmatprep.subr.mxu0 0.0
    %1009 = vmatpush1.msra.mxu0 0.0
    %1010 = vmatprep.subr.mxu0 0.0
    %1011 = vmatpush1.msra.mxu0 0.0
    %1012 = vmatprep.subr.mxu0 0.0
    %1013 = vmatpush1.msra.mxu0 0.0
    %1014 = vmatprep.subr.mxu0 0.0
    %1015 = vmatpush1.msra.mxu0 0.0
    %1016 = vmatprep.subr.mxu0 0.0
    %1017 = vmatpush1.msra.mxu0 0.0
    %1018 = vmatprep.subr.mxu0 0.0
    %1019 = vmatpush1.msra.mxu0 0.0
    %1020 = vmatprep.subr.mxu0 0.0
    %1021 = vmatpush1.msra.mxu0 0.0
    %1022 = vmatprep.subr.mxu0 0.0
    %1023 = vmatpush1.msra.mxu0 0.0
    %1024 = vmatprep.subr.mxu0 0.0
    %1025 = vmatpush1.msra.mxu0 0.0
    %1026 = vmatprep.subr.mxu0 %v557
    %1027 = vmatpush1.msra.mxu0 %v555
    %1028 = vmatprep.subr.mxu0 0.0
    %1029 = vmatpush2.msra.mxu0 0.0
    %1030 = vmatprep.subr.mxu0 0.0
    %1031 = vmatpush2.msra.mxu0 0.0
    %1032 = vmatprep.subr.mxu0 0.0
    %1033 = vmatpush2.msra.mxu0 0.0
    %1034 = vmatprep.subr.mxu0 0.0
    %1035 = vmatpush2.msra.mxu0 0.0
    %1036 = vmatprep.subr.mxu0 0.0
    %1037 = vmatpush2.msra.mxu0 0.0
    %1038 = vmatprep.subr.mxu0 0.0
    %1039 = vmatpush2.msra.mxu0 0.0
    %1040 = vmatprep.subr.mxu0 0.0
    %1041 = vmatpush2.msra.mxu0 0.0
    %1042 = vmatprep.subr.mxu0 0.0
    %1043 = vmatpush2.msra.mxu0 0.0
    %1044 = vmatprep.subr.mxu0 0.0
    %1045 = vmatpush2.msra.mxu0 0.0
    %1046 = vmatprep.subr.mxu0 0.0
    %1047 = vmatpush2.msra.mxu0 0.0
    %1048 = vmatprep.subr.mxu0 0.0
    %1049 = vmatpush2.msra.mxu0 0.0
    %1050 = vmatprep.subr.mxu0 0.0
    %1051 = vmatpush2.msra.mxu0 0.0
    %1052 = vmatprep.subr.mxu0 0.0
    %1053 = vmatpush2.msra.mxu0 0.0
    %1054 = vmatprep.subr.mxu0 0.0
    %1055 = vmatpush2.msra.mxu0 0.0
    %1056 = vmatprep.subr.mxu0 0.0
    %1057 = vmatpush2.msra.mxu0 0.0
    %1058 = vmatprep.subr.mxu0 0.0
    %1059 = vmatpush2.msra.mxu0 0.0
    %1060 = vmatprep.mubr.f32.mxu0 0.0
    %1061 = vmatmul.mubr.f32.gmra.mxu0 %v710
    %v1062 = vpop.f32.mrf.mxu0
    %v1063 = vadd.f32 0.0, %v1062
    %v1064 = vpop.f32.mrf.mxu0
    %v1065 = vadd.f32 0.0, %v1064
    %1066 = vdwg.mxu0
    %1067 = vmatprep.subr.mxu0 0.0
    %1068 = vmatpush1.msra.mxu0 0.0
    %1069 = vmatprep.subr.mxu0 0.0
    %1070 = vmatpush1.msra.mxu0 0.0
    %1071 = vmatprep.subr.mxu0 0.0
    %1072 = vmatpush1.msra.mxu0 0.0
    %1073 = vmatprep.subr.mxu0 0.0
    %1074 = vmatpush1.msra.mxu0 0.0
    %1075 = vmatprep.subr.mxu0 0.0
    %1076 = vmatpush1.msra.mxu0 0.0
    %1077 = vmatprep.subr.mxu0 0.0
    %1078 = vmatpush1.msra.mxu0 0.0
    %1079 = vmatprep.subr.mxu0 0.0
    %1080 = vmatpush1.msra.mxu0 0.0
    %1081 = vmatprep.subr.mxu0 0.0
    %1082 = vmatpush1.msra.mxu0 0.0
    %1083 = vmatprep.subr.mxu0 0.0
    %1084 = vmatpush1.msra.mxu0 0.0
    %1085 = vmatprep.subr.mxu0 0.0
    %1086 = vmatpush1.msra.mxu0 0.0
    %1087 = vmatprep.subr.mxu0 0.0
    %1088 = vmatpush1.msra.mxu0 0.0
    %1089 = vmatprep.subr.mxu0 0.0
    %1090 = vmatpush1.msra.mxu0 0.0
    %1091 = vmatprep.subr.mxu0 0.0
    %1092 = vmatpush1.msra.mxu0 0.0
    %1093 = vmatprep.subr.mxu0 0.0
    %1094 = vmatpush1.msra.mxu0 0.0
    %1095 = vmatprep.subr.mxu0 0.0
    %1096 = vmatpush1.msra.mxu0 0.0
    %1097 = vmatprep.subr.mxu0 %v598
    %1098 = vmatpush1.msra.mxu0 %v596
    %1099 = vmatprep.subr.mxu0 0.0
    %1100 = vmatpush2.msra.mxu0 0.0
    %1101 = vmatprep.subr.mxu0 0.0
    %1102 = vmatpush2.msra.mxu0 0.0
    %1103 = vmatprep.subr.mxu0 0.0
    %1104 = vmatpush2.msra.mxu0 0.0
    %1105 = vmatprep.subr.mxu0 0.0
    %1106 = vmatpush2.msra.mxu0 0.0
    %1107 = vmatprep.subr.mxu0 0.0
    %1108 = vmatpush2.msra.mxu0 0.0
    %1109 = vmatprep.subr.mxu0 0.0
    %1110 = vmatpush2.msra.mxu0 0.0
    %1111 = vmatprep.subr.mxu0 0.0
    %1112 = vmatpush2.msra.mxu0 0.0
    %1113 = vmatprep.subr.mxu0 0.0
    %1114 = vmatpush2.msra.mxu0 0.0
    %1115 = vmatprep.subr.mxu0 0.0
    %1116 = vmatpush2.msra.mxu0 0.0
    %1117 = vmatprep.subr.mxu0 0.0
    %1118 = vmatpush2.msra.mxu0 0.0
    %1119 = vmatprep.subr.mxu0 0.0
    %1120 = vmatpush2.msra.mxu0 0.0
    %1121 = vmatprep.subr.mxu0 0.0
    %1122 = vmatpush2.msra.mxu0 0.0
    %1123 = vmatprep.subr.mxu0 0.0
    %1124 = vmatpush2.msra.mxu0 0.0
    %1125 = vmatprep.subr.mxu0 0.0
    %1126 = vmatpush2.msra.mxu0 0.0
    %1127 = vmatprep.subr.mxu0 0.0
    %1128 = vmatpush2.msra.mxu0 0.0
    %1129 = vmatprep.subr.mxu0 0.0
    %1130 = vmatpush2.msra.mxu0 0.0
    %1131 = vmatprep.mubr.f32.mxu0 0.0
    %1132 = vmatmul.mubr.f32.gmra.mxu0 %v710
    %v1133 = vpop.f32.mrf.mxu0
    %v1134 = vadd.f32 0.0, %v1133
    %v1135 = vpop.f32.mrf.mxu0
    %v1136 = vadd.f32 0.0, %v1135
    %1137 = vdwg.mxu0
    %1138 = vmatprep.subr.mxu0 0.0
    %1139 = vmatpush1.msra.mxu0 0.0
    %1140 = vmatprep.subr.mxu0 0.0
    %1141 = vmatpush1.msra.mxu0 0.0
    %1142 = vmatprep.subr.mxu0 0.0
    %1143 = vmatpush1.msra.mxu0 0.0
    %1144 = vmatprep.subr.mxu0 0.0
    %1145 = vmatpush1.msra.mxu0 0.0
    %1146 = vmatprep.subr.mxu0 0.0
    %1147 = vmatpush1.msra.mxu0 0.0
    %1148 = vmatprep.subr.mxu0 0.0
    %1149 = vmatpush1.msra.mxu0 0.0
    %1150 = vmatprep.subr.mxu0 0.0
    %1151 = vmatpush1.msra.mxu0 0.0
    %1152 = vmatprep.subr.mxu0 0.0
    %1153 = vmatpush1.msra.mxu0 0.0
    %1154 = vmatprep.subr.mxu0 0.0
    %1155 = vmatpush1.msra.mxu0 0.0
    %1156 = vmatprep.subr.mxu0 0.0
    %1157 = vmatpush1.msra.mxu0 0.0
    %1158 = vmatprep.subr.mxu0 0.0
    %1159 = vmatpush1.msra.mxu0 0.0
    %1160 = vmatprep.subr.mxu0 0.0
    %1161 = vmatpush1.msra.mxu0 0.0
    %1162 = vmatprep.subr.mxu0 0.0
    %1163 = vmatpush1.msra.mxu0 0.0
    %1164 = vmatprep.subr.mxu0 0.0
    %1165 = vmatpush1.msra.mxu0 0.0
    %1166 = vmatprep.subr.mxu0 0.0
    %1167 = vmatpush1.msra.mxu0 0.0
    %1168 = vmatprep.subr.mxu0 0.0
    %1169 = vmatpush1.msra.mxu0 %v637
    %1170 = vmatprep.subr.mxu0 0.0
    %1171 = vmatpush2.msra.mxu0 0.0
    %1172 = vmatprep.subr.mxu0 0.0
    %1173 = vmatpush2.msra.mxu0 0.0
    %1174 = vmatprep.subr.mxu0 0.0
    %1175 = vmatpush2.msra.mxu0 0.0
    %1176 = vmatprep.subr.mxu0 0.0
    %1177 = vmatpush2.msra.mxu0 0.0
    %1178 = vmatprep.subr.mxu0 0.0
    %1179 = vmatpush2.msra.mxu0 0.0
    %1180 = vmatprep.subr.mxu0 0.0
    %1181 = vmatpush2.msra.mxu0 0.0
    %1182 = vmatprep.subr.mxu0 0.0
    %1183 = vmatpush2.msra.mxu0 0.0
    %1184 = vmatprep.subr.mxu0 0.0
    %1185 = vmatpush2.msra.mxu0 0.0
    %1186 = vmatprep.subr.mxu0 0.0
    %1187 = vmatpush2.msra.mxu0 0.0
    %1188 = vmatprep.subr.mxu0 0.0
    %1189 = vmatpush2.msra.mxu0 0.0
    %1190 = vmatprep.subr.mxu0 0.0
    %1191 = vmatpush2.msra.mxu0 0.0
    %1192 = vmatprep.subr.mxu0 0.0
    %1193 = vmatpush2.msra.mxu0 0.0
    %1194 = vmatprep.subr.mxu0 0.0
    %1195 = vmatpush2.msra.mxu0 0.0
    %1196 = vmatprep.subr.mxu0 0.0
    %1197 = vmatpush2.msra.mxu0 0.0
    %1198 = vmatprep.subr.mxu0 0.0
    %1199 = vmatpush2.msra.mxu0 0.0
    %1200 = vmatprep.subr.mxu0 0.0
    %1201 = vmatpush2.msra.mxu0 0.0
    %1202 = vmatprep.mubr.f32.mxu0 0.0
    %1203 = vmatmul.mubr.f32.gmra.mxu0 %v710
    %v1204 = vpop.f32.mrf.mxu0
    %v1205 = vadd.f32 0.0, %v1204
    %v1206 = vpop.f32.mrf.mxu0
    %1207 = vdwg.mxu0
    %v1208 = vpack.c.bf16 %v779, %v779
    %v1209 = vpack.c.bf16 %v781, %v781
    %v1210 = vpack.c.bf16 %v850, %v850
    %v1211 = vpack.c.bf16 %v852, %v852
    %v1212 = vpack.c.bf16 %v921, %v921
    %v1213 = vpack.c.bf16 %v923, %v923
    %v1214 = vpack.c.bf16 %v992, %v992
    %v1215 = vpack.c.bf16 %v994, %v994
    %v1216 = vpack.c.bf16 %v1063, %v1063
    %v1217 = vpack.c.bf16 %v1065, %v1065
    %v1218 = vpack.c.bf16 %v1134, %v1134
    %v1219 = vpack.c.bf16 %v1136, %v1136
    %v1220 = vpack.c.bf16 %v1205, %v1205
    %v1221 = vld [vmem:[%s6] sm:$0xff]
    %v1222 = vld [vmem:[%s6 + $0x8] sm:$0xff]
    %v1223 = vld [vmem:[%s6 + $0x10] sm:$0xff]
    %v1224 = vld [vmem:[%s6 + $0x18] sm:$0xff]
    %v1225 = vld [vmem:[%s6 + $0x20] sm:$0xff]
    %v1226 = vld [vmem:[%s6 + $0x28] sm:$0xff]
    %v1227 = vld [vmem:[%s6 + $0x30] sm:$0xff]
    %v1228 = vld [vmem:[%s6 + $0x38] sm:$0xff]
    %v1229 = vld [vmem:[%s6 + $0x40] sm:$0xff]
    %v1230 = vld [vmem:[%s6 + $0x48] sm:$0xff]
    %v1231 = vld [vmem:[%s6 + $0x50] sm:$0xff]
    %v1232 = vld [vmem:[%s6 + $0x58] sm:$0xff]
    %v1233 = vld [vmem:[%s6 + $0x60] sm:$0xff]
    %v1234 = vld [vmem:[%s6 + $0x68] sm:$0xff]
    %v1235 = vld [vmem:[%s6 + $0x70] sm:$0xff]
    %v1236 = vld [vmem:[%s6 + $0x78] sm:$0xff]
    %v1237 = vld [vmem:[%s6 + $0x80] sm:$0xff]
    %v1238 = vld [vmem:[%s6 + $0x88] sm:$0xff]
    %v1239 = vld [vmem:[%s6 + $0x90] sm:$0xff]
    %v1240 = vld [vmem:[%s6 + $0x98] sm:$0xff]
    %v1241 = vld [vmem:[%s6 + $0xa0] sm:$0xff]
    %v1242 = vld [vmem:[%s6 + $0xa8] sm:$0xff]
    %v1243 = vld [vmem:[%s6 + $0xb0] sm:$0xff]
    %v1244 = vld [vmem:[%s6 + $0xb8] sm:$0xff]
    %v1245 = vld [vmem:[%s6 + $0xc0] sm:$0xff]
    %v1246 = vld [vmem:[%s6 + $0xc8] sm:$0xff]
    %v1247 = vld [vmem:[%s6 + $0xd0] sm:$0xff]
    %v1248 = vld [vmem:[%s6 + $0xd8] sm:$0xff]
    %v1249 = vld [vmem:[%s6 + $0xe0] sm:$0xff]
    %v1250 = vld [vmem:[%s6 + $0xe8] sm:$0xff]
    %v1251 = vld [vmem:[%s6 + $0xf0] sm:$0xff]
    %v1252 = vld [vmem:[%s6 + $0xf8] sm:$0xff]
    %v1253 = vld [vmem:[%s6 + $0x100] sm:$0xff]
    %v1254 = vld [vmem:[%s6 + $0x108] sm:$0xff]
    %v1255 = vld [vmem:[%s6 + $0x110] sm:$0xff]
    %v1256 = vld [vmem:[%s6 + $0x118] sm:$0xff]
    %v1257 = vld [vmem:[%s6 + $0x120] sm:$0xff]
    %v1258 = vld [vmem:[%s6 + $0x128] sm:$0xff]
    %v1259 = vld [vmem:[%s6 + $0x130] sm:$0xff]
    %v1260 = vld [vmem:[%s6 + $0x138] sm:$0xff]
    %v1261 = vld [vmem:[%s6 + $0x140] sm:$0xff]
    %v1262 = vld [vmem:[%s6 + $0x148] sm:$0xff]
    %v1263 = vld [vmem:[%s6 + $0x150] sm:$0xff]
    %v1264 = vld [vmem:[%s6 + $0x158] sm:$0xff]
    %v1265 = vld [vmem:[%s6 + $0x160] sm:$0xff]
    %v1266 = vld [vmem:[%s6 + $0x168] sm:$0xff]
    %v1267 = vld [vmem:[%s6 + $0x170] sm:$0xff]
    %v1268 = vld [vmem:[%s6 + $0x178] sm:$0xff]
    %v1269 = vld [vmem:[%s6 + $0x180] sm:$0xff]
    %v1270 = vld [vmem:[%s6 + $0x188] sm:$0xff]
    %v1271 = vld [vmem:[%s6 + $0x190] sm:$0xff]
    %v1272 = vld [vmem:[%s6 + $0x198] sm:$0xff]
    %v1273 = vld [vmem:[%s6 + $0x1a0] sm:$0xff]
    %v1274 = vld [vmem:[%s6 + $0x1a8] sm:$0xff]
    %v1275 = vld [vmem:[%s6 + $0x1b0] sm:$0xff]
    %v1276 = vld [vmem:[%s6 + $0x1b8] sm:$0xff]
    %v1277 = vld [vmem:[%s6 + $0x1c0] sm:$0xff]
    %v1278 = vld [vmem:[%s6 + $0x1c8] sm:$0xff]
    %v1279 = vld [vmem:[%s6 + $0x1d0] sm:$0xff]
    %v1280 = vld [vmem:[%s6 + $0x1d8] sm:$0xff]
    %v1281 = vld [vmem:[%s6 + $0x1e0] sm:$0xff]
    %v1282 = vld [vmem:[%s6 + $0x1e8] sm:$0xff]
    %v1283 = vld [vmem:[%s6 + $0x1f0] sm:$0xff]
    %v1284 = vld [vmem:[%s6 + $0x1f8] sm:$0xff]
    %v1285 = vld [vmem:[%s6 + $0x200] sm:$0xff]
    %v1286 = vld [vmem:[%s6 + $0x208] sm:$0xff]
    %v1287 = vld [vmem:[%s6 + $0x210] sm:$0xff]
    %v1288 = vld [vmem:[%s6 + $0x218] sm:$0xff]
    %v1289 = vld [vmem:[%s6 + $0x220] sm:$0xff]
    %v1290 = vld [vmem:[%s6 + $0x228] sm:$0xff]
    %v1291 = vld [vmem:[%s6 + $0x230] sm:$0xff]
    %v1292 = vld [vmem:[%s6 + $0x238] sm:$0xff]
    %v1293 = vld [vmem:[%s6 + $0x240] sm:$0xff]
    %v1294 = vld [vmem:[%s6 + $0x248] sm:$0xff]
    %v1295 = vld [vmem:[%s6 + $0x250] sm:$0xff]
    %v1296 = vld [vmem:[%s6 + $0x258] sm:$0xff]
    %v1297 = vld [vmem:[%s6 + $0x260] sm:$0xff]
    %v1298 = vld [vmem:[%s6 + $0x268] sm:$0xff]
    %v1299 = vld [vmem:[%s6 + $0x270] sm:$0xff]
    %v1300 = vld [vmem:[%s6 + $0x278] sm:$0xff]
    %v1301 = vld [vmem:[%s6 + $0x280] sm:$0xff]
    %v1302 = vld [vmem:[%s6 + $0x288] sm:$0xff]
    %v1303 = vld [vmem:[%s6 + $0x290] sm:$0xff]
    %v1304 = vld [vmem:[%s6 + $0x298] sm:$0xff]
    %v1305 = vld [vmem:[%s6 + $0x2a0] sm:$0xff]
    %v1306 = vld [vmem:[%s6 + $0x2a8] sm:$0xff]
    %v1307 = vld [vmem:[%s6 + $0x2b0] sm:$0xff]
    %v1308 = vld [vmem:[%s6 + $0x2b8] sm:$0xff]
    %v1309 = vld [vmem:[%s6 + $0x2c0] sm:$0xff]
    %v1310 = vld [vmem:[%s6 + $0x2c8] sm:$0xff]
    %v1311 = vld [vmem:[%s6 + $0x2d0] sm:$0xff]
    %v1312 = vld [vmem:[%s6 + $0x2d8] sm:$0xff]
    %v1313 = vld [vmem:[%s6 + $0x2e0] sm:$0xff]
    %v1314 = vld [vmem:[%s6 + $0x2e8] sm:$0xff]
    %v1315 = vld [vmem:[%s6 + $0x2f0] sm:$0xff]
    %v1316 = vld [vmem:[%s6 + $0x2f8] sm:$0xff]
    %v1317 = vld [vmem:[%s6 + $0x300] sm:$0xff]
    %v1318 = vld [vmem:[%s6 + $0x308] sm:$0xff]
    %v1319 = vld [vmem:[%s6 + $0x310] sm:$0xff]
    %v1320 = vld [vmem:[%s6 + $0x318] sm:$0xff]
    %v1321 = vld [vmem:[%s6 + $0x320] sm:$0xff]
    %v1322 = vld [vmem:[%s6 + $0x328] sm:$0xff]
    %v1323 = vld [vmem:[%s6 + $0x330] sm:$0xff]
    %v1324 = vld [vmem:[%s6 + $0x338] sm:$0xff]
    %v1325 = vld [vmem:[%s6 + $0x340] sm:$0xff]
    %v1326 = vld [vmem:[%s6 + $0x348] sm:$0xff]
    %v1327 = vld [vmem:[%s6 + $0x350] sm:$0xff]
    %v1328 = vld [vmem:[%s6 + $0x358] sm:$0xff]
    %v1329 = vld [vmem:[%s6 + $0x360] sm:$0xff]
    %v1330 = vld [vmem:[%s6 + $0x368] sm:$0xff]
    %v1331 = vld [vmem:[%s6 + $0x370] sm:$0xff]
    %v1332 = vld [vmem:[%s6 + $0x378] sm:$0xff]
    %v1333 = vld [vmem:[%s6 + $0x380] sm:$0xff]
    %v1334 = vld [vmem:[%s6 + $0x388] sm:$0xff]
    %v1335 = vld [vmem:[%s6 + $0x390] sm:$0xff]
    %v1336 = vld [vmem:[%s6 + $0x398] sm:$0xff]
    %v1337 = vld [vmem:[%s6 + $0x3a0] sm:$0xff]
    %v1338 = vld [vmem:[%s6 + $0x3a8] sm:$0xff]
    %v1339 = vld [vmem:[%s6 + $0x3b0] sm:$0xff]
    %v1340 = vld [vmem:[%s6 + $0x3b8] sm:$0xff]
    %v1341 = vld [vmem:[%s6 + $0x3c0] sm:$0xff]
    %v1342 = vld [vmem:[%s6 + $0x3c8] sm:$0xff]
    %v1343 = vld [vmem:[%s6 + $0x3d0] sm:$0xff]
    %v1344 = vld [vmem:[%s6 + $0x3d8] sm:$0xff]
    %v1345 = vld [vmem:[%s6 + $0x3e0] sm:$0xff]
    %v1346 = vld [vmem:[%s6 + $0x3e8] sm:$0xff]
    %v1347 = vld [vmem:[%s6 + $0x3f0] sm:$0xff]
    %v1348 = vld [vmem:[%s6 + $0x3f8] sm:$0xff]
    %v1349 = vld [vmem:[%s6 + $0x400] sm:$0xff]
    %v1350 = vld [vmem:[%s6 + $0x408] sm:$0xff]
    %v1351 = vld [vmem:[%s6 + $0x410] sm:$0xff]
    %v1352 = vld [vmem:[%s6 + $0x418] sm:$0xff]
    %v1353 = vld [vmem:[%s6 + $0x420] sm:$0xff]
    %v1354 = vld [vmem:[%s6 + $0x428] sm:$0xff]
    %v1355 = vld [vmem:[%s6 + $0x430] sm:$0xff]
    %v1356 = vld [vmem:[%s6 + $0x438] sm:$0xff]
    %v1357 = vld [vmem:[%s6 + $0x440] sm:$0xff]
    %v1358 = vld [vmem:[%s6 + $0x448] sm:$0xff]
    %v1359 = vld [vmem:[%s6 + $0x450] sm:$0xff]
    %v1360 = vld [vmem:[%s6 + $0x458] sm:$0xff]
    %v1361 = vld [vmem:[%s6 + $0x460] sm:$0xff]
    %v1362 = vld [vmem:[%s6 + $0x468] sm:$0xff]
    %v1363 = vld [vmem:[%s6 + $0x470] sm:$0xff]
    %v1364 = vld [vmem:[%s6 + $0x478] sm:$0xff]
    %v1365 = vld [vmem:[%s6 + $0x480] sm:$0xff]
    %v1366 = vld [vmem:[%s6 + $0x488] sm:$0xff]
    %v1367 = vld [vmem:[%s6 + $0x490] sm:$0xff]
    %v1368 = vld [vmem:[%s6 + $0x498] sm:$0xff]
    %v1369 = vld [vmem:[%s6 + $0x4a0] sm:$0xff]
    %v1370 = vld [vmem:[%s6 + $0x4a8] sm:$0xff]
    %v1371 = vld [vmem:[%s6 + $0x4b0] sm:$0xff]
    %v1372 = vld [vmem:[%s6 + $0x4b8] sm:$0xff]
    %v1373 = vld [vmem:[%s6 + $0x4c0] sm:$0xff]
    %v1374 = vld [vmem:[%s6 + $0x4c8] sm:$0xff]
    %v1375 = vld [vmem:[%s6 + $0x4d0] sm:$0xff]
    %v1376 = vld [vmem:[%s6 + $0x4d8] sm:$0xff]
    %v1377 = vld [vmem:[%s6 + $0x4e0] sm:$0xff]
    %v1378 = vld [vmem:[%s6 + $0x4e8] sm:$0xff]
    %v1379 = vld [vmem:[%s6 + $0x4f0] sm:$0xff]
    %v1380 = vld [vmem:[%s6 + $0x4f8] sm:$0xff]
    %v1381 = vld [vmem:[%s6 + $0x500] sm:$0xff]
    %v1382 = vld [vmem:[%s6 + $0x508] sm:$0xff]
    %v1383 = vld [vmem:[%s6 + $0x510] sm:$0xff]
    %v1384 = vld [vmem:[%s6 + $0x518] sm:$0xff]
    %v1385 = vld [vmem:[%s6 + $0x520] sm:$0xff]
    %v1386 = vld [vmem:[%s6 + $0x528] sm:$0xff]
    %v1387 = vld [vmem:[%s6 + $0x530] sm:$0xff]
    %v1388 = vld [vmem:[%s6 + $0x538] sm:$0xff]
    %v1389 = vld [vmem:[%s6 + $0x540] sm:$0xff]
    %v1390 = vld [vmem:[%s6 + $0x548] sm:$0xff]
    %v1391 = vld [vmem:[%s6 + $0x550] sm:$0xff]
    %v1392 = vld [vmem:[%s6 + $0x558] sm:$0xff]
    %v1393 = vld [vmem:[%s6 + $0x560] sm:$0xff]
    %v1394 = vld [vmem:[%s6 + $0x568] sm:$0xff]
    %v1395 = vld [vmem:[%s6 + $0x570] sm:$0xff]
    %v1396 = vld [vmem:[%s6 + $0x578] sm:$0xff]
    %v1397 = vld [vmem:[%s6 + $0x580] sm:$0xff]
    %v1398 = vld [vmem:[%s6 + $0x588] sm:$0xff]
    %v1399 = vld [vmem:[%s6 + $0x590] sm:$0xff]
    %v1400 = vld [vmem:[%s6 + $0x598] sm:$0xff]
    %v1401 = vld [vmem:[%s6 + $0x5a0] sm:$0xff]
    %v1402 = vld [vmem:[%s6 + $0x5a8] sm:$0xff]
    %v1403 = vld [vmem:[%s6 + $0x5b0] sm:$0xff]
    %v1404 = vld [vmem:[%s6 + $0x5b8] sm:$0xff]
    %v1405 = vld [vmem:[%s6 + $0x5c0] sm:$0xff]
    %v1406 = vld [vmem:[%s6 + $0x5c8] sm:$0xff]
    %v1407 = vld [vmem:[%s6 + $0x5d0] sm:$0xff]
    %v1408 = vld [vmem:[%s6 + $0x5d8] sm:$0xff]
    %v1409 = vld [vmem:[%s6 + $0x5e0] sm:$0xff]
    %v1410 = vld [vmem:[%s6 + $0x5e8] sm:$0xff]
    %v1411 = vld [vmem:[%s6 + $0x5f0] sm:$0xff]
    %v1412 = vld [vmem:[%s6 + $0x5f8] sm:$0xff]
    %v1413 = vld [vmem:[%s6 + $0x600] sm:$0xff]
    %v1414 = vld [vmem:[%s6 + $0x608] sm:$0xff]
    %v1415 = vld [vmem:[%s6 + $0x610] sm:$0xff]
    %v1416 = vld [vmem:[%s6 + $0x618] sm:$0xff]
    %v1417 = vld [vmem:[%s6 + $0x620] sm:$0xff]
    %v1418 = vld [vmem:[%s6 + $0x628] sm:$0xff]
    %v1419 = vld [vmem:[%s6 + $0x630] sm:$0xff]
    %v1420 = vld [vmem:[%s6 + $0x638] sm:$0xff]
    %v1421 = vld [vmem:[%s6 + $0x640] sm:$0xff]
    %v1422 = vld [vmem:[%s6 + $0x648] sm:$0xff]
    %v1423 = vld [vmem:[%s6 + $0x650] sm:$0xff]
    %v1424 = vld [vmem:[%s6 + $0x658] sm:$0xff]
    %v1425 = vld [vmem:[%s6 + $0x660] sm:$0xff]
    %v1426 = vld [vmem:[%s6 + $0x668] sm:$0xff]
    %v1427 = vld [vmem:[%s6 + $0x670] sm:$0xff]
    %v1428 = vld [vmem:[%s6 + $0x678] sm:$0xff]
    %v1429 = vld [vmem:[%s7] sm:$0x3]
    %v1431 = vlaneseq
    %v1432 = vshrl.u32 %v1431, 7
    %v1433 = vsub.s32 0, %v1432
    %v1434 = vrot.slane %v1429, %v1433
    %v1435 = vlaneseq
    %v1436 = vshrl.u32 %v1435, 7
    %v1437 = vsub.s32 1, %v1436
    %v1438 = vrot.slane %v1429, %v1437
    %v1649 = vunpack.c.l.b16 %v1221
    %v1650 = vunpack.c.h.b16 %v1221
    %v1651 = vunpack.c.l.b16 %v1222
    %v1652 = vunpack.c.h.b16 %v1222
    %v1653 = vunpack.c.l.b16 %v1223
    %v1654 = vunpack.c.h.b16 %v1223
    %v1655 = vunpack.c.l.b16 %v1224
    %v1656 = vunpack.c.h.b16 %v1224
    %v1657 = vunpack.c.l.b16 %v1225
    %v1658 = vunpack.c.h.b16 %v1225
    %v1659 = vunpack.c.l.b16 %v1226
    %v1660 = vunpack.c.h.b16 %v1226
    %v1661 = vunpack.c.l.b16 %v1227
    %v1662 = vunpack.c.h.b16 %v1227
    %v1663 = vunpack.c.l.b16 %v1228
    %v1664 = vunpack.c.h.b16 %v1228
    %v1665 = vunpack.c.l.b16 %v1229
    %v1666 = vunpack.c.h.b16 %v1229
    %v1667 = vunpack.c.l.b16 %v1230
    %v1668 = vunpack.c.h.b16 %v1230
    %v1669 = vunpack.c.l.b16 %v1231
    %v1670 = vunpack.c.h.b16 %v1231
    %v1671 = vunpack.c.l.b16 %v1232
    %v1672 = vunpack.c.h.b16 %v1232
    %v1673 = vunpack.c.l.b16 %v1233
    %v1674 = vunpack.c.h.b16 %v1233
    %v1675 = vunpack.c.l.b16 %v1234
    %v1676 = vunpack.c.h.b16 %v1234
    %v1677 = vunpack.c.l.b16 %v1235
    %v1678 = vunpack.c.h.b16 %v1235
    %v1679 = vunpack.c.l.b16 %v1236
    %v1680 = vunpack.c.h.b16 %v1236
    %v1681 = vunpack.c.l.b16 %v1237
    %v1682 = vunpack.c.h.b16 %v1237
    %v1683 = vunpack.c.l.b16 %v1238
    %v1684 = vunpack.c.h.b16 %v1238
    %v1685 = vunpack.c.l.b16 %v1239
    %v1686 = vunpack.c.h.b16 %v1239
    %v1687 = vunpack.c.l.b16 %v1240
    %v1688 = vunpack.c.h.b16 %v1240
    %v1689 = vunpack.c.l.b16 %v1241
    %v1690 = vunpack.c.h.b16 %v1241
    %v1691 = vunpack.c.l.b16 %v1242
    %v1692 = vunpack.c.h.b16 %v1242
    %v1693 = vunpack.c.l.b16 %v1243
    %v1694 = vunpack.c.h.b16 %v1243
    %v1695 = vunpack.c.l.b16 %v1244
    %v1696 = vunpack.c.h.b16 %v1244
    %v1697 = vunpack.c.l.b16 %v1245
    %v1698 = vunpack.c.h.b16 %v1245
    %v1699 = vunpack.c.l.b16 %v1246
    %v1700 = vunpack.c.h.b16 %v1246
    %v1701 = vunpack.c.l.b16 %v1247
    %v1702 = vunpack.c.h.b16 %v1247
    %v1703 = vunpack.c.l.b16 %v1248
    %v1704 = vunpack.c.h.b16 %v1248
    %v1705 = vunpack.c.l.b16 %v1249
    %v1706 = vunpack.c.h.b16 %v1249
    %v1707 = vunpack.c.l.b16 %v1250
    %v1708 = vunpack.c.h.b16 %v1250
    %v1709 = vunpack.c.l.b16 %v1251
    %v1710 = vunpack.c.h.b16 %v1251
    %v1711 = vunpack.c.l.b16 %v1252
    %v1712 = vunpack.c.h.b16 %v1252
    %v1713 = vunpack.c.l.b16 %v1253
    %v1714 = vunpack.c.h.b16 %v1253
    %v1715 = vunpack.c.l.b16 %v1254
    %v1716 = vunpack.c.h.b16 %v1254
    %v1717 = vunpack.c.l.b16 %v1255
    %v1718 = vunpack.c.h.b16 %v1255
    %v1719 = vunpack.c.l.b16 %v1256
    %v1720 = vunpack.c.h.b16 %v1256
    %v1721 = vunpack.c.l.b16 %v1257
    %v1722 = vunpack.c.h.b16 %v1257
    %v1723 = vunpack.c.l.b16 %v1258
    %v1724 = vunpack.c.h.b16 %v1258
    %v1725 = vunpack.c.l.b16 %v1259
    %v1726 = vunpack.c.h.b16 %v1259
    %v1727 = vunpack.c.l.b16 %v1260
    %v1728 = vunpack.c.h.b16 %v1260
    %v1729 = vunpack.c.l.b16 %v1261
    %v1730 = vunpack.c.h.b16 %v1261
    %v1731 = vunpack.c.l.b16 %v1262
    %v1732 = vunpack.c.h.b16 %v1262
    %v1733 = vunpack.c.l.b16 %v1263
    %v1734 = vunpack.c.h.b16 %v1263
    %v1735 = vunpack.c.l.b16 %v1264
    %v1736 = vunpack.c.h.b16 %v1264
    %v1737 = vunpack.c.l.b16 %v1265
    %v1738 = vunpack.c.h.b16 %v1265
    %v1739 = vunpack.c.l.b16 %v1266
    %v1740 = vunpack.c.h.b16 %v1266
    %v1741 = vunpack.c.l.b16 %v1267
    %v1742 = vunpack.c.h.b16 %v1267
    %v1743 = vunpack.c.l.b16 %v1268
    %v1744 = vunpack.c.h.b16 %v1268
    %v1745 = vunpack.c.l.b16 %v1269
    %v1746 = vunpack.c.h.b16 %v1269
    %v1747 = vunpack.c.l.b16 %v1270
    %v1748 = vunpack.c.h.b16 %v1270
    %v1749 = vunpack.c.l.b16 %v1271
    %v1750 = vunpack.c.h.b16 %v1271
    %v1751 = vunpack.c.l.b16 %v1272
    %v1752 = vunpack.c.h.b16 %v1272
    %v1753 = vunpack.c.l.b16 %v1273
    %v1754 = vunpack.c.h.b16 %v1273
    %v1755 = vunpack.c.l.b16 %v1274
    %v1756 = vunpack.c.h.b16 %v1274
    %v1757 = vunpack.c.l.b16 %v1275
    %v1758 = vunpack.c.h.b16 %v1275
    %v1759 = vunpack.c.l.b16 %v1276
    %v1760 = vunpack.c.h.b16 %v1276
    %v1761 = vunpack.c.l.b16 %v1277
    %v1762 = vunpack.c.h.b16 %v1277
    %v1763 = vunpack.c.l.b16 %v1278
    %v1764 = vunpack.c.h.b16 %v1278
    %v1765 = vunpack.c.l.b16 %v1279
    %v1766 = vunpack.c.h.b16 %v1279
    %v1767 = vunpack.c.l.b16 %v1280
    %v1768 = vunpack.c.h.b16 %v1280
    %v1769 = vunpack.c.l.b16 %v1281
    %v1770 = vunpack.c.h.b16 %v1281
    %v1771 = vunpack.c.l.b16 %v1282
    %v1772 = vunpack.c.h.b16 %v1282
    %v1773 = vunpack.c.l.b16 %v1283
    %v1774 = vunpack.c.h.b16 %v1283
    %v1775 = vunpack.c.l.b16 %v1284
    %v1776 = vunpack.c.h.b16 %v1284
    %v1777 = vunpack.c.l.b16 %v1285
    %v1778 = vunpack.c.h.b16 %v1285
    %v1779 = vunpack.c.l.b16 %v1286
    %v1780 = vunpack.c.h.b16 %v1286
    %v1781 = vunpack.c.l.b16 %v1287
    %v1782 = vunpack.c.h.b16 %v1287
    %v1783 = vunpack.c.l.b16 %v1288
    %v1784 = vunpack.c.h.b16 %v1288
    %v1785 = vunpack.c.l.b16 %v1289
    %v1786 = vunpack.c.h.b16 %v1289
    %v1787 = vunpack.c.l.b16 %v1290
    %v1788 = vunpack.c.h.b16 %v1290
    %v1789 = vunpack.c.l.b16 %v1291
    %v1790 = vunpack.c.h.b16 %v1291
    %v1791 = vunpack.c.l.b16 %v1292
    %v1792 = vunpack.c.h.b16 %v1292
    %v1793 = vunpack.c.l.b16 %v1293
    %v1794 = vunpack.c.h.b16 %v1293
    %v1795 = vunpack.c.l.b16 %v1294
    %v1796 = vunpack.c.h.b16 %v1294
    %v1797 = vunpack.c.l.b16 %v1295
    %v1798 = vunpack.c.h.b16 %v1295
    %v1799 = vunpack.c.l.b16 %v1296
    %v1800 = vunpack.c.h.b16 %v1296
    %v1801 = vunpack.c.l.b16 %v1297
    %v1802 = vunpack.c.h.b16 %v1297
    %v1803 = vunpack.c.l.b16 %v1298
    %v1804 = vunpack.c.h.b16 %v1298
    %v1805 = vunpack.c.l.b16 %v1299
    %v1806 = vunpack.c.h.b16 %v1299
    %v1807 = vunpack.c.l.b16 %v1300
    %v1808 = vunpack.c.h.b16 %v1300
    %v1809 = vunpack.c.l.b16 %v1301
    %v1810 = vunpack.c.h.b16 %v1301
    %v1811 = vunpack.c.l.b16 %v1302
    %v1812 = vunpack.c.h.b16 %v1302
    %v1813 = vunpack.c.l.b16 %v1303
    %v1814 = vunpack.c.h.b16 %v1303
    %v1815 = vunpack.c.l.b16 %v1304
    %v1816 = vunpack.c.h.b16 %v1304
    %v1817 = vunpack.c.l.b16 %v1305
    %v1818 = vunpack.c.h.b16 %v1305
    %v1819 = vunpack.c.l.b16 %v1306
    %v1820 = vunpack.c.h.b16 %v1306
    %v1821 = vunpack.c.l.b16 %v1307
    %v1822 = vunpack.c.h.b16 %v1307
    %v1823 = vunpack.c.l.b16 %v1308
    %v1824 = vunpack.c.h.b16 %v1308
    %v1825 = vunpack.c.l.b16 %v1309
    %v1826 = vunpack.c.h.b16 %v1309
    %v1827 = vunpack.c.l.b16 %v1310
    %v1828 = vunpack.c.h.b16 %v1310
    %v1829 = vunpack.c.l.b16 %v1311
    %v1830 = vunpack.c.h.b16 %v1311
    %v1831 = vunpack.c.l.b16 %v1312
    %v1832 = vunpack.c.h.b16 %v1312
    %v1833 = vunpack.c.l.b16 %v1313
    %v1834 = vunpack.c.h.b16 %v1313
    %v1835 = vunpack.c.l.b16 %v1314
    %v1836 = vunpack.c.h.b16 %v1314
    %v1837 = vunpack.c.l.b16 %v1315
    %v1838 = vunpack.c.h.b16 %v1315
    %v1839 = vunpack.c.l.b16 %v1316
    %v1840 = vunpack.c.h.b16 %v1316
    %v1841 = vunpack.c.l.b16 %v1317
    %v1842 = vunpack.c.h.b16 %v1317
    %v1843 = vunpack.c.l.b16 %v1318
    %v1844 = vunpack.c.h.b16 %v1318
    %v1845 = vunpack.c.l.b16 %v1319
    %v1846 = vunpack.c.h.b16 %v1319
    %v1847 = vunpack.c.l.b16 %v1320
    %v1848 = vunpack.c.h.b16 %v1320
    %v1849 = vunpack.c.l.b16 %v1321
    %v1850 = vunpack.c.h.b16 %v1321
    %v1851 = vunpack.c.l.b16 %v1322
    %v1852 = vunpack.c.h.b16 %v1322
    %v1853 = vunpack.c.l.b16 %v1323
    %v1854 = vunpack.c.h.b16 %v1323
    %v1855 = vunpack.c.l.b16 %v1324
    %v1856 = vunpack.c.h.b16 %v1324
    %v1857 = vunpack.c.l.b16 %v1325
    %v1858 = vunpack.c.h.b16 %v1325
    %v1859 = vunpack.c.l.b16 %v1326
    %v1860 = vunpack.c.h.b16 %v1326
    %v1861 = vunpack.c.l.b16 %v1327
    %v1862 = vunpack.c.h.b16 %v1327
    %v1863 = vunpack.c.l.b16 %v1328
    %v1864 = vunpack.c.h.b16 %v1328
    %v1865 = vunpack.c.l.b16 %v1329
    %v1866 = vunpack.c.h.b16 %v1329
    %v1867 = vunpack.c.l.b16 %v1330
    %v1868 = vunpack.c.h.b16 %v1330
    %v1869 = vunpack.c.l.b16 %v1331
    %v1870 = vunpack.c.h.b16 %v1331
    %v1871 = vunpack.c.l.b16 %v1332
    %v1872 = vunpack.c.h.b16 %v1332
    %v1873 = vunpack.c.l.b16 %v1333
    %v1874 = vunpack.c.h.b16 %v1333
    %v1875 = vunpack.c.l.b16 %v1334
    %v1876 = vunpack.c.h.b16 %v1334
    %v1877 = vunpack.c.l.b16 %v1335
    %v1878 = vunpack.c.h.b16 %v1335
    %v1879 = vunpack.c.l.b16 %v1336
    %v1880 = vunpack.c.h.b16 %v1336
    %v1881 = vunpack.c.l.b16 %v1337
    %v1882 = vunpack.c.h.b16 %v1337
    %v1883 = vunpack.c.l.b16 %v1338
    %v1884 = vunpack.c.h.b16 %v1338
    %v1885 = vunpack.c.l.b16 %v1339
    %v1886 = vunpack.c.h.b16 %v1339
    %v1887 = vunpack.c.l.b16 %v1340
    %v1888 = vunpack.c.h.b16 %v1340
    %v1889 = vunpack.c.l.b16 %v1341
    %v1890 = vunpack.c.h.b16 %v1341
    %v1891 = vunpack.c.l.b16 %v1342
    %v1892 = vunpack.c.h.b16 %v1342
    %v1893 = vunpack.c.l.b16 %v1343
    %v1894 = vunpack.c.h.b16 %v1343
    %v1895 = vunpack.c.l.b16 %v1344
    %v1896 = vunpack.c.h.b16 %v1344
    %v1897 = vunpack.c.l.b16 %v1345
    %v1898 = vunpack.c.h.b16 %v1345
    %v1899 = vunpack.c.l.b16 %v1346
    %v1900 = vunpack.c.h.b16 %v1346
    %v1901 = vunpack.c.l.b16 %v1347
    %v1902 = vunpack.c.h.b16 %v1347
    %v1903 = vunpack.c.l.b16 %v1348
    %v1904 = vunpack.c.h.b16 %v1348
    %v1905 = vunpack.c.l.b16 %v1349
    %v1906 = vunpack.c.h.b16 %v1349
    %v1907 = vunpack.c.l.b16 %v1350
    %v1908 = vunpack.c.h.b16 %v1350
    %v1909 = vunpack.c.l.b16 %v1351
    %v1910 = vunpack.c.h.b16 %v1351
    %v1911 = vunpack.c.l.b16 %v1352
    %v1912 = vunpack.c.h.b16 %v1352
    %v1913 = vunpack.c.l.b16 %v1353
    %v1914 = vunpack.c.h.b16 %v1353
    %v1915 = vunpack.c.l.b16 %v1354
    %v1916 = vunpack.c.h.b16 %v1354
    %v1917 = vunpack.c.l.b16 %v1355
    %v1918 = vunpack.c.h.b16 %v1355
    %v1919 = vunpack.c.l.b16 %v1356
    %v1920 = vunpack.c.h.b16 %v1356
    %v1921 = vunpack.c.l.b16 %v1357
    %v1922 = vunpack.c.h.b16 %v1357
    %v1923 = vunpack.c.l.b16 %v1358
    %v1924 = vunpack.c.h.b16 %v1358
    %v1925 = vunpack.c.l.b16 %v1359
    %v1926 = vunpack.c.h.b16 %v1359
    %v1927 = vunpack.c.l.b16 %v1360
    %v1928 = vunpack.c.h.b16 %v1360
    %v1929 = vunpack.c.l.b16 %v1361
    %v1930 = vunpack.c.h.b16 %v1361
    %v1931 = vunpack.c.l.b16 %v1362
    %v1932 = vunpack.c.h.b16 %v1362
    %v1933 = vunpack.c.l.b16 %v1363
    %v1934 = vunpack.c.h.b16 %v1363
    %v1935 = vunpack.c.l.b16 %v1364
    %v1936 = vunpack.c.h.b16 %v1364
    %v1937 = vunpack.c.l.b16 %v1365
    %v1938 = vunpack.c.h.b16 %v1365
    %v1939 = vunpack.c.l.b16 %v1366
    %v1940 = vunpack.c.h.b16 %v1366
    %v1941 = vunpack.c.l.b16 %v1367
    %v1942 = vunpack.c.h.b16 %v1367
    %v1943 = vunpack.c.l.b16 %v1368
    %v1944 = vunpack.c.h.b16 %v1368
    %v1945 = vunpack.c.l.b16 %v1369
    %v1946 = vunpack.c.h.b16 %v1369
    %v1947 = vunpack.c.l.b16 %v1370
    %v1948 = vunpack.c.h.b16 %v1370
    %v1949 = vunpack.c.l.b16 %v1371
    %v1950 = vunpack.c.h.b16 %v1371
    %v1951 = vunpack.c.l.b16 %v1372
    %v1952 = vunpack.c.h.b16 %v1372
    %v1953 = vunpack.c.l.b16 %v1373
    %v1954 = vunpack.c.h.b16 %v1373
    %v1955 = vunpack.c.l.b16 %v1374
    %v1956 = vunpack.c.h.b16 %v1374
    %v1957 = vunpack.c.l.b16 %v1375
    %v1958 = vunpack.c.h.b16 %v1375
    %v1959 = vunpack.c.l.b16 %v1376
    %v1960 = vunpack.c.h.b16 %v1376
    %v1961 = vunpack.c.l.b16 %v1377
    %v1962 = vunpack.c.h.b16 %v1377
    %v1963 = vunpack.c.l.b16 %v1378
    %v1964 = vunpack.c.h.b16 %v1378
    %v1965 = vunpack.c.l.b16 %v1379
    %v1966 = vunpack.c.h.b16 %v1379
    %v1967 = vunpack.c.l.b16 %v1380
    %v1968 = vunpack.c.h.b16 %v1380
    %v1969 = vunpack.c.l.b16 %v1381
    %v1970 = vunpack.c.h.b16 %v1381
    %v1971 = vunpack.c.l.b16 %v1382
    %v1972 = vunpack.c.h.b16 %v1382
    %v1973 = vunpack.c.l.b16 %v1383
    %v1974 = vunpack.c.h.b16 %v1383
    %v1975 = vunpack.c.l.b16 %v1384
    %v1976 = vunpack.c.h.b16 %v1384
    %v1977 = vunpack.c.l.b16 %v1385
    %v1978 = vunpack.c.h.b16 %v1385
    %v1979 = vunpack.c.l.b16 %v1386
    %v1980 = vunpack.c.h.b16 %v1386
    %v1981 = vunpack.c.l.b16 %v1387
    %v1982 = vunpack.c.h.b16 %v1387
    %v1983 = vunpack.c.l.b16 %v1388
    %v1984 = vunpack.c.h.b16 %v1388
    %v1985 = vunpack.c.l.b16 %v1389
    %v1986 = vunpack.c.h.b16 %v1389
    %v1987 = vunpack.c.l.b16 %v1390
    %v1988 = vunpack.c.h.b16 %v1390
    %v1989 = vunpack.c.l.b16 %v1391
    %v1990 = vunpack.c.h.b16 %v1391
    %v1991 = vunpack.c.l.b16 %v1392
    %v1992 = vunpack.c.h.b16 %v1392
    %v1993 = vunpack.c.l.b16 %v1393
    %v1994 = vunpack.c.h.b16 %v1393
    %v1995 = vunpack.c.l.b16 %v1394
    %v1996 = vunpack.c.h.b16 %v1394
    %v1997 = vunpack.c.l.b16 %v1395
    %v1998 = vunpack.c.h.b16 %v1395
    %v1999 = vunpack.c.l.b16 %v1396
    %v2000 = vunpack.c.h.b16 %v1396
    %v2001 = vunpack.c.l.b16 %v1397
    %v2002 = vunpack.c.h.b16 %v1397
    %v2003 = vunpack.c.l.b16 %v1398
    %v2004 = vunpack.c.h.b16 %v1398
    %v2005 = vunpack.c.l.b16 %v1399
    %v2006 = vunpack.c.h.b16 %v1399
    %v2007 = vunpack.c.l.b16 %v1400
    %v2008 = vunpack.c.h.b16 %v1400
    %v2009 = vunpack.c.l.b16 %v1401
    %v2010 = vunpack.c.h.b16 %v1401
    %v2011 = vunpack.c.l.b16 %v1402
    %v2012 = vunpack.c.h.b16 %v1402
    %v2013 = vunpack.c.l.b16 %v1403
    %v2014 = vunpack.c.h.b16 %v1403
    %v2015 = vunpack.c.l.b16 %v1404
    %v2016 = vunpack.c.h.b16 %v1404
    %v2017 = vunpack.c.l.b16 %v1405
    %v2018 = vunpack.c.h.b16 %v1405
    %v2019 = vunpack.c.l.b16 %v1406
    %v2020 = vunpack.c.h.b16 %v1406
    %v2021 = vunpack.c.l.b16 %v1407
    %v2022 = vunpack.c.h.b16 %v1407
    %v2023 = vunpack.c.l.b16 %v1408
    %v2024 = vunpack.c.h.b16 %v1408
    %v2025 = vunpack.c.l.b16 %v1409
    %v2026 = vunpack.c.h.b16 %v1409
    %v2027 = vunpack.c.l.b16 %v1410
    %v2028 = vunpack.c.h.b16 %v1410
    %v2029 = vunpack.c.l.b16 %v1411
    %v2030 = vunpack.c.h.b16 %v1411
    %v2031 = vunpack.c.l.b16 %v1412
    %v2032 = vunpack.c.h.b16 %v1412
    %v2033 = vunpack.c.l.b16 %v1413
    %v2034 = vunpack.c.h.b16 %v1413
    %v2035 = vunpack.c.l.b16 %v1414
    %v2036 = vunpack.c.h.b16 %v1414
    %v2037 = vunpack.c.l.b16 %v1415
    %v2038 = vunpack.c.h.b16 %v1415
    %v2039 = vunpack.c.l.b16 %v1416
    %v2040 = vunpack.c.h.b16 %v1416
    %v2041 = vunpack.c.l.b16 %v1417
    %v2042 = vunpack.c.h.b16 %v1417
    %v2043 = vunpack.c.l.b16 %v1418
    %v2044 = vunpack.c.h.b16 %v1418
    %v2045 = vunpack.c.l.b16 %v1419
    %v2046 = vunpack.c.h.b16 %v1419
    %v2047 = vunpack.c.l.b16 %v1420
    %v2048 = vunpack.c.h.b16 %v1420
    %v2049 = vunpack.c.l.b16 %v1421
    %v2050 = vunpack.c.h.b16 %v1421
    %v2051 = vunpack.c.l.b16 %v1422
    %v2052 = vunpack.c.h.b16 %v1422
    %v2053 = vunpack.c.l.b16 %v1423
    %v2054 = vunpack.c.h.b16 %v1423
    %v2055 = vunpack.c.l.b16 %v1424
    %v2056 = vunpack.c.h.b16 %v1424
    %v2057 = vunpack.c.l.b16 %v1425
    %v2058 = vunpack.c.h.b16 %v1425
    %v2059 = vunpack.c.l.b16 %v1426
    %v2060 = vunpack.c.h.b16 %v1426
    %v2061 = vunpack.c.l.b16 %v1427
    %v2062 = vunpack.c.h.b16 %v1427
    %v2063 = vunpack.c.l.b16 %v1428
    %v2064 = vunpack.c.h.b16 %v1428
    %v2065 = vpack.c.b16 %v1651, %v1649
    %v2066 = vpack.c.b16 %v1652, %v1650
    %v2067 = vpack.c.b16 %v1655, %v1653
    %v2068 = vpack.c.b16 %v1656, %v1654
    %v2069 = vpack.c.b16 %v1659, %v1657
    %v2070 = vpack.c.b16 %v1660, %v1658
    %v2071 = vpack.c.b16 %v1663, %v1661
    %v2072 = vpack.c.b16 %v1664, %v1662
    %v2073 = vpack.c.b16 %v1667, %v1665
    %v2074 = vpack.c.b16 %v1668, %v1666
    %v2075 = vpack.c.b16 %v1671, %v1669
    %v2076 = vpack.c.b16 %v1672, %v1670
    %v2077 = vpack.c.b16 %v1675, %v1673
    %v2078 = vpack.c.b16 %v1676, %v1674
    %v2079 = vpack.c.b16 %v1679, %v1677
    %v2080 = vpack.c.b16 %v1680, %v1678
    %v2081 = vpack.c.b16 %v1683, %v1681
    %v2082 = vpack.c.b16 %v1684, %v1682
    %v2083 = vpack.c.b16 %v1687, %v1685
    %v2084 = vpack.c.b16 %v1688, %v1686
    %v2085 = vpack.c.b16 %v1691, %v1689
    %v2086 = vpack.c.b16 %v1692, %v1690
    %v2087 = vpack.c.b16 %v1695, %v1693
    %v2088 = vpack.c.b16 %v1696, %v1694
    %v2089 = vpack.c.b16 %v1699, %v1697
    %v2090 = vpack.c.b16 %v1700, %v1698
    %v2091 = vpack.c.b16 %v1703, %v1701
    %v2092 = vpack.c.b16 %v1704, %v1702
    %v2093 = vpack.c.b16 %v1707, %v1705
    %v2094 = vpack.c.b16 %v1708, %v1706
    %v2095 = vpack.c.b16 %v1711, %v1709
    %v2096 = vpack.c.b16 %v1712, %v1710
    %v2097 = vpack.c.b16 %v1715, %v1713
    %v2098 = vpack.c.b16 %v1716, %v1714
    %v2099 = vpack.c.b16 %v1719, %v1717
    %v2100 = vpack.c.b16 %v1720, %v1718
    %v2101 = vpack.c.b16 %v1723, %v1721
    %v2102 = vpack.c.b16 %v1724, %v1722
    %v2103 = vpack.c.b16 %v1727, %v1725
    %v2104 = vpack.c.b16 %v1728, %v1726
    %v2105 = vpack.c.b16 %v1731, %v1729
    %v2106 = vpack.c.b16 %v1732, %v1730
    %v2107 = vpack.c.b16 %v1735, %v1733
    %v2108 = vpack.c.b16 %v1736, %v1734
    %v2109 = vpack.c.b16 %v1739, %v1737
    %v2110 = vpack.c.b16 %v1740, %v1738
    %v2111 = vpack.c.b16 %v1743, %v1741
    %v2112 = vpack.c.b16 %v1744, %v1742
    %v2113 = vpack.c.b16 %v1747, %v1745
    %v2114 = vpack.c.b16 %v1748, %v1746
    %v2115 = vpack.c.b16 %v1751, %v1749
    %v2116 = vpack.c.b16 %v1752, %v1750
    %v2117 = vpack.c.b16 %v1755, %v1753
    %v2118 = vpack.c.b16 %v1756, %v1754
    %v2119 = vpack.c.b16 %v1759, %v1757
    %v2120 = vpack.c.b16 %v1760, %v1758
    %v2121 = vpack.c.b16 %v1763, %v1761
    %v2122 = vpack.c.b16 %v1764, %v1762
    %v2123 = vpack.c.b16 %v1767, %v1765
    %v2124 = vpack.c.b16 %v1768, %v1766
    %v2125 = vpack.c.b16 %v1771, %v1769
    %v2126 = vpack.c.b16 %v1772, %v1770
    %v2127 = vpack.c.b16 %v1775, %v1773
    %v2128 = vpack.c.b16 %v1776, %v1774
    %v2129 = vpack.c.b16 %v1779, %v1777
    %v2130 = vpack.c.b16 %v1780, %v1778
    %v2131 = vpack.c.b16 %v1783, %v1781
    %v2132 = vpack.c.b16 %v1784, %v1782
    %v2133 = vpack.c.b16 %v1787, %v1785
    %v2134 = vpack.c.b16 %v1788, %v1786
    %v2135 = vpack.c.b16 %v1791, %v1789
    %v2136 = vpack.c.b16 %v1792, %v1790
    %v2137 = vpack.c.b16 %v1795, %v1793
    %v2138 = vpack.c.b16 %v1796, %v1794
    %v2139 = vpack.c.b16 %v1799, %v1797
    %v2140 = vpack.c.b16 %v1800, %v1798
    %v2141 = vpack.c.b16 %v1803, %v1801
    %v2142 = vpack.c.b16 %v1804, %v1802
    %v2143 = vpack.c.b16 %v1807, %v1805
    %v2144 = vpack.c.b16 %v1808, %v1806
    %v2145 = vpack.c.b16 %v1811, %v1809
    %v2146 = vpack.c.b16 %v1812, %v1810
    %v2147 = vpack.c.b16 %v1815, %v1813
    %v2148 = vpack.c.b16 %v1816, %v1814
    %v2149 = vpack.c.b16 %v1819, %v1817
    %v2150 = vpack.c.b16 %v1820, %v1818
    %v2151 = vpack.c.b16 %v1823, %v1821
    %v2152 = vpack.c.b16 %v1824, %v1822
    %v2153 = vpack.c.b16 %v1827, %v1825
    %v2154 = vpack.c.b16 %v1828, %v1826
    %v2155 = vpack.c.b16 %v1831, %v1829
    %v2156 = vpack.c.b16 %v1832, %v1830
    %v2157 = vpack.c.b16 %v1835, %v1833
    %v2158 = vpack.c.b16 %v1836, %v1834
    %v2159 = vpack.c.b16 %v1839, %v1837
    %v2160 = vpack.c.b16 %v1840, %v1838
    %v2161 = vpack.c.b16 %v1843, %v1841
    %v2162 = vpack.c.b16 %v1844, %v1842
    %v2163 = vpack.c.b16 %v1847, %v1845
    %v2164 = vpack.c.b16 %v1848, %v1846
    %v2165 = vpack.c.b16 %v1851, %v1849
    %v2166 = vpack.c.b16 %v1852, %v1850
    %v2167 = vpack.c.b16 %v1855, %v1853
    %v2168 = vpack.c.b16 %v1856, %v1854
    %v2169 = vpack.c.b16 %v1859, %v1857
    %v2170 = vpack.c.b16 %v1860, %v1858
    %v2171 = vpack.c.b16 %v1863, %v1861
    %v2172 = vpack.c.b16 %v1864, %v1862
    %v2173 = vpack.c.b16 %v1867, %v1865
    %v2174 = vpack.c.b16 %v1868, %v1866
    %v2175 = vpack.c.b16 %v1871, %v1869
    %v2176 = vpack.c.b16 %v1872, %v1870
    %v2177 = vpack.c.b16 %v1875, %v1873
    %v2178 = vpack.c.b16 %v1876, %v1874
    %v2179 = vpack.c.b16 %v1879, %v1877
    %v2180 = vpack.c.b16 %v1880, %v1878
    %v2181 = vpack.c.b16 %v1883, %v1881
    %v2182 = vpack.c.b16 %v1884, %v1882
    %v2183 = vpack.c.b16 %v1887, %v1885
    %v2184 = vpack.c.b16 %v1888, %v1886
    %v2185 = vpack.c.b16 %v1891, %v1889
    %v2186 = vpack.c.b16 %v1892, %v1890
    %v2187 = vpack.c.b16 %v1895, %v1893
    %v2188 = vpack.c.b16 %v1896, %v1894
    %v2189 = vpack.c.b16 %v1899, %v1897
    %v2190 = vpack.c.b16 %v1900, %v1898
    %v2191 = vpack.c.b16 %v1903, %v1901
    %v2192 = vpack.c.b16 %v1904, %v1902
    %v2193 = vpack.c.b16 %v1907, %v1905
    %v2194 = vpack.c.b16 %v1908, %v1906
    %v2195 = vpack.c.b16 %v1911, %v1909
    %v2196 = vpack.c.b16 %v1912, %v1910
    %v2197 = vpack.c.b16 %v1915, %v1913
    %v2198 = vpack.c.b16 %v1916, %v1914
    %v2199 = vpack.c.b16 %v1919, %v1917
    %v2200 = vpack.c.b16 %v1920, %v1918
    %v2201 = vpack.c.b16 %v1923, %v1921
    %v2202 = vpack.c.b16 %v1924, %v1922
    %v2203 = vpack.c.b16 %v1927, %v1925
    %v2204 = vpack.c.b16 %v1928, %v1926
    %v2205 = vpack.c.b16 %v1931, %v1929
    %v2206 = vpack.c.b16 %v1932, %v1930
    %v2207 = vpack.c.b16 %v1935, %v1933
    %v2208 = vpack.c.b16 %v1936, %v1934
    %v2209 = vpack.c.b16 %v1939, %v1937
    %v2210 = vpack.c.b16 %v1940, %v1938
    %v2211 = vpack.c.b16 %v1943, %v1941
    %v2212 = vpack.c.b16 %v1944, %v1942
    %v2213 = vpack.c.b16 %v1947, %v1945
    %v2214 = vpack.c.b16 %v1948, %v1946
    %v2215 = vpack.c.b16 %v1951, %v1949
    %v2216 = vpack.c.b16 %v1952, %v1950
    %v2217 = vpack.c.b16 %v1955, %v1953
    %v2218 = vpack.c.b16 %v1956, %v1954
    %v2219 = vpack.c.b16 %v1959, %v1957
    %v2220 = vpack.c.b16 %v1960, %v1958
    %v2221 = vpack.c.b16 %v1963, %v1961
    %v2222 = vpack.c.b16 %v1964, %v1962
    %v2223 = vpack.c.b16 %v1967, %v1965
    %v2224 = vpack.c.b16 %v1968, %v1966
    %v2225 = vpack.c.b16 %v1971, %v1969
    %v2226 = vpack.c.b16 %v1972, %v1970
    %v2227 = vpack.c.b16 %v1975, %v1973
    %v2228 = vpack.c.b16 %v1976, %v1974
    %v2229 = vpack.c.b16 %v1979, %v1977
    %v2230 = vpack.c.b16 %v1980, %v1978
    %v2231 = vpack.c.b16 %v1983, %v1981
    %v2232 = vpack.c.b16 %v1984, %v1982
    %v2233 = vpack.c.b16 %v1987, %v1985
    %v2234 = vpack.c.b16 %v1988, %v1986
    %v2235 = vpack.c.b16 %v1991, %v1989
    %v2236 = vpack.c.b16 %v1992, %v1990
    %v2237 = vpack.c.b16 %v1995, %v1993
    %v2238 = vpack.c.b16 %v1996, %v1994
    %v2239 = vpack.c.b16 %v1999, %v1997
    %v2240 = vpack.c.b16 %v2000, %v1998
    %v2241 = vpack.c.b16 %v2003, %v2001
    %v2242 = vpack.c.b16 %v2004, %v2002
    %v2243 = vpack.c.b16 %v2007, %v2005
    %v2244 = vpack.c.b16 %v2008, %v2006
    %v2245 = vpack.c.b16 %v2011, %v2009
    %v2246 = vpack.c.b16 %v2012, %v2010
    %v2247 = vpack.c.b16 %v2015, %v2013
    %v2248 = vpack.c.b16 %v2016, %v2014
    %v2249 = vpack.c.b16 %v2019, %v2017
    %v2250 = vpack.c.b16 %v2020, %v2018
    %v2251 = vpack.c.b16 %v2023, %v2021
    %v2252 = vpack.c.b16 %v2024, %v2022
    %v2253 = vpack.c.b16 %v2027, %v2025
    %v2254 = vpack.c.b16 %v2028, %v2026
    %v2255 = vpack.c.b16 %v2031, %v2029
    %v2256 = vpack.c.b16 %v2032, %v2030
    %v2257 = vpack.c.b16 %v2035, %v2033
    %v2258 = vpack.c.b16 %v2036, %v2034
    %v2259 = vpack.c.b16 %v2039, %v2037
    %v2260 = vpack.c.b16 %v2040, %v2038
    %v2261 = vpack.c.b16 %v2043, %v2041
    %v2262 = vpack.c.b16 %v2044, %v2042
    %v2263 = vpack.c.b16 %v2047, %v2045
    %v2264 = vpack.c.b16 %v2048, %v2046
    %v2265 = vpack.c.b16 %v2051, %v2049
    %v2266 = vpack.c.b16 %v2052, %v2050
    %v2267 = vpack.c.b16 %v2055, %v2053
    %v2268 = vpack.c.b16 %v2056, %v2054
    %v2269 = vpack.c.b16 %v2059, %v2057
    %v2270 = vpack.c.b16 %v2060, %v2058
    %v2271 = vpack.c.b16 %v2063, %v2061
    %v2272 = vpack.c.b16 %v2064, %v2062
    %2481 = vmatprep.subr.bf16.mxu0 %v2080
    %2482 = vmatpush1.bf16.msra.mxu0 %v2079
    %2483 = vmatprep.subr.bf16.mxu0 %v2078
    %2484 = vmatpush1.bf16.msra.mxu0 %v2077
    %2485 = vmatprep.subr.bf16.mxu0 %v2076
    %2486 = vmatpush1.bf16.msra.mxu0 %v2075
    %2487 = vmatprep.subr.bf16.mxu0 %v2074
    %2488 = vmatpush1.bf16.msra.mxu0 %v2073
    %2489 = vmatprep.subr.bf16.mxu0 %v2072
    %2490 = vmatpush1.bf16.msra.mxu0 %v2071
    %2491 = vmatprep.subr.bf16.mxu0 %v2070
    %2492 = vmatpush1.bf16.msra.mxu0 %v2069
    %2493 = vmatprep.subr.bf16.mxu0 %v2068
    %2494 = vmatpush1.bf16.msra.mxu0 %v2067
    %2495 = vmatprep.subr.bf16.mxu0 %v2066
    %2496 = vmatpush1.bf16.msra.mxu0 %v2065
    %2497 = vmatprep.subr.bf16.mxu0 %v2096
    %2498 = vmatpush2.bf16.msra.mxu0 %v2095
    %2499 = vmatprep.subr.bf16.mxu0 %v2094
    %2500 = vmatpush2.bf16.msra.mxu0 %v2093
    %2501 = vmatprep.subr.bf16.mxu0 %v2092
    %2502 = vmatpush2.bf16.msra.mxu0 %v2091
    %2503 = vmatprep.subr.bf16.mxu0 %v2090
    %2504 = vmatpush2.bf16.msra.mxu0 %v2089
    %2505 = vmatprep.subr.bf16.mxu0 %v2088
    %2506 = vmatpush2.bf16.msra.mxu0 %v2087
    %2507 = vmatprep.subr.bf16.mxu0 %v2086
    %2508 = vmatpush2.bf16.msra.mxu0 %v2085
    %2509 = vmatprep.subr.bf16.mxu0 %v2084
    %2510 = vmatpush2.bf16.msra.mxu0 %v2083
    %2511 = vmatprep.subr.bf16.mxu0 %v2082
    %2512 = vmatpush2.bf16.msra.mxu0 %v2081
    %2513 = vmatprep.mubr.bf16.mxu0 %v1209
    %2514 = vmatmul.mubr.bf16.gmra.mxu0 %v1208
    %v2515 = vpop.f32.mrf.mxu0
    %v2516 = vadd.f32 %v1434, %v2515
    %v2517 = vpop.f32.mrf.mxu0
    %v2518 = vadd.f32 %v1438, %v2517
    %v2519 = vpop.f32.mrf.mxu0
    %v2520 = vpop.f32.mrf.mxu0
    %2521 = vdwg.mxu0
    %2522 = vmatprep.subr.bf16.mxu0 %v2112
    %2523 = vmatpush1.bf16.msra.mxu0 %v2111
    %2524 = vmatprep.subr.bf16.mxu0 %v2110
    %2525 = vmatpush1.bf16.msra.mxu0 %v2109
    %2526 = vmatprep.subr.bf16.mxu0 %v2108
    %2527 = vmatpush1.bf16.msra.mxu0 %v2107
    %2528 = vmatprep.subr.bf16.mxu0 %v2106
    %2529 = vmatpush1.bf16.msra.mxu0 %v2105
    %2530 = vmatprep.subr.bf16.mxu0 %v2104
    %2531 = vmatpush1.bf16.msra.mxu0 %v2103
    %2532 = vmatprep.subr.bf16.mxu0 %v2102
    %2533 = vmatpush1.bf16.msra.mxu0 %v2101
    %2534 = vmatprep.subr.bf16.mxu0 %v2100
    %2535 = vmatpush1.bf16.msra.mxu0 %v2099
    %2536 = vmatprep.subr.bf16.mxu0 %v2098
    %2537 = vmatpush1.bf16.msra.mxu0 %v2097
    %2538 = vmatprep.subr.bf16.mxu0 %v2128
    %2539 = vmatpush2.bf16.msra.mxu0 %v2127
    %2540 = vmatprep.subr.bf16.mxu0 %v2126
    %2541 = vmatpush2.bf16.msra.mxu0 %v2125
    %2542 = vmatprep.subr.bf16.mxu0 %v2124
    %2543 = vmatpush2.bf16.msra.mxu0 %v2123
    %2544 = vmatprep.subr.bf16.mxu0 %v2122
    %2545 = vmatpush2.bf16.msra.mxu0 %v2121
    %2546 = vmatprep.subr.bf16.mxu0 %v2120
    %2547 = vmatpush2.bf16.msra.mxu0 %v2119
    %2548 = vmatprep.subr.bf16.mxu0 %v2118
    %2549 = vmatpush2.bf16.msra.mxu0 %v2117
    %2550 = vmatprep.subr.bf16.mxu0 %v2116
    %2551 = vmatpush2.bf16.msra.mxu0 %v2115
    %2552 = vmatprep.subr.bf16.mxu0 %v2114
    %2553 = vmatpush2.bf16.msra.mxu0 %v2113
    %2554 = vmatprep.mubr.bf16.mxu0 %v1211
    %2555 = vmatmul.mubr.bf16.gmra.mxu0 %v1210
    %v2556 = vpop.f32.mrf.mxu0
    %v2557 = vadd.f32 %v2516, %v2556
    %v2558 = vpop.f32.mrf.mxu0
    %v2559 = vadd.f32 %v2518, %v2558
    %v2560 = vpop.f32.mrf.mxu0
    %v2561 = vpop.f32.mrf.mxu0
    %2562 = vdwg.mxu0
    %2563 = vmatprep.subr.bf16.mxu0 %v2144
    %2564 = vmatpush1.bf16.msra.mxu0 %v2143
    %2565 = vmatprep.subr.bf16.mxu0 %v2142
    %2566 = vmatpush1.bf16.msra.mxu0 %v2141
    %2567 = vmatprep.subr.bf16.mxu0 %v2140
    %2568 = vmatpush1.bf16.msra.mxu0 %v2139
    %2569 = vmatprep.subr.bf16.mxu0 %v2138
    %2570 = vmatpush1.bf16.msra.mxu0 %v2137
    %2571 = vmatprep.subr.bf16.mxu0 %v2136
    %2572 = vmatpush1.bf16.msra.mxu0 %v2135
    %2573 = vmatprep.subr.bf16.mxu0 %v2134
    %2574 = vmatpush1.bf16.msra.mxu0 %v2133
    %2575 = vmatprep.subr.bf16.mxu0 %v2132
    %2576 = vmatpush1.bf16.msra.mxu0 %v2131
    %2577 = vmatprep.subr.bf16.mxu0 %v2130
    %2578 = vmatpush1.bf16.msra.mxu0 %v2129
    %2579 = vmatprep.subr.bf16.mxu0 %v2160
    %2580 = vmatpush2.bf16.msra.mxu0 %v2159
    %2581 = vmatprep.subr.bf16.mxu0 %v2158
    %2582 = vmatpush2.bf16.msra.mxu0 %v2157
    %2583 = vmatprep.subr.bf16.mxu0 %v2156
    %2584 = vmatpush2.bf16.msra.mxu0 %v2155
    %2585 = vmatprep.subr.bf16.mxu0 %v2154
    %2586 = vmatpush2.bf16.msra.mxu0 %v2153
    %2587 = vmatprep.subr.bf16.mxu0 %v2152
    %2588 = vmatpush2.bf16.msra.mxu0 %v2151
    %2589 = vmatprep.subr.bf16.mxu0 %v2150
    %2590 = vmatpush2.bf16.msra.mxu0 %v2149
    %2591 = vmatprep.subr.bf16.mxu0 %v2148
    %2592 = vmatpush2.bf16.msra.mxu0 %v2147
    %2593 = vmatprep.subr.bf16.mxu0 %v2146
    %2594 = vmatpush2.bf16.msra.mxu0 %v2145
    %2595 = vmatprep.mubr.bf16.mxu0 %v1213
    %2596 = vmatmul.mubr.bf16.gmra.mxu0 %v1212
    %v2597 = vpop.f32.mrf.mxu0
    %v2598 = vadd.f32 %v2557, %v2597
    %v2599 = vpop.f32.mrf.mxu0
    %v2600 = vadd.f32 %v2559, %v2599
    %v2601 = vpop.f32.mrf.mxu0
    %v2602 = vpop.f32.mrf.mxu0
    %2603 = vdwg.mxu0
    %2604 = vmatprep.subr.bf16.mxu0 %v2176
    %2605 = vmatpush1.bf16.msra.mxu0 %v2175
    %2606 = vmatprep.subr.bf16.mxu0 %v2174
    %2607 = vmatpush1.bf16.msra.mxu0 %v2173
    %2608 = vmatprep.subr.bf16.mxu0 %v2172
    %2609 = vmatpush1.bf16.msra.mxu0 %v2171
    %2610 = vmatprep.subr.bf16.mxu0 %v2170
    %2611 = vmatpush1.bf16.msra.mxu0 %v2169
    %2612 = vmatprep.subr.bf16.mxu0 %v2168
    %2613 = vmatpush1.bf16.msra.mxu0 %v2167
    %2614 = vmatprep.subr.bf16.mxu0 %v2166
    %2615 = vmatpush1.bf16.msra.mxu0 %v2165
    %2616 = vmatprep.subr.bf16.mxu0 %v2164
    %2617 = vmatpush1.bf16.msra.mxu0 %v2163
    %2618 = vmatprep.subr.bf16.mxu0 %v2162
    %2619 = vmatpush1.bf16.msra.mxu0 %v2161
    %2620 = vmatprep.subr.bf16.mxu0 %v2192
    %2621 = vmatpush2.bf16.msra.mxu0 %v2191
    %2622 = vmatprep.subr.bf16.mxu0 %v2190
    %2623 = vmatpush2.bf16.msra.mxu0 %v2189
    %2624 = vmatprep.subr.bf16.mxu0 %v2188
    %2625 = vmatpush2.bf16.msra.mxu0 %v2187
    %2626 = vmatprep.subr.bf16.mxu0 %v2186
    %2627 = vmatpush2.bf16.msra.mxu0 %v2185
    %2628 = vmatprep.subr.bf16.mxu0 %v2184
    %2629 = vmatpush2.bf16.msra.mxu0 %v2183
    %2630 = vmatprep.subr.bf16.mxu0 %v2182
    %2631 = vmatpush2.bf16.msra.mxu0 %v2181
    %2632 = vmatprep.subr.bf16.mxu0 %v2180
    %2633 = vmatpush2.bf16.msra.mxu0 %v2179
    %2634 = vmatprep.subr.bf16.mxu0 %v2178
    %2635 = vmatpush2.bf16.msra.mxu0 %v2177
    %2636 = vmatprep.mubr.bf16.mxu0 %v1215
    %2637 = vmatmul.mubr.bf16.gmra.mxu0 %v1214
    %v2638 = vpop.f32.mrf.mxu0
    %v2639 = vadd.f32 %v2598, %v2638
    %v2640 = vpop.f32.mrf.mxu0
    %v2641 = vadd.f32 %v2600, %v2640
    %v2642 = vpop.f32.mrf.mxu0
    %v2643 = vpop.f32.mrf.mxu0
    %2644 = vdwg.mxu0
    %2645 = vmatprep.subr.bf16.mxu0 %v2208
    %2646 = vmatpush1.bf16.msra.mxu0 %v2207
    %2647 = vmatprep.subr.bf16.mxu0 %v2206
    %2648 = vmatpush1.bf16.msra.mxu0 %v2205
    %2649 = vmatprep.subr.bf16.mxu0 %v2204
    %2650 = vmatpush1.bf16.msra.mxu0 %v2203
    %2651 = vmatprep.subr.bf16.mxu0 %v2202
    %2652 = vmatpush1.bf16.msra.mxu0 %v2201
    %2653 = vmatprep.subr.bf16.mxu0 %v2200
    %2654 = vmatpush1.bf16.msra.mxu0 %v2199
    %2655 = vmatprep.subr.bf16.mxu0 %v2198
    %2656 = vmatpush1.bf16.msra.mxu0 %v2197
    %2657 = vmatprep.subr.bf16.mxu0 %v2196
    %2658 = vmatpush1.bf16.msra.mxu0 %v2195
    %2659 = vmatprep.subr.bf16.mxu0 %v2194
    %2660 = vmatpush1.bf16.msra.mxu0 %v2193
    %2661 = vmatprep.subr.bf16.mxu0 %v2224
    %2662 = vmatpush2.bf16.msra.mxu0 %v2223
    %2663 = vmatprep.subr.bf16.mxu0 %v2222
    %2664 = vmatpush2.bf16.msra.mxu0 %v2221
    %2665 = vmatprep.subr.bf16.mxu0 %v2220
    %2666 = vmatpush2.bf16.msra.mxu0 %v2219
    %2667 = vmatprep.subr.bf16.mxu0 %v2218
    %2668 = vmatpush2.bf16.msra.mxu0 %v2217
    %2669 = vmatprep.subr.bf16.mxu0 %v2216
    %2670 = vmatpush2.bf16.msra.mxu0 %v2215
    %2671 = vmatprep.subr.bf16.mxu0 %v2214
    %2672 = vmatpush2.bf16.msra.mxu0 %v2213
    %2673 = vmatprep.subr.bf16.mxu0 %v2212
    %2674 = vmatpush2.bf16.msra.mxu0 %v2211
    %2675 = vmatprep.subr.bf16.mxu0 %v2210
    %2676 = vmatpush2.bf16.msra.mxu0 %v2209
    %2677 = vmatprep.mubr.bf16.mxu0 %v1217
    %2678 = vmatmul.mubr.bf16.gmra.mxu0 %v1216
    %v2679 = vpop.f32.mrf.mxu0
    %v2680 = vadd.f32 %v2639, %v2679
    %v2681 = vpop.f32.mrf.mxu0
    %v2682 = vadd.f32 %v2641, %v2681
    %v2683 = vpop.f32.mrf.mxu0
    %v2684 = vpop.f32.mrf.mxu0
    %2685 = vdwg.mxu0
    %2686 = vmatprep.subr.bf16.mxu0 %v2240
    %2687 = vmatpush1.bf16.msra.mxu0 %v2239
    %2688 = vmatprep.subr.bf16.mxu0 %v2238
    %2689 = vmatpush1.bf16.msra.mxu0 %v2237
    %2690 = vmatprep.subr.bf16.mxu0 %v2236
    %2691 = vmatpush1.bf16.msra.mxu0 %v2235
    %2692 = vmatprep.subr.bf16.mxu0 %v2234
    %2693 = vmatpush1.bf16.msra.mxu0 %v2233
    %2694 = vmatprep.subr.bf16.mxu0 %v2232
    %2695 = vmatpush1.bf16.msra.mxu0 %v2231
    %2696 = vmatprep.subr.bf16.mxu0 %v2230
    %2697 = vmatpush1.bf16.msra.mxu0 %v2229
    %2698 = vmatprep.subr.bf16.mxu0 %v2228
    %2699 = vmatpush1.bf16.msra.mxu0 %v2227
    %2700 = vmatprep.subr.bf16.mxu0 %v2226
    %2701 = vmatpush1.bf16.msra.mxu0 %v2225
    %2702 = vmatprep.subr.bf16.mxu0 %v2256
    %2703 = vmatpush2.bf16.msra.mxu0 %v2255
    %2704 = vmatprep.subr.bf16.mxu0 %v2254
    %2705 = vmatpush2.bf16.msra.mxu0 %v2253
    %2706 = vmatprep.subr.bf16.mxu0 %v2252
    %2707 = vmatpush2.bf16.msra.mxu0 %v2251
    %2708 = vmatprep.subr.bf16.mxu0 %v2250
    %2709 = vmatpush2.bf16.msra.mxu0 %v2249
    %2710 = vmatprep.subr.bf16.mxu0 %v2248
    %2711 = vmatpush2.bf16.msra.mxu0 %v2247
    %2712 = vmatprep.subr.bf16.mxu0 %v2246
    %2713 = vmatpush2.bf16.msra.mxu0 %v2245
    %2714 = vmatprep.subr.bf16.mxu0 %v2244
    %2715 = vmatpush2.bf16.msra.mxu0 %v2243
    %2716 = vmatprep.subr.bf16.mxu0 %v2242
    %2717 = vmatpush2.bf16.msra.mxu0 %v2241
    %2718 = vmatprep.mubr.bf16.mxu0 %v1219
    %2719 = vmatmul.mubr.bf16.gmra.mxu0 %v1218
    %v2720 = vpop.f32.mrf.mxu0
    %v2721 = vadd.f32 %v2680, %v2720
    %v2722 = vpop.f32.mrf.mxu0
    %v2723 = vadd.f32 %v2682, %v2722
    %v2724 = vpop.f32.mrf.mxu0
    %v2725 = vpop.f32.mrf.mxu0
    %2726 = vdwg.mxu0
    %2727 = vmatprep.subr.bf16.mxu0 %v2272
    %2728 = vmatpush1.bf16.msra.mxu0 %v2271
    %2729 = vmatprep.subr.bf16.mxu0 %v2270
    %2730 = vmatpush1.bf16.msra.mxu0 %v2269
    %2731 = vmatprep.subr.bf16.mxu0 %v2268
    %2732 = vmatpush1.bf16.msra.mxu0 %v2267
    %2733 = vmatprep.subr.bf16.mxu0 %v2266
    %2734 = vmatpush1.bf16.msra.mxu0 %v2265
    %2735 = vmatprep.subr.bf16.mxu0 %v2264
    %2736 = vmatpush1.bf16.msra.mxu0 %v2263
    %2737 = vmatprep.subr.bf16.mxu0 %v2262
    %2738 = vmatpush1.bf16.msra.mxu0 %v2261
    %2739 = vmatprep.subr.bf16.mxu0 %v2260
    %2740 = vmatpush1.bf16.msra.mxu0 %v2259
    %2741 = vmatprep.subr.bf16.mxu0 %v2258
    %2742 = vmatpush1.bf16.msra.mxu0 %v2257
    %2743 = vmatprep.subr.bf16.mxu0 0
    %2744 = vmatpush2.bf16.msra.mxu0 0
    %2745 = vmatprep.subr.bf16.mxu0 0
    %2746 = vmatpush2.bf16.msra.mxu0 0
    %2747 = vmatprep.subr.bf16.mxu0 0
    %2748 = vmatpush2.bf16.msra.mxu0 0
    %2749 = vmatprep.subr.bf16.mxu0 0
    %2750 = vmatpush2.bf16.msra.mxu0 0
    %2751 = vmatprep.subr.bf16.mxu0 0
    %2752 = vmatpush2.bf16.msra.mxu0 0
    %2753 = vmatprep.subr.bf16.mxu0 0
    %2754 = vmatpush2.bf16.msra.mxu0 0
    %2755 = vmatprep.subr.bf16.mxu0 0
    %2756 = vmatpush2.bf16.msra.mxu0 0
    %2757 = vmatprep.subr.bf16.mxu0 0
    %2758 = vmatpush2.bf16.msra.mxu0 0
    %2759 = vmatprep.mubr.bf16.mxu0 0
    %2760 = vmatmul.mubr.bf16.gmra.mxu0 %v1220
    %v2761 = vpop.f32.mrf.mxu0
    %v2762 = vadd.f32 %v2721, %v2761
    %v2763 = vpop.f32.mrf.mxu0
    %v2764 = vadd.f32 %v2723, %v2763
    %v2765 = vpop.f32.mrf.mxu0
    %v2766 = vpop.f32.mrf.mxu0
    %2767 = vdwg.mxu0
    %v2768 = vmax.f32 %v2762, 0.0
    %v2769 = vmax.f32 %v2764, 0.0
    %v2770 = vpack.c.bf16 %v2768, %v2768
    %v2771 = vpack.c.bf16 %v2769, %v2769
    %v2772 = vld [vmem:[#allocation2] sm:$0xff]
    %v2773 = vld [vmem:[#allocation2 + $0x8] sm:$0xff]
    %v2774 = vld [vmem:[#allocation2 + $0x10] sm:$0xff]
    %v2775 = vld [vmem:[#allocation2 + $0x18] sm:$0xff]
    %v2776 = vld [vmem:[#allocation2 + $0x20] sm:$0xff]
    %v2777 = vld [vmem:[#allocation2 + $0x28] sm:$0xff]
    %v2778 = vld [vmem:[#allocation2 + $0x30] sm:$0xf]
    %v2779 = vld [vmem:[#allocation2 + $0x34] sm:$0xff]
    %v2780 = vld [vmem:[#allocation2 + $0x3c] sm:$0xff]
    %v2781 = vld [vmem:[#allocation2 + $0x44] sm:$0xff]
    %v2782 = vld [vmem:[#allocation2 + $0x4c] sm:$0xff]
    %v2783 = vld [vmem:[#allocation2 + $0x54] sm:$0xff]
    %v2784 = vld [vmem:[#allocation2 + $0x5c] sm:$0xff]
    %v2785 = vld [vmem:[#allocation2 + $0x64] sm:$0xf]
    %v2786 = vld [vmem:[#allocation2 + $0x68] sm:$0xff]
    %v2787 = vld [vmem:[#allocation2 + $0x70] sm:$0xff]
    %v2788 = vld [vmem:[#allocation2 + $0x78] sm:$0xff]
    %v2789 = vld [vmem:[#allocation2 + $0x80] sm:$0xff]
    %v2790 = vld [vmem:[#allocation2 + $0x88] sm:$0xff]
    %v2791 = vld [vmem:[#allocation2 + $0x90] sm:$0xff]
    %v2792 = vld [vmem:[#allocation2 + $0x98] sm:$0xf]
    %v2793 = vld [vmem:[#allocation2 + $0x9c] sm:$0xff]
    %v2794 = vld [vmem:[#allocation2 + $0xa4] sm:$0xff]
    %v2795 = vld [vmem:[#allocation2 + $0xac] sm:$0xff]
    %v2796 = vld [vmem:[#allocation2 + $0xb4] sm:$0xff]
    %v2797 = vld [vmem:[#allocation2 + $0xbc] sm:$0xff]
    %v2798 = vld [vmem:[#allocation2 + $0xc4] sm:$0xff]
    %v2799 = vld [vmem:[#allocation2 + $0xcc] sm:$0xf]
    %v2800 = vld [vmem:[#allocation2 + $0xd0] sm:$0xff]
    %v2801 = vld [vmem:[#allocation2 + $0xd8] sm:$0xff]
    %v2802 = vld [vmem:[#allocation2 + $0xe0] sm:$0xff]
    %v2803 = vld [vmem:[#allocation2 + $0xe8] sm:$0xff]
    %v2804 = vld [vmem:[#allocation2 + $0xf0] sm:$0xff]
    %v2805 = vld [vmem:[#allocation2 + $0xf8] sm:$0xff]
    %v2806 = vld [vmem:[#allocation2 + $0x100] sm:$0xf]
    %v2807 = vld [vmem:[#allocation2 + $0x104] sm:$0xff]
    %v2808 = vld [vmem:[#allocation2 + $0x10c] sm:$0xff]
    %v2809 = vld [vmem:[#allocation2 + $0x114] sm:$0xff]
    %v2810 = vld [vmem:[#allocation2 + $0x11c] sm:$0xff]
    %v2811 = vld [vmem:[#allocation2 + $0x124] sm:$0xff]
    %v2812 = vld [vmem:[#allocation2 + $0x12c] sm:$0xff]
    %v2813 = vld [vmem:[#allocation2 + $0x134] sm:$0xf]
    %v2814 = vld [vmem:[#allocation2 + $0x138] sm:$0xff]
    %v2815 = vld [vmem:[#allocation2 + $0x140] sm:$0xff]
    %v2816 = vld [vmem:[#allocation2 + $0x148] sm:$0xff]
    %v2817 = vld [vmem:[#allocation2 + $0x150] sm:$0xff]
    %v2818 = vld [vmem:[#allocation2 + $0x158] sm:$0xff]
    %v2819 = vld [vmem:[#allocation2 + $0x160] sm:$0xff]
    %v2820 = vld [vmem:[#allocation2 + $0x168] sm:$0xf]
    %v2821 = vld [vmem:[#allocation2 + $0x16c] sm:$0xff]
    %v2822 = vld [vmem:[#allocation2 + $0x174] sm:$0xff]
    %v2823 = vld [vmem:[#allocation2 + $0x17c] sm:$0xff]
    %v2824 = vld [vmem:[#allocation2 + $0x184] sm:$0xff]
    %v2825 = vld [vmem:[#allocation2 + $0x18c] sm:$0xff]
    %v2826 = vld [vmem:[#allocation2 + $0x194] sm:$0xff]
    %v2827 = vld [vmem:[#allocation2 + $0x19c] sm:$0xf]
    %v2828 = vld [vmem:[#allocation2 + $0x1a0] sm:$0xff]
    %v2829 = vld [vmem:[#allocation2 + $0x1a8] sm:$0xff]
    %v2830 = vld [vmem:[#allocation2 + $0x1b0] sm:$0xff]
    %v2831 = vld [vmem:[#allocation2 + $0x1b8] sm:$0xff]
    %v2832 = vld [vmem:[#allocation2 + $0x1c0] sm:$0xff]
    %v2833 = vld [vmem:[#allocation2 + $0x1c8] sm:$0xff]
    %v2834 = vld [vmem:[#allocation2 + $0x1d0] sm:$0xf]
    %v2835 = vld [vmem:[#allocation2 + $0x1d4] sm:$0xff]
    %v2836 = vld [vmem:[#allocation2 + $0x1dc] sm:$0xff]
    %v2837 = vld [vmem:[#allocation2 + $0x1e4] sm:$0xff]
    %v2838 = vld [vmem:[#allocation2 + $0x1ec] sm:$0xff]
    %v2839 = vld [vmem:[#allocation2 + $0x1f4] sm:$0xff]
    %v2840 = vld [vmem:[#allocation2 + $0x1fc] sm:$0xff]
    %v2841 = vld [vmem:[#allocation2 + $0x204] sm:$0xf]
    %v2842 = vld [vmem:[#allocation2 + $0x208] sm:$0xff]
    %v2843 = vld [vmem:[#allocation2 + $0x210] sm:$0xff]
    %v2844 = vld [vmem:[#allocation2 + $0x218] sm:$0xff]
    %v2845 = vld [vmem:[#allocation2 + $0x220] sm:$0xff]
    %v2846 = vld [vmem:[#allocation2 + $0x228] sm:$0xff]
    %v2847 = vld [vmem:[#allocation2 + $0x230] sm:$0xff]
    %v2848 = vld [vmem:[#allocation2 + $0x238] sm:$0xf]
    %v2849 = vld [vmem:[#allocation2 + $0x23c] sm:$0xff]
    %v2850 = vld [vmem:[#allocation2 + $0x244] sm:$0xff]
    %v2851 = vld [vmem:[#allocation2 + $0x24c] sm:$0xff]
    %v2852 = vld [vmem:[#allocation2 + $0x254] sm:$0xff]
    %v2853 = vld [vmem:[#allocation2 + $0x25c] sm:$0xff]
    %v2854 = vld [vmem:[#allocation2 + $0x264] sm:$0xff]
    %v2855 = vld [vmem:[#allocation2 + $0x26c] sm:$0xf]
    %v2856 = vld [vmem:[#allocation2 + $0x270] sm:$0xff]
    %v2857 = vld [vmem:[#allocation2 + $0x278] sm:$0xff]
    %v2858 = vld [vmem:[#allocation2 + $0x280] sm:$0xff]
    %v2859 = vld [vmem:[#allocation2 + $0x288] sm:$0xff]
    %v2860 = vld [vmem:[#allocation2 + $0x290] sm:$0xff]
    %v2861 = vld [vmem:[#allocation2 + $0x298] sm:$0xff]
    %v2862 = vld [vmem:[#allocation2 + $0x2a0] sm:$0xf]
    %v2863 = vld [vmem:[#allocation2 + $0x2a4] sm:$0xff]
    %v2864 = vld [vmem:[#allocation2 + $0x2ac] sm:$0xff]
    %v2865 = vld [vmem:[#allocation2 + $0x2b4] sm:$0xff]
    %v2866 = vld [vmem:[#allocation2 + $0x2bc] sm:$0xff]
    %v2867 = vld [vmem:[#allocation2 + $0x2c4] sm:$0xff]
    %v2868 = vld [vmem:[#allocation2 + $0x2cc] sm:$0xff]
    %v2869 = vld [vmem:[#allocation2 + $0x2d4] sm:$0xf]
    %v2870 = vld [vmem:[#allocation2 + $0x2d8] sm:$0xff]
    %v2871 = vld [vmem:[#allocation2 + $0x2e0] sm:$0xff]
    %v2872 = vld [vmem:[#allocation2 + $0x2e8] sm:$0xff]
    %v2873 = vld [vmem:[#allocation2 + $0x2f0] sm:$0xff]
    %v2874 = vld [vmem:[#allocation2 + $0x2f8] sm:$0xff]
    %v2875 = vld [vmem:[#allocation2 + $0x300] sm:$0xff]
    %v2876 = vld [vmem:[#allocation2 + $0x308] sm:$0xf]
    %v2877 = vld [vmem:[#allocation2 + $0x30c] sm:$0xff]
    %v2878 = vld [vmem:[#allocation2 + $0x314] sm:$0xff]
    %v2879 = vld [vmem:[#allocation2 + $0x31c] sm:$0xff]
    %v2880 = vld [vmem:[#allocation2 + $0x324] sm:$0xff]
    %v2881 = vld [vmem:[#allocation2 + $0x32c] sm:$0xff]
    %v2882 = vld [vmem:[#allocation2 + $0x334] sm:$0xff]
    %v2883 = vld [vmem:[#allocation2 + $0x33c] sm:$0xf]
    %v2884 = vld [vmem:[#allocation2 + $0x340] sm:$0xff]
    %v2885 = vld [vmem:[#allocation2 + $0x348] sm:$0xff]
    %v2886 = vld [vmem:[#allocation2 + $0x350] sm:$0xff]
    %v2887 = vld [vmem:[#allocation2 + $0x358] sm:$0xff]
    %v2888 = vld [vmem:[#allocation2 + $0x360] sm:$0xff]
    %v2889 = vld [vmem:[#allocation2 + $0x368] sm:$0xff]
    %v2890 = vld [vmem:[#allocation2 + $0x370] sm:$0xf]
    %v2891 = vld [vmem:[#allocation2 + $0x374] sm:$0xff]
    %v2892 = vld [vmem:[#allocation2 + $0x37c] sm:$0xff]
    %v2893 = vld [vmem:[#allocation2 + $0x384] sm:$0xff]
    %v2894 = vld [vmem:[#allocation2 + $0x38c] sm:$0xff]
    %v2895 = vld [vmem:[#allocation2 + $0x394] sm:$0xff]
    %v2896 = vld [vmem:[#allocation2 + $0x39c] sm:$0xff]
    %v2897 = vld [vmem:[#allocation2 + $0x3a4] sm:$0xf]
    %v2898 = vld [vmem:[#allocation2 + $0x3a8] sm:$0xff]
    %v2899 = vld [vmem:[#allocation2 + $0x3b0] sm:$0xff]
    %v2900 = vld [vmem:[#allocation2 + $0x3b8] sm:$0xff]
    %v2901 = vld [vmem:[#allocation2 + $0x3c0] sm:$0xff]
    %v2902 = vld [vmem:[#allocation2 + $0x3c8] sm:$0xff]
    %v2903 = vld [vmem:[#allocation2 + $0x3d0] sm:$0xff]
    %v2904 = vld [vmem:[#allocation2 + $0x3d8] sm:$0xf]
    %v2905 = vld [vmem:[#allocation2 + $0x3dc] sm:$0xff]
    %v2906 = vld [vmem:[#allocation2 + $0x3e4] sm:$0xff]
    %v2907 = vld [vmem:[#allocation2 + $0x3ec] sm:$0xff]
    %v2908 = vld [vmem:[#allocation2 + $0x3f4] sm:$0xff]
    %v2909 = vld [vmem:[#allocation2 + $0x3fc] sm:$0xff]
    %v2910 = vld [vmem:[#allocation2 + $0x404] sm:$0xff]
    %v2911 = vld [vmem:[#allocation2 + $0x40c] sm:$0xf]
    %v2912 = vld [vmem:[#allocation2 + $0x410] sm:$0xff]
    %v2913 = vld [vmem:[#allocation2 + $0x418] sm:$0xff]
    %v2914 = vld [vmem:[#allocation2 + $0x420] sm:$0xff]
    %v2915 = vld [vmem:[#allocation2 + $0x428] sm:$0xff]
    %v2916 = vld [vmem:[#allocation2 + $0x430] sm:$0xff]
    %v2917 = vld [vmem:[#allocation2 + $0x438] sm:$0xff]
    %v2918 = vld [vmem:[#allocation2 + $0x440] sm:$0xf]
    %v2919 = vld [vmem:[#allocation2 + $0x444] sm:$0xff]
    %v2920 = vld [vmem:[#allocation2 + $0x44c] sm:$0xff]
    %v2921 = vld [vmem:[#allocation2 + $0x454] sm:$0xff]
    %v2922 = vld [vmem:[#allocation2 + $0x45c] sm:$0xff]
    %v2923 = vld [vmem:[#allocation2 + $0x464] sm:$0xff]
    %v2924 = vld [vmem:[#allocation2 + $0x46c] sm:$0xff]
    %v2925 = vld [vmem:[#allocation2 + $0x474] sm:$0xf]
    %v2926 = vld [vmem:[#allocation2 + $0x478] sm:$0xff]
    %v2927 = vld [vmem:[#allocation2 + $0x480] sm:$0xff]
    %v2928 = vld [vmem:[#allocation2 + $0x488] sm:$0xff]
    %v2929 = vld [vmem:[#allocation2 + $0x490] sm:$0xff]
    %v2930 = vld [vmem:[#allocation2 + $0x498] sm:$0xff]
    %v2931 = vld [vmem:[#allocation2 + $0x4a0] sm:$0xff]
    %v2932 = vld [vmem:[#allocation2 + $0x4a8] sm:$0xf]
    %v2933 = vld [vmem:[#allocation2 + $0x4ac] sm:$0xff]
    %v2934 = vld [vmem:[#allocation2 + $0x4b4] sm:$0xff]
    %v2935 = vld [vmem:[#allocation2 + $0x4bc] sm:$0xff]
    %v2936 = vld [vmem:[#allocation2 + $0x4c4] sm:$0xff]
    %v2937 = vld [vmem:[#allocation2 + $0x4cc] sm:$0xff]
    %v2938 = vld [vmem:[#allocation2 + $0x4d4] sm:$0xff]
    %v2939 = vld [vmem:[#allocation2 + $0x4dc] sm:$0xf]
    %v2940 = vld [vmem:[#allocation2 + $0x4e0] sm:$0xff]
    %v2941 = vld [vmem:[#allocation2 + $0x4e8] sm:$0xff]
    %v2942 = vld [vmem:[#allocation2 + $0x4f0] sm:$0xff]
    %v2943 = vld [vmem:[#allocation2 + $0x4f8] sm:$0xff]
    %v2944 = vld [vmem:[#allocation2 + $0x500] sm:$0xff]
    %v2945 = vld [vmem:[#allocation2 + $0x508] sm:$0xff]
    %v2946 = vld [vmem:[#allocation2 + $0x510] sm:$0xf]
    %v2947 = vld [vmem:[#allocation2 + $0x514] sm:$0xff]
    %v2948 = vld [vmem:[#allocation2 + $0x51c] sm:$0xff]
    %v2949 = vld [vmem:[#allocation2 + $0x524] sm:$0xff]
    %v2950 = vld [vmem:[#allocation2 + $0x52c] sm:$0xff]
    %v2951 = vld [vmem:[#allocation2 + $0x534] sm:$0xff]
    %v2952 = vld [vmem:[#allocation2 + $0x53c] sm:$0xff]
    %v2953 = vld [vmem:[#allocation2 + $0x544] sm:$0xf]
    %v2954 = vld [vmem:[%s9] sm:$0xff]
    %v2955 = vld [vmem:[%s9 + $0x8] sm:$0x1f]
    %v2958 = vlaneseq
    %v2959 = vshrl.u32 %v2958, 7
    %v2960 = vsub.s32 0, %v2959
    %v2961 = vrot.slane %v2954, %v2960
    %v2962 = vlaneseq
    %v2963 = vshrl.u32 %v2962, 7
    %v2964 = vsub.s32 1, %v2963
    %v2965 = vrot.slane %v2954, %v2964
    %v2966 = vlaneseq
    %v2967 = vshrl.u32 %v2966, 7
    %v2968 = vsub.s32 2, %v2967
    %v2969 = vrot.slane %v2954, %v2968
    %v2970 = vlaneseq
    %v2971 = vshrl.u32 %v2970, 7
    %v2972 = vsub.s32 3, %v2971
    %v2973 = vrot.slane %v2954, %v2972
    %v2974 = vlaneseq
    %v2975 = vshrl.u32 %v2974, 7
    %v2976 = vsub.s32 4, %v2975
    %v2977 = vrot.slane %v2954, %v2976
    %v2978 = vlaneseq
    %v2979 = vshrl.u32 %v2978, 7
    %v2980 = vsub.s32 5, %v2979
    %v2981 = vrot.slane %v2954, %v2980
    %v2982 = vlaneseq
    %v2983 = vshrl.u32 %v2982, 7
    %v2984 = vsub.s32 6, %v2983
    %v2985 = vrot.slane %v2954, %v2984
    %v2986 = vlaneseq
    %v2987 = vshrl.u32 %v2986, 7
    %v2988 = vsub.s32 7, %v2987
    %v2989 = vrot.slane %v2954, %v2988
    %v2990 = vlaneseq
    %v2991 = vshrl.u32 %v2990, 7
    %v2992 = vsub.s32 0, %v2991
    %v2993 = vrot.slane %v2955, %v2992
    %v2994 = vlaneseq
    %v2995 = vshrl.u32 %v2994, 7
    %v2996 = vsub.s32 1, %v2995
    %v2997 = vrot.slane %v2955, %v2996
    %v2998 = vlaneseq
    %v2999 = vshrl.u32 %v2998, 7
    %v3000 = vsub.s32 2, %v2999
    %v3001 = vrot.slane %v2955, %v3000
    %v3002 = vlaneseq
    %v3003 = vshrl.u32 %v3002, 7
    %v3004 = vsub.s32 3, %v3003
    %v3005 = vrot.slane %v2955, %v3004
    %v3006 = vlaneseq
    %v3007 = vshrl.u32 %v3006, 7
    %v3008 = vsub.s32 4, %v3007
    %v3009 = vrot.slane %v2955, %v3008
    %v3205 = vunpack.c.l.b16 %v2772
    %v3206 = vunpack.c.h.b16 %v2772
    %v3207 = vunpack.c.l.b16 %v2773
    %v3208 = vunpack.c.h.b16 %v2773
    %v3209 = vunpack.c.l.b16 %v2774
    %v3210 = vunpack.c.h.b16 %v2774
    %v3211 = vunpack.c.l.b16 %v2775
    %v3212 = vunpack.c.h.b16 %v2775
    %v3213 = vunpack.c.l.b16 %v2776
    %v3214 = vunpack.c.h.b16 %v2776
    %v3215 = vunpack.c.l.b16 %v2777
    %v3216 = vunpack.c.h.b16 %v2777
    %v3217 = vunpack.c.l.b16 %v2778
    %v3218 = vunpack.c.l.b16 %v2779
    %v3219 = vunpack.c.h.b16 %v2779
    %v3220 = vunpack.c.l.b16 %v2780
    %v3221 = vunpack.c.h.b16 %v2780
    %v3222 = vunpack.c.l.b16 %v2781
    %v3223 = vunpack.c.h.b16 %v2781
    %v3224 = vunpack.c.l.b16 %v2782
    %v3225 = vunpack.c.h.b16 %v2782
    %v3226 = vunpack.c.l.b16 %v2783
    %v3227 = vunpack.c.h.b16 %v2783
    %v3228 = vunpack.c.l.b16 %v2784
    %v3229 = vunpack.c.h.b16 %v2784
    %v3230 = vunpack.c.l.b16 %v2785
    %v3231 = vunpack.c.l.b16 %v2786
    %v3232 = vunpack.c.h.b16 %v2786
    %v3233 = vunpack.c.l.b16 %v2787
    %v3234 = vunpack.c.h.b16 %v2787
    %v3235 = vunpack.c.l.b16 %v2788
    %v3236 = vunpack.c.h.b16 %v2788
    %v3237 = vunpack.c.l.b16 %v2789
    %v3238 = vunpack.c.h.b16 %v2789
    %v3239 = vunpack.c.l.b16 %v2790
    %v3240 = vunpack.c.h.b16 %v2790
    %v3241 = vunpack.c.l.b16 %v2791
    %v3242 = vunpack.c.h.b16 %v2791
    %v3243 = vunpack.c.l.b16 %v2792
    %v3244 = vunpack.c.l.b16 %v2793
    %v3245 = vunpack.c.h.b16 %v2793
    %v3246 = vunpack.c.l.b16 %v2794
    %v3247 = vunpack.c.h.b16 %v2794
    %v3248 = vunpack.c.l.b16 %v2795
    %v3249 = vunpack.c.h.b16 %v2795
    %v3250 = vunpack.c.l.b16 %v2796
    %v3251 = vunpack.c.h.b16 %v2796
    %v3252 = vunpack.c.l.b16 %v2797
    %v3253 = vunpack.c.h.b16 %v2797
    %v3254 = vunpack.c.l.b16 %v2798
    %v3255 = vunpack.c.h.b16 %v2798
    %v3256 = vunpack.c.l.b16 %v2799
    %v3257 = vunpack.c.l.b16 %v2800
    %v3258 = vunpack.c.h.b16 %v2800
    %v3259 = vunpack.c.l.b16 %v2801
    %v3260 = vunpack.c.h.b16 %v2801
    %v3261 = vunpack.c.l.b16 %v2802
    %v3262 = vunpack.c.h.b16 %v2802
    %v3263 = vunpack.c.l.b16 %v2803
    %v3264 = vunpack.c.h.b16 %v2803
    %v3265 = vunpack.c.l.b16 %v2804
    %v3266 = vunpack.c.h.b16 %v2804
    %v3267 = vunpack.c.l.b16 %v2805
    %v3268 = vunpack.c.h.b16 %v2805
    %v3269 = vunpack.c.l.b16 %v2806
    %v3270 = vunpack.c.l.b16 %v2807
    %v3271 = vunpack.c.h.b16 %v2807
    %v3272 = vunpack.c.l.b16 %v2808
    %v3273 = vunpack.c.h.b16 %v2808
    %v3274 = vunpack.c.l.b16 %v2809
    %v3275 = vunpack.c.h.b16 %v2809
    %v3276 = vunpack.c.l.b16 %v2810
    %v3277 = vunpack.c.h.b16 %v2810
    %v3278 = vunpack.c.l.b16 %v2811
    %v3279 = vunpack.c.h.b16 %v2811
    %v3280 = vunpack.c.l.b16 %v2812
    %v3281 = vunpack.c.h.b16 %v2812
    %v3282 = vunpack.c.l.b16 %v2813
    %v3283 = vunpack.c.l.b16 %v2814
    %v3284 = vunpack.c.h.b16 %v2814
    %v3285 = vunpack.c.l.b16 %v2815
    %v3286 = vunpack.c.h.b16 %v2815
    %v3287 = vunpack.c.l.b16 %v2816
    %v3288 = vunpack.c.h.b16 %v2816
    %v3289 = vunpack.c.l.b16 %v2817
    %v3290 = vunpack.c.h.b16 %v2817
    %v3291 = vunpack.c.l.b16 %v2818
    %v3292 = vunpack.c.h.b16 %v2818
    %v3293 = vunpack.c.l.b16 %v2819
    %v3294 = vunpack.c.h.b16 %v2819
    %v3295 = vunpack.c.l.b16 %v2820
    %v3296 = vunpack.c.l.b16 %v2821
    %v3297 = vunpack.c.h.b16 %v2821
    %v3298 = vunpack.c.l.b16 %v2822
    %v3299 = vunpack.c.h.b16 %v2822
    %v3300 = vunpack.c.l.b16 %v2823
    %v3301 = vunpack.c.h.b16 %v2823
    %v3302 = vunpack.c.l.b16 %v2824
    %v3303 = vunpack.c.h.b16 %v2824
    %v3304 = vunpack.c.l.b16 %v2825
    %v3305 = vunpack.c.h.b16 %v2825
    %v3306 = vunpack.c.l.b16 %v2826
    %v3307 = vunpack.c.h.b16 %v2826
    %v3308 = vunpack.c.l.b16 %v2827
    %v3309 = vunpack.c.l.b16 %v2828
    %v3310 = vunpack.c.h.b16 %v2828
    %v3311 = vunpack.c.l.b16 %v2829
    %v3312 = vunpack.c.h.b16 %v2829
    %v3313 = vunpack.c.l.b16 %v2830
    %v3314 = vunpack.c.h.b16 %v2830
    %v3315 = vunpack.c.l.b16 %v2831
    %v3316 = vunpack.c.h.b16 %v2831
    %v3317 = vunpack.c.l.b16 %v2832
    %v3318 = vunpack.c.h.b16 %v2832
    %v3319 = vunpack.c.l.b16 %v2833
    %v3320 = vunpack.c.h.b16 %v2833
    %v3321 = vunpack.c.l.b16 %v2834
    %v3322 = vunpack.c.l.b16 %v2835
    %v3323 = vunpack.c.h.b16 %v2835
    %v3324 = vunpack.c.l.b16 %v2836
    %v3325 = vunpack.c.h.b16 %v2836
    %v3326 = vunpack.c.l.b16 %v2837
    %v3327 = vunpack.c.h.b16 %v2837
    %v3328 = vunpack.c.l.b16 %v2838
    %v3329 = vunpack.c.h.b16 %v2838
    %v3330 = vunpack.c.l.b16 %v2839
    %v3331 = vunpack.c.h.b16 %v2839
    %v3332 = vunpack.c.l.b16 %v2840
    %v3333 = vunpack.c.h.b16 %v2840
    %v3334 = vunpack.c.l.b16 %v2841
    %v3335 = vunpack.c.l.b16 %v2842
    %v3336 = vunpack.c.h.b16 %v2842
    %v3337 = vunpack.c.l.b16 %v2843
    %v3338 = vunpack.c.h.b16 %v2843
    %v3339 = vunpack.c.l.b16 %v2844
    %v3340 = vunpack.c.h.b16 %v2844
    %v3341 = vunpack.c.l.b16 %v2845
    %v3342 = vunpack.c.h.b16 %v2845
    %v3343 = vunpack.c.l.b16 %v2846
    %v3344 = vunpack.c.h.b16 %v2846
    %v3345 = vunpack.c.l.b16 %v2847
    %v3346 = vunpack.c.h.b16 %v2847
    %v3347 = vunpack.c.l.b16 %v2848
    %v3348 = vunpack.c.l.b16 %v2849
    %v3349 = vunpack.c.h.b16 %v2849
    %v3350 = vunpack.c.l.b16 %v2850
    %v3351 = vunpack.c.h.b16 %v2850
    %v3352 = vunpack.c.l.b16 %v2851
    %v3353 = vunpack.c.h.b16 %v2851
    %v3354 = vunpack.c.l.b16 %v2852
    %v3355 = vunpack.c.h.b16 %v2852
    %v3356 = vunpack.c.l.b16 %v2853
    %v3357 = vunpack.c.h.b16 %v2853
    %v3358 = vunpack.c.l.b16 %v2854
    %v3359 = vunpack.c.h.b16 %v2854
    %v3360 = vunpack.c.l.b16 %v2855
    %v3361 = vunpack.c.l.b16 %v2856
    %v3362 = vunpack.c.h.b16 %v2856
    %v3363 = vunpack.c.l.b16 %v2857
    %v3364 = vunpack.c.h.b16 %v2857
    %v3365 = vunpack.c.l.b16 %v2858
    %v3366 = vunpack.c.h.b16 %v2858
    %v3367 = vunpack.c.l.b16 %v2859
    %v3368 = vunpack.c.h.b16 %v2859
    %v3369 = vunpack.c.l.b16 %v2860
    %v3370 = vunpack.c.h.b16 %v2860
    %v3371 = vunpack.c.l.b16 %v2861
    %v3372 = vunpack.c.h.b16 %v2861
    %v3373 = vunpack.c.l.b16 %v2862
    %v3374 = vunpack.c.l.b16 %v2863
    %v3375 = vunpack.c.h.b16 %v2863
    %v3376 = vunpack.c.l.b16 %v2864
    %v3377 = vunpack.c.h.b16 %v2864
    %v3378 = vunpack.c.l.b16 %v2865
    %v3379 = vunpack.c.h.b16 %v2865
    %v3380 = vunpack.c.l.b16 %v2866
    %v3381 = vunpack.c.h.b16 %v2866
    %v3382 = vunpack.c.l.b16 %v2867
    %v3383 = vunpack.c.h.b16 %v2867
    %v3384 = vunpack.c.l.b16 %v2868
    %v3385 = vunpack.c.h.b16 %v2868
    %v3386 = vunpack.c.l.b16 %v2869
    %v3387 = vunpack.c.l.b16 %v2870
    %v3388 = vunpack.c.h.b16 %v2870
    %v3389 = vunpack.c.l.b16 %v2871
    %v3390 = vunpack.c.h.b16 %v2871
    %v3391 = vunpack.c.l.b16 %v2872
    %v3392 = vunpack.c.h.b16 %v2872
    %v3393 = vunpack.c.l.b16 %v2873
    %v3394 = vunpack.c.h.b16 %v2873
    %v3395 = vunpack.c.l.b16 %v2874
    %v3396 = vunpack.c.h.b16 %v2874
    %v3397 = vunpack.c.l.b16 %v2875
    %v3398 = vunpack.c.h.b16 %v2875
    %v3399 = vunpack.c.l.b16 %v2876
    %v3400 = vunpack.c.l.b16 %v2877
    %v3401 = vunpack.c.h.b16 %v2877
    %v3402 = vunpack.c.l.b16 %v2878
    %v3403 = vunpack.c.h.b16 %v2878
    %v3404 = vunpack.c.l.b16 %v2879
    %v3405 = vunpack.c.h.b16 %v2879
    %v3406 = vunpack.c.l.b16 %v2880
    %v3407 = vunpack.c.h.b16 %v2880
    %v3408 = vunpack.c.l.b16 %v2881
    %v3409 = vunpack.c.h.b16 %v2881
    %v3410 = vunpack.c.l.b16 %v2882
    %v3411 = vunpack.c.h.b16 %v2882
    %v3412 = vunpack.c.l.b16 %v2883
    %v3413 = vunpack.c.l.b16 %v2884
    %v3414 = vunpack.c.h.b16 %v2884
    %v3415 = vunpack.c.l.b16 %v2885
    %v3416 = vunpack.c.h.b16 %v2885
    %v3417 = vunpack.c.l.b16 %v2886
    %v3418 = vunpack.c.h.b16 %v2886
    %v3419 = vunpack.c.l.b16 %v2887
    %v3420 = vunpack.c.h.b16 %v2887
    %v3421 = vunpack.c.l.b16 %v2888
    %v3422 = vunpack.c.h.b16 %v2888
    %v3423 = vunpack.c.l.b16 %v2889
    %v3424 = vunpack.c.h.b16 %v2889
    %v3425 = vunpack.c.l.b16 %v2890
    %v3426 = vunpack.c.l.b16 %v2891
    %v3427 = vunpack.c.h.b16 %v2891
    %v3428 = vunpack.c.l.b16 %v2892
    %v3429 = vunpack.c.h.b16 %v2892
    %v3430 = vunpack.c.l.b16 %v2893
    %v3431 = vunpack.c.h.b16 %v2893
    %v3432 = vunpack.c.l.b16 %v2894
    %v3433 = vunpack.c.h.b16 %v2894
    %v3434 = vunpack.c.l.b16 %v2895
    %v3435 = vunpack.c.h.b16 %v2895
    %v3436 = vunpack.c.l.b16 %v2896
    %v3437 = vunpack.c.h.b16 %v2896
    %v3438 = vunpack.c.l.b16 %v2897
    %v3439 = vunpack.c.l.b16 %v2898
    %v3440 = vunpack.c.h.b16 %v2898
    %v3441 = vunpack.c.l.b16 %v2899
    %v3442 = vunpack.c.h.b16 %v2899
    %v3443 = vunpack.c.l.b16 %v2900
    %v3444 = vunpack.c.h.b16 %v2900
    %v3445 = vunpack.c.l.b16 %v2901
    %v3446 = vunpack.c.h.b16 %v2901
    %v3447 = vunpack.c.l.b16 %v2902
    %v3448 = vunpack.c.h.b16 %v2902
    %v3449 = vunpack.c.l.b16 %v2903
    %v3450 = vunpack.c.h.b16 %v2903
    %v3451 = vunpack.c.l.b16 %v2904
    %v3452 = vunpack.c.l.b16 %v2905
    %v3453 = vunpack.c.h.b16 %v2905
    %v3454 = vunpack.c.l.b16 %v2906
    %v3455 = vunpack.c.h.b16 %v2906
    %v3456 = vunpack.c.l.b16 %v2907
    %v3457 = vunpack.c.h.b16 %v2907
    %v3458 = vunpack.c.l.b16 %v2908
    %v3459 = vunpack.c.h.b16 %v2908
    %v3460 = vunpack.c.l.b16 %v2909
    %v3461 = vunpack.c.h.b16 %v2909
    %v3462 = vunpack.c.l.b16 %v2910
    %v3463 = vunpack.c.h.b16 %v2910
    %v3464 = vunpack.c.l.b16 %v2911
    %v3465 = vunpack.c.l.b16 %v2912
    %v3466 = vunpack.c.h.b16 %v2912
    %v3467 = vunpack.c.l.b16 %v2913
    %v3468 = vunpack.c.h.b16 %v2913
    %v3469 = vunpack.c.l.b16 %v2914
    %v3470 = vunpack.c.h.b16 %v2914
    %v3471 = vunpack.c.l.b16 %v2915
    %v3472 = vunpack.c.h.b16 %v2915
    %v3473 = vunpack.c.l.b16 %v2916
    %v3474 = vunpack.c.h.b16 %v2916
    %v3475 = vunpack.c.l.b16 %v2917
    %v3476 = vunpack.c.h.b16 %v2917
    %v3477 = vunpack.c.l.b16 %v2918
    %v3478 = vunpack.c.l.b16 %v2919
    %v3479 = vunpack.c.h.b16 %v2919
    %v3480 = vunpack.c.l.b16 %v2920
    %v3481 = vunpack.c.h.b16 %v2920
    %v3482 = vunpack.c.l.b16 %v2921
    %v3483 = vunpack.c.h.b16 %v2921
    %v3484 = vunpack.c.l.b16 %v2922
    %v3485 = vunpack.c.h.b16 %v2922
    %v3486 = vunpack.c.l.b16 %v2923
    %v3487 = vunpack.c.h.b16 %v2923
    %v3488 = vunpack.c.l.b16 %v2924
    %v3489 = vunpack.c.h.b16 %v2924
    %v3490 = vunpack.c.l.b16 %v2925
    %v3491 = vunpack.c.l.b16 %v2926
    %v3492 = vunpack.c.h.b16 %v2926
    %v3493 = vunpack.c.l.b16 %v2927
    %v3494 = vunpack.c.h.b16 %v2927
    %v3495 = vunpack.c.l.b16 %v2928
    %v3496 = vunpack.c.h.b16 %v2928
    %v3497 = vunpack.c.l.b16 %v2929
    %v3498 = vunpack.c.h.b16 %v2929
    %v3499 = vunpack.c.l.b16 %v2930
    %v3500 = vunpack.c.h.b16 %v2930
    %v3501 = vunpack.c.l.b16 %v2931
    %v3502 = vunpack.c.h.b16 %v2931
    %v3503 = vunpack.c.l.b16 %v2932
    %v3504 = vunpack.c.l.b16 %v2933
    %v3505 = vunpack.c.h.b16 %v2933
    %v3506 = vunpack.c.l.b16 %v2934
    %v3507 = vunpack.c.h.b16 %v2934
    %v3508 = vunpack.c.l.b16 %v2935
    %v3509 = vunpack.c.h.b16 %v2935
    %v3510 = vunpack.c.l.b16 %v2936
    %v3511 = vunpack.c.h.b16 %v2936
    %v3512 = vunpack.c.l.b16 %v2937
    %v3513 = vunpack.c.h.b16 %v2937
    %v3514 = vunpack.c.l.b16 %v2938
    %v3515 = vunpack.c.h.b16 %v2938
    %v3516 = vunpack.c.l.b16 %v2939
    %v3517 = vunpack.c.l.b16 %v2940
    %v3518 = vunpack.c.h.b16 %v2940
    %v3519 = vunpack.c.l.b16 %v2941
    %v3520 = vunpack.c.h.b16 %v2941
    %v3521 = vunpack.c.l.b16 %v2942
    %v3522 = vunpack.c.h.b16 %v2942
    %v3523 = vunpack.c.l.b16 %v2943
    %v3524 = vunpack.c.h.b16 %v2943
    %v3525 = vunpack.c.l.b16 %v2944
    %v3526 = vunpack.c.h.b16 %v2944
    %v3527 = vunpack.c.l.b16 %v2945
    %v3528 = vunpack.c.h.b16 %v2945
    %v3529 = vunpack.c.l.b16 %v2946
    %v3530 = vunpack.c.l.b16 %v2947
    %v3531 = vunpack.c.h.b16 %v2947
    %v3532 = vunpack.c.l.b16 %v2948
    %v3533 = vunpack.c.h.b16 %v2948
    %v3534 = vunpack.c.l.b16 %v2949
    %v3535 = vunpack.c.h.b16 %v2949
    %v3536 = vunpack.c.l.b16 %v2950
    %v3537 = vunpack.c.h.b16 %v2950
    %v3538 = vunpack.c.l.b16 %v2951
    %v3539 = vunpack.c.h.b16 %v2951
    %v3540 = vunpack.c.l.b16 %v2952
    %v3541 = vunpack.c.h.b16 %v2952
    %v3542 = vunpack.c.l.b16 %v2953
    %v3543 = vpack.c.b16 %v3218, %v3205
    %v3544 = vpack.c.b16 %v3219, %v3206
    %v3545 = vpack.c.b16 %v3220, %v3207
    %v3546 = vpack.c.b16 %v3221, %v3208
    %v3547 = vpack.c.b16 %v3222, %v3209
    %v3548 = vpack.c.b16 %v3223, %v3210
    %v3549 = vpack.c.b16 %v3224, %v3211
    %v3550 = vpack.c.b16 %v3225, %v3212
    %v3551 = vpack.c.b16 %v3226, %v3213
    %v3552 = vpack.c.b16 %v3227, %v3214
    %v3553 = vpack.c.b16 %v3228, %v3215
    %v3554 = vpack.c.b16 %v3229, %v3216
    %v3555 = vpack.c.b16 %v3230, %v3217
    %v3556 = vpack.c.b16 %v3244, %v3231
    %v3557 = vpack.c.b16 %v3245, %v3232
    %v3558 = vpack.c.b16 %v3246, %v3233
    %v3559 = vpack.c.b16 %v3247, %v3234
    %v3560 = vpack.c.b16 %v3248, %v3235
    %v3561 = vpack.c.b16 %v3249, %v3236
    %v3562 = vpack.c.b16 %v3250, %v3237
    %v3563 = vpack.c.b16 %v3251, %v3238
    %v3564 = vpack.c.b16 %v3252, %v3239
    %v3565 = vpack.c.b16 %v3253, %v3240
    %v3566 = vpack.c.b16 %v3254, %v3241
    %v3567 = vpack.c.b16 %v3255, %v3242
    %v3568 = vpack.c.b16 %v3256, %v3243
    %v3569 = vpack.c.b16 %v3270, %v3257
    %v3570 = vpack.c.b16 %v3271, %v3258
    %v3571 = vpack.c.b16 %v3272, %v3259
    %v3572 = vpack.c.b16 %v3273, %v3260
    %v3573 = vpack.c.b16 %v3274, %v3261
    %v3574 = vpack.c.b16 %v3275, %v3262
    %v3575 = vpack.c.b16 %v3276, %v3263
    %v3576 = vpack.c.b16 %v3277, %v3264
    %v3577 = vpack.c.b16 %v3278, %v3265
    %v3578 = vpack.c.b16 %v3279, %v3266
    %v3579 = vpack.c.b16 %v3280, %v3267
    %v3580 = vpack.c.b16 %v3281, %v3268
    %v3581 = vpack.c.b16 %v3282, %v3269
    %v3582 = vpack.c.b16 %v3296, %v3283
    %v3583 = vpack.c.b16 %v3297, %v3284
    %v3584 = vpack.c.b16 %v3298, %v3285
    %v3585 = vpack.c.b16 %v3299, %v3286
    %v3586 = vpack.c.b16 %v3300, %v3287
    %v3587 = vpack.c.b16 %v3301, %v3288
    %v3588 = vpack.c.b16 %v3302, %v3289
    %v3589 = vpack.c.b16 %v3303, %v3290
    %v3590 = vpack.c.b16 %v3304, %v3291
    %v3591 = vpack.c.b16 %v3305, %v3292
    %v3592 = vpack.c.b16 %v3306, %v3293
    %v3593 = vpack.c.b16 %v3307, %v3294
    %v3594 = vpack.c.b16 %v3308, %v3295
    %v3595 = vpack.c.b16 %v3322, %v3309
    %v3596 = vpack.c.b16 %v3323, %v3310
    %v3597 = vpack.c.b16 %v3324, %v3311
    %v3598 = vpack.c.b16 %v3325, %v3312
    %v3599 = vpack.c.b16 %v3326, %v3313
    %v3600 = vpack.c.b16 %v3327, %v3314
    %v3601 = vpack.c.b16 %v3328, %v3315
    %v3602 = vpack.c.b16 %v3329, %v3316
    %v3603 = vpack.c.b16 %v3330, %v3317
    %v3604 = vpack.c.b16 %v3331, %v3318
    %v3605 = vpack.c.b16 %v3332, %v3319
    %v3606 = vpack.c.b16 %v3333, %v3320
    %v3607 = vpack.c.b16 %v3334, %v3321
    %v3608 = vpack.c.b16 %v3348, %v3335
    %v3609 = vpack.c.b16 %v3349, %v3336
    %v3610 = vpack.c.b16 %v3350, %v3337
    %v3611 = vpack.c.b16 %v3351, %v3338
    %v3612 = vpack.c.b16 %v3352, %v3339
    %v3613 = vpack.c.b16 %v3353, %v3340
    %v3614 = vpack.c.b16 %v3354, %v3341
    %v3615 = vpack.c.b16 %v3355, %v3342
    %v3616 = vpack.c.b16 %v3356, %v3343
    %v3617 = vpack.c.b16 %v3357, %v3344
    %v3618 = vpack.c.b16 %v3358, %v3345
    %v3619 = vpack.c.b16 %v3359, %v3346
    %v3620 = vpack.c.b16 %v3360, %v3347
    %v3621 = vpack.c.b16 %v3374, %v3361
    %v3622 = vpack.c.b16 %v3375, %v3362
    %v3623 = vpack.c.b16 %v3376, %v3363
    %v3624 = vpack.c.b16 %v3377, %v3364
    %v3625 = vpack.c.b16 %v3378, %v3365
    %v3626 = vpack.c.b16 %v3379, %v3366
    %v3627 = vpack.c.b16 %v3380, %v3367
    %v3628 = vpack.c.b16 %v3381, %v3368
    %v3629 = vpack.c.b16 %v3382, %v3369
    %v3630 = vpack.c.b16 %v3383, %v3370
    %v3631 = vpack.c.b16 %v3384, %v3371
    %v3632 = vpack.c.b16 %v3385, %v3372
    %v3633 = vpack.c.b16 %v3386, %v3373
    %v3634 = vpack.c.b16 %v3400, %v3387
    %v3635 = vpack.c.b16 %v3401, %v3388
    %v3636 = vpack.c.b16 %v3402, %v3389
    %v3637 = vpack.c.b16 %v3403, %v3390
    %v3638 = vpack.c.b16 %v3404, %v3391
    %v3639 = vpack.c.b16 %v3405, %v3392
    %v3640 = vpack.c.b16 %v3406, %v3393
    %v3641 = vpack.c.b16 %v3407, %v3394
    %v3642 = vpack.c.b16 %v3408, %v3395
    %v3643 = vpack.c.b16 %v3409, %v3396
    %v3644 = vpack.c.b16 %v3410, %v3397
    %v3645 = vpack.c.b16 %v3411, %v3398
    %v3646 = vpack.c.b16 %v3412, %v3399
    %v3647 = vpack.c.b16 %v3426, %v3413
    %v3648 = vpack.c.b16 %v3427, %v3414
    %v3649 = vpack.c.b16 %v3428, %v3415
    %v3650 = vpack.c.b16 %v3429, %v3416
    %v3651 = vpack.c.b16 %v3430, %v3417
    %v3652 = vpack.c.b16 %v3431, %v3418
    %v3653 = vpack.c.b16 %v3432, %v3419
    %v3654 = vpack.c.b16 %v3433, %v3420
    %v3655 = vpack.c.b16 %v3434, %v3421
    %v3656 = vpack.c.b16 %v3435, %v3422
    %v3657 = vpack.c.b16 %v3436, %v3423
    %v3658 = vpack.c.b16 %v3437, %v3424
    %v3659 = vpack.c.b16 %v3438, %v3425
    %v3660 = vpack.c.b16 %v3452, %v3439
    %v3661 = vpack.c.b16 %v3453, %v3440
    %v3662 = vpack.c.b16 %v3454, %v3441
    %v3663 = vpack.c.b16 %v3455, %v3442
    %v3664 = vpack.c.b16 %v3456, %v3443
    %v3665 = vpack.c.b16 %v3457, %v3444
    %v3666 = vpack.c.b16 %v3458, %v3445
    %v3667 = vpack.c.b16 %v3459, %v3446
    %v3668 = vpack.c.b16 %v3460, %v3447
    %v3669 = vpack.c.b16 %v3461, %v3448
    %v3670 = vpack.c.b16 %v3462, %v3449
    %v3671 = vpack.c.b16 %v3463, %v3450
    %v3672 = vpack.c.b16 %v3464, %v3451
    %v3673 = vpack.c.b16 %v3478, %v3465
    %v3674 = vpack.c.b16 %v3479, %v3466
    %v3675 = vpack.c.b16 %v3480, %v3467
    %v3676 = vpack.c.b16 %v3481, %v3468
    %v3677 = vpack.c.b16 %v3482, %v3469
    %v3678 = vpack.c.b16 %v3483, %v3470
    %v3679 = vpack.c.b16 %v3484, %v3471
    %v3680 = vpack.c.b16 %v3485, %v3472
    %v3681 = vpack.c.b16 %v3486, %v3473
    %v3682 = vpack.c.b16 %v3487, %v3474
    %v3683 = vpack.c.b16 %v3488, %v3475
    %v3684 = vpack.c.b16 %v3489, %v3476
    %v3685 = vpack.c.b16 %v3490, %v3477
    %v3686 = vpack.c.b16 %v3504, %v3491
    %v3687 = vpack.c.b16 %v3505, %v3492
    %v3688 = vpack.c.b16 %v3506, %v3493
    %v3689 = vpack.c.b16 %v3507, %v3494
    %v3690 = vpack.c.b16 %v3508, %v3495
    %v3691 = vpack.c.b16 %v3509, %v3496
    %v3692 = vpack.c.b16 %v3510, %v3497
    %v3693 = vpack.c.b16 %v3511, %v3498
    %v3694 = vpack.c.b16 %v3512, %v3499
    %v3695 = vpack.c.b16 %v3513, %v3500
    %v3696 = vpack.c.b16 %v3514, %v3501
    %v3697 = vpack.c.b16 %v3515, %v3502
    %v3698 = vpack.c.b16 %v3516, %v3503
    %v3699 = vpack.c.b16 %v3530, %v3517
    %v3700 = vpack.c.b16 %v3531, %v3518
    %v3701 = vpack.c.b16 %v3532, %v3519
    %v3702 = vpack.c.b16 %v3533, %v3520
    %v3703 = vpack.c.b16 %v3534, %v3521
    %v3704 = vpack.c.b16 %v3535, %v3522
    %v3705 = vpack.c.b16 %v3536, %v3523
    %v3706 = vpack.c.b16 %v3537, %v3524
    %v3707 = vpack.c.b16 %v3538, %v3525
    %v3708 = vpack.c.b16 %v3539, %v3526
    %v3709 = vpack.c.b16 %v3540, %v3527
    %v3710 = vpack.c.b16 %v3541, %v3528
    %v3711 = vpack.c.b16 %v3542, %v3529
    %vm3881 = vcmask 654336
    %v3883 = vsel %vm3881, %v2771, 0
    %3885 = vmatprep.subr.bf16.mxu0 %v3635
    %3886 = vmatpush1.bf16.msra.mxu0 %v3634
    %3887 = vmatprep.subr.bf16.mxu0 %v3622
    %3888 = vmatpush1.bf16.msra.mxu0 %v3621
    %3889 = vmatprep.subr.bf16.mxu0 %v3609
    %3890 = vmatpush1.bf16.msra.mxu0 %v3608
    %3891 = vmatprep.subr.bf16.mxu0 %v3596
    %3892 = vmatpush1.bf16.msra.mxu0 %v3595
    %3893 = vmatprep.subr.bf16.mxu0 %v3583
    %3894 = vmatpush1.bf16.msra.mxu0 %v3582
    %3895 = vmatprep.subr.bf16.mxu0 %v3570
    %3896 = vmatpush1.bf16.msra.mxu0 %v3569
    %3897 = vmatprep.subr.bf16.mxu0 %v3557
    %3898 = vmatpush1.bf16.msra.mxu0 %v3556
    %3899 = vmatprep.subr.bf16.mxu0 %v3544
    %3900 = vmatpush1.bf16.msra.mxu0 %v3543
    %3901 = vmatprep.subr.bf16.mxu0 0
    %3902 = vmatpush2.bf16.msra.mxu0 0
    %3903 = vmatprep.subr.bf16.mxu0 0
    %3904 = vmatpush2.bf16.msra.mxu0 0
    %3905 = vmatprep.subr.bf16.mxu0 0
    %3906 = vmatpush2.bf16.msra.mxu0 0
    %3907 = vmatprep.subr.bf16.mxu0 %v3700
    %3908 = vmatpush2.bf16.msra.mxu0 %v3699
    %3909 = vmatprep.subr.bf16.mxu0 %v3687
    %3910 = vmatpush2.bf16.msra.mxu0 %v3686
    %3911 = vmatprep.subr.bf16.mxu0 %v3674
    %3912 = vmatpush2.bf16.msra.mxu0 %v3673
    %3913 = vmatprep.subr.bf16.mxu0 %v3661
    %3914 = vmatpush2.bf16.msra.mxu0 %v3660
    %3915 = vmatprep.subr.bf16.mxu0 %v3648
    %3916 = vmatpush2.bf16.msra.mxu0 %v3647
    %3917 = vmatprep.mubr.bf16.mxu0 %v3883
    %3918 = vmatmul.mubr.bf16.gmra.mxu0 %v2770
    %v3919 = vpop.f32.mrf.mxu0
    %v3920 = vadd.f32 %v2961, %v3919
    %v3921 = vpop.f32.mrf.mxu0
    %v3922 = vadd.f32 %v2965, %v3921
    %v3923 = vpop.f32.mrf.mxu0
    %v3924 = vpop.f32.mrf.mxu0
    %3925 = vdwg.mxu0
    %3926 = vmatprep.subr.bf16.mxu0 %v3637
    %3927 = vmatpush1.bf16.msra.mxu0 %v3636
    %3928 = vmatprep.subr.bf16.mxu0 %v3624
    %3929 = vmatpush1.bf16.msra.mxu0 %v3623
    %3930 = vmatprep.subr.bf16.mxu0 %v3611
    %3931 = vmatpush1.bf16.msra.mxu0 %v3610
    %3932 = vmatprep.subr.bf16.mxu0 %v3598
    %3933 = vmatpush1.bf16.msra.mxu0 %v3597
    %3934 = vmatprep.subr.bf16.mxu0 %v3585
    %3935 = vmatpush1.bf16.msra.mxu0 %v3584
    %3936 = vmatprep.subr.bf16.mxu0 %v3572
    %3937 = vmatpush1.bf16.msra.mxu0 %v3571
    %3938 = vmatprep.subr.bf16.mxu0 %v3559
    %3939 = vmatpush1.bf16.msra.mxu0 %v3558
    %3940 = vmatprep.subr.bf16.mxu0 %v3546
    %3941 = vmatpush1.bf16.msra.mxu0 %v3545
    %3942 = vmatprep.subr.bf16.mxu0 0
    %3943 = vmatpush2.bf16.msra.mxu0 0
    %3944 = vmatprep.subr.bf16.mxu0 0
    %3945 = vmatpush2.bf16.msra.mxu0 0
    %3946 = vmatprep.subr.bf16.mxu0 0
    %3947 = vmatpush2.bf16.msra.mxu0 0
    %3948 = vmatprep.subr.bf16.mxu0 %v3702
    %3949 = vmatpush2.bf16.msra.mxu0 %v3701
    %3950 = vmatprep.subr.bf16.mxu0 %v3689
    %3951 = vmatpush2.bf16.msra.mxu0 %v3688
    %3952 = vmatprep.subr.bf16.mxu0 %v3676
    %3953 = vmatpush2.bf16.msra.mxu0 %v3675
    %3954 = vmatprep.subr.bf16.mxu0 %v3663
    %3955 = vmatpush2.bf16.msra.mxu0 %v3662
    %3956 = vmatprep.subr.bf16.mxu0 %v3650
    %3957 = vmatpush2.bf16.msra.mxu0 %v3649
    %3958 = vmatprep.mubr.bf16.mxu0 %v3883
    %3959 = vmatmul.mubr.bf16.gmra.mxu0 %v2770
    %v3960 = vpop.f32.mrf.mxu0
    %v3961 = vadd.f32 %v2969, %v3960
    %v3962 = vpop.f32.mrf.mxu0
    %v3963 = vadd.f32 %v2973, %v3962
    %v3964 = vpop.f32.mrf.mxu0
    %v3965 = vpop.f32.mrf.mxu0
    %3966 = vdwg.mxu0
    %3967 = vmatprep.subr.bf16.mxu0 %v3639
    %3968 = vmatpush1.bf16.msra.mxu0 %v3638
    %3969 = vmatprep.subr.bf16.mxu0 %v3626
    %3970 = vmatpush1.bf16.msra.mxu0 %v3625
    %3971 = vmatprep.subr.bf16.mxu0 %v3613
    %3972 = vmatpush1.bf16.msra.mxu0 %v3612
    %3973 = vmatprep.subr.bf16.mxu0 %v3600
    %3974 = vmatpush1.bf16.msra.mxu0 %v3599
    %3975 = vmatprep.subr.bf16.mxu0 %v3587
    %3976 = vmatpush1.bf16.msra.mxu0 %v3586
    %3977 = vmatprep.subr.bf16.mxu0 %v3574
    %3978 = vmatpush1.bf16.msra.mxu0 %v3573
    %3979 = vmatprep.subr.bf16.mxu0 %v3561
    %3980 = vmatpush1.bf16.msra.mxu0 %v3560
    %3981 = vmatprep.subr.bf16.mxu0 %v3548
    %3982 = vmatpush1.bf16.msra.mxu0 %v3547
    %3983 = vmatprep.subr.bf16.mxu0 0
    %3984 = vmatpush2.bf16.msra.mxu0 0
    %3985 = vmatprep.subr.bf16.mxu0 0
    %3986 = vmatpush2.bf16.msra.mxu0 0
    %3987 = vmatprep.subr.bf16.mxu0 0
    %3988 = vmatpush2.bf16.msra.mxu0 0
    %3989 = vmatprep.subr.bf16.mxu0 %v3704
    %3990 = vmatpush2.bf16.msra.mxu0 %v3703
    %3991 = vmatprep.subr.bf16.mxu0 %v3691
    %3992 = vmatpush2.bf16.msra.mxu0 %v3690
    %3993 = vmatprep.subr.bf16.mxu0 %v3678
    %3994 = vmatpush2.bf16.msra.mxu0 %v3677
    %3995 = vmatprep.subr.bf16.mxu0 %v3665
    %3996 = vmatpush2.bf16.msra.mxu0 %v3664
    %3997 = vmatprep.subr.bf16.mxu0 %v3652
    %3998 = vmatpush2.bf16.msra.mxu0 %v3651
    %3999 = vmatprep.mubr.bf16.mxu0 %v3883
    %4000 = vmatmul.mubr.bf16.gmra.mxu0 %v2770
    %v4001 = vpop.f32.mrf.mxu0
    %v4002 = vadd.f32 %v2977, %v4001
    %v4003 = vpop.f32.mrf.mxu0
    %v4004 = vadd.f32 %v2981, %v4003
    %v4005 = vpop.f32.mrf.mxu0
    %v4006 = vpop.f32.mrf.mxu0
    %4007 = vdwg.mxu0
    %4008 = vmatprep.subr.bf16.mxu0 %v3641
    %4009 = vmatpush1.bf16.msra.mxu0 %v3640
    %4010 = vmatprep.subr.bf16.mxu0 %v3628
    %4011 = vmatpush1.bf16.msra.mxu0 %v3627
    %4012 = vmatprep.subr.bf16.mxu0 %v3615
    %4013 = vmatpush1.bf16.msra.mxu0 %v3614
    %4014 = vmatprep.subr.bf16.mxu0 %v3602
    %4015 = vmatpush1.bf16.msra.mxu0 %v3601
    %4016 = vmatprep.subr.bf16.mxu0 %v3589
    %4017 = vmatpush1.bf16.msra.mxu0 %v3588
    %4018 = vmatprep.subr.bf16.mxu0 %v3576
    %4019 = vmatpush1.bf16.msra.mxu0 %v3575
    %4020 = vmatprep.subr.bf16.mxu0 %v3563
    %4021 = vmatpush1.bf16.msra.mxu0 %v3562
    %4022 = vmatprep.subr.bf16.mxu0 %v3550
    %4023 = vmatpush1.bf16.msra.mxu0 %v3549
    %4024 = vmatprep.subr.bf16.mxu0 0
    %4025 = vmatpush2.bf16.msra.mxu0 0
    %4026 = vmatprep.subr.bf16.mxu0 0
    %4027 = vmatpush2.bf16.msra.mxu0 0
    %4028 = vmatprep.subr.bf16.mxu0 0
    %4029 = vmatpush2.bf16.msra.mxu0 0
    %4030 = vmatprep.subr.bf16.mxu0 %v3706
    %4031 = vmatpush2.bf16.msra.mxu0 %v3705
    %4032 = vmatprep.subr.bf16.mxu0 %v3693
    %4033 = vmatpush2.bf16.msra.mxu0 %v3692
    %4034 = vmatprep.subr.bf16.mxu0 %v3680
    %4035 = vmatpush2.bf16.msra.mxu0 %v3679
    %4036 = vmatprep.subr.bf16.mxu0 %v3667
    %4037 = vmatpush2.bf16.msra.mxu0 %v3666
    %4038 = vmatprep.subr.bf16.mxu0 %v3654
    %4039 = vmatpush2.bf16.msra.mxu0 %v3653
    %4040 = vmatprep.mubr.bf16.mxu0 %v3883
    %4041 = vmatmul.mubr.bf16.gmra.mxu0 %v2770
    %v4042 = vpop.f32.mrf.mxu0
    %v4043 = vadd.f32 %v2985, %v4042
    %v4044 = vpop.f32.mrf.mxu0
    %v4045 = vadd.f32 %v2989, %v4044
    %v4046 = vpop.f32.mrf.mxu0
    %v4047 = vpop.f32.mrf.mxu0
    %4048 = vdwg.mxu0
    %4049 = vmatprep.subr.bf16.mxu0 %v3643
    %4050 = vmatpush1.bf16.msra.mxu0 %v3642
    %4051 = vmatprep.subr.bf16.mxu0 %v3630
    %4052 = vmatpush1.bf16.msra.mxu0 %v3629
    %4053 = vmatprep.subr.bf16.mxu0 %v3617
    %4054 = vmatpush1.bf16.msra.mxu0 %v3616
    %4055 = vmatprep.subr.bf16.mxu0 %v3604
    %4056 = vmatpush1.bf16.msra.mxu0 %v3603
    %4057 = vmatprep.subr.bf16.mxu0 %v3591
    %4058 = vmatpush1.bf16.msra.mxu0 %v3590
    %4059 = vmatprep.subr.bf16.mxu0 %v3578
    %4060 = vmatpush1.bf16.msra.mxu0 %v3577
    %4061 = vmatprep.subr.bf16.mxu0 %v3565
    %4062 = vmatpush1.bf16.msra.mxu0 %v3564
    %4063 = vmatprep.subr.bf16.mxu0 %v3552
    %4064 = vmatpush1.bf16.msra.mxu0 %v3551
    %4065 = vmatprep.subr.bf16.mxu0 0
    %4066 = vmatpush2.bf16.msra.mxu0 0
    %4067 = vmatprep.subr.bf16.mxu0 0
    %4068 = vmatpush2.bf16.msra.mxu0 0
    %4069 = vmatprep.subr.bf16.mxu0 0
    %4070 = vmatpush2.bf16.msra.mxu0 0
    %4071 = vmatprep.subr.bf16.mxu0 %v3708
    %4072 = vmatpush2.bf16.msra.mxu0 %v3707
    %4073 = vmatprep.subr.bf16.mxu0 %v3695
    %4074 = vmatpush2.bf16.msra.mxu0 %v3694
    %4075 = vmatprep.subr.bf16.mxu0 %v3682
    %4076 = vmatpush2.bf16.msra.mxu0 %v3681
    %4077 = vmatprep.subr.bf16.mxu0 %v3669
    %4078 = vmatpush2.bf16.msra.mxu0 %v3668
    %4079 = vmatprep.subr.bf16.mxu0 %v3656
    %4080 = vmatpush2.bf16.msra.mxu0 %v3655
    %4081 = vmatprep.mubr.bf16.mxu0 %v3883
    %4082 = vmatmul.mubr.bf16.gmra.mxu0 %v2770
    %v4083 = vpop.f32.mrf.mxu0
    %v4084 = vadd.f32 %v2993, %v4083
    %v4085 = vpop.f32.mrf.mxu0
    %v4086 = vadd.f32 %v2997, %v4085
    %v4087 = vpop.f32.mrf.mxu0
    %v4088 = vpop.f32.mrf.mxu0
    %4089 = vdwg.mxu0
    %4090 = vmatprep.subr.bf16.mxu0 %v3645
    %4091 = vmatpush1.bf16.msra.mxu0 %v3644
    %4092 = vmatprep.subr.bf16.mxu0 %v3632
    %4093 = vmatpush1.bf16.msra.mxu0 %v3631
    %4094 = vmatprep.subr.bf16.mxu0 %v3619
    %4095 = vmatpush1.bf16.msra.mxu0 %v3618
    %4096 = vmatprep.subr.bf16.mxu0 %v3606
    %4097 = vmatpush1.bf16.msra.mxu0 %v3605
    %4098 = vmatprep.subr.bf16.mxu0 %v3593
    %4099 = vmatpush1.bf16.msra.mxu0 %v3592
    %4100 = vmatprep.subr.bf16.mxu0 %v3580
    %4101 = vmatpush1.bf16.msra.mxu0 %v3579
    %4102 = vmatprep.subr.bf16.mxu0 %v3567
    %4103 = vmatpush1.bf16.msra.mxu0 %v3566
    %4104 = vmatprep.subr.bf16.mxu0 %v3554
    %4105 = vmatpush1.bf16.msra.mxu0 %v3553
    %4106 = vmatprep.subr.bf16.mxu0 0
    %4107 = vmatpush2.bf16.msra.mxu0 0
    %4108 = vmatprep.subr.bf16.mxu0 0
    %4109 = vmatpush2.bf16.msra.mxu0 0
    %4110 = vmatprep.subr.bf16.mxu0 0
    %4111 = vmatpush2.bf16.msra.mxu0 0
    %4112 = vmatprep.subr.bf16.mxu0 %v3710
    %4113 = vmatpush2.bf16.msra.mxu0 %v3709
    %4114 = vmatprep.subr.bf16.mxu0 %v3697
    %4115 = vmatpush2.bf16.msra.mxu0 %v3696
    %4116 = vmatprep.subr.bf16.mxu0 %v3684
    %4117 = vmatpush2.bf16.msra.mxu0 %v3683
    %4118 = vmatprep.subr.bf16.mxu0 %v3671
    %4119 = vmatpush2.bf16.msra.mxu0 %v3670
    %4120 = vmatprep.subr.bf16.mxu0 %v3658
    %4121 = vmatpush2.bf16.msra.mxu0 %v3657
    %4122 = vmatprep.mubr.bf16.mxu0 %v3883
    %4123 = vmatmul.mubr.bf16.gmra.mxu0 %v2770
    %v4124 = vpop.f32.mrf.mxu0
    %v4125 = vadd.f32 %v3001, %v4124
    %v4126 = vpop.f32.mrf.mxu0
    %v4127 = vadd.f32 %v3005, %v4126
    %v4128 = vpop.f32.mrf.mxu0
    %v4129 = vpop.f32.mrf.mxu0
    %4130 = vdwg.mxu0
    %4131 = vmatprep.subr.bf16.mxu0 0
    %4132 = vmatpush1.bf16.msra.mxu0 %v3646
    %4133 = vmatprep.subr.bf16.mxu0 0
    %4134 = vmatpush1.bf16.msra.mxu0 %v3633
    %4135 = vmatprep.subr.bf16.mxu0 0
    %4136 = vmatpush1.bf16.msra.mxu0 %v3620
    %4137 = vmatprep.subr.bf16.mxu0 0
    %4138 = vmatpush1.bf16.msra.mxu0 %v3607
    %4139 = vmatprep.subr.bf16.mxu0 0
    %4140 = vmatpush1.bf16.msra.mxu0 %v3594
    %4141 = vmatprep.subr.bf16.mxu0 0
    %4142 = vmatpush1.bf16.msra.mxu0 %v3581
    %4143 = vmatprep.subr.bf16.mxu0 0
    %4144 = vmatpush1.bf16.msra.mxu0 %v3568
    %4145 = vmatprep.subr.bf16.mxu0 0
    %4146 = vmatpush1.bf16.msra.mxu0 %v3555
    %4147 = vmatprep.subr.bf16.mxu0 0
    %4148 = vmatpush2.bf16.msra.mxu0 0
    %4149 = vmatprep.subr.bf16.mxu0 0
    %4150 = vmatpush2.bf16.msra.mxu0 0
    %4151 = vmatprep.subr.bf16.mxu0 0
    %4152 = vmatpush2.bf16.msra.mxu0 0
    %4153 = vmatprep.subr.bf16.mxu0 0
    %4154 = vmatpush2.bf16.msra.mxu0 %v3711
    %4155 = vmatprep.subr.bf16.mxu0 0
    %4156 = vmatpush2.bf16.msra.mxu0 %v3698
    %4157 = vmatprep.subr.bf16.mxu0 0
    %4158 = vmatpush2.bf16.msra.mxu0 %v3685
    %4159 = vmatprep.subr.bf16.mxu0 0
    %4160 = vmatpush2.bf16.msra.mxu0 %v3672
    %4161 = vmatprep.subr.bf16.mxu0 0
    %4162 = vmatpush2.bf16.msra.mxu0 %v3659
    %4163 = vmatprep.mubr.bf16.mxu0 %v3883
    %4164 = vmatmul.mubr.bf16.gmra.mxu0 %v2770
    %v4165 = vpop.f32.mrf.mxu0
    %v4166 = vadd.f32 %v3009, %v4165
    %v4167 = vpop.f32.mrf.mxu0
    %v4168 = vpop.f32.mrf.mxu0
    %v4169 = vpop.f32.mrf.mxu0
    %4170 = vdwg.mxu0
    %v4171 = vxor.u32 %v3920, 2147483648
    %v4172 = vxor.u32 %v3922, 2147483648
    %v4173 = vxor.u32 %v3961, 2147483648
    %v4174 = vxor.u32 %v3963, 2147483648
    %v4175 = vxor.u32 %v4002, 2147483648
    %v4176 = vxor.u32 %v4004, 2147483648
    %v4177 = vxor.u32 %v4043, 2147483648
    %v4178 = vxor.u32 %v4045, 2147483648
    %v4179 = vxor.u32 %v4084, 2147483648
    %v4180 = vxor.u32 %v4086, 2147483648
    %v4181 = vxor.u32 %v4125, 2147483648
    %v4182 = vxor.u32 %v4127, 2147483648
    %v4183 = vxor.u32 %v4166, 2147483648
    %v4184 = vmul.f32 %v4171, 1.442695
    %v4185 = vpow.pop %v4184
    %v4186 = vmul.f32 %v4172, 1.442695
    %v4187 = vpow.pop %v4186
    %v4188 = vmul.f32 %v4173, 1.442695
    %v4189 = vpow.pop %v4188
    %v4190 = vmul.f32 %v4174, 1.442695
    %v4191 = vpow.pop %v4190
    %v4192 = vmul.f32 %v4175, 1.442695
    %v4193 = vpow.pop %v4192
    %v4194 = vmul.f32 %v4176, 1.442695
    %v4195 = vpow.pop %v4194
    %v4196 = vmul.f32 %v4177, 1.442695
    %v4197 = vpow.pop %v4196
    %v4198 = vmul.f32 %v4178, 1.442695
    %v4199 = vpow.pop %v4198
    %v4200 = vmul.f32 %v4179, 1.442695
    %v4201 = vpow.pop %v4200
    %v4202 = vmul.f32 %v4180, 1.442695
    %v4203 = vpow.pop %v4202
    %v4204 = vmul.f32 %v4181, 1.442695
    %v4205 = vpow.pop %v4204
    %v4206 = vmul.f32 %v4182, 1.442695
    %v4207 = vpow.pop %v4206
    %v4208 = vmul.f32 %v4183, 1.442695
    %v4209 = vpow.pop %v4208
    %v4210 = vadd.f32 %v4185, 1.0
    %v4211 = vadd.f32 %v4187, 1.0
    %v4212 = vadd.f32 %v4189, 1.0
    %v4213 = vadd.f32 %v4191, 1.0
    %v4214 = vadd.f32 %v4193, 1.0
    %v4215 = vadd.f32 %v4195, 1.0
    %v4216 = vadd.f32 %v4197, 1.0
    %v4217 = vadd.f32 %v4199, 1.0
    %v4218 = vadd.f32 %v4201, 1.0
    %v4219 = vadd.f32 %v4203, 1.0
    %v4220 = vadd.f32 %v4205, 1.0
    %v4221 = vadd.f32 %v4207, 1.0
    %v4222 = vadd.f32 %v4209, 1.0
    %v4223 = vrcp.pop %v4210
    %v4224 = vmul.f32 1.0, %v4223
    %v4225 = vrcp.pop %v4211
    %v4226 = vmul.f32 1.0, %v4225
    %v4227 = vrcp.pop %v4212
    %v4228 = vmul.f32 1.0, %v4227
    %v4229 = vrcp.pop %v4213
    %v4230 = vmul.f32 1.0, %v4229
    %v4231 = vrcp.pop %v4214
    %v4232 = vmul.f32 1.0, %v4231
    %v4233 = vrcp.pop %v4215
    %v4234 = vmul.f32 1.0, %v4233
    %v4235 = vrcp.pop %v4216
    %v4236 = vmul.f32 1.0, %v4235
    %v4237 = vrcp.pop %v4217
    %v4238 = vmul.f32 1.0, %v4237
    %v4239 = vrcp.pop %v4218
    %v4240 = vmul.f32 1.0, %v4239
    %v4241 = vrcp.pop %v4219
    %v4242 = vmul.f32 1.0, %v4241
    %v4243 = vrcp.pop %v4220
    %v4244 = vmul.f32 1.0, %v4243
    %v4245 = vrcp.pop %v4221
    %v4246 = vmul.f32 1.0, %v4245
    %v4247 = vrcp.pop %v4222
    %v4248 = vmul.f32 1.0, %v4247
    %v4249 = vld [vmem:[%s10] sm:$0xff]
    %v4250 = vld [vmem:[%s10 + $0x8] sm:$0xff]
    %v4251 = vld [vmem:[%s10 + $0x10] sm:$0xff]
    %v4252 = vld [vmem:[%s10 + $0x18] sm:$0xff]
    %v4253 = vld [vmem:[%s10 + $0x20] sm:$0xff]
    %v4254 = vld [vmem:[%s10 + $0x28] sm:$0xff]
    %v4255 = vld [vmem:[%s10 + $0x30] sm:$0xff]
    %v4256 = vld [vmem:[%s10 + $0x38] sm:$0xff]
    %v4257 = vld [vmem:[%s10 + $0x40] sm:$0xff]
    %v4258 = vld [vmem:[%s10 + $0x48] sm:$0xff]
    %v4259 = vld [vmem:[%s10 + $0x50] sm:$0xff]
    %v4260 = vld [vmem:[%s10 + $0x58] sm:$0xff]
    %v4261 = vld [vmem:[%s10 + $0x60] sm:$0xff]
    %v4262 = vmul.f32 %v391, %v4249
    %v4263 = vmul.f32 %v393, %v4250
    %v4264 = vmul.f32 %v432, %v4251
    %v4265 = vmul.f32 %v434, %v4252
    %v4266 = vmul.f32 %v473, %v4253
    %v4267 = vmul.f32 %v475, %v4254
    %v4268 = vmul.f32 %v514, %v4255
    %v4269 = vmul.f32 %v516, %v4256
    %v4270 = vmul.f32 %v555, %v4257
    %v4271 = vmul.f32 %v557, %v4258
    %v4272 = vmul.f32 %v596, %v4259
    %v4273 = vmul.f32 %v598, %v4260
    %v4274 = vmul.f32 %v637, %v4261
    %4275 = vmatprep.subr.mxu0 0.0
    %4276 = vmatpush1.msra.mxu0 0.0
    %4277 = vmatprep.subr.mxu0 0.0
    %4278 = vmatpush1.msra.mxu0 0.0
    %4279 = vmatprep.subr.mxu0 0.0
    %4280 = vmatpush1.msra.mxu0 0.0
    %4281 = vmatprep.subr.mxu0 0.0
    %4282 = vmatpush1.msra.mxu0 0.0
    %4283 = vmatprep.subr.mxu0 0.0
    %4284 = vmatpush1.msra.mxu0 0.0
    %4285 = vmatprep.subr.mxu0 0.0
    %4286 = vmatpush1.msra.mxu0 0.0
    %4287 = vmatprep.subr.mxu0 0.0
    %4288 = vmatpush1.msra.mxu0 0.0
    %4289 = vmatprep.subr.mxu0 0.0
    %4290 = vmatpush1.msra.mxu0 0.0
    %4291 = vmatprep.subr.mxu0 0.0
    %4292 = vmatpush1.msra.mxu0 0.0
    %4293 = vmatprep.subr.mxu0 0.0
    %4294 = vmatpush1.msra.mxu0 0.0
    %4295 = vmatprep.subr.mxu0 0.0
    %4296 = vmatpush1.msra.mxu0 0.0
    %4297 = vmatprep.subr.mxu0 0.0
    %4298 = vmatpush1.msra.mxu0 0.0
    %4299 = vmatprep.subr.mxu0 0.0
    %4300 = vmatpush1.msra.mxu0 0.0
    %4301 = vmatprep.subr.mxu0 0.0
    %4302 = vmatpush1.msra.mxu0 0.0
    %4303 = vmatprep.subr.mxu0 0.0
    %4304 = vmatpush1.msra.mxu0 0.0
    %4305 = vmatprep.subr.mxu0 %v4263
    %4306 = vmatpush1.msra.mxu0 %v4262
    %4307 = vmatprep.subr.mxu0 0.0
    %4308 = vmatpush2.msra.mxu0 0.0
    %4309 = vmatprep.subr.mxu0 0.0
    %4310 = vmatpush2.msra.mxu0 0.0
    %4311 = vmatprep.subr.mxu0 0.0
    %4312 = vmatpush2.msra.mxu0 0.0
    %4313 = vmatprep.subr.mxu0 0.0
    %4314 = vmatpush2.msra.mxu0 0.0
    %4315 = vmatprep.subr.mxu0 0.0
    %4316 = vmatpush2.msra.mxu0 0.0
    %4317 = vmatprep.subr.mxu0 0.0
    %4318 = vmatpush2.msra.mxu0 0.0
    %4319 = vmatprep.subr.mxu0 0.0
    %4320 = vmatpush2.msra.mxu0 0.0
    %4321 = vmatprep.subr.mxu0 0.0
    %4322 = vmatpush2.msra.mxu0 0.0
    %4323 = vmatprep.subr.mxu0 0.0
    %4324 = vmatpush2.msra.mxu0 0.0
    %4325 = vmatprep.subr.mxu0 0.0
    %4326 = vmatpush2.msra.mxu0 0.0
    %4327 = vmatprep.subr.mxu0 0.0
    %4328 = vmatpush2.msra.mxu0 0.0
    %4329 = vmatprep.subr.mxu0 0.0
    %4330 = vmatpush2.msra.mxu0 0.0
    %4331 = vmatprep.subr.mxu0 0.0
    %4332 = vmatpush2.msra.mxu0 0.0
    %4333 = vmatprep.subr.mxu0 0.0
    %4334 = vmatpush2.msra.mxu0 0.0
    %4335 = vmatprep.subr.mxu0 0.0
    %4336 = vmatpush2.msra.mxu0 0.0
    %4337 = vmatprep.subr.mxu0 0.0
    %4338 = vmatpush2.msra.mxu0 0.0
    %4339 = vmatprep.mubr.f32.mxu0 0.0
    %4340 = vmatmul.mubr.f32.gmra.mxu0 %v710
    %v4341 = vpop.f32.mrf.mxu0
    %v4342 = vadd.f32 0.0, %v4341
    %v4343 = vpop.f32.mrf.mxu0
    %v4344 = vadd.f32 0.0, %v4343
    %4345 = vdwg.mxu0
    %4346 = vmatprep.subr.mxu0 0.0
    %4347 = vmatpush1.msra.mxu0 0.0
    %4348 = vmatprep.subr.mxu0 0.0
    %4349 = vmatpush1.msra.mxu0 0.0
    %4350 = vmatprep.subr.mxu0 0.0
    %4351 = vmatpush1.msra.mxu0 0.0
    %4352 = vmatprep.subr.mxu0 0.0
    %4353 = vmatpush1.msra.mxu0 0.0
    %4354 = vmatprep.subr.mxu0 0.0
    %4355 = vmatpush1.msra.mxu0 0.0
    %4356 = vmatprep.subr.mxu0 0.0
    %4357 = vmatpush1.msra.mxu0 0.0
    %4358 = vmatprep.subr.mxu0 0.0
    %4359 = vmatpush1.msra.mxu0 0.0
    %4360 = vmatprep.subr.mxu0 0.0
    %4361 = vmatpush1.msra.mxu0 0.0
    %4362 = vmatprep.subr.mxu0 0.0
    %4363 = vmatpush1.msra.mxu0 0.0
    %4364 = vmatprep.subr.mxu0 0.0
    %4365 = vmatpush1.msra.mxu0 0.0
    %4366 = vmatprep.subr.mxu0 0.0
    %4367 = vmatpush1.msra.mxu0 0.0
    %4368 = vmatprep.subr.mxu0 0.0
    %4369 = vmatpush1.msra.mxu0 0.0
    %4370 = vmatprep.subr.mxu0 0.0
    %4371 = vmatpush1.msra.mxu0 0.0
    %4372 = vmatprep.subr.mxu0 0.0
    %4373 = vmatpush1.msra.mxu0 0.0
    %4374 = vmatprep.subr.mxu0 0.0
    %4375 = vmatpush1.msra.mxu0 0.0
    %4376 = vmatprep.subr.mxu0 %v4265
    %4377 = vmatpush1.msra.mxu0 %v4264
    %4378 = vmatprep.subr.mxu0 0.0
    %4379 = vmatpush2.msra.mxu0 0.0
    %4380 = vmatprep.subr.mxu0 0.0
    %4381 = vmatpush2.msra.mxu0 0.0
    %4382 = vmatprep.subr.mxu0 0.0
    %4383 = vmatpush2.msra.mxu0 0.0
    %4384 = vmatprep.subr.mxu0 0.0
    %4385 = vmatpush2.msra.mxu0 0.0
    %4386 = vmatprep.subr.mxu0 0.0
    %4387 = vmatpush2.msra.mxu0 0.0
    %4388 = vmatprep.subr.mxu0 0.0
    %4389 = vmatpush2.msra.mxu0 0.0
    %4390 = vmatprep.subr.mxu0 0.0
    %4391 = vmatpush2.msra.mxu0 0.0
    %4392 = vmatprep.subr.mxu0 0.0
    %4393 = vmatpush2.msra.mxu0 0.0
    %4394 = vmatprep.subr.mxu0 0.0
    %4395 = vmatpush2.msra.mxu0 0.0
    %4396 = vmatprep.subr.mxu0 0.0
    %4397 = vmatpush2.msra.mxu0 0.0
    %4398 = vmatprep.subr.mxu0 0.0
    %4399 = vmatpush2.msra.mxu0 0.0
    %4400 = vmatprep.subr.mxu0 0.0
    %4401 = vmatpush2.msra.mxu0 0.0
    %4402 = vmatprep.subr.mxu0 0.0
    %4403 = vmatpush2.msra.mxu0 0.0
    %4404 = vmatprep.subr.mxu0 0.0
    %4405 = vmatpush2.msra.mxu0 0.0
    %4406 = vmatprep.subr.mxu0 0.0
    %4407 = vmatpush2.msra.mxu0 0.0
    %4408 = vmatprep.subr.mxu0 0.0
    %4409 = vmatpush2.msra.mxu0 0.0
    %4410 = vmatprep.mubr.f32.mxu0 0.0
    %4411 = vmatmul.mubr.f32.gmra.mxu0 %v710
    %v4412 = vpop.f32.mrf.mxu0
    %v4413 = vadd.f32 0.0, %v4412
    %v4414 = vpop.f32.mrf.mxu0
    %v4415 = vadd.f32 0.0, %v4414
    %4416 = vdwg.mxu0
    %4417 = vmatprep.subr.mxu0 0.0
    %4418 = vmatpush1.msra.mxu0 0.0
    %4419 = vmatprep.subr.mxu0 0.0
    %4420 = vmatpush1.msra.mxu0 0.0
    %4421 = vmatprep.subr.mxu0 0.0
    %4422 = vmatpush1.msra.mxu0 0.0
    %4423 = vmatprep.subr.mxu0 0.0
    %4424 = vmatpush1.msra.mxu0 0.0
    %4425 = vmatprep.subr.mxu0 0.0
    %4426 = vmatpush1.msra.mxu0 0.0
    %4427 = vmatprep.subr.mxu0 0.0
    %4428 = vmatpush1.msra.mxu0 0.0
    %4429 = vmatprep.subr.mxu0 0.0
    %4430 = vmatpush1.msra.mxu0 0.0
    %4431 = vmatprep.subr.mxu0 0.0
    %4432 = vmatpush1.msra.mxu0 0.0
    %4433 = vmatprep.subr.mxu0 0.0
    %4434 = vmatpush1.msra.mxu0 0.0
    %4435 = vmatprep.subr.mxu0 0.0
    %4436 = vmatpush1.msra.mxu0 0.0
    %4437 = vmatprep.subr.mxu0 0.0
    %4438 = vmatpush1.msra.mxu0 0.0
    %4439 = vmatprep.subr.mxu0 0.0
    %4440 = vmatpush1.msra.mxu0 0.0
    %4441 = vmatprep.subr.mxu0 0.0
    %4442 = vmatpush1.msra.mxu0 0.0
    %4443 = vmatprep.subr.mxu0 0.0
    %4444 = vmatpush1.msra.mxu0 0.0
    %4445 = vmatprep.subr.mxu0 0.0
    %4446 = vmatpush1.msra.mxu0 0.0
    %4447 = vmatprep.subr.mxu0 %v4267
    %4448 = vmatpush1.msra.mxu0 %v4266
    %4449 = vmatprep.subr.mxu0 0.0
    %4450 = vmatpush2.msra.mxu0 0.0
    %4451 = vmatprep.subr.mxu0 0.0
    %4452 = vmatpush2.msra.mxu0 0.0
    %4453 = vmatprep.subr.mxu0 0.0
    %4454 = vmatpush2.msra.mxu0 0.0
    %4455 = vmatprep.subr.mxu0 0.0
    %4456 = vmatpush2.msra.mxu0 0.0
    %4457 = vmatprep.subr.mxu0 0.0
    %4458 = vmatpush2.msra.mxu0 0.0
    %4459 = vmatprep.subr.mxu0 0.0
    %4460 = vmatpush2.msra.mxu0 0.0
    %4461 = vmatprep.subr.mxu0 0.0
    %4462 = vmatpush2.msra.mxu0 0.0
    %4463 = vmatprep.subr.mxu0 0.0
    %4464 = vmatpush2.msra.mxu0 0.0
    %4465 = vmatprep.subr.mxu0 0.0
    %4466 = vmatpush2.msra.mxu0 0.0
    %4467 = vmatprep.subr.mxu0 0.0
    %4468 = vmatpush2.msra.mxu0 0.0
    %4469 = vmatprep.subr.mxu0 0.0
    %4470 = vmatpush2.msra.mxu0 0.0
    %4471 = vmatprep.subr.mxu0 0.0
    %4472 = vmatpush2.msra.mxu0 0.0
    %4473 = vmatprep.subr.mxu0 0.0
    %4474 = vmatpush2.msra.mxu0 0.0
    %4475 = vmatprep.subr.mxu0 0.0
    %4476 = vmatpush2.msra.mxu0 0.0
    %4477 = vmatprep.subr.mxu0 0.0
    %4478 = vmatpush2.msra.mxu0 0.0
    %4479 = vmatprep.subr.mxu0 0.0
    %4480 = vmatpush2.msra.mxu0 0.0
    %4481 = vmatprep.mubr.f32.mxu0 0.0
    %4482 = vmatmul.mubr.f32.gmra.mxu0 %v710
    %v4483 = vpop.f32.mrf.mxu0
    %v4484 = vadd.f32 0.0, %v4483
    %v4485 = vpop.f32.mrf.mxu0
    %v4486 = vadd.f32 0.0, %v4485
    %4487 = vdwg.mxu0
    %4488 = vmatprep.subr.mxu0 0.0
    %4489 = vmatpush1.msra.mxu0 0.0
    %4490 = vmatprep.subr.mxu0 0.0
    %4491 = vmatpush1.msra.mxu0 0.0
    %4492 = vmatprep.subr.mxu0 0.0
    %4493 = vmatpush1.msra.mxu0 0.0
    %4494 = vmatprep.subr.mxu0 0.0
    %4495 = vmatpush1.msra.mxu0 0.0
    %4496 = vmatprep.subr.mxu0 0.0
    %4497 = vmatpush1.msra.mxu0 0.0
    %4498 = vmatprep.subr.mxu0 0.0
    %4499 = vmatpush1.msra.mxu0 0.0
    %4500 = vmatprep.subr.mxu0 0.0
    %4501 = vmatpush1.msra.mxu0 0.0
    %4502 = vmatprep.subr.mxu0 0.0
    %4503 = vmatpush1.msra.mxu0 0.0
    %4504 = vmatprep.subr.mxu0 0.0
    %4505 = vmatpush1.msra.mxu0 0.0
    %4506 = vmatprep.subr.mxu0 0.0
    %4507 = vmatpush1.msra.mxu0 0.0
    %4508 = vmatprep.subr.mxu0 0.0
    %4509 = vmatpush1.msra.mxu0 0.0
    %4510 = vmatprep.subr.mxu0 0.0
    %4511 = vmatpush1.msra.mxu0 0.0
    %4512 = vmatprep.subr.mxu0 0.0
    %4513 = vmatpush1.msra.mxu0 0.0
    %4514 = vmatprep.subr.mxu0 0.0
    %4515 = vmatpush1.msra.mxu0 0.0
    %4516 = vmatprep.subr.mxu0 0.0
    %4517 = vmatpush1.msra.mxu0 0.0
    %4518 = vmatprep.subr.mxu0 %v4269
    %4519 = vmatpush1.msra.mxu0 %v4268
    %4520 = vmatprep.subr.mxu0 0.0
    %4521 = vmatpush2.msra.mxu0 0.0
    %4522 = vmatprep.subr.mxu0 0.0
    %4523 = vmatpush2.msra.mxu0 0.0
    %4524 = vmatprep.subr.mxu0 0.0
    %4525 = vmatpush2.msra.mxu0 0.0
    %4526 = vmatprep.subr.mxu0 0.0
    %4527 = vmatpush2.msra.mxu0 0.0
    %4528 = vmatprep.subr.mxu0 0.0
    %4529 = vmatpush2.msra.mxu0 0.0
    %4530 = vmatprep.subr.mxu0 0.0
    %4531 = vmatpush2.msra.mxu0 0.0
    %4532 = vmatprep.subr.mxu0 0.0
    %4533 = vmatpush2.msra.mxu0 0.0
    %4534 = vmatprep.subr.mxu0 0.0
    %4535 = vmatpush2.msra.mxu0 0.0
    %4536 = vmatprep.subr.mxu0 0.0
    %4537 = vmatpush2.msra.mxu0 0.0
    %4538 = vmatprep.subr.mxu0 0.0
    %4539 = vmatpush2.msra.mxu0 0.0
    %4540 = vmatprep.subr.mxu0 0.0
    %4541 = vmatpush2.msra.mxu0 0.0
    %4542 = vmatprep.subr.mxu0 0.0
    %4543 = vmatpush2.msra.mxu0 0.0
    %4544 = vmatprep.subr.mxu0 0.0
    %4545 = vmatpush2.msra.mxu0 0.0
    %4546 = vmatprep.subr.mxu0 0.0
    %4547 = vmatpush2.msra.mxu0 0.0
    %4548 = vmatprep.subr.mxu0 0.0
    %4549 = vmatpush2.msra.mxu0 0.0
    %4550 = vmatprep.subr.mxu0 0.0
    %4551 = vmatpush2.msra.mxu0 0.0
    %4552 = vmatprep.mubr.f32.mxu0 0.0
    %4553 = vmatmul.mubr.f32.gmra.mxu0 %v710
    %v4554 = vpop.f32.mrf.mxu0
    %v4555 = vadd.f32 0.0, %v4554
    %v4556 = vpop.f32.mrf.mxu0
    %v4557 = vadd.f32 0.0, %v4556
    %4558 = vdwg.mxu0
    %4559 = vmatprep.subr.mxu0 0.0
    %4560 = vmatpush1.msra.mxu0 0.0
    %4561 = vmatprep.subr.mxu0 0.0
    %4562 = vmatpush1.msra.mxu0 0.0
    %4563 = vmatprep.subr.mxu0 0.0
    %4564 = vmatpush1.msra.mxu0 0.0
    %4565 = vmatprep.subr.mxu0 0.0
    %4566 = vmatpush1.msra.mxu0 0.0
    %4567 = vmatprep.subr.mxu0 0.0
    %4568 = vmatpush1.msra.mxu0 0.0
    %4569 = vmatprep.subr.mxu0 0.0
    %4570 = vmatpush1.msra.mxu0 0.0
    %4571 = vmatprep.subr.mxu0 0.0
    %4572 = vmatpush1.msra.mxu0 0.0
    %4573 = vmatprep.subr.mxu0 0.0
    %4574 = vmatpush1.msra.mxu0 0.0
    %4575 = vmatprep.subr.mxu0 0.0
    %4576 = vmatpush1.msra.mxu0 0.0
    %4577 = vmatprep.subr.mxu0 0.0
    %4578 = vmatpush1.msra.mxu0 0.0
    %4579 = vmatprep.subr.mxu0 0.0
    %4580 = vmatpush1.msra.mxu0 0.0
    %4581 = vmatprep.subr.mxu0 0.0
    %4582 = vmatpush1.msra.mxu0 0.0
    %4583 = vmatprep.subr.mxu0 0.0
    %4584 = vmatpush1.msra.mxu0 0.0
    %4585 = vmatprep.subr.mxu0 0.0
    %4586 = vmatpush1.msra.mxu0 0.0
    %4587 = vmatprep.subr.mxu0 0.0
    %4588 = vmatpush1.msra.mxu0 0.0
    %4589 = vmatprep.subr.mxu0 %v4271
    %4590 = vmatpush1.msra.mxu0 %v4270
    %4591 = vmatprep.subr.mxu0 0.0
    %4592 = vmatpush2.msra.mxu0 0.0
    %4593 = vmatprep.subr.mxu0 0.0
    %4594 = vmatpush2.msra.mxu0 0.0
    %4595 = vmatprep.subr.mxu0 0.0
    %4596 = vmatpush2.msra.mxu0 0.0
    %4597 = vmatprep.subr.mxu0 0.0
    %4598 = vmatpush2.msra.mxu0 0.0
    %4599 = vmatprep.subr.mxu0 0.0
    %4600 = vmatpush2.msra.mxu0 0.0
    %4601 = vmatprep.subr.mxu0 0.0
    %4602 = vmatpush2.msra.mxu0 0.0
    %4603 = vmatprep.subr.mxu0 0.0
    %4604 = vmatpush2.msra.mxu0 0.0
    %4605 = vmatprep.subr.mxu0 0.0
    %4606 = vmatpush2.msra.mxu0 0.0
    %4607 = vmatprep.subr.mxu0 0.0
    %4608 = vmatpush2.msra.mxu0 0.0
    %4609 = vmatprep.subr.mxu0 0.0
    %4610 = vmatpush2.msra.mxu0 0.0
    %4611 = vmatprep.subr.mxu0 0.0
    %4612 = vmatpush2.msra.mxu0 0.0
    %4613 = vmatprep.subr.mxu0 0.0
    %4614 = vmatpush2.msra.mxu0 0.0
    %4615 = vmatprep.subr.mxu0 0.0
    %4616 = vmatpush2.msra.mxu0 0.0
    %4617 = vmatprep.subr.mxu0 0.0
    %4618 = vmatpush2.msra.mxu0 0.0
    %4619 = vmatprep.subr.mxu0 0.0
    %4620 = vmatpush2.msra.mxu0 0.0
    %4621 = vmatprep.subr.mxu0 0.0
    %4622 = vmatpush2.msra.mxu0 0.0
    %4623 = vmatprep.mubr.f32.mxu0 0.0
    %4624 = vmatmul.mubr.f32.gmra.mxu0 %v710
    %v4625 = vpop.f32.mrf.mxu0
    %v4626 = vadd.f32 0.0, %v4625
    %v4627 = vpop.f32.mrf.mxu0
    %v4628 = vadd.f32 0.0, %v4627
    %4629 = vdwg.mxu0
    %4630 = vmatprep.subr.mxu0 0.0
    %4631 = vmatpush1.msra.mxu0 0.0
    %4632 = vmatprep.subr.mxu0 0.0
    %4633 = vmatpush1.msra.mxu0 0.0
    %4634 = vmatprep.subr.mxu0 0.0
    %4635 = vmatpush1.msra.mxu0 0.0
    %4636 = vmatprep.subr.mxu0 0.0
    %4637 = vmatpush1.msra.mxu0 0.0
    %4638 = vmatprep.subr.mxu0 0.0
    %4639 = vmatpush1.msra.mxu0 0.0
    %4640 = vmatprep.subr.mxu0 0.0
    %4641 = vmatpush1.msra.mxu0 0.0
    %4642 = vmatprep.subr.mxu0 0.0
    %4643 = vmatpush1.msra.mxu0 0.0
    %4644 = vmatprep.subr.mxu0 0.0
    %4645 = vmatpush1.msra.mxu0 0.0
    %4646 = vmatprep.subr.mxu0 0.0
    %4647 = vmatpush1.msra.mxu0 0.0
    %4648 = vmatprep.subr.mxu0 0.0
    %4649 = vmatpush1.msra.mxu0 0.0
    %4650 = vmatprep.subr.mxu0 0.0
    %4651 = vmatpush1.msra.mxu0 0.0
    %4652 = vmatprep.subr.mxu0 0.0
    %4653 = vmatpush1.msra.mxu0 0.0
    %4654 = vmatprep.subr.mxu0 0.0
    %4655 = vmatpush1.msra.mxu0 0.0
    %4656 = vmatprep.subr.mxu0 0.0
    %4657 = vmatpush1.msra.mxu0 0.0
    %4658 = vmatprep.subr.mxu0 0.0
    %4659 = vmatpush1.msra.mxu0 0.0
    %4660 = vmatprep.subr.mxu0 %v4273
    %4661 = vmatpush1.msra.mxu0 %v4272
    %4662 = vmatprep.subr.mxu0 0.0
    %4663 = vmatpush2.msra.mxu0 0.0
    %4664 = vmatprep.subr.mxu0 0.0
    %4665 = vmatpush2.msra.mxu0 0.0
    %4666 = vmatprep.subr.mxu0 0.0
    %4667 = vmatpush2.msra.mxu0 0.0
    %4668 = vmatprep.subr.mxu0 0.0
    %4669 = vmatpush2.msra.mxu0 0.0
    %4670 = vmatprep.subr.mxu0 0.0
    %4671 = vmatpush2.msra.mxu0 0.0
    %4672 = vmatprep.subr.mxu0 0.0
    %4673 = vmatpush2.msra.mxu0 0.0
    %4674 = vmatprep.subr.mxu0 0.0
    %4675 = vmatpush2.msra.mxu0 0.0
    %4676 = vmatprep.subr.mxu0 0.0
    %4677 = vmatpush2.msra.mxu0 0.0
    %4678 = vmatprep.subr.mxu0 0.0
    %4679 = vmatpush2.msra.mxu0 0.0
    %4680 = vmatprep.subr.mxu0 0.0
    %4681 = vmatpush2.msra.mxu0 0.0
    %4682 = vmatprep.subr.mxu0 0.0
    %4683 = vmatpush2.msra.mxu0 0.0
    %4684 = vmatprep.subr.mxu0 0.0
    %4685 = vmatpush2.msra.mxu0 0.0
    %4686 = vmatprep.subr.mxu0 0.0
    %4687 = vmatpush2.msra.mxu0 0.0
    %4688 = vmatprep.subr.mxu0 0.0
    %4689 = vmatpush2.msra.mxu0 0.0
    %4690 = vmatprep.subr.mxu0 0.0
    %4691 = vmatpush2.msra.mxu0 0.0
    %4692 = vmatprep.subr.mxu0 0.0
    %4693 = vmatpush2.msra.mxu0 0.0
    %4694 = vmatprep.mubr.f32.mxu0 0.0
    %4695 = vmatmul.mubr.f32.gmra.mxu0 %v710
    %v4696 = vpop.f32.mrf.mxu0
    %v4697 = vadd.f32 0.0, %v4696
    %v4698 = vpop.f32.mrf.mxu0
    %v4699 = vadd.f32 0.0, %v4698
    %4700 = vdwg.mxu0
    %4701 = vmatprep.subr.mxu0 0.0
    %4702 = vmatpush1.msra.mxu0 0.0
    %4703 = vmatprep.subr.mxu0 0.0
    %4704 = vmatpush1.msra.mxu0 0.0
    %4705 = vmatprep.subr.mxu0 0.0
    %4706 = vmatpush1.msra.mxu0 0.0
    %4707 = vmatprep.subr.mxu0 0.0
    %4708 = vmatpush1.msra.mxu0 0.0
    %4709 = vmatprep.subr.mxu0 0.0
    %4710 = vmatpush1.msra.mxu0 0.0
    %4711 = vmatprep.subr.mxu0 0.0
    %4712 = vmatpush1.msra.mxu0 0.0
    %4713 = vmatprep.subr.mxu0 0.0
    %4714 = vmatpush1.msra.mxu0 0.0
    %4715 = vmatprep.subr.mxu0 0.0
    %4716 = vmatpush1.msra.mxu0 0.0
    %4717 = vmatprep.subr.mxu0 0.0
    %4718 = vmatpush1.msra.mxu0 0.0
    %4719 = vmatprep.subr.mxu0 0.0
    %4720 = vmatpush1.msra.mxu0 0.0
    %4721 = vmatprep.subr.mxu0 0.0
    %4722 = vmatpush1.msra.mxu0 0.0
    %4723 = vmatprep.subr.mxu0 0.0
    %4724 = vmatpush1.msra.mxu0 0.0
    %4725 = vmatprep.subr.mxu0 0.0
    %4726 = vmatpush1.msra.mxu0 0.0
    %4727 = vmatprep.subr.mxu0 0.0
    %4728 = vmatpush1.msra.mxu0 0.0
    %4729 = vmatprep.subr.mxu0 0.0
    %4730 = vmatpush1.msra.mxu0 0.0
    %4731 = vmatprep.subr.mxu0 0.0
    %4732 = vmatpush1.msra.mxu0 %v4274
    %4733 = vmatprep.subr.mxu0 0.0
    %4734 = vmatpush2.msra.mxu0 0.0
    %4735 = vmatprep.subr.mxu0 0.0
    %4736 = vmatpush2.msra.mxu0 0.0
    %4737 = vmatprep.subr.mxu0 0.0
    %4738 = vmatpush2.msra.mxu0 0.0
    %4739 = vmatprep.subr.mxu0 0.0
    %4740 = vmatpush2.msra.mxu0 0.0
    %4741 = vmatprep.subr.mxu0 0.0
    %4742 = vmatpush2.msra.mxu0 0.0
    %4743 = vmatprep.subr.mxu0 0.0
    %4744 = vmatpush2.msra.mxu0 0.0
    %4745 = vmatprep.subr.mxu0 0.0
    %4746 = vmatpush2.msra.mxu0 0.0
    %4747 = vmatprep.subr.mxu0 0.0
    %4748 = vmatpush2.msra.mxu0 0.0
    %4749 = vmatprep.subr.mxu0 0.0
    %4750 = vmatpush2.msra.mxu0 0.0
    %4751 = vmatprep.subr.mxu0 0.0
    %4752 = vmatpush2.msra.mxu0 0.0
    %4753 = vmatprep.subr.mxu0 0.0
    %4754 = vmatpush2.msra.mxu0 0.0
    %4755 = vmatprep.subr.mxu0 0.0
    %4756 = vmatpush2.msra.mxu0 0.0
    %4757 = vmatprep.subr.mxu0 0.0
    %4758 = vmatpush2.msra.mxu0 0.0
    %4759 = vmatprep.subr.mxu0 0.0
    %4760 = vmatpush2.msra.mxu0 0.0
    %4761 = vmatprep.subr.mxu0 0.0
    %4762 = vmatpush2.msra.mxu0 0.0
    %4763 = vmatprep.subr.mxu0 0.0
    %4764 = vmatpush2.msra.mxu0 0.0
    %4765 = vmatprep.mubr.f32.mxu0 0.0
    %4766 = vmatmul.mubr.f32.gmra.mxu0 %v710
    %v4767 = vpop.f32.mrf.mxu0
    %v4768 = vadd.f32 0.0, %v4767
    %v4769 = vpop.f32.mrf.mxu0
    %4770 = vdwg.mxu0
    %v4771 = vmul.f32 %v4224, %v4342
    %v4772 = vmul.f32 %v4226, %v4344
    %v4773 = vmul.f32 %v4228, %v4413
    %v4774 = vmul.f32 %v4230, %v4415
    %v4775 = vmul.f32 %v4232, %v4484
    %v4776 = vmul.f32 %v4234, %v4486
    %v4777 = vmul.f32 %v4236, %v4555
    %v4778 = vmul.f32 %v4238, %v4557
    %v4779 = vmul.f32 %v4240, %v4626
    %v4780 = vmul.f32 %v4242, %v4628
    %v4781 = vmul.f32 %v4244, %v4697
    %v4782 = vmul.f32 %v4246, %v4699
    %v4783 = vmul.f32 %v4248, %v4768
    %v4784 = vld [vmem:[%s11] sm:$0xff]
    %v4785 = vld [vmem:[%s11 + $0x8] sm:$0x1f]
    %v4788 = vlaneseq
    %v4789 = vshrl.u32 %v4788, 7
    %v4790 = vsub.s32 0, %v4789
    %v4791 = vrot.slane %v4784, %v4790
    %v4792 = vlaneseq
    %v4793 = vshrl.u32 %v4792, 7
    %v4794 = vsub.s32 1, %v4793
    %v4795 = vrot.slane %v4784, %v4794
    %v4796 = vlaneseq
    %v4797 = vshrl.u32 %v4796, 7
    %v4798 = vsub.s32 2, %v4797
    %v4799 = vrot.slane %v4784, %v4798
    %v4800 = vlaneseq
    %v4801 = vshrl.u32 %v4800, 7
    %v4802 = vsub.s32 3, %v4801
    %v4803 = vrot.slane %v4784, %v4802
    %v4804 = vlaneseq
    %v4805 = vshrl.u32 %v4804, 7
    %v4806 = vsub.s32 4, %v4805
    %v4807 = vrot.slane %v4784, %v4806
    %v4808 = vlaneseq
    %v4809 = vshrl.u32 %v4808, 7
    %v4810 = vsub.s32 5, %v4809
    %v4811 = vrot.slane %v4784, %v4810
    %v4812 = vlaneseq
    %v4813 = vshrl.u32 %v4812, 7
    %v4814 = vsub.s32 6, %v4813
    %v4815 = vrot.slane %v4784, %v4814
    %v4816 = vlaneseq
    %v4817 = vshrl.u32 %v4816, 7
    %v4818 = vsub.s32 7, %v4817
    %v4819 = vrot.slane %v4784, %v4818
    %v4820 = vlaneseq
    %v4821 = vshrl.u32 %v4820, 7
    %v4822 = vsub.s32 0, %v4821
    %v4823 = vrot.slane %v4785, %v4822
    %v4824 = vlaneseq
    %v4825 = vshrl.u32 %v4824, 7
    %v4826 = vsub.s32 1, %v4825
    %v4827 = vrot.slane %v4785, %v4826
    %v4828 = vlaneseq
    %v4829 = vshrl.u32 %v4828, 7
    %v4830 = vsub.s32 2, %v4829
    %v4831 = vrot.slane %v4785, %v4830
    %v4832 = vlaneseq
    %v4833 = vshrl.u32 %v4832, 7
    %v4834 = vsub.s32 3, %v4833
    %v4835 = vrot.slane %v4785, %v4834
    %v4836 = vlaneseq
    %v4837 = vshrl.u32 %v4836, 7
    %v4838 = vsub.s32 4, %v4837
    %v4839 = vrot.slane %v4785, %v4838
    %v4853 = vadd.f32 %v4771, %v4791
    %v4854 = vadd.f32 %v4772, %v4795
    %v4855 = vadd.f32 %v4773, %v4799
    %v4856 = vadd.f32 %v4774, %v4803
    %v4857 = vadd.f32 %v4775, %v4807
    %v4858 = vadd.f32 %v4776, %v4811
    %v4859 = vadd.f32 %v4777, %v4815
    %v4860 = vadd.f32 %v4778, %v4819
    %v4861 = vadd.f32 %v4779, %v4823
    %v4862 = vadd.f32 %v4780, %v4827
    %v4863 = vadd.f32 %v4781, %v4831
    %v4864 = vadd.f32 %v4782, %v4835
    %v4865 = vadd.f32 %v4783, %v4839
    %4866 = vmatprep.subr.mxu0 0.0
    %4867 = vmatpush1.msra.mxu0 0.0
    %4868 = vmatprep.subr.mxu0 0.0
    %4869 = vmatpush1.msra.mxu0 0.0
    %4870 = vmatprep.subr.mxu0 0.0
    %4871 = vmatpush1.msra.mxu0 0.0
    %4872 = vmatprep.subr.mxu0 0.0
    %4873 = vmatpush1.msra.mxu0 0.0
    %4874 = vmatprep.subr.mxu0 0.0
    %4875 = vmatpush1.msra.mxu0 0.0
    %4876 = vmatprep.subr.mxu0 0.0
    %4877 = vmatpush1.msra.mxu0 0.0
    %4878 = vmatprep.subr.mxu0 0.0
    %4879 = vmatpush1.msra.mxu0 0.0
    %4880 = vmatprep.subr.mxu0 0.0
    %4881 = vmatpush1.msra.mxu0 0.0
    %4882 = vmatprep.subr.mxu0 0.0
    %4883 = vmatpush1.msra.mxu0 0.0
    %4884 = vmatprep.subr.mxu0 0.0
    %4885 = vmatpush1.msra.mxu0 0.0
    %4886 = vmatprep.subr.mxu0 0.0
    %4887 = vmatpush1.msra.mxu0 0.0
    %4888 = vmatprep.subr.mxu0 0.0
    %4889 = vmatpush1.msra.mxu0 0.0
    %4890 = vmatprep.subr.mxu0 0.0
    %4891 = vmatpush1.msra.mxu0 0.0
    %4892 = vmatprep.subr.mxu0 0.0
    %4893 = vmatpush1.msra.mxu0 0.0
    %4894 = vmatprep.subr.mxu0 0.0
    %4895 = vmatpush1.msra.mxu0 0.0
    %4896 = vmatprep.subr.mxu0 0.0
    %4897 = vmatpush1.msra.mxu0 %v707
    %4898 = vmatprep.subr.mxu0 0.0
    %4899 = vmatpush2.msra.mxu0 0.0
    %4900 = vmatprep.subr.mxu0 0.0
    %4901 = vmatpush2.msra.mxu0 0.0
    %4902 = vmatprep.subr.mxu0 0.0
    %4903 = vmatpush2.msra.mxu0 0.0
    %4904 = vmatprep.subr.mxu0 0.0
    %4905 = vmatpush2.msra.mxu0 0.0
    %4906 = vmatprep.subr.mxu0 0.0
    %4907 = vmatpush2.msra.mxu0 0.0
    %4908 = vmatprep.subr.mxu0 0.0
    %4909 = vmatpush2.msra.mxu0 0.0
    %4910 = vmatprep.subr.mxu0 0.0
    %4911 = vmatpush2.msra.mxu0 0.0
    %4912 = vmatprep.subr.mxu0 0.0
    %4913 = vmatpush2.msra.mxu0 0.0
    %4914 = vmatprep.subr.mxu0 0.0
    %4915 = vmatpush2.msra.mxu0 0.0
    %4916 = vmatprep.subr.mxu0 0.0
    %4917 = vmatpush2.msra.mxu0 0.0
    %4918 = vmatprep.subr.mxu0 0.0
    %4919 = vmatpush2.msra.mxu0 0.0
    %4920 = vmatprep.subr.mxu0 0.0
    %4921 = vmatpush2.msra.mxu0 0.0
    %4922 = vmatprep.subr.mxu0 0.0
    %4923 = vmatpush2.msra.mxu0 0.0
    %4924 = vmatprep.subr.mxu0 0.0
    %4925 = vmatpush2.msra.mxu0 0.0
    %4926 = vmatprep.subr.mxu0 0.0
    %4927 = vmatpush2.msra.mxu0 0.0
    %4928 = vmatprep.subr.mxu0 0.0
    %4929 = vmatpush2.msra.mxu0 0.0
    %4930 = vmatprep.mubr.f32.mxu0 0.0
    %4931 = vmatmul.mubr.f32.gmra.mxu0 %v710
    %v4932 = vpop.f32.mrf.mxu0
    %v4933 = vadd.f32 0.0, %v4932
    %v4934 = vpop.f32.mrf.mxu0
    %4935 = vdwg.mxu0
    %v4936 = vpack.c.bf16 %v4933, %v4933
    %v4937 = vld [vmem:[%s12] sm:$0xf]
    %v4938 = vld [vmem:[%s12 + $0x4] sm:$0xf]
    %v4939 = vld [vmem:[%s12 + $0x8] sm:$0xf]
    %v4940 = vld [vmem:[%s12 + $0xc] sm:$0xf]
    %v4941 = vld [vmem:[%s13] sm:$0x1]
    %v4943 = vlaneseq
    %v4944 = vshrl.u32 %v4943, 7
    %v4945 = vsub.s32 0, %v4944
    %v4946 = vrot.slane %v4941, %v4945
    %v4952 = vunpack.c.l.b16 %v4937
    %v4953 = vunpack.c.l.b16 %v4938
    %v4954 = vunpack.c.l.b16 %v4939
    %v4955 = vunpack.c.l.b16 %v4940
    %v4956 = vpack.c.b16 %v4953, %v4952
    %v4957 = vpack.c.b16 %v4955, %v4954
    %vm4960 = vcmask 261120
    %v4962 = vsel %vm4960, %v4936, 0
    %4964 = vmatprep.subr.bf16.mxu0 0
    %4965 = vmatpush1.bf16.msra.mxu0 0
    %4966 = vmatprep.subr.bf16.mxu0 0
    %4967 = vmatpush1.bf16.msra.mxu0 0
    %4968 = vmatprep.subr.bf16.mxu0 0
    %4969 = vmatpush1.bf16.msra.mxu0 0
    %4970 = vmatprep.subr.bf16.mxu0 0
    %4971 = vmatpush1.bf16.msra.mxu0 0
    %4972 = vmatprep.subr.bf16.mxu0 0
    %4973 = vmatpush1.bf16.msra.mxu0 0
    %4974 = vmatprep.subr.bf16.mxu0 0
    %4975 = vmatpush1.bf16.msra.mxu0 0
    %4976 = vmatprep.subr.bf16.mxu0 0
    %4977 = vmatpush1.bf16.msra.mxu0 %v4957
    %4978 = vmatprep.subr.bf16.mxu0 0
    %4979 = vmatpush1.bf16.msra.mxu0 %v4956
    %4980 = vmatprep.subr.bf16.mxu0 0
    %4981 = vmatpush2.bf16.msra.mxu0 0
    %4982 = vmatprep.subr.bf16.mxu0 0
    %4983 = vmatpush2.bf16.msra.mxu0 0
    %4984 = vmatprep.subr.bf16.mxu0 0
    %4985 = vmatpush2.bf16.msra.mxu0 0
    %4986 = vmatprep.subr.bf16.mxu0 0
    %4987 = vmatpush2.bf16.msra.mxu0 0
    %4988 = vmatprep.subr.bf16.mxu0 0
    %4989 = vmatpush2.bf16.msra.mxu0 0
    %4990 = vmatprep.subr.bf16.mxu0 0
    %4991 = vmatpush2.bf16.msra.mxu0 0
    %4992 = vmatprep.subr.bf16.mxu0 0
    %4993 = vmatpush2.bf16.msra.mxu0 0
    %4994 = vmatprep.subr.bf16.mxu0 0
    %4995 = vmatpush2.bf16.msra.mxu0 0
    %4996 = vmatprep.mubr.bf16.mxu0 0
    %4997 = vmatmul.mubr.bf16.gmra.mxu0 %v4962
    %v4998 = vpop.f32.mrf.mxu0
    %v4999 = vadd.f32 %v4946, %v4998
    %v5000 = vpop.f32.mrf.mxu0
    %v5001 = vpop.f32.mrf.mxu0
    %v5002 = vpop.f32.mrf.mxu0
    %5003 = vdwg.mxu0
    %v5004 = vmax.f32 %v4999, 0.0
    %v5005 = vpack.c.bf16 %v5004, %v5004
    %v5006 = vld [vmem:[%s14] sm:$0x3]
    %v5007 = vld [vmem:[%s15] sm:$0x1]
    %v5009 = vlaneseq
    %v5010 = vshrl.u32 %v5009, 7
    %v5011 = vsub.s32 0, %v5010
    %v5012 = vrot.slane %v5007, %v5011
    %vm5014 = vcmask 31744
    %v5016 = vsel %vm5014, %v5005, 0
    %vm5018 = vcmask 1041408
    %v5020 = vsel %vm5018, %v5006, 0
    %5022 = vmatprep.subr.bf16.mxu0 0
    %5023 = vmatpush1.bf16.msra.mxu0 0
    %5024 = vmatprep.subr.bf16.mxu0 0
    %5025 = vmatpush1.bf16.msra.mxu0 0
    %5026 = vmatprep.subr.bf16.mxu0 0
    %5027 = vmatpush1.bf16.msra.mxu0 0
    %5028 = vmatprep.subr.bf16.mxu0 0
    %5029 = vmatpush1.bf16.msra.mxu0 0
    %5030 = vmatprep.subr.bf16.mxu0 0
    %5031 = vmatpush1.bf16.msra.mxu0 0
    %5032 = vmatprep.subr.bf16.mxu0 0
    %5033 = vmatpush1.bf16.msra.mxu0 0
    %5034 = vmatprep.subr.bf16.mxu0 0
    %5035 = vmatpush1.bf16.msra.mxu0 0
    %5036 = vmatprep.subr.bf16.mxu0 0
    %5037 = vmatpush1.bf16.msra.mxu0 %v5020
    %5038 = vmatprep.subr.bf16.mxu0 0
    %5039 = vmatpush2.bf16.msra.mxu0 0
    %5040 = vmatprep.subr.bf16.mxu0 0
    %5041 = vmatpush2.bf16.msra.mxu0 0
    %5042 = vmatprep.subr.bf16.mxu0 0
    %5043 = vmatpush2.bf16.msra.mxu0 0
    %5044 = vmatprep.subr.bf16.mxu0 0
    %5045 = vmatpush2.bf16.msra.mxu0 0
    %5046 = vmatprep.subr.bf16.mxu0 0
    %5047 = vmatpush2.bf16.msra.mxu0 0
    %5048 = vmatprep.subr.bf16.mxu0 0
    %5049 = vmatpush2.bf16.msra.mxu0 0
    %5050 = vmatprep.subr.bf16.mxu0 0
    %5051 = vmatpush2.bf16.msra.mxu0 0
    %5052 = vmatprep.subr.bf16.mxu0 0
    %5053 = vmatpush2.bf16.msra.mxu0 0
    %5054 = vmatprep.mubr.bf16.mxu0 0
    %5055 = vmatmul.mubr.bf16.gmra.mxu0 %v5016
    %v5056 = vpop.f32.mrf.mxu0
    %v5057 = vadd.f32 %v5012, %v5056
    %v5058 = vpop.f32.mrf.mxu0
    %v5059 = vpop.f32.mrf.mxu0
    %v5060 = vpop.f32.mrf.mxu0
    %5061 = vdwg.mxu0
    %v5062 = vxor.u32 %v5057, 2147483648
    %v5063 = vmul.f32 %v5062, 1.442695
    %v5064 = vpow.pop %v5063
    %v5065 = vadd.f32 %v5064, 1.0
    %v5066 = vrcp.pop %v5065
    %v5067 = vmul.f32 1.0, %v5066
    %v5068 = vld [vmem:[%s16] sm:$0xff]
    %v5069 = vmul.f32 %v707, %v5068
    %5070 = vmatprep.subr.mxu0 0.0
    %5071 = vmatpush1.msra.mxu0 0.0
    %5072 = vmatprep.subr.mxu0 0.0
    %5073 = vmatpush1.msra.mxu0 0.0
    %5074 = vmatprep.subr.mxu0 0.0
    %5075 = vmatpush1.msra.mxu0 0.0
    %5076 = vmatprep.subr.mxu0 0.0
    %5077 = vmatpush1.msra.mxu0 0.0
    %5078 = vmatprep.subr.mxu0 0.0
    %5079 = vmatpush1.msra.mxu0 0.0
    %5080 = vmatprep.subr.mxu0 0.0
    %5081 = vmatpush1.msra.mxu0 0.0
    %5082 = vmatprep.subr.mxu0 0.0
    %5083 = vmatpush1.msra.mxu0 0.0
    %5084 = vmatprep.subr.mxu0 0.0
    %5085 = vmatpush1.msra.mxu0 0.0
    %5086 = vmatprep.subr.mxu0 0.0
    %5087 = vmatpush1.msra.mxu0 0.0
    %5088 = vmatprep.subr.mxu0 0.0
    %5089 = vmatpush1.msra.mxu0 0.0
    %5090 = vmatprep.subr.mxu0 0.0
    %5091 = vmatpush1.msra.mxu0 0.0
    %5092 = vmatprep.subr.mxu0 0.0
    %5093 = vmatpush1.msra.mxu0 0.0
    %5094 = vmatprep.subr.mxu0 0.0
    %5095 = vmatpush1.msra.mxu0 0.0
    %5096 = vmatprep.subr.mxu0 0.0
    %5097 = vmatpush1.msra.mxu0 0.0
    %5098 = vmatprep.subr.mxu0 0.0
    %5099 = vmatpush1.msra.mxu0 0.0
    %5100 = vmatprep.subr.mxu0 0.0
    %5101 = vmatpush1.msra.mxu0 %v5069
    %5102 = vmatprep.subr.mxu0 0.0
    %5103 = vmatpush2.msra.mxu0 0.0
    %5104 = vmatprep.subr.mxu0 0.0
    %5105 = vmatpush2.msra.mxu0 0.0
    %5106 = vmatprep.subr.mxu0 0.0
    %5107 = vmatpush2.msra.mxu0 0.0
    %5108 = vmatprep.subr.mxu0 0.0
    %5109 = vmatpush2.msra.mxu0 0.0
    %5110 = vmatprep.subr.mxu0 0.0
    %5111 = vmatpush2.msra.mxu0 0.0
    %5112 = vmatprep.subr.mxu0 0.0
    %5113 = vmatpush2.msra.mxu0 0.0
    %5114 = vmatprep.subr.mxu0 0.0
    %5115 = vmatpush2.msra.mxu0 0.0
    %5116 = vmatprep.subr.mxu0 0.0
    %5117 = vmatpush2.msra.mxu0 0.0
    %5118 = vmatprep.subr.mxu0 0.0
    %5119 = vmatpush2.msra.mxu0 0.0
    %5120 = vmatprep.subr.mxu0 0.0
    %5121 = vmatpush2.msra.mxu0 0.0
    %5122 = vmatprep.subr.mxu0 0.0
    %5123 = vmatpush2.msra.mxu0 0.0
    %5124 = vmatprep.subr.mxu0 0.0
    %5125 = vmatpush2.msra.mxu0 0.0
    %5126 = vmatprep.subr.mxu0 0.0
    %5127 = vmatpush2.msra.mxu0 0.0
    %5128 = vmatprep.subr.mxu0 0.0
    %5129 = vmatpush2.msra.mxu0 0.0
    %5130 = vmatprep.subr.mxu0 0.0
    %5131 = vmatpush2.msra.mxu0 0.0
    %5132 = vmatprep.subr.mxu0 0.0
    %5133 = vmatpush2.msra.mxu0 0.0
    %5134 = vmatprep.mubr.f32.mxu0 0.0
    %5135 = vmatmul.mubr.f32.gmra.mxu0 %v710
    %v5136 = vpop.f32.mrf.mxu0
    %v5137 = vadd.f32 0.0, %v5136
    %v5138 = vpop.f32.mrf.mxu0
    %5139 = vdwg.mxu0
    %v5140 = vmul.f32 %v5067, %v5137
    %v5141 = vld [vmem:[%s17] sm:$0x1]
    %v5143 = vlaneseq
    %v5144 = vshrl.u32 %v5143, 7
    %v5145 = vsub.s32 0, %v5144
    %v5146 = vrot.slane %v5141, %v5145
    %v5148 = vadd.f32 %v5140, %v5146
    %v5149 = vpack.c.bf16 %v4853, %v4853
    %v5150 = vpack.c.bf16 %v4854, %v4854
    %v5151 = vpack.c.bf16 %v4855, %v4855
    %v5152 = vpack.c.bf16 %v4856, %v4856
    %v5153 = vpack.c.bf16 %v4857, %v4857
    %v5154 = vpack.c.bf16 %v4858, %v4858
    %v5155 = vpack.c.bf16 %v4859, %v4859
    %v5156 = vpack.c.bf16 %v4860, %v4860
    %v5157 = vpack.c.bf16 %v4861, %v4861
    %v5158 = vpack.c.bf16 %v4862, %v4862
    %v5159 = vpack.c.bf16 %v4863, %v4863
    %v5160 = vpack.c.bf16 %v4864, %v4864
    %v5161 = vpack.c.bf16 %v4865, %v4865
    %v5162 = vld [vmem:[%s18] sm:$0xff]
    %v5163 = vld [vmem:[%s18 + $0x8] sm:$0xff]
    %v5164 = vld [vmem:[%s18 + $0x10] sm:$0xff]
    %v5165 = vld [vmem:[%s18 + $0x18] sm:$0xff]
    %v5166 = vld [vmem:[%s18 + $0x20] sm:$0xff]
    %v5167 = vld [vmem:[%s18 + $0x28] sm:$0xff]
    %v5168 = vld [vmem:[%s18 + $0x30] sm:$0xff]
    %v5169 = vld [vmem:[%s18 + $0x38] sm:$0xff]
    %v5170 = vld [vmem:[%s18 + $0x40] sm:$0xff]
    %v5171 = vld [vmem:[%s18 + $0x48] sm:$0xff]
    %v5172 = vld [vmem:[%s18 + $0x50] sm:$0xff]
    %v5173 = vld [vmem:[%s18 + $0x58] sm:$0xff]
    %v5174 = vld [vmem:[%s18 + $0x60] sm:$0xff]
    %v5175 = vld [vmem:[%s18 + $0x68] sm:$0xff]
    %v5176 = vld [vmem:[%s18 + $0x70] sm:$0xff]
    %v5177 = vld [vmem:[%s18 + $0x78] sm:$0xff]
    %v5178 = vld [vmem:[%s18 + $0x80] sm:$0xff]
    %v5179 = vld [vmem:[%s18 + $0x88] sm:$0xff]
    %v5180 = vld [vmem:[%s18 + $0x90] sm:$0xff]
    %v5181 = vld [vmem:[%s18 + $0x98] sm:$0xff]
    %v5182 = vld [vmem:[%s18 + $0xa0] sm:$0xff]
    %v5183 = vld [vmem:[%s18 + $0xa8] sm:$0xff]
    %v5184 = vld [vmem:[%s18 + $0xb0] sm:$0xff]
    %v5185 = vld [vmem:[%s18 + $0xb8] sm:$0xff]
    %v5186 = vld [vmem:[%s18 + $0xc0] sm:$0xff]
    %v5187 = vld [vmem:[%s18 + $0xc8] sm:$0xff]
    %v5188 = vld [vmem:[%s18 + $0xd0] sm:$0xff]
    %v5189 = vld [vmem:[%s18 + $0xd8] sm:$0xff]
    %v5190 = vld [vmem:[%s18 + $0xe0] sm:$0xff]
    %v5191 = vld [vmem:[%s18 + $0xe8] sm:$0xff]
    %v5192 = vld [vmem:[%s18 + $0xf0] sm:$0xff]
    %v5193 = vld [vmem:[%s18 + $0xf8] sm:$0xff]
    %v5194 = vld [vmem:[%s18 + $0x100] sm:$0xff]
    %v5195 = vld [vmem:[%s18 + $0x108] sm:$0xff]
    %v5196 = vld [vmem:[%s18 + $0x110] sm:$0xff]
    %v5197 = vld [vmem:[%s18 + $0x118] sm:$0xff]
    %v5198 = vld [vmem:[%s18 + $0x120] sm:$0xff]
    %v5199 = vld [vmem:[%s18 + $0x128] sm:$0xff]
    %v5200 = vld [vmem:[%s18 + $0x130] sm:$0xff]
    %v5201 = vld [vmem:[%s18 + $0x138] sm:$0xff]
    %v5202 = vld [vmem:[%s18 + $0x140] sm:$0xff]
    %v5203 = vld [vmem:[%s18 + $0x148] sm:$0xff]
    %v5204 = vld [vmem:[%s18 + $0x150] sm:$0xff]
    %v5205 = vld [vmem:[%s18 + $0x158] sm:$0xff]
    %v5206 = vld [vmem:[%s18 + $0x160] sm:$0xff]
    %v5207 = vld [vmem:[%s18 + $0x168] sm:$0xff]
    %v5208 = vld [vmem:[%s18 + $0x170] sm:$0xff]
    %v5209 = vld [vmem:[%s18 + $0x178] sm:$0xff]
    %v5210 = vld [vmem:[%s18 + $0x180] sm:$0xff]
    %v5211 = vld [vmem:[%s18 + $0x188] sm:$0xff]
    %v5212 = vld [vmem:[%s18 + $0x190] sm:$0xff]
    %v5213 = vld [vmem:[%s18 + $0x198] sm:$0xff]
    %v5214 = vld [vmem:[%s18 + $0x1a0] sm:$0xff]
    %v5215 = vld [vmem:[%s18 + $0x1a8] sm:$0xff]
    %v5216 = vld [vmem:[%s18 + $0x1b0] sm:$0xff]
    %v5217 = vld [vmem:[%s18 + $0x1b8] sm:$0xff]
    %v5218 = vld [vmem:[%s18 + $0x1c0] sm:$0xff]
    %v5219 = vld [vmem:[%s18 + $0x1c8] sm:$0xff]
    %v5220 = vld [vmem:[%s18 + $0x1d0] sm:$0xff]
    %v5221 = vld [vmem:[%s18 + $0x1d8] sm:$0xff]
    %v5222 = vld [vmem:[%s18 + $0x1e0] sm:$0xff]
    %v5223 = vld [vmem:[%s18 + $0x1e8] sm:$0xff]
    %v5224 = vld [vmem:[%s18 + $0x1f0] sm:$0xff]
    %v5225 = vld [vmem:[%s18 + $0x1f8] sm:$0xff]
    %v5226 = vld [vmem:[%s18 + $0x200] sm:$0xff]
    %v5227 = vld [vmem:[%s18 + $0x208] sm:$0xff]
    %v5228 = vld [vmem:[%s18 + $0x210] sm:$0xff]
    %v5229 = vld [vmem:[%s18 + $0x218] sm:$0xff]
    %v5230 = vld [vmem:[%s18 + $0x220] sm:$0xff]
    %v5231 = vld [vmem:[%s18 + $0x228] sm:$0xff]
    %v5232 = vld [vmem:[%s18 + $0x230] sm:$0xff]
    %v5233 = vld [vmem:[%s18 + $0x238] sm:$0xff]
    %v5234 = vld [vmem:[%s18 + $0x240] sm:$0xff]
    %v5235 = vld [vmem:[%s18 + $0x248] sm:$0xff]
    %v5236 = vld [vmem:[%s18 + $0x250] sm:$0xff]
    %v5237 = vld [vmem:[%s18 + $0x258] sm:$0xff]
    %v5238 = vld [vmem:[%s18 + $0x260] sm:$0xff]
    %v5239 = vld [vmem:[%s18 + $0x268] sm:$0xff]
    %v5240 = vld [vmem:[%s18 + $0x270] sm:$0xff]
    %v5241 = vld [vmem:[%s18 + $0x278] sm:$0xff]
    %v5242 = vld [vmem:[%s18 + $0x280] sm:$0xff]
    %v5243 = vld [vmem:[%s18 + $0x288] sm:$0xff]
    %v5244 = vld [vmem:[%s18 + $0x290] sm:$0xff]
    %v5245 = vld [vmem:[%s18 + $0x298] sm:$0xff]
    %v5246 = vld [vmem:[%s18 + $0x2a0] sm:$0xff]
    %v5247 = vld [vmem:[%s18 + $0x2a8] sm:$0xff]
    %v5248 = vld [vmem:[%s18 + $0x2b0] sm:$0xff]
    %v5249 = vld [vmem:[%s18 + $0x2b8] sm:$0xff]
    %v5250 = vld [vmem:[%s18 + $0x2c0] sm:$0xff]
    %v5251 = vld [vmem:[%s18 + $0x2c8] sm:$0xff]
    %v5252 = vld [vmem:[%s18 + $0x2d0] sm:$0xff]
    %v5253 = vld [vmem:[%s18 + $0x2d8] sm:$0xff]
    %v5254 = vld [vmem:[%s18 + $0x2e0] sm:$0xff]
    %v5255 = vld [vmem:[%s18 + $0x2e8] sm:$0xff]
    %v5256 = vld [vmem:[%s18 + $0x2f0] sm:$0xff]
    %v5257 = vld [vmem:[%s18 + $0x2f8] sm:$0xff]
    %v5258 = vld [vmem:[%s18 + $0x300] sm:$0xff]
    %v5259 = vld [vmem:[%s18 + $0x308] sm:$0xff]
    %v5260 = vld [vmem:[%s18 + $0x310] sm:$0xff]
    %v5261 = vld [vmem:[%s18 + $0x318] sm:$0xff]
    %v5262 = vld [vmem:[%s18 + $0x320] sm:$0xff]
    %v5263 = vld [vmem:[%s18 + $0x328] sm:$0xff]
    %v5264 = vld [vmem:[%s18 + $0x330] sm:$0xff]
    %v5265 = vld [vmem:[%s18 + $0x338] sm:$0xff]
    %v5266 = vld [vmem:[%s18 + $0x340] sm:$0xff]
    %v5267 = vld [vmem:[%s18 + $0x348] sm:$0xff]
    %v5268 = vld [vmem:[%s18 + $0x350] sm:$0xff]
    %v5269 = vld [vmem:[%s18 + $0x358] sm:$0xff]
    %v5270 = vld [vmem:[%s18 + $0x360] sm:$0xff]
    %v5271 = vld [vmem:[%s18 + $0x368] sm:$0xff]
    %v5272 = vld [vmem:[%s18 + $0x370] sm:$0xff]
    %v5273 = vld [vmem:[%s18 + $0x378] sm:$0xff]
    %v5274 = vld [vmem:[%s18 + $0x380] sm:$0xff]
    %v5275 = vld [vmem:[%s18 + $0x388] sm:$0xff]
    %v5276 = vld [vmem:[%s18 + $0x390] sm:$0xff]
    %v5277 = vld [vmem:[%s18 + $0x398] sm:$0xff]
    %v5278 = vld [vmem:[%s18 + $0x3a0] sm:$0xff]
    %v5279 = vld [vmem:[%s18 + $0x3a8] sm:$0xff]
    %v5280 = vld [vmem:[%s18 + $0x3b0] sm:$0xff]
    %v5281 = vld [vmem:[%s18 + $0x3b8] sm:$0xff]
    %v5282 = vld [vmem:[%s18 + $0x3c0] sm:$0xff]
    %v5283 = vld [vmem:[%s18 + $0x3c8] sm:$0xff]
    %v5284 = vld [vmem:[%s18 + $0x3d0] sm:$0xff]
    %v5285 = vld [vmem:[%s18 + $0x3d8] sm:$0xff]
    %v5286 = vld [vmem:[%s18 + $0x3e0] sm:$0xff]
    %v5287 = vld [vmem:[%s18 + $0x3e8] sm:$0xff]
    %v5288 = vld [vmem:[%s18 + $0x3f0] sm:$0xff]
    %v5289 = vld [vmem:[%s18 + $0x3f8] sm:$0xff]
    %v5290 = vld [vmem:[%s18 + $0x400] sm:$0xff]
    %v5291 = vld [vmem:[%s18 + $0x408] sm:$0xff]
    %v5292 = vld [vmem:[%s18 + $0x410] sm:$0xff]
    %v5293 = vld [vmem:[%s18 + $0x418] sm:$0xff]
    %v5294 = vld [vmem:[%s18 + $0x420] sm:$0xff]
    %v5295 = vld [vmem:[%s18 + $0x428] sm:$0xff]
    %v5296 = vld [vmem:[%s18 + $0x430] sm:$0xff]
    %v5297 = vld [vmem:[%s18 + $0x438] sm:$0xff]
    %v5298 = vld [vmem:[%s18 + $0x440] sm:$0xff]
    %v5299 = vld [vmem:[%s18 + $0x448] sm:$0xff]
    %v5300 = vld [vmem:[%s18 + $0x450] sm:$0xff]
    %v5301 = vld [vmem:[%s18 + $0x458] sm:$0xff]
    %v5302 = vld [vmem:[%s18 + $0x460] sm:$0xff]
    %v5303 = vld [vmem:[%s18 + $0x468] sm:$0xff]
    %v5304 = vld [vmem:[%s18 + $0x470] sm:$0xff]
    %v5305 = vld [vmem:[%s18 + $0x478] sm:$0xff]
    %v5306 = vld [vmem:[%s18 + $0x480] sm:$0xff]
    %v5307 = vld [vmem:[%s18 + $0x488] sm:$0xff]
    %v5308 = vld [vmem:[%s18 + $0x490] sm:$0xff]
    %v5309 = vld [vmem:[%s18 + $0x498] sm:$0xff]
    %v5310 = vld [vmem:[%s18 + $0x4a0] sm:$0xff]
    %v5311 = vld [vmem:[%s18 + $0x4a8] sm:$0xff]
    %v5312 = vld [vmem:[%s18 + $0x4b0] sm:$0xff]
    %v5313 = vld [vmem:[%s18 + $0x4b8] sm:$0xff]
    %v5314 = vld [vmem:[%s18 + $0x4c0] sm:$0xff]
    %v5315 = vld [vmem:[%s18 + $0x4c8] sm:$0xff]
    %v5316 = vld [vmem:[%s18 + $0x4d0] sm:$0xff]
    %v5317 = vld [vmem:[%s18 + $0x4d8] sm:$0xff]
    %v5318 = vld [vmem:[%s18 + $0x4e0] sm:$0xff]
    %v5319 = vld [vmem:[%s18 + $0x4e8] sm:$0xff]
    %v5320 = vld [vmem:[%s18 + $0x4f0] sm:$0xff]
    %v5321 = vld [vmem:[%s18 + $0x4f8] sm:$0xff]
    %v5322 = vld [vmem:[%s18 + $0x500] sm:$0xff]
    %v5323 = vld [vmem:[%s18 + $0x508] sm:$0xff]
    %v5324 = vld [vmem:[%s18 + $0x510] sm:$0xff]
    %v5325 = vld [vmem:[%s18 + $0x518] sm:$0xff]
    %v5326 = vld [vmem:[%s18 + $0x520] sm:$0xff]
    %v5327 = vld [vmem:[%s18 + $0x528] sm:$0xff]
    %v5328 = vld [vmem:[%s18 + $0x530] sm:$0xff]
    %v5329 = vld [vmem:[%s18 + $0x538] sm:$0xff]
    %v5330 = vld [vmem:[%s18 + $0x540] sm:$0xff]
    %v5331 = vld [vmem:[%s18 + $0x548] sm:$0xff]
    %v5332 = vld [vmem:[%s18 + $0x550] sm:$0xff]
    %v5333 = vld [vmem:[%s18 + $0x558] sm:$0xff]
    %v5334 = vld [vmem:[%s18 + $0x560] sm:$0xff]
    %v5335 = vld [vmem:[%s18 + $0x568] sm:$0xff]
    %v5336 = vld [vmem:[%s18 + $0x570] sm:$0xff]
    %v5337 = vld [vmem:[%s18 + $0x578] sm:$0xff]
    %v5338 = vld [vmem:[%s18 + $0x580] sm:$0xff]
    %v5339 = vld [vmem:[%s18 + $0x588] sm:$0xff]
    %v5340 = vld [vmem:[%s18 + $0x590] sm:$0xff]
    %v5341 = vld [vmem:[%s18 + $0x598] sm:$0xff]
    %v5342 = vld [vmem:[%s18 + $0x5a0] sm:$0xff]
    %v5343 = vld [vmem:[%s18 + $0x5a8] sm:$0xff]
    %v5344 = vld [vmem:[%s18 + $0x5b0] sm:$0xff]
    %v5345 = vld [vmem:[%s18 + $0x5b8] sm:$0xff]
    %v5346 = vld [vmem:[%s18 + $0x5c0] sm:$0xff]
    %v5347 = vld [vmem:[%s18 + $0x5c8] sm:$0xff]
    %v5348 = vld [vmem:[%s18 + $0x5d0] sm:$0xff]
    %v5349 = vld [vmem:[%s18 + $0x5d8] sm:$0xff]
    %v5350 = vld [vmem:[%s18 + $0x5e0] sm:$0xff]
    %v5351 = vld [vmem:[%s18 + $0x5e8] sm:$0xff]
    %v5352 = vld [vmem:[%s18 + $0x5f0] sm:$0xff]
    %v5353 = vld [vmem:[%s18 + $0x5f8] sm:$0xff]
    %v5354 = vld [vmem:[%s18 + $0x600] sm:$0xff]
    %v5355 = vld [vmem:[%s18 + $0x608] sm:$0xff]
    %v5356 = vld [vmem:[%s18 + $0x610] sm:$0xff]
    %v5357 = vld [vmem:[%s18 + $0x618] sm:$0xff]
    %v5358 = vld [vmem:[%s18 + $0x620] sm:$0xff]
    %v5359 = vld [vmem:[%s18 + $0x628] sm:$0xff]
    %v5360 = vld [vmem:[%s18 + $0x630] sm:$0xff]
    %v5361 = vld [vmem:[%s18 + $0x638] sm:$0xff]
    %v5362 = vld [vmem:[%s18 + $0x640] sm:$0xff]
    %v5363 = vld [vmem:[%s18 + $0x648] sm:$0xff]
    %v5364 = vld [vmem:[%s18 + $0x650] sm:$0xff]
    %v5365 = vld [vmem:[%s18 + $0x658] sm:$0xff]
    %v5366 = vld [vmem:[%s18 + $0x660] sm:$0xff]
    %v5367 = vld [vmem:[%s18 + $0x668] sm:$0xff]
    %v5368 = vld [vmem:[%s18 + $0x670] sm:$0xff]
    %v5369 = vld [vmem:[%s18 + $0x678] sm:$0xff]
    %v5370 = vld [vmem:[%s18 + $0x680] sm:$0xff]
    %v5371 = vld [vmem:[%s18 + $0x688] sm:$0xff]
    %v5372 = vld [vmem:[%s18 + $0x690] sm:$0xff]
    %v5373 = vld [vmem:[%s18 + $0x698] sm:$0xff]
    %v5374 = vld [vmem:[%s18 + $0x6a0] sm:$0xff]
    %v5375 = vld [vmem:[%s18 + $0x6a8] sm:$0xff]
    %v5376 = vld [vmem:[%s18 + $0x6b0] sm:$0xff]
    %v5377 = vld [vmem:[%s18 + $0x6b8] sm:$0xff]
    %v5378 = vld [vmem:[%s18 + $0x6c0] sm:$0xff]
    %v5379 = vld [vmem:[%s18 + $0x6c8] sm:$0xff]
    %v5380 = vld [vmem:[%s18 + $0x6d0] sm:$0xff]
    %v5381 = vld [vmem:[%s18 + $0x6d8] sm:$0xff]
    %v5382 = vld [vmem:[%s18 + $0x6e0] sm:$0xff]
    %v5383 = vld [vmem:[%s18 + $0x6e8] sm:$0xff]
    %v5384 = vld [vmem:[%s18 + $0x6f0] sm:$0xff]
    %v5385 = vld [vmem:[%s18 + $0x6f8] sm:$0xff]
    %v5386 = vld [vmem:[%s18 + $0x700] sm:$0xff]
    %v5387 = vld [vmem:[%s18 + $0x708] sm:$0xff]
    %v5388 = vld [vmem:[%s18 + $0x710] sm:$0xff]
    %v5389 = vld [vmem:[%s18 + $0x718] sm:$0xff]
    %v5390 = vld [vmem:[%s18 + $0x720] sm:$0xff]
    %v5391 = vld [vmem:[%s18 + $0x728] sm:$0xff]
    %v5392 = vld [vmem:[%s18 + $0x730] sm:$0xff]
    %v5393 = vld [vmem:[%s18 + $0x738] sm:$0xff]
    %v5394 = vld [vmem:[%s18 + $0x740] sm:$0xff]
    %v5395 = vld [vmem:[%s18 + $0x748] sm:$0xff]
    %v5396 = vld [vmem:[%s18 + $0x750] sm:$0xff]
    %v5397 = vld [vmem:[%s18 + $0x758] sm:$0xff]
    %v5398 = vld [vmem:[%s18 + $0x760] sm:$0xff]
    %v5399 = vld [vmem:[%s18 + $0x768] sm:$0xff]
    %v5400 = vld [vmem:[%s18 + $0x770] sm:$0xff]
    %v5401 = vld [vmem:[%s18 + $0x778] sm:$0xff]
    %v5402 = vld [vmem:[%s18 + $0x780] sm:$0xff]
    %v5403 = vld [vmem:[%s18 + $0x788] sm:$0xff]
    %v5404 = vld [vmem:[%s18 + $0x790] sm:$0xff]
    %v5405 = vld [vmem:[%s18 + $0x798] sm:$0xff]
    %v5406 = vld [vmem:[%s18 + $0x7a0] sm:$0xff]
    %v5407 = vld [vmem:[%s18 + $0x7a8] sm:$0xff]
    %v5408 = vld [vmem:[%s18 + $0x7b0] sm:$0xff]
    %v5409 = vld [vmem:[%s18 + $0x7b8] sm:$0xff]
    %v5410 = vld [vmem:[%s18 + $0x7c0] sm:$0xff]
    %v5411 = vld [vmem:[%s18 + $0x7c8] sm:$0xff]
    %v5412 = vld [vmem:[%s18 + $0x7d0] sm:$0xff]
    %v5413 = vld [vmem:[%s18 + $0x7d8] sm:$0xff]
    %v5414 = vld [vmem:[%s18 + $0x7e0] sm:$0xff]
    %v5415 = vld [vmem:[%s18 + $0x7e8] sm:$0xff]
    %v5416 = vld [vmem:[%s18 + $0x7f0] sm:$0xff]
    %v5417 = vld [vmem:[%s18 + $0x7f8] sm:$0xff]
    %v5418 = vld [vmem:[%s18 + $0x800] sm:$0xff]
    %v5419 = vld [vmem:[%s18 + $0x808] sm:$0xff]
    %v5420 = vld [vmem:[%s18 + $0x810] sm:$0xff]
    %v5421 = vld [vmem:[%s18 + $0x818] sm:$0xff]
    %v5422 = vld [vmem:[%s18 + $0x820] sm:$0xff]
    %v5423 = vld [vmem:[%s18 + $0x828] sm:$0xff]
    %v5424 = vld [vmem:[%s18 + $0x830] sm:$0xff]
    %v5425 = vld [vmem:[%s18 + $0x838] sm:$0xff]
    %v5426 = vld [vmem:[%s18 + $0x840] sm:$0xff]
    %v5427 = vld [vmem:[%s18 + $0x848] sm:$0xff]
    %v5428 = vld [vmem:[%s18 + $0x850] sm:$0xff]
    %v5429 = vld [vmem:[%s18 + $0x858] sm:$0xff]
    %v5430 = vld [vmem:[%s18 + $0x860] sm:$0xff]
    %v5431 = vld [vmem:[%s18 + $0x868] sm:$0xff]
    %v5432 = vld [vmem:[%s18 + $0x870] sm:$0xff]
    %v5433 = vld [vmem:[%s18 + $0x878] sm:$0xff]
    %v5434 = vld [vmem:[%s18 + $0x880] sm:$0xff]
    %v5435 = vld [vmem:[%s18 + $0x888] sm:$0xff]
    %v5436 = vld [vmem:[%s18 + $0x890] sm:$0xff]
    %v5437 = vld [vmem:[%s18 + $0x898] sm:$0xff]
    %v5438 = vld [vmem:[%s18 + $0x8a0] sm:$0xff]
    %v5439 = vld [vmem:[%s18 + $0x8a8] sm:$0xff]
    %v5440 = vld [vmem:[%s18 + $0x8b0] sm:$0xff]
    %v5441 = vld [vmem:[%s18 + $0x8b8] sm:$0xff]
    %v5442 = vld [vmem:[%s18 + $0x8c0] sm:$0xff]
    %v5443 = vld [vmem:[%s18 + $0x8c8] sm:$0xff]
    %v5444 = vld [vmem:[%s18 + $0x8d0] sm:$0xff]
    %v5445 = vld [vmem:[%s18 + $0x8d8] sm:$0xff]
    %v5446 = vld [vmem:[%s18 + $0x8e0] sm:$0xff]
    %v5447 = vld [vmem:[%s18 + $0x8e8] sm:$0xff]
    %v5448 = vld [vmem:[%s18 + $0x8f0] sm:$0xff]
    %v5449 = vld [vmem:[%s18 + $0x8f8] sm:$0xff]
    %v5450 = vld [vmem:[%s18 + $0x900] sm:$0xff]
    %v5451 = vld [vmem:[%s18 + $0x908] sm:$0xff]
    %v5452 = vld [vmem:[%s18 + $0x910] sm:$0xff]
    %v5453 = vld [vmem:[%s18 + $0x918] sm:$0xff]
    %v5454 = vld [vmem:[%s18 + $0x920] sm:$0xff]
    %v5455 = vld [vmem:[%s18 + $0x928] sm:$0xff]
    %v5456 = vld [vmem:[%s18 + $0x930] sm:$0xff]
    %v5457 = vld [vmem:[%s18 + $0x938] sm:$0xff]
    %v5458 = vld [vmem:[%s18 + $0x940] sm:$0xff]
    %v5459 = vld [vmem:[%s18 + $0x948] sm:$0xff]
    %v5460 = vld [vmem:[%s18 + $0x950] sm:$0xff]
    %v5461 = vld [vmem:[%s18 + $0x958] sm:$0xff]
    %v5462 = vld [vmem:[%s18 + $0x960] sm:$0xff]
    %v5463 = vld [vmem:[%s18 + $0x968] sm:$0xff]
    %v5464 = vld [vmem:[%s18 + $0x970] sm:$0xff]
    %v5465 = vld [vmem:[%s18 + $0x978] sm:$0xff]
    %v5466 = vld [vmem:[%s18 + $0x980] sm:$0xff]
    %v5467 = vld [vmem:[%s18 + $0x988] sm:$0xff]
    %v5468 = vld [vmem:[%s18 + $0x990] sm:$0xff]
    %v5469 = vld [vmem:[%s18 + $0x998] sm:$0xff]
    %v5470 = vld [vmem:[%s18 + $0x9a0] sm:$0xff]
    %v5471 = vld [vmem:[%s18 + $0x9a8] sm:$0xff]
    %v5472 = vld [vmem:[%s18 + $0x9b0] sm:$0xff]
    %v5473 = vld [vmem:[%s18 + $0x9b8] sm:$0xff]
    %v5474 = vld [vmem:[%s18 + $0x9c0] sm:$0xff]
    %v5475 = vld [vmem:[%s18 + $0x9c8] sm:$0xff]
    %v5476 = vld [vmem:[%s18 + $0x9d0] sm:$0xff]
    %v5477 = vld [vmem:[%s18 + $0x9d8] sm:$0xff]
    %v5478 = vld [vmem:[%s18 + $0x9e0] sm:$0xff]
    %v5479 = vld [vmem:[%s18 + $0x9e8] sm:$0xff]
    %v5480 = vld [vmem:[%s18 + $0x9f0] sm:$0xff]
    %v5481 = vld [vmem:[%s18 + $0x9f8] sm:$0xff]
    %v5482 = vld [vmem:[%s18 + $0xa00] sm:$0xff]
    %v5483 = vld [vmem:[%s18 + $0xa08] sm:$0xff]
    %v5484 = vld [vmem:[%s18 + $0xa10] sm:$0xff]
    %v5485 = vld [vmem:[%s18 + $0xa18] sm:$0xff]
    %v5486 = vld [vmem:[%s18 + $0xa20] sm:$0xff]
    %v5487 = vld [vmem:[%s18 + $0xa28] sm:$0xff]
    %v5488 = vld [vmem:[%s18 + $0xa30] sm:$0xff]
    %v5489 = vld [vmem:[%s18 + $0xa38] sm:$0xff]
    %v5490 = vld [vmem:[%s18 + $0xa40] sm:$0xff]
    %v5491 = vld [vmem:[%s18 + $0xa48] sm:$0xff]
    %v5492 = vld [vmem:[%s18 + $0xa50] sm:$0xff]
    %v5493 = vld [vmem:[%s18 + $0xa58] sm:$0xff]
    %v5494 = vld [vmem:[%s18 + $0xa60] sm:$0xff]
    %v5495 = vld [vmem:[%s18 + $0xa68] sm:$0xff]
    %v5496 = vld [vmem:[%s18 + $0xa70] sm:$0xff]
    %v5497 = vld [vmem:[%s18 + $0xa78] sm:$0xff]
    %v5498 = vld [vmem:[%s18 + $0xa80] sm:$0xff]
    %v5499 = vld [vmem:[%s18 + $0xa88] sm:$0xff]
    %v5500 = vld [vmem:[%s18 + $0xa90] sm:$0xff]
    %v5501 = vld [vmem:[%s18 + $0xa98] sm:$0xff]
    %v5502 = vld [vmem:[%s18 + $0xaa0] sm:$0xff]
    %v5503 = vld [vmem:[%s18 + $0xaa8] sm:$0xff]
    %v5504 = vld [vmem:[%s18 + $0xab0] sm:$0xff]
    %v5505 = vld [vmem:[%s18 + $0xab8] sm:$0xff]
    %v5506 = vld [vmem:[%s18 + $0xac0] sm:$0xff]
    %v5507 = vld [vmem:[%s18 + $0xac8] sm:$0xff]
    %v5508 = vld [vmem:[%s18 + $0xad0] sm:$0xff]
    %v5509 = vld [vmem:[%s18 + $0xad8] sm:$0xff]
    %v5510 = vld [vmem:[%s18 + $0xae0] sm:$0xff]
    %v5511 = vld [vmem:[%s18 + $0xae8] sm:$0xff]
    %v5512 = vld [vmem:[%s18 + $0xaf0] sm:$0xff]
    %v5513 = vld [vmem:[%s18 + $0xaf8] sm:$0xff]
    %v5514 = vld [vmem:[%s18 + $0xb00] sm:$0xff]
    %v5515 = vld [vmem:[%s18 + $0xb08] sm:$0xff]
    %v5516 = vld [vmem:[%s18 + $0xb10] sm:$0xff]
    %v5517 = vld [vmem:[%s18 + $0xb18] sm:$0xff]
    %v5518 = vld [vmem:[%s18 + $0xb20] sm:$0xff]
    %v5519 = vld [vmem:[%s18 + $0xb28] sm:$0xff]
    %v5520 = vld [vmem:[%s18 + $0xb30] sm:$0xff]
    %v5521 = vld [vmem:[%s18 + $0xb38] sm:$0xff]
    %v5522 = vld [vmem:[%s18 + $0xb40] sm:$0xff]
    %v5523 = vld [vmem:[%s18 + $0xb48] sm:$0xff]
    %v5524 = vld [vmem:[%s18 + $0xb50] sm:$0xff]
    %v5525 = vld [vmem:[%s18 + $0xb58] sm:$0xff]
    %v5526 = vld [vmem:[%s18 + $0xb60] sm:$0xff]
    %v5527 = vld [vmem:[%s18 + $0xb68] sm:$0xff]
    %v5528 = vld [vmem:[%s18 + $0xb70] sm:$0xff]
    %v5529 = vld [vmem:[%s18 + $0xb78] sm:$0xff]
    %v5530 = vld [vmem:[%s18 + $0xb80] sm:$0xff]
    %v5531 = vld [vmem:[%s18 + $0xb88] sm:$0xff]
    %v5532 = vld [vmem:[%s18 + $0xb90] sm:$0xff]
    %v5533 = vld [vmem:[%s18 + $0xb98] sm:$0xff]
    %v5534 = vld [vmem:[%s18 + $0xba0] sm:$0xff]
    %v5535 = vld [vmem:[%s18 + $0xba8] sm:$0xff]
    %v5536 = vld [vmem:[%s18 + $0xbb0] sm:$0xff]
    %v5537 = vld [vmem:[%s18 + $0xbb8] sm:$0xff]
    %v5538 = vld [vmem:[%s18 + $0xbc0] sm:$0xff]
    %v5539 = vld [vmem:[%s18 + $0xbc8] sm:$0xff]
    %v5540 = vld [vmem:[%s18 + $0xbd0] sm:$0xff]
    %v5541 = vld [vmem:[%s18 + $0xbd8] sm:$0xff]
    %v5542 = vld [vmem:[%s18 + $0xbe0] sm:$0xff]
    %v5543 = vld [vmem:[%s18 + $0xbe8] sm:$0xff]
    %v5544 = vld [vmem:[%s18 + $0xbf0] sm:$0xff]
    %v5545 = vld [vmem:[%s18 + $0xbf8] sm:$0xff]
    %v5546 = vld [vmem:[%s18 + $0xc00] sm:$0xff]
    %v5547 = vld [vmem:[%s18 + $0xc08] sm:$0xff]
    %v5548 = vld [vmem:[%s18 + $0xc10] sm:$0xff]
    %v5549 = vld [vmem:[%s18 + $0xc18] sm:$0xff]
    %v5550 = vld [vmem:[%s18 + $0xc20] sm:$0xff]
    %v5551 = vld [vmem:[%s18 + $0xc28] sm:$0xff]
    %v5552 = vld [vmem:[%s18 + $0xc30] sm:$0xff]
    %v5553 = vld [vmem:[%s18 + $0xc38] sm:$0xff]
    %v5554 = vld [vmem:[%s18 + $0xc40] sm:$0xff]
    %v5555 = vld [vmem:[%s18 + $0xc48] sm:$0xff]
    %v5556 = vld [vmem:[%s18 + $0xc50] sm:$0xff]
    %v5557 = vld [vmem:[%s18 + $0xc58] sm:$0xff]
    %v5558 = vld [vmem:[%s18 + $0xc60] sm:$0xff]
    %v5559 = vld [vmem:[%s18 + $0xc68] sm:$0xff]
    %v5560 = vld [vmem:[%s18 + $0xc70] sm:$0xff]
    %v5561 = vld [vmem:[%s18 + $0xc78] sm:$0xff]
    %v5562 = vld [vmem:[%s18 + $0xc80] sm:$0xff]
    %v5563 = vld [vmem:[%s18 + $0xc88] sm:$0xff]
    %v5564 = vld [vmem:[%s18 + $0xc90] sm:$0xff]
    %v5565 = vld [vmem:[%s18 + $0xc98] sm:$0xff]
    %v5566 = vld [vmem:[%s18 + $0xca0] sm:$0xff]
    %v5567 = vld [vmem:[%s18 + $0xca8] sm:$0xff]
    %v5568 = vld [vmem:[%s18 + $0xcb0] sm:$0xff]
    %v5569 = vld [vmem:[%s18 + $0xcb8] sm:$0xff]
    %v5570 = vld [vmem:[%s18 + $0xcc0] sm:$0xff]
    %v5571 = vld [vmem:[%s18 + $0xcc8] sm:$0xff]
    %v5572 = vld [vmem:[%s18 + $0xcd0] sm:$0xff]
    %v5573 = vld [vmem:[%s18 + $0xcd8] sm:$0xff]
    %v5574 = vld [vmem:[%s18 + $0xce0] sm:$0xff]
    %v5575 = vld [vmem:[%s18 + $0xce8] sm:$0xff]
    %v5576 = vld [vmem:[%s18 + $0xcf0] sm:$0xff]
    %v5577 = vld [vmem:[%s18 + $0xcf8] sm:$0xff]
    %v5578 = vpack.c.bf16 %v5148, %v5148
    %v5579 = vld [vmem:[%s19] sm:$0xff]
    %v5580 = vld [vmem:[%s19 + $0x8] sm:$0xff]
    %v5581 = vld [vmem:[%s19 + $0x10] sm:$0xff]
    %v5582 = vld [vmem:[%s19 + $0x18] sm:$0xff]
    %v5583 = vld [vmem:[%s19 + $0x20] sm:$0xff]
    %v5584 = vld [vmem:[%s19 + $0x28] sm:$0xff]
    %v5585 = vld [vmem:[%s19 + $0x30] sm:$0xff]
    %v5586 = vld [vmem:[%s19 + $0x38] sm:$0xff]
    %v5595 = vunpack.c.l.b16 %v5579
    %v5596 = vunpack.c.h.b16 %v5579
    %v5597 = vunpack.c.l.b16 %v5580
    %v5598 = vunpack.c.h.b16 %v5580
    %v5599 = vunpack.c.l.b16 %v5581
    %v5600 = vunpack.c.h.b16 %v5581
    %v5601 = vunpack.c.l.b16 %v5582
    %v5602 = vunpack.c.h.b16 %v5582
    %v5603 = vunpack.c.l.b16 %v5583
    %v5604 = vunpack.c.h.b16 %v5583
    %v5605 = vunpack.c.l.b16 %v5584
    %v5606 = vunpack.c.h.b16 %v5584
    %v5607 = vunpack.c.l.b16 %v5585
    %v5608 = vunpack.c.h.b16 %v5585
    %v5609 = vunpack.c.l.b16 %v5586
    %v5610 = vunpack.c.h.b16 %v5586
    %v5611 = vpack.c.b16 %v5599, %v5595
    %v5612 = vpack.c.b16 %v5600, %v5596
    %v5613 = vpack.c.b16 %v5601, %v5597
    %v5614 = vpack.c.b16 %v5602, %v5598
    %v5615 = vpack.c.b16 %v5607, %v5603
    %v5616 = vpack.c.b16 %v5608, %v5604
    %v5617 = vpack.c.b16 %v5609, %v5605
    %v5618 = vpack.c.b16 %v5610, %v5606
    %v5628 = vsel %vm4960, %v5578, 0
    %5630 = vmatprep.subr.bf16.mxu0 0
    %5631 = vmatpush1.bf16.msra.mxu0 0
    %5632 = vmatprep.subr.bf16.mxu0 0
    %5633 = vmatpush1.bf16.msra.mxu0 0
    %5634 = vmatprep.subr.bf16.mxu0 0
    %5635 = vmatpush1.bf16.msra.mxu0 0
    %5636 = vmatprep.subr.bf16.mxu0 0
    %5637 = vmatpush1.bf16.msra.mxu0 0
    %5638 = vmatprep.subr.bf16.mxu0 0
    %5639 = vmatpush1.bf16.msra.mxu0 0
    %5640 = vmatprep.subr.bf16.mxu0 0
    %5641 = vmatpush1.bf16.msra.mxu0 0
    %5642 = vmatprep.subr.bf16.mxu0 %v5616
    %5643 = vmatpush1.bf16.msra.mxu0 %v5615
    %5644 = vmatprep.subr.bf16.mxu0 %v5612
    %5645 = vmatpush1.bf16.msra.mxu0 %v5611
    %5646 = vmatprep.subr.bf16.mxu0 0
    %5647 = vmatpush2.bf16.msra.mxu0 0
    %5648 = vmatprep.subr.bf16.mxu0 0
    %5649 = vmatpush2.bf16.msra.mxu0 0
    %5650 = vmatprep.subr.bf16.mxu0 0
    %5651 = vmatpush2.bf16.msra.mxu0 0
    %5652 = vmatprep.subr.bf16.mxu0 0
    %5653 = vmatpush2.bf16.msra.mxu0 0
    %5654 = vmatprep.subr.bf16.mxu0 0
    %5655 = vmatpush2.bf16.msra.mxu0 0
    %5656 = vmatprep.subr.bf16.mxu0 0
    %5657 = vmatpush2.bf16.msra.mxu0 0
    %5658 = vmatprep.subr.bf16.mxu0 0
    %5659 = vmatpush2.bf16.msra.mxu0 0
    %5660 = vmatprep.subr.bf16.mxu0 0
    %5661 = vmatpush2.bf16.msra.mxu0 0
    %5662 = vmatprep.mubr.bf16.mxu0 0
    %5663 = vmatmul.mubr.bf16.gmra.mxu0 %v5628
    %v5664 = vpop.f32.mrf.mxu0
    %v5665 = vadd.f32 0.0, %v5664
    %v5666 = vpop.f32.mrf.mxu0
    %v5667 = vadd.f32 0.0, %v5666
    %v5668 = vpop.f32.mrf.mxu0
    %v5669 = vpop.f32.mrf.mxu0
    %5670 = vdwg.mxu0
    %5671 = vmatprep.subr.bf16.mxu0 0
    %5672 = vmatpush1.bf16.msra.mxu0 0
    %5673 = vmatprep.subr.bf16.mxu0 0
    %5674 = vmatpush1.bf16.msra.mxu0 0
    %5675 = vmatprep.subr.bf16.mxu0 0
    %5676 = vmatpush1.bf16.msra.mxu0 0
    %5677 = vmatprep.subr.bf16.mxu0 0
    %5678 = vmatpush1.bf16.msra.mxu0 0
    %5679 = vmatprep.subr.bf16.mxu0 0
    %5680 = vmatpush1.bf16.msra.mxu0 0
    %5681 = vmatprep.subr.bf16.mxu0 0
    %5682 = vmatpush1.bf16.msra.mxu0 0
    %5683 = vmatprep.subr.bf16.mxu0 %v5618
    %5684 = vmatpush1.bf16.msra.mxu0 %v5617
    %5685 = vmatprep.subr.bf16.mxu0 %v5614
    %5686 = vmatpush1.bf16.msra.mxu0 %v5613
    %5687 = vmatprep.subr.bf16.mxu0 0
    %5688 = vmatpush2.bf16.msra.mxu0 0
    %5689 = vmatprep.subr.bf16.mxu0 0
    %5690 = vmatpush2.bf16.msra.mxu0 0
    %5691 = vmatprep.subr.bf16.mxu0 0
    %5692 = vmatpush2.bf16.msra.mxu0 0
    %5693 = vmatprep.subr.bf16.mxu0 0
    %5694 = vmatpush2.bf16.msra.mxu0 0
    %5695 = vmatprep.subr.bf16.mxu0 0
    %5696 = vmatpush2.bf16.msra.mxu0 0
    %5697 = vmatprep.subr.bf16.mxu0 0
    %5698 = vmatpush2.bf16.msra.mxu0 0
    %5699 = vmatprep.subr.bf16.mxu0 0
    %5700 = vmatpush2.bf16.msra.mxu0 0
    %5701 = vmatprep.subr.bf16.mxu0 0
    %5702 = vmatpush2.bf16.msra.mxu0 0
    %5703 = vmatprep.mubr.bf16.mxu0 0
    %5704 = vmatmul.mubr.bf16.gmra.mxu0 %v5628
    %v5705 = vpop.f32.mrf.mxu0
    %v5706 = vadd.f32 0.0, %v5705
    %v5707 = vpop.f32.mrf.mxu0
    %v5708 = vadd.f32 0.0, %v5707
    %v5709 = vpop.f32.mrf.mxu0
    %v5710 = vpop.f32.mrf.mxu0
    %5711 = vdwg.mxu0
    %v6128 = vunpack.c.l.b16 %v5162
    %v6129 = vunpack.c.h.b16 %v5162
    %v6130 = vunpack.c.l.b16 %v5163
    %v6131 = vunpack.c.h.b16 %v5163
    %v6132 = vunpack.c.l.b16 %v5164
    %v6133 = vunpack.c.h.b16 %v5164
    %v6134 = vunpack.c.l.b16 %v5165
    %v6135 = vunpack.c.h.b16 %v5165
    %v6136 = vunpack.c.l.b16 %v5166
    %v6137 = vunpack.c.h.b16 %v5166
    %v6138 = vunpack.c.l.b16 %v5167
    %v6139 = vunpack.c.h.b16 %v5167
    %v6140 = vunpack.c.l.b16 %v5168
    %v6141 = vunpack.c.h.b16 %v5168
    %v6142 = vunpack.c.l.b16 %v5169
    %v6143 = vunpack.c.h.b16 %v5169
    %v6144 = vunpack.c.l.b16 %v5170
    %v6145 = vunpack.c.h.b16 %v5170
    %v6146 = vunpack.c.l.b16 %v5171
    %v6147 = vunpack.c.h.b16 %v5171
    %v6148 = vunpack.c.l.b16 %v5172
    %v6149 = vunpack.c.h.b16 %v5172
    %v6150 = vunpack.c.l.b16 %v5173
    %v6151 = vunpack.c.h.b16 %v5173
    %v6152 = vunpack.c.l.b16 %v5174
    %v6153 = vunpack.c.h.b16 %v5174
    %v6154 = vunpack.c.l.b16 %v5175
    %v6155 = vunpack.c.h.b16 %v5175
    %v6156 = vunpack.c.l.b16 %v5176
    %v6157 = vunpack.c.h.b16 %v5176
    %v6158 = vunpack.c.l.b16 %v5177
    %v6159 = vunpack.c.h.b16 %v5177
    %v6160 = vunpack.c.l.b16 %v5178
    %v6161 = vunpack.c.h.b16 %v5178
    %v6162 = vunpack.c.l.b16 %v5179
    %v6163 = vunpack.c.h.b16 %v5179
    %v6164 = vunpack.c.l.b16 %v5180
    %v6165 = vunpack.c.h.b16 %v5180
    %v6166 = vunpack.c.l.b16 %v5181
    %v6167 = vunpack.c.h.b16 %v5181
    %v6168 = vunpack.c.l.b16 %v5182
    %v6169 = vunpack.c.h.b16 %v5182
    %v6170 = vunpack.c.l.b16 %v5183
    %v6171 = vunpack.c.h.b16 %v5183
    %v6172 = vunpack.c.l.b16 %v5184
    %v6173 = vunpack.c.h.b16 %v5184
    %v6174 = vunpack.c.l.b16 %v5185
    %v6175 = vunpack.c.h.b16 %v5185
    %v6176 = vunpack.c.l.b16 %v5186
    %v6177 = vunpack.c.h.b16 %v5186
    %v6178 = vunpack.c.l.b16 %v5187
    %v6179 = vunpack.c.h.b16 %v5187
    %v6180 = vunpack.c.l.b16 %v5188
    %v6181 = vunpack.c.h.b16 %v5188
    %v6182 = vunpack.c.l.b16 %v5189
    %v6183 = vunpack.c.h.b16 %v5189
    %v6184 = vunpack.c.l.b16 %v5190
    %v6185 = vunpack.c.h.b16 %v5190
    %v6186 = vunpack.c.l.b16 %v5191
    %v6187 = vunpack.c.h.b16 %v5191
    %v6188 = vunpack.c.l.b16 %v5192
    %v6189 = vunpack.c.h.b16 %v5192
    %v6190 = vunpack.c.l.b16 %v5193
    %v6191 = vunpack.c.h.b16 %v5193
    %v6192 = vunpack.c.l.b16 %v5194
    %v6193 = vunpack.c.h.b16 %v5194
    %v6194 = vunpack.c.l.b16 %v5195
    %v6195 = vunpack.c.h.b16 %v5195
    %v6196 = vunpack.c.l.b16 %v5196
    %v6197 = vunpack.c.h.b16 %v5196
    %v6198 = vunpack.c.l.b16 %v5197
    %v6199 = vunpack.c.h.b16 %v5197
    %v6200 = vunpack.c.l.b16 %v5198
    %v6201 = vunpack.c.h.b16 %v5198
    %v6202 = vunpack.c.l.b16 %v5199
    %v6203 = vunpack.c.h.b16 %v5199
    %v6204 = vunpack.c.l.b16 %v5200
    %v6205 = vunpack.c.h.b16 %v5200
    %v6206 = vunpack.c.l.b16 %v5201
    %v6207 = vunpack.c.h.b16 %v5201
    %v6208 = vunpack.c.l.b16 %v5202
    %v6209 = vunpack.c.h.b16 %v5202
    %v6210 = vunpack.c.l.b16 %v5203
    %v6211 = vunpack.c.h.b16 %v5203
    %v6212 = vunpack.c.l.b16 %v5204
    %v6213 = vunpack.c.h.b16 %v5204
    %v6214 = vunpack.c.l.b16 %v5205
    %v6215 = vunpack.c.h.b16 %v5205
    %v6216 = vunpack.c.l.b16 %v5206
    %v6217 = vunpack.c.h.b16 %v5206
    %v6218 = vunpack.c.l.b16 %v5207
    %v6219 = vunpack.c.h.b16 %v5207
    %v6220 = vunpack.c.l.b16 %v5208
    %v6221 = vunpack.c.h.b16 %v5208
    %v6222 = vunpack.c.l.b16 %v5209
    %v6223 = vunpack.c.h.b16 %v5209
    %v6224 = vunpack.c.l.b16 %v5210
    %v6225 = vunpack.c.h.b16 %v5210
    %v6226 = vunpack.c.l.b16 %v5211
    %v6227 = vunpack.c.h.b16 %v5211
    %v6228 = vunpack.c.l.b16 %v5212
    %v6229 = vunpack.c.h.b16 %v5212
    %v6230 = vunpack.c.l.b16 %v5213
    %v6231 = vunpack.c.h.b16 %v5213
    %v6232 = vunpack.c.l.b16 %v5214
    %v6233 = vunpack.c.h.b16 %v5214
    %v6234 = vunpack.c.l.b16 %v5215
    %v6235 = vunpack.c.h.b16 %v5215
    %v6236 = vunpack.c.l.b16 %v5216
    %v6237 = vunpack.c.h.b16 %v5216
    %v6238 = vunpack.c.l.b16 %v5217
    %v6239 = vunpack.c.h.b16 %v5217
    %v6240 = vunpack.c.l.b16 %v5218
    %v6241 = vunpack.c.h.b16 %v5218
    %v6242 = vunpack.c.l.b16 %v5219
    %v6243 = vunpack.c.h.b16 %v5219
    %v6244 = vunpack.c.l.b16 %v5220
    %v6245 = vunpack.c.h.b16 %v5220
    %v6246 = vunpack.c.l.b16 %v5221
    %v6247 = vunpack.c.h.b16 %v5221
    %v6248 = vunpack.c.l.b16 %v5222
    %v6249 = vunpack.c.h.b16 %v5222
    %v6250 = vunpack.c.l.b16 %v5223
    %v6251 = vunpack.c.h.b16 %v5223
    %v6252 = vunpack.c.l.b16 %v5224
    %v6253 = vunpack.c.h.b16 %v5224
    %v6254 = vunpack.c.l.b16 %v5225
    %v6255 = vunpack.c.h.b16 %v5225
    %v6256 = vunpack.c.l.b16 %v5226
    %v6257 = vunpack.c.h.b16 %v5226
    %v6258 = vunpack.c.l.b16 %v5227
    %v6259 = vunpack.c.h.b16 %v5227
    %v6260 = vunpack.c.l.b16 %v5228
    %v6261 = vunpack.c.h.b16 %v5228
    %v6262 = vunpack.c.l.b16 %v5229
    %v6263 = vunpack.c.h.b16 %v5229
    %v6264 = vunpack.c.l.b16 %v5230
    %v6265 = vunpack.c.h.b16 %v5230
    %v6266 = vunpack.c.l.b16 %v5231
    %v6267 = vunpack.c.h.b16 %v5231
    %v6268 = vunpack.c.l.b16 %v5232
    %v6269 = vunpack.c.h.b16 %v5232
    %v6270 = vunpack.c.l.b16 %v5233
    %v6271 = vunpack.c.h.b16 %v5233
    %v6272 = vunpack.c.l.b16 %v5234
    %v6273 = vunpack.c.h.b16 %v5234
    %v6274 = vunpack.c.l.b16 %v5235
    %v6275 = vunpack.c.h.b16 %v5235
    %v6276 = vunpack.c.l.b16 %v5236
    %v6277 = vunpack.c.h.b16 %v5236
    %v6278 = vunpack.c.l.b16 %v5237
    %v6279 = vunpack.c.h.b16 %v5237
    %v6280 = vunpack.c.l.b16 %v5238
    %v6281 = vunpack.c.h.b16 %v5238
    %v6282 = vunpack.c.l.b16 %v5239
    %v6283 = vunpack.c.h.b16 %v5239
    %v6284 = vunpack.c.l.b16 %v5240
    %v6285 = vunpack.c.h.b16 %v5240
    %v6286 = vunpack.c.l.b16 %v5241
    %v6287 = vunpack.c.h.b16 %v5241
    %v6288 = vunpack.c.l.b16 %v5242
    %v6289 = vunpack.c.h.b16 %v5242
    %v6290 = vunpack.c.l.b16 %v5243
    %v6291 = vunpack.c.h.b16 %v5243
    %v6292 = vunpack.c.l.b16 %v5244
    %v6293 = vunpack.c.h.b16 %v5244
    %v6294 = vunpack.c.l.b16 %v5245
    %v6295 = vunpack.c.h.b16 %v5245
    %v6296 = vunpack.c.l.b16 %v5246
    %v6297 = vunpack.c.h.b16 %v5246
    %v6298 = vunpack.c.l.b16 %v5247
    %v6299 = vunpack.c.h.b16 %v5247
    %v6300 = vunpack.c.l.b16 %v5248
    %v6301 = vunpack.c.h.b16 %v5248
    %v6302 = vunpack.c.l.b16 %v5249
    %v6303 = vunpack.c.h.b16 %v5249
    %v6304 = vunpack.c.l.b16 %v5250
    %v6305 = vunpack.c.h.b16 %v5250
    %v6306 = vunpack.c.l.b16 %v5251
    %v6307 = vunpack.c.h.b16 %v5251
    %v6308 = vunpack.c.l.b16 %v5252
    %v6309 = vunpack.c.h.b16 %v5252
    %v6310 = vunpack.c.l.b16 %v5253
    %v6311 = vunpack.c.h.b16 %v5253
    %v6312 = vunpack.c.l.b16 %v5254
    %v6313 = vunpack.c.h.b16 %v5254
    %v6314 = vunpack.c.l.b16 %v5255
    %v6315 = vunpack.c.h.b16 %v5255
    %v6316 = vunpack.c.l.b16 %v5256
    %v6317 = vunpack.c.h.b16 %v5256
    %v6318 = vunpack.c.l.b16 %v5257
    %v6319 = vunpack.c.h.b16 %v5257
    %v6320 = vunpack.c.l.b16 %v5258
    %v6321 = vunpack.c.h.b16 %v5258
    %v6322 = vunpack.c.l.b16 %v5259
    %v6323 = vunpack.c.h.b16 %v5259
    %v6324 = vunpack.c.l.b16 %v5260
    %v6325 = vunpack.c.h.b16 %v5260
    %v6326 = vunpack.c.l.b16 %v5261
    %v6327 = vunpack.c.h.b16 %v5261
    %v6328 = vunpack.c.l.b16 %v5262
    %v6329 = vunpack.c.h.b16 %v5262
    %v6330 = vunpack.c.l.b16 %v5263
    %v6331 = vunpack.c.h.b16 %v5263
    %v6332 = vunpack.c.l.b16 %v5264
    %v6333 = vunpack.c.h.b16 %v5264
    %v6334 = vunpack.c.l.b16 %v5265
    %v6335 = vunpack.c.h.b16 %v5265
    %v6336 = vunpack.c.l.b16 %v5266
    %v6337 = vunpack.c.h.b16 %v5266
    %v6338 = vunpack.c.l.b16 %v5267
    %v6339 = vunpack.c.h.b16 %v5267
    %v6340 = vunpack.c.l.b16 %v5268
    %v6341 = vunpack.c.h.b16 %v5268
    %v6342 = vunpack.c.l.b16 %v5269
    %v6343 = vunpack.c.h.b16 %v5269
    %v6344 = vunpack.c.l.b16 %v5270
    %v6345 = vunpack.c.h.b16 %v5270
    %v6346 = vunpack.c.l.b16 %v5271
    %v6347 = vunpack.c.h.b16 %v5271
    %v6348 = vunpack.c.l.b16 %v5272
    %v6349 = vunpack.c.h.b16 %v5272
    %v6350 = vunpack.c.l.b16 %v5273
    %v6351 = vunpack.c.h.b16 %v5273
    %v6352 = vunpack.c.l.b16 %v5274
    %v6353 = vunpack.c.h.b16 %v5274
    %v6354 = vunpack.c.l.b16 %v5275
    %v6355 = vunpack.c.h.b16 %v5275
    %v6356 = vunpack.c.l.b16 %v5276
    %v6357 = vunpack.c.h.b16 %v5276
    %v6358 = vunpack.c.l.b16 %v5277
    %v6359 = vunpack.c.h.b16 %v5277
    %v6360 = vunpack.c.l.b16 %v5278
    %v6361 = vunpack.c.h.b16 %v5278
    %v6362 = vunpack.c.l.b16 %v5279
    %v6363 = vunpack.c.h.b16 %v5279
    %v6364 = vunpack.c.l.b16 %v5280
    %v6365 = vunpack.c.h.b16 %v5280
    %v6366 = vunpack.c.l.b16 %v5281
    %v6367 = vunpack.c.h.b16 %v5281
    %v6368 = vunpack.c.l.b16 %v5282
    %v6369 = vunpack.c.h.b16 %v5282
    %v6370 = vunpack.c.l.b16 %v5283
    %v6371 = vunpack.c.h.b16 %v5283
    %v6372 = vunpack.c.l.b16 %v5284
    %v6373 = vunpack.c.h.b16 %v5284
    %v6374 = vunpack.c.l.b16 %v5285
    %v6375 = vunpack.c.h.b16 %v5285
    %v6376 = vunpack.c.l.b16 %v5286
    %v6377 = vunpack.c.h.b16 %v5286
    %v6378 = vunpack.c.l.b16 %v5287
    %v6379 = vunpack.c.h.b16 %v5287
    %v6380 = vunpack.c.l.b16 %v5288
    %v6381 = vunpack.c.h.b16 %v5288
    %v6382 = vunpack.c.l.b16 %v5289
    %v6383 = vunpack.c.h.b16 %v5289
    %v6384 = vunpack.c.l.b16 %v5290
    %v6385 = vunpack.c.h.b16 %v5290
    %v6386 = vunpack.c.l.b16 %v5291
    %v6387 = vunpack.c.h.b16 %v5291
    %v6388 = vunpack.c.l.b16 %v5292
    %v6389 = vunpack.c.h.b16 %v5292
    %v6390 = vunpack.c.l.b16 %v5293
    %v6391 = vunpack.c.h.b16 %v5293
    %v6392 = vunpack.c.l.b16 %v5294
    %v6393 = vunpack.c.h.b16 %v5294
    %v6394 = vunpack.c.l.b16 %v5295
    %v6395 = vunpack.c.h.b16 %v5295
    %v6396 = vunpack.c.l.b16 %v5296
    %v6397 = vunpack.c.h.b16 %v5296
    %v6398 = vunpack.c.l.b16 %v5297
    %v6399 = vunpack.c.h.b16 %v5297
    %v6400 = vunpack.c.l.b16 %v5298
    %v6401 = vunpack.c.h.b16 %v5298
    %v6402 = vunpack.c.l.b16 %v5299
    %v6403 = vunpack.c.h.b16 %v5299
    %v6404 = vunpack.c.l.b16 %v5300
    %v6405 = vunpack.c.h.b16 %v5300
    %v6406 = vunpack.c.l.b16 %v5301
    %v6407 = vunpack.c.h.b16 %v5301
    %v6408 = vunpack.c.l.b16 %v5302
    %v6409 = vunpack.c.h.b16 %v5302
    %v6410 = vunpack.c.l.b16 %v5303
    %v6411 = vunpack.c.h.b16 %v5303
    %v6412 = vunpack.c.l.b16 %v5304
    %v6413 = vunpack.c.h.b16 %v5304
    %v6414 = vunpack.c.l.b16 %v5305
    %v6415 = vunpack.c.h.b16 %v5305
    %v6416 = vunpack.c.l.b16 %v5306
    %v6417 = vunpack.c.h.b16 %v5306
    %v6418 = vunpack.c.l.b16 %v5307
    %v6419 = vunpack.c.h.b16 %v5307
    %v6420 = vunpack.c.l.b16 %v5308
    %v6421 = vunpack.c.h.b16 %v5308
    %v6422 = vunpack.c.l.b16 %v5309
    %v6423 = vunpack.c.h.b16 %v5309
    %v6424 = vunpack.c.l.b16 %v5310
    %v6425 = vunpack.c.h.b16 %v5310
    %v6426 = vunpack.c.l.b16 %v5311
    %v6427 = vunpack.c.h.b16 %v5311
    %v6428 = vunpack.c.l.b16 %v5312
    %v6429 = vunpack.c.h.b16 %v5312
    %v6430 = vunpack.c.l.b16 %v5313
    %v6431 = vunpack.c.h.b16 %v5313
    %v6432 = vunpack.c.l.b16 %v5314
    %v6433 = vunpack.c.h.b16 %v5314
    %v6434 = vunpack.c.l.b16 %v5315
    %v6435 = vunpack.c.h.b16 %v5315
    %v6436 = vunpack.c.l.b16 %v5316
    %v6437 = vunpack.c.h.b16 %v5316
    %v6438 = vunpack.c.l.b16 %v5317
    %v6439 = vunpack.c.h.b16 %v5317
    %v6440 = vunpack.c.l.b16 %v5318
    %v6441 = vunpack.c.h.b16 %v5318
    %v6442 = vunpack.c.l.b16 %v5319
    %v6443 = vunpack.c.h.b16 %v5319
    %v6444 = vunpack.c.l.b16 %v5320
    %v6445 = vunpack.c.h.b16 %v5320
    %v6446 = vunpack.c.l.b16 %v5321
    %v6447 = vunpack.c.h.b16 %v5321
    %v6448 = vunpack.c.l.b16 %v5322
    %v6449 = vunpack.c.h.b16 %v5322
    %v6450 = vunpack.c.l.b16 %v5323
    %v6451 = vunpack.c.h.b16 %v5323
    %v6452 = vunpack.c.l.b16 %v5324
    %v6453 = vunpack.c.h.b16 %v5324
    %v6454 = vunpack.c.l.b16 %v5325
    %v6455 = vunpack.c.h.b16 %v5325
    %v6456 = vunpack.c.l.b16 %v5326
    %v6457 = vunpack.c.h.b16 %v5326
    %v6458 = vunpack.c.l.b16 %v5327
    %v6459 = vunpack.c.h.b16 %v5327
    %v6460 = vunpack.c.l.b16 %v5328
    %v6461 = vunpack.c.h.b16 %v5328
    %v6462 = vunpack.c.l.b16 %v5329
    %v6463 = vunpack.c.h.b16 %v5329
    %v6464 = vunpack.c.l.b16 %v5330
    %v6465 = vunpack.c.h.b16 %v5330
    %v6466 = vunpack.c.l.b16 %v5331
    %v6467 = vunpack.c.h.b16 %v5331
    %v6468 = vunpack.c.l.b16 %v5332
    %v6469 = vunpack.c.h.b16 %v5332
    %v6470 = vunpack.c.l.b16 %v5333
    %v6471 = vunpack.c.h.b16 %v5333
    %v6472 = vunpack.c.l.b16 %v5334
    %v6473 = vunpack.c.h.b16 %v5334
    %v6474 = vunpack.c.l.b16 %v5335
    %v6475 = vunpack.c.h.b16 %v5335
    %v6476 = vunpack.c.l.b16 %v5336
    %v6477 = vunpack.c.h.b16 %v5336
    %v6478 = vunpack.c.l.b16 %v5337
    %v6479 = vunpack.c.h.b16 %v5337
    %v6480 = vunpack.c.l.b16 %v5338
    %v6481 = vunpack.c.h.b16 %v5338
    %v6482 = vunpack.c.l.b16 %v5339
    %v6483 = vunpack.c.h.b16 %v5339
    %v6484 = vunpack.c.l.b16 %v5340
    %v6485 = vunpack.c.h.b16 %v5340
    %v6486 = vunpack.c.l.b16 %v5341
    %v6487 = vunpack.c.h.b16 %v5341
    %v6488 = vunpack.c.l.b16 %v5342
    %v6489 = vunpack.c.h.b16 %v5342
    %v6490 = vunpack.c.l.b16 %v5343
    %v6491 = vunpack.c.h.b16 %v5343
    %v6492 = vunpack.c.l.b16 %v5344
    %v6493 = vunpack.c.h.b16 %v5344
    %v6494 = vunpack.c.l.b16 %v5345
    %v6495 = vunpack.c.h.b16 %v5345
    %v6496 = vunpack.c.l.b16 %v5346
    %v6497 = vunpack.c.h.b16 %v5346
    %v6498 = vunpack.c.l.b16 %v5347
    %v6499 = vunpack.c.h.b16 %v5347
    %v6500 = vunpack.c.l.b16 %v5348
    %v6501 = vunpack.c.h.b16 %v5348
    %v6502 = vunpack.c.l.b16 %v5349
    %v6503 = vunpack.c.h.b16 %v5349
    %v6504 = vunpack.c.l.b16 %v5350
    %v6505 = vunpack.c.h.b16 %v5350
    %v6506 = vunpack.c.l.b16 %v5351
    %v6507 = vunpack.c.h.b16 %v5351
    %v6508 = vunpack.c.l.b16 %v5352
    %v6509 = vunpack.c.h.b16 %v5352
    %v6510 = vunpack.c.l.b16 %v5353
    %v6511 = vunpack.c.h.b16 %v5353
    %v6512 = vunpack.c.l.b16 %v5354
    %v6513 = vunpack.c.h.b16 %v5354
    %v6514 = vunpack.c.l.b16 %v5355
    %v6515 = vunpack.c.h.b16 %v5355
    %v6516 = vunpack.c.l.b16 %v5356
    %v6517 = vunpack.c.h.b16 %v5356
    %v6518 = vunpack.c.l.b16 %v5357
    %v6519 = vunpack.c.h.b16 %v5357
    %v6520 = vunpack.c.l.b16 %v5358
    %v6521 = vunpack.c.h.b16 %v5358
    %v6522 = vunpack.c.l.b16 %v5359
    %v6523 = vunpack.c.h.b16 %v5359
    %v6524 = vunpack.c.l.b16 %v5360
    %v6525 = vunpack.c.h.b16 %v5360
    %v6526 = vunpack.c.l.b16 %v5361
    %v6527 = vunpack.c.h.b16 %v5361
    %v6528 = vunpack.c.l.b16 %v5362
    %v6529 = vunpack.c.h.b16 %v5362
    %v6530 = vunpack.c.l.b16 %v5363
    %v6531 = vunpack.c.h.b16 %v5363
    %v6532 = vunpack.c.l.b16 %v5364
    %v6533 = vunpack.c.h.b16 %v5364
    %v6534 = vunpack.c.l.b16 %v5365
    %v6535 = vunpack.c.h.b16 %v5365
    %v6536 = vunpack.c.l.b16 %v5366
    %v6537 = vunpack.c.h.b16 %v5366
    %v6538 = vunpack.c.l.b16 %v5367
    %v6539 = vunpack.c.h.b16 %v5367
    %v6540 = vunpack.c.l.b16 %v5368
    %v6541 = vunpack.c.h.b16 %v5368
    %v6542 = vunpack.c.l.b16 %v5369
    %v6543 = vunpack.c.h.b16 %v5369
    %v6544 = vunpack.c.l.b16 %v5370
    %v6545 = vunpack.c.h.b16 %v5370
    %v6546 = vunpack.c.l.b16 %v5371
    %v6547 = vunpack.c.h.b16 %v5371
    %v6548 = vunpack.c.l.b16 %v5372
    %v6549 = vunpack.c.h.b16 %v5372
    %v6550 = vunpack.c.l.b16 %v5373
    %v6551 = vunpack.c.h.b16 %v5373
    %v6552 = vunpack.c.l.b16 %v5374
    %v6553 = vunpack.c.h.b16 %v5374
    %v6554 = vunpack.c.l.b16 %v5375
    %v6555 = vunpack.c.h.b16 %v5375
    %v6556 = vunpack.c.l.b16 %v5376
    %v6557 = vunpack.c.h.b16 %v5376
    %v6558 = vunpack.c.l.b16 %v5377
    %v6559 = vunpack.c.h.b16 %v5377
    %v6560 = vunpack.c.l.b16 %v5378
    %v6561 = vunpack.c.h.b16 %v5378
    %v6562 = vunpack.c.l.b16 %v5379
    %v6563 = vunpack.c.h.b16 %v5379
    %v6564 = vunpack.c.l.b16 %v5380
    %v6565 = vunpack.c.h.b16 %v5380
    %v6566 = vunpack.c.l.b16 %v5381
    %v6567 = vunpack.c.h.b16 %v5381
    %v6568 = vunpack.c.l.b16 %v5382
    %v6569 = vunpack.c.h.b16 %v5382
    %v6570 = vunpack.c.l.b16 %v5383
    %v6571 = vunpack.c.h.b16 %v5383
    %v6572 = vunpack.c.l.b16 %v5384
    %v6573 = vunpack.c.h.b16 %v5384
    %v6574 = vunpack.c.l.b16 %v5385
    %v6575 = vunpack.c.h.b16 %v5385
    %v6576 = vunpack.c.l.b16 %v5386
    %v6577 = vunpack.c.h.b16 %v5386
    %v6578 = vunpack.c.l.b16 %v5387
    %v6579 = vunpack.c.h.b16 %v5387
    %v6580 = vunpack.c.l.b16 %v5388
    %v6581 = vunpack.c.h.b16 %v5388
    %v6582 = vunpack.c.l.b16 %v5389
    %v6583 = vunpack.c.h.b16 %v5389
    %v6584 = vunpack.c.l.b16 %v5390
    %v6585 = vunpack.c.h.b16 %v5390
    %v6586 = vunpack.c.l.b16 %v5391
    %v6587 = vunpack.c.h.b16 %v5391
    %v6588 = vunpack.c.l.b16 %v5392
    %v6589 = vunpack.c.h.b16 %v5392
    %v6590 = vunpack.c.l.b16 %v5393
    %v6591 = vunpack.c.h.b16 %v5393
    %v6592 = vunpack.c.l.b16 %v5394
    %v6593 = vunpack.c.h.b16 %v5394
    %v6594 = vunpack.c.l.b16 %v5395
    %v6595 = vunpack.c.h.b16 %v5395
    %v6596 = vunpack.c.l.b16 %v5396
    %v6597 = vunpack.c.h.b16 %v5396
    %v6598 = vunpack.c.l.b16 %v5397
    %v6599 = vunpack.c.h.b16 %v5397
    %v6600 = vunpack.c.l.b16 %v5398
    %v6601 = vunpack.c.h.b16 %v5398
    %v6602 = vunpack.c.l.b16 %v5399
    %v6603 = vunpack.c.h.b16 %v5399
    %v6604 = vunpack.c.l.b16 %v5400
    %v6605 = vunpack.c.h.b16 %v5400
    %v6606 = vunpack.c.l.b16 %v5401
    %v6607 = vunpack.c.h.b16 %v5401
    %v6608 = vunpack.c.l.b16 %v5402
    %v6609 = vunpack.c.h.b16 %v5402
    %v6610 = vunpack.c.l.b16 %v5403
    %v6611 = vunpack.c.h.b16 %v5403
    %v6612 = vunpack.c.l.b16 %v5404
    %v6613 = vunpack.c.h.b16 %v5404
    %v6614 = vunpack.c.l.b16 %v5405
    %v6615 = vunpack.c.h.b16 %v5405
    %v6616 = vunpack.c.l.b16 %v5406
    %v6617 = vunpack.c.h.b16 %v5406
    %v6618 = vunpack.c.l.b16 %v5407
    %v6619 = vunpack.c.h.b16 %v5407
    %v6620 = vunpack.c.l.b16 %v5408
    %v6621 = vunpack.c.h.b16 %v5408
    %v6622 = vunpack.c.l.b16 %v5409
    %v6623 = vunpack.c.h.b16 %v5409
    %v6624 = vunpack.c.l.b16 %v5410
    %v6625 = vunpack.c.h.b16 %v5410
    %v6626 = vunpack.c.l.b16 %v5411
    %v6627 = vunpack.c.h.b16 %v5411
    %v6628 = vunpack.c.l.b16 %v5412
    %v6629 = vunpack.c.h.b16 %v5412
    %v6630 = vunpack.c.l.b16 %v5413
    %v6631 = vunpack.c.h.b16 %v5413
    %v6632 = vunpack.c.l.b16 %v5414
    %v6633 = vunpack.c.h.b16 %v5414
    %v6634 = vunpack.c.l.b16 %v5415
    %v6635 = vunpack.c.h.b16 %v5415
    %v6636 = vunpack.c.l.b16 %v5416
    %v6637 = vunpack.c.h.b16 %v5416
    %v6638 = vunpack.c.l.b16 %v5417
    %v6639 = vunpack.c.h.b16 %v5417
    %v6640 = vunpack.c.l.b16 %v5418
    %v6641 = vunpack.c.h.b16 %v5418
    %v6642 = vunpack.c.l.b16 %v5419
    %v6643 = vunpack.c.h.b16 %v5419
    %v6644 = vunpack.c.l.b16 %v5420
    %v6645 = vunpack.c.h.b16 %v5420
    %v6646 = vunpack.c.l.b16 %v5421
    %v6647 = vunpack.c.h.b16 %v5421
    %v6648 = vunpack.c.l.b16 %v5422
    %v6649 = vunpack.c.h.b16 %v5422
    %v6650 = vunpack.c.l.b16 %v5423
    %v6651 = vunpack.c.h.b16 %v5423
    %v6652 = vunpack.c.l.b16 %v5424
    %v6653 = vunpack.c.h.b16 %v5424
    %v6654 = vunpack.c.l.b16 %v5425
    %v6655 = vunpack.c.h.b16 %v5425
    %v6656 = vunpack.c.l.b16 %v5426
    %v6657 = vunpack.c.h.b16 %v5426
    %v6658 = vunpack.c.l.b16 %v5427
    %v6659 = vunpack.c.h.b16 %v5427
    %v6660 = vunpack.c.l.b16 %v5428
    %v6661 = vunpack.c.h.b16 %v5428
    %v6662 = vunpack.c.l.b16 %v5429
    %v6663 = vunpack.c.h.b16 %v5429
    %v6664 = vunpack.c.l.b16 %v5430
    %v6665 = vunpack.c.h.b16 %v5430
    %v6666 = vunpack.c.l.b16 %v5431
    %v6667 = vunpack.c.h.b16 %v5431
    %v6668 = vunpack.c.l.b16 %v5432
    %v6669 = vunpack.c.h.b16 %v5432
    %v6670 = vunpack.c.l.b16 %v5433
    %v6671 = vunpack.c.h.b16 %v5433
    %v6672 = vunpack.c.l.b16 %v5434
    %v6673 = vunpack.c.h.b16 %v5434
    %v6674 = vunpack.c.l.b16 %v5435
    %v6675 = vunpack.c.h.b16 %v5435
    %v6676 = vunpack.c.l.b16 %v5436
    %v6677 = vunpack.c.h.b16 %v5436
    %v6678 = vunpack.c.l.b16 %v5437
    %v6679 = vunpack.c.h.b16 %v5437
    %v6680 = vunpack.c.l.b16 %v5438
    %v6681 = vunpack.c.h.b16 %v5438
    %v6682 = vunpack.c.l.b16 %v5439
    %v6683 = vunpack.c.h.b16 %v5439
    %v6684 = vunpack.c.l.b16 %v5440
    %v6685 = vunpack.c.h.b16 %v5440
    %v6686 = vunpack.c.l.b16 %v5441
    %v6687 = vunpack.c.h.b16 %v5441
    %v6688 = vunpack.c.l.b16 %v5442
    %v6689 = vunpack.c.h.b16 %v5442
    %v6690 = vunpack.c.l.b16 %v5443
    %v6691 = vunpack.c.h.b16 %v5443
    %v6692 = vunpack.c.l.b16 %v5444
    %v6693 = vunpack.c.h.b16 %v5444
    %v6694 = vunpack.c.l.b16 %v5445
    %v6695 = vunpack.c.h.b16 %v5445
    %v6696 = vunpack.c.l.b16 %v5446
    %v6697 = vunpack.c.h.b16 %v5446
    %v6698 = vunpack.c.l.b16 %v5447
    %v6699 = vunpack.c.h.b16 %v5447
    %v6700 = vunpack.c.l.b16 %v5448
    %v6701 = vunpack.c.h.b16 %v5448
    %v6702 = vunpack.c.l.b16 %v5449
    %v6703 = vunpack.c.h.b16 %v5449
    %v6704 = vunpack.c.l.b16 %v5450
    %v6705 = vunpack.c.h.b16 %v5450
    %v6706 = vunpack.c.l.b16 %v5451
    %v6707 = vunpack.c.h.b16 %v5451
    %v6708 = vunpack.c.l.b16 %v5452
    %v6709 = vunpack.c.h.b16 %v5452
    %v6710 = vunpack.c.l.b16 %v5453
    %v6711 = vunpack.c.h.b16 %v5453
    %v6712 = vunpack.c.l.b16 %v5454
    %v6713 = vunpack.c.h.b16 %v5454
    %v6714 = vunpack.c.l.b16 %v5455
    %v6715 = vunpack.c.h.b16 %v5455
    %v6716 = vunpack.c.l.b16 %v5456
    %v6717 = vunpack.c.h.b16 %v5456
    %v6718 = vunpack.c.l.b16 %v5457
    %v6719 = vunpack.c.h.b16 %v5457
    %v6720 = vunpack.c.l.b16 %v5458
    %v6721 = vunpack.c.h.b16 %v5458
    %v6722 = vunpack.c.l.b16 %v5459
    %v6723 = vunpack.c.h.b16 %v5459
    %v6724 = vunpack.c.l.b16 %v5460
    %v6725 = vunpack.c.h.b16 %v5460
    %v6726 = vunpack.c.l.b16 %v5461
    %v6727 = vunpack.c.h.b16 %v5461
    %v6728 = vunpack.c.l.b16 %v5462
    %v6729 = vunpack.c.h.b16 %v5462
    %v6730 = vunpack.c.l.b16 %v5463
    %v6731 = vunpack.c.h.b16 %v5463
    %v6732 = vunpack.c.l.b16 %v5464
    %v6733 = vunpack.c.h.b16 %v5464
    %v6734 = vunpack.c.l.b16 %v5465
    %v6735 = vunpack.c.h.b16 %v5465
    %v6736 = vunpack.c.l.b16 %v5466
    %v6737 = vunpack.c.h.b16 %v5466
    %v6738 = vunpack.c.l.b16 %v5467
    %v6739 = vunpack.c.h.b16 %v5467
    %v6740 = vunpack.c.l.b16 %v5468
    %v6741 = vunpack.c.h.b16 %v5468
    %v6742 = vunpack.c.l.b16 %v5469
    %v6743 = vunpack.c.h.b16 %v5469
    %v6744 = vunpack.c.l.b16 %v5470
    %v6745 = vunpack.c.h.b16 %v5470
    %v6746 = vunpack.c.l.b16 %v5471
    %v6747 = vunpack.c.h.b16 %v5471
    %v6748 = vunpack.c.l.b16 %v5472
    %v6749 = vunpack.c.h.b16 %v5472
    %v6750 = vunpack.c.l.b16 %v5473
    %v6751 = vunpack.c.h.b16 %v5473
    %v6752 = vunpack.c.l.b16 %v5474
    %v6753 = vunpack.c.h.b16 %v5474
    %v6754 = vunpack.c.l.b16 %v5475
    %v6755 = vunpack.c.h.b16 %v5475
    %v6756 = vunpack.c.l.b16 %v5476
    %v6757 = vunpack.c.h.b16 %v5476
    %v6758 = vunpack.c.l.b16 %v5477
    %v6759 = vunpack.c.h.b16 %v5477
    %v6760 = vunpack.c.l.b16 %v5478
    %v6761 = vunpack.c.h.b16 %v5478
    %v6762 = vunpack.c.l.b16 %v5479
    %v6763 = vunpack.c.h.b16 %v5479
    %v6764 = vunpack.c.l.b16 %v5480
    %v6765 = vunpack.c.h.b16 %v5480
    %v6766 = vunpack.c.l.b16 %v5481
    %v6767 = vunpack.c.h.b16 %v5481
    %v6768 = vunpack.c.l.b16 %v5482
    %v6769 = vunpack.c.h.b16 %v5482
    %v6770 = vunpack.c.l.b16 %v5483
    %v6771 = vunpack.c.h.b16 %v5483
    %v6772 = vunpack.c.l.b16 %v5484
    %v6773 = vunpack.c.h.b16 %v5484
    %v6774 = vunpack.c.l.b16 %v5485
    %v6775 = vunpack.c.h.b16 %v5485
    %v6776 = vunpack.c.l.b16 %v5486
    %v6777 = vunpack.c.h.b16 %v5486
    %v6778 = vunpack.c.l.b16 %v5487
    %v6779 = vunpack.c.h.b16 %v5487
    %v6780 = vunpack.c.l.b16 %v5488
    %v6781 = vunpack.c.h.b16 %v5488
    %v6782 = vunpack.c.l.b16 %v5489
    %v6783 = vunpack.c.h.b16 %v5489
    %v6784 = vunpack.c.l.b16 %v5490
    %v6785 = vunpack.c.h.b16 %v5490
    %v6786 = vunpack.c.l.b16 %v5491
    %v6787 = vunpack.c.h.b16 %v5491
    %v6788 = vunpack.c.l.b16 %v5492
    %v6789 = vunpack.c.h.b16 %v5492
    %v6790 = vunpack.c.l.b16 %v5493
    %v6791 = vunpack.c.h.b16 %v5493
    %v6792 = vunpack.c.l.b16 %v5494
    %v6793 = vunpack.c.h.b16 %v5494
    %v6794 = vunpack.c.l.b16 %v5495
    %v6795 = vunpack.c.h.b16 %v5495
    %v6796 = vunpack.c.l.b16 %v5496
    %v6797 = vunpack.c.h.b16 %v5496
    %v6798 = vunpack.c.l.b16 %v5497
    %v6799 = vunpack.c.h.b16 %v5497
    %v6800 = vunpack.c.l.b16 %v5498
    %v6801 = vunpack.c.h.b16 %v5498
    %v6802 = vunpack.c.l.b16 %v5499
    %v6803 = vunpack.c.h.b16 %v5499
    %v6804 = vunpack.c.l.b16 %v5500
    %v6805 = vunpack.c.h.b16 %v5500
    %v6806 = vunpack.c.l.b16 %v5501
    %v6807 = vunpack.c.h.b16 %v5501
    %v6808 = vunpack.c.l.b16 %v5502
    %v6809 = vunpack.c.h.b16 %v5502
    %v6810 = vunpack.c.l.b16 %v5503
    %v6811 = vunpack.c.h.b16 %v5503
    %v6812 = vunpack.c.l.b16 %v5504
    %v6813 = vunpack.c.h.b16 %v5504
    %v6814 = vunpack.c.l.b16 %v5505
    %v6815 = vunpack.c.h.b16 %v5505
    %v6816 = vunpack.c.l.b16 %v5506
    %v6817 = vunpack.c.h.b16 %v5506
    %v6818 = vunpack.c.l.b16 %v5507
    %v6819 = vunpack.c.h.b16 %v5507
    %v6820 = vunpack.c.l.b16 %v5508
    %v6821 = vunpack.c.h.b16 %v5508
    %v6822 = vunpack.c.l.b16 %v5509
    %v6823 = vunpack.c.h.b16 %v5509
    %v6824 = vunpack.c.l.b16 %v5510
    %v6825 = vunpack.c.h.b16 %v5510
    %v6826 = vunpack.c.l.b16 %v5511
    %v6827 = vunpack.c.h.b16 %v5511
    %v6828 = vunpack.c.l.b16 %v5512
    %v6829 = vunpack.c.h.b16 %v5512
    %v6830 = vunpack.c.l.b16 %v5513
    %v6831 = vunpack.c.h.b16 %v5513
    %v6832 = vunpack.c.l.b16 %v5514
    %v6833 = vunpack.c.h.b16 %v5514
    %v6834 = vunpack.c.l.b16 %v5515
    %v6835 = vunpack.c.h.b16 %v5515
    %v6836 = vunpack.c.l.b16 %v5516
    %v6837 = vunpack.c.h.b16 %v5516
    %v6838 = vunpack.c.l.b16 %v5517
    %v6839 = vunpack.c.h.b16 %v5517
    %v6840 = vunpack.c.l.b16 %v5518
    %v6841 = vunpack.c.h.b16 %v5518
    %v6842 = vunpack.c.l.b16 %v5519
    %v6843 = vunpack.c.h.b16 %v5519
    %v6844 = vunpack.c.l.b16 %v5520
    %v6845 = vunpack.c.h.b16 %v5520
    %v6846 = vunpack.c.l.b16 %v5521
    %v6847 = vunpack.c.h.b16 %v5521
    %v6848 = vunpack.c.l.b16 %v5522
    %v6849 = vunpack.c.h.b16 %v5522
    %v6850 = vunpack.c.l.b16 %v5523
    %v6851 = vunpack.c.h.b16 %v5523
    %v6852 = vunpack.c.l.b16 %v5524
    %v6853 = vunpack.c.h.b16 %v5524
    %v6854 = vunpack.c.l.b16 %v5525
    %v6855 = vunpack.c.h.b16 %v5525
    %v6856 = vunpack.c.l.b16 %v5526
    %v6857 = vunpack.c.h.b16 %v5526
    %v6858 = vunpack.c.l.b16 %v5527
    %v6859 = vunpack.c.h.b16 %v5527
    %v6860 = vunpack.c.l.b16 %v5528
    %v6861 = vunpack.c.h.b16 %v5528
    %v6862 = vunpack.c.l.b16 %v5529
    %v6863 = vunpack.c.h.b16 %v5529
    %v6864 = vunpack.c.l.b16 %v5530
    %v6865 = vunpack.c.h.b16 %v5530
    %v6866 = vunpack.c.l.b16 %v5531
    %v6867 = vunpack.c.h.b16 %v5531
    %v6868 = vunpack.c.l.b16 %v5532
    %v6869 = vunpack.c.h.b16 %v5532
    %v6870 = vunpack.c.l.b16 %v5533
    %v6871 = vunpack.c.h.b16 %v5533
    %v6872 = vunpack.c.l.b16 %v5534
    %v6873 = vunpack.c.h.b16 %v5534
    %v6874 = vunpack.c.l.b16 %v5535
    %v6875 = vunpack.c.h.b16 %v5535
    %v6876 = vunpack.c.l.b16 %v5536
    %v6877 = vunpack.c.h.b16 %v5536
    %v6878 = vunpack.c.l.b16 %v5537
    %v6879 = vunpack.c.h.b16 %v5537
    %v6880 = vunpack.c.l.b16 %v5538
    %v6881 = vunpack.c.h.b16 %v5538
    %v6882 = vunpack.c.l.b16 %v5539
    %v6883 = vunpack.c.h.b16 %v5539
    %v6884 = vunpack.c.l.b16 %v5540
    %v6885 = vunpack.c.h.b16 %v5540
    %v6886 = vunpack.c.l.b16 %v5541
    %v6887 = vunpack.c.h.b16 %v5541
    %v6888 = vunpack.c.l.b16 %v5542
    %v6889 = vunpack.c.h.b16 %v5542
    %v6890 = vunpack.c.l.b16 %v5543
    %v6891 = vunpack.c.h.b16 %v5543
    %v6892 = vunpack.c.l.b16 %v5544
    %v6893 = vunpack.c.h.b16 %v5544
    %v6894 = vunpack.c.l.b16 %v5545
    %v6895 = vunpack.c.h.b16 %v5545
    %v6896 = vunpack.c.l.b16 %v5546
    %v6897 = vunpack.c.h.b16 %v5546
    %v6898 = vunpack.c.l.b16 %v5547
    %v6899 = vunpack.c.h.b16 %v5547
    %v6900 = vunpack.c.l.b16 %v5548
    %v6901 = vunpack.c.h.b16 %v5548
    %v6902 = vunpack.c.l.b16 %v5549
    %v6903 = vunpack.c.h.b16 %v5549
    %v6904 = vunpack.c.l.b16 %v5550
    %v6905 = vunpack.c.h.b16 %v5550
    %v6906 = vunpack.c.l.b16 %v5551
    %v6907 = vunpack.c.h.b16 %v5551
    %v6908 = vunpack.c.l.b16 %v5552
    %v6909 = vunpack.c.h.b16 %v5552
    %v6910 = vunpack.c.l.b16 %v5553
    %v6911 = vunpack.c.h.b16 %v5553
    %v6912 = vunpack.c.l.b16 %v5554
    %v6913 = vunpack.c.h.b16 %v5554
    %v6914 = vunpack.c.l.b16 %v5555
    %v6915 = vunpack.c.h.b16 %v5555
    %v6916 = vunpack.c.l.b16 %v5556
    %v6917 = vunpack.c.h.b16 %v5556
    %v6918 = vunpack.c.l.b16 %v5557
    %v6919 = vunpack.c.h.b16 %v5557
    %v6920 = vunpack.c.l.b16 %v5558
    %v6921 = vunpack.c.h.b16 %v5558
    %v6922 = vunpack.c.l.b16 %v5559
    %v6923 = vunpack.c.h.b16 %v5559
    %v6924 = vunpack.c.l.b16 %v5560
    %v6925 = vunpack.c.h.b16 %v5560
    %v6926 = vunpack.c.l.b16 %v5561
    %v6927 = vunpack.c.h.b16 %v5561
    %v6928 = vunpack.c.l.b16 %v5562
    %v6929 = vunpack.c.h.b16 %v5562
    %v6930 = vunpack.c.l.b16 %v5563
    %v6931 = vunpack.c.h.b16 %v5563
    %v6932 = vunpack.c.l.b16 %v5564
    %v6933 = vunpack.c.h.b16 %v5564
    %v6934 = vunpack.c.l.b16 %v5565
    %v6935 = vunpack.c.h.b16 %v5565
    %v6936 = vunpack.c.l.b16 %v5566
    %v6937 = vunpack.c.h.b16 %v5566
    %v6938 = vunpack.c.l.b16 %v5567
    %v6939 = vunpack.c.h.b16 %v5567
    %v6940 = vunpack.c.l.b16 %v5568
    %v6941 = vunpack.c.h.b16 %v5568
    %v6942 = vunpack.c.l.b16 %v5569
    %v6943 = vunpack.c.h.b16 %v5569
    %v6944 = vunpack.c.l.b16 %v5570
    %v6945 = vunpack.c.h.b16 %v5570
    %v6946 = vunpack.c.l.b16 %v5571
    %v6947 = vunpack.c.h.b16 %v5571
    %v6948 = vunpack.c.l.b16 %v5572
    %v6949 = vunpack.c.h.b16 %v5572
    %v6950 = vunpack.c.l.b16 %v5573
    %v6951 = vunpack.c.h.b16 %v5573
    %v6952 = vunpack.c.l.b16 %v5574
    %v6953 = vunpack.c.h.b16 %v5574
    %v6954 = vunpack.c.l.b16 %v5575
    %v6955 = vunpack.c.h.b16 %v5575
    %v6956 = vunpack.c.l.b16 %v5576
    %v6957 = vunpack.c.h.b16 %v5576
    %v6958 = vunpack.c.l.b16 %v5577
    %v6959 = vunpack.c.h.b16 %v5577
    %v6960 = vpack.c.b16 %v6132, %v6128
    %v6961 = vpack.c.b16 %v6133, %v6129
    %v6962 = vpack.c.b16 %v6134, %v6130
    %v6963 = vpack.c.b16 %v6135, %v6131
    %v6964 = vpack.c.b16 %v6140, %v6136
    %v6965 = vpack.c.b16 %v6141, %v6137
    %v6966 = vpack.c.b16 %v6142, %v6138
    %v6967 = vpack.c.b16 %v6143, %v6139
    %v6968 = vpack.c.b16 %v6148, %v6144
    %v6969 = vpack.c.b16 %v6149, %v6145
    %v6970 = vpack.c.b16 %v6150, %v6146
    %v6971 = vpack.c.b16 %v6151, %v6147
    %v6972 = vpack.c.b16 %v6156, %v6152
    %v6973 = vpack.c.b16 %v6157, %v6153
    %v6974 = vpack.c.b16 %v6158, %v6154
    %v6975 = vpack.c.b16 %v6159, %v6155
    %v6976 = vpack.c.b16 %v6164, %v6160
    %v6977 = vpack.c.b16 %v6165, %v6161
    %v6978 = vpack.c.b16 %v6166, %v6162
    %v6979 = vpack.c.b16 %v6167, %v6163
    %v6980 = vpack.c.b16 %v6172, %v6168
    %v6981 = vpack.c.b16 %v6173, %v6169
    %v6982 = vpack.c.b16 %v6174, %v6170
    %v6983 = vpack.c.b16 %v6175, %v6171
    %v6984 = vpack.c.b16 %v6180, %v6176
    %v6985 = vpack.c.b16 %v6181, %v6177
    %v6986 = vpack.c.b16 %v6182, %v6178
    %v6987 = vpack.c.b16 %v6183, %v6179
    %v6988 = vpack.c.b16 %v6188, %v6184
    %v6989 = vpack.c.b16 %v6189, %v6185
    %v6990 = vpack.c.b16 %v6190, %v6186
    %v6991 = vpack.c.b16 %v6191, %v6187
    %v6992 = vpack.c.b16 %v6196, %v6192
    %v6993 = vpack.c.b16 %v6197, %v6193
    %v6994 = vpack.c.b16 %v6198, %v6194
    %v6995 = vpack.c.b16 %v6199, %v6195
    %v6996 = vpack.c.b16 %v6204, %v6200
    %v6997 = vpack.c.b16 %v6205, %v6201
    %v6998 = vpack.c.b16 %v6206, %v6202
    %v6999 = vpack.c.b16 %v6207, %v6203
    %v7000 = vpack.c.b16 %v6212, %v6208
    %v7001 = vpack.c.b16 %v6213, %v6209
    %v7002 = vpack.c.b16 %v6214, %v6210
    %v7003 = vpack.c.b16 %v6215, %v6211
    %v7004 = vpack.c.b16 %v6220, %v6216
    %v7005 = vpack.c.b16 %v6221, %v6217
    %v7006 = vpack.c.b16 %v6222, %v6218
    %v7007 = vpack.c.b16 %v6223, %v6219
    %v7008 = vpack.c.b16 %v6228, %v6224
    %v7009 = vpack.c.b16 %v6229, %v6225
    %v7010 = vpack.c.b16 %v6230, %v6226
    %v7011 = vpack.c.b16 %v6231, %v6227
    %v7012 = vpack.c.b16 %v6236, %v6232
    %v7013 = vpack.c.b16 %v6237, %v6233
    %v7014 = vpack.c.b16 %v6238, %v6234
    %v7015 = vpack.c.b16 %v6239, %v6235
    %v7016 = vpack.c.b16 %v6244, %v6240
    %v7017 = vpack.c.b16 %v6245, %v6241
    %v7018 = vpack.c.b16 %v6246, %v6242
    %v7019 = vpack.c.b16 %v6247, %v6243
    %v7020 = vpack.c.b16 %v6252, %v6248
    %v7021 = vpack.c.b16 %v6253, %v6249
    %v7022 = vpack.c.b16 %v6254, %v6250
    %v7023 = vpack.c.b16 %v6255, %v6251
    %v7024 = vpack.c.b16 %v6260, %v6256
    %v7025 = vpack.c.b16 %v6261, %v6257
    %v7026 = vpack.c.b16 %v6262, %v6258
    %v7027 = vpack.c.b16 %v6263, %v6259
    %v7028 = vpack.c.b16 %v6268, %v6264
    %v7029 = vpack.c.b16 %v6269, %v6265
    %v7030 = vpack.c.b16 %v6270, %v6266
    %v7031 = vpack.c.b16 %v6271, %v6267
    %v7032 = vpack.c.b16 %v6276, %v6272
    %v7033 = vpack.c.b16 %v6277, %v6273
    %v7034 = vpack.c.b16 %v6278, %v6274
    %v7035 = vpack.c.b16 %v6279, %v6275
    %v7036 = vpack.c.b16 %v6284, %v6280
    %v7037 = vpack.c.b16 %v6285, %v6281
    %v7038 = vpack.c.b16 %v6286, %v6282
    %v7039 = vpack.c.b16 %v6287, %v6283
    %v7040 = vpack.c.b16 %v6292, %v6288
    %v7041 = vpack.c.b16 %v6293, %v6289
    %v7042 = vpack.c.b16 %v6294, %v6290
    %v7043 = vpack.c.b16 %v6295, %v6291
    %v7044 = vpack.c.b16 %v6300, %v6296
    %v7045 = vpack.c.b16 %v6301, %v6297
    %v7046 = vpack.c.b16 %v6302, %v6298
    %v7047 = vpack.c.b16 %v6303, %v6299
    %v7048 = vpack.c.b16 %v6308, %v6304
    %v7049 = vpack.c.b16 %v6309, %v6305
    %v7050 = vpack.c.b16 %v6310, %v6306
    %v7051 = vpack.c.b16 %v6311, %v6307
    %v7052 = vpack.c.b16 %v6316, %v6312
    %v7053 = vpack.c.b16 %v6317, %v6313
    %v7054 = vpack.c.b16 %v6318, %v6314
    %v7055 = vpack.c.b16 %v6319, %v6315
    %v7056 = vpack.c.b16 %v6324, %v6320
    %v7057 = vpack.c.b16 %v6325, %v6321
    %v7058 = vpack.c.b16 %v6326, %v6322
    %v7059 = vpack.c.b16 %v6327, %v6323
    %v7060 = vpack.c.b16 %v6332, %v6328
    %v7061 = vpack.c.b16 %v6333, %v6329
    %v7062 = vpack.c.b16 %v6334, %v6330
    %v7063 = vpack.c.b16 %v6335, %v6331
    %v7064 = vpack.c.b16 %v6340, %v6336
    %v7065 = vpack.c.b16 %v6341, %v6337
    %v7066 = vpack.c.b16 %v6342, %v6338
    %v7067 = vpack.c.b16 %v6343, %v6339
    %v7068 = vpack.c.b16 %v6348, %v6344
    %v7069 = vpack.c.b16 %v6349, %v6345
    %v7070 = vpack.c.b16 %v6350, %v6346
    %v7071 = vpack.c.b16 %v6351, %v6347
    %v7072 = vpack.c.b16 %v6356, %v6352
    %v7073 = vpack.c.b16 %v6357, %v6353
    %v7074 = vpack.c.b16 %v6358, %v6354
    %v7075 = vpack.c.b16 %v6359, %v6355
    %v7076 = vpack.c.b16 %v6364, %v6360
    %v7077 = vpack.c.b16 %v6365, %v6361
    %v7078 = vpack.c.b16 %v6366, %v6362
    %v7079 = vpack.c.b16 %v6367, %v6363
    %v7080 = vpack.c.b16 %v6372, %v6368
    %v7081 = vpack.c.b16 %v6373, %v6369
    %v7082 = vpack.c.b16 %v6374, %v6370
    %v7083 = vpack.c.b16 %v6375, %v6371
    %v7084 = vpack.c.b16 %v6380, %v6376
    %v7085 = vpack.c.b16 %v6381, %v6377
    %v7086 = vpack.c.b16 %v6382, %v6378
    %v7087 = vpack.c.b16 %v6383, %v6379
    %v7088 = vpack.c.b16 %v6388, %v6384
    %v7089 = vpack.c.b16 %v6389, %v6385
    %v7090 = vpack.c.b16 %v6390, %v6386
    %v7091 = vpack.c.b16 %v6391, %v6387
    %v7092 = vpack.c.b16 %v6396, %v6392
    %v7093 = vpack.c.b16 %v6397, %v6393
    %v7094 = vpack.c.b16 %v6398, %v6394
    %v7095 = vpack.c.b16 %v6399, %v6395
    %v7096 = vpack.c.b16 %v6404, %v6400
    %v7097 = vpack.c.b16 %v6405, %v6401
    %v7098 = vpack.c.b16 %v6406, %v6402
    %v7099 = vpack.c.b16 %v6407, %v6403
    %v7100 = vpack.c.b16 %v6412, %v6408
    %v7101 = vpack.c.b16 %v6413, %v6409
    %v7102 = vpack.c.b16 %v6414, %v6410
    %v7103 = vpack.c.b16 %v6415, %v6411
    %v7104 = vpack.c.b16 %v6420, %v6416
    %v7105 = vpack.c.b16 %v6421, %v6417
    %v7106 = vpack.c.b16 %v6422, %v6418
    %v7107 = vpack.c.b16 %v6423, %v6419
    %v7108 = vpack.c.b16 %v6428, %v6424
    %v7109 = vpack.c.b16 %v6429, %v6425
    %v7110 = vpack.c.b16 %v6430, %v6426
    %v7111 = vpack.c.b16 %v6431, %v6427
    %v7112 = vpack.c.b16 %v6436, %v6432
    %v7113 = vpack.c.b16 %v6437, %v6433
    %v7114 = vpack.c.b16 %v6438, %v6434
    %v7115 = vpack.c.b16 %v6439, %v6435
    %v7116 = vpack.c.b16 %v6444, %v6440
    %v7117 = vpack.c.b16 %v6445, %v6441
    %v7118 = vpack.c.b16 %v6446, %v6442
    %v7119 = vpack.c.b16 %v6447, %v6443
    %v7120 = vpack.c.b16 %v6452, %v6448
    %v7121 = vpack.c.b16 %v6453, %v6449
    %v7122 = vpack.c.b16 %v6454, %v6450
    %v7123 = vpack.c.b16 %v6455, %v6451
    %v7124 = vpack.c.b16 %v6460, %v6456
    %v7125 = vpack.c.b16 %v6461, %v6457
    %v7126 = vpack.c.b16 %v6462, %v6458
    %v7127 = vpack.c.b16 %v6463, %v6459
    %v7128 = vpack.c.b16 %v6468, %v6464
    %v7129 = vpack.c.b16 %v6469, %v6465
    %v7130 = vpack.c.b16 %v6470, %v6466
    %v7131 = vpack.c.b16 %v6471, %v6467
    %v7132 = vpack.c.b16 %v6476, %v6472
    %v7133 = vpack.c.b16 %v6477, %v6473
    %v7134 = vpack.c.b16 %v6478, %v6474
    %v7135 = vpack.c.b16 %v6479, %v6475
    %v7136 = vpack.c.b16 %v6484, %v6480
    %v7137 = vpack.c.b16 %v6485, %v6481
    %v7138 = vpack.c.b16 %v6486, %v6482
    %v7139 = vpack.c.b16 %v6487, %v6483
    %v7140 = vpack.c.b16 %v6492, %v6488
    %v7141 = vpack.c.b16 %v6493, %v6489
    %v7142 = vpack.c.b16 %v6494, %v6490
    %v7143 = vpack.c.b16 %v6495, %v6491
    %v7144 = vpack.c.b16 %v6500, %v6496
    %v7145 = vpack.c.b16 %v6501, %v6497
    %v7146 = vpack.c.b16 %v6502, %v6498
    %v7147 = vpack.c.b16 %v6503, %v6499
    %v7148 = vpack.c.b16 %v6508, %v6504
    %v7149 = vpack.c.b16 %v6509, %v6505
    %v7150 = vpack.c.b16 %v6510, %v6506
    %v7151 = vpack.c.b16 %v6511, %v6507
    %v7152 = vpack.c.b16 %v6516, %v6512
    %v7153 = vpack.c.b16 %v6517, %v6513
    %v7154 = vpack.c.b16 %v6518, %v6514
    %v7155 = vpack.c.b16 %v6519, %v6515
    %v7156 = vpack.c.b16 %v6524, %v6520
    %v7157 = vpack.c.b16 %v6525, %v6521
    %v7158 = vpack.c.b16 %v6526, %v6522
    %v7159 = vpack.c.b16 %v6527, %v6523
    %v7160 = vpack.c.b16 %v6532, %v6528
    %v7161 = vpack.c.b16 %v6533, %v6529
    %v7162 = vpack.c.b16 %v6534, %v6530
    %v7163 = vpack.c.b16 %v6535, %v6531
    %v7164 = vpack.c.b16 %v6540, %v6536
    %v7165 = vpack.c.b16 %v6541, %v6537
    %v7166 = vpack.c.b16 %v6542, %v6538
    %v7167 = vpack.c.b16 %v6543, %v6539
    %v7168 = vpack.c.b16 %v6548, %v6544
    %v7169 = vpack.c.b16 %v6549, %v6545
    %v7170 = vpack.c.b16 %v6550, %v6546
    %v7171 = vpack.c.b16 %v6551, %v6547
    %v7172 = vpack.c.b16 %v6556, %v6552
    %v7173 = vpack.c.b16 %v6557, %v6553
    %v7174 = vpack.c.b16 %v6558, %v6554
    %v7175 = vpack.c.b16 %v6559, %v6555
    %v7176 = vpack.c.b16 %v6564, %v6560
    %v7177 = vpack.c.b16 %v6565, %v6561
    %v7178 = vpack.c.b16 %v6566, %v6562
    %v7179 = vpack.c.b16 %v6567, %v6563
    %v7180 = vpack.c.b16 %v6572, %v6568
    %v7181 = vpack.c.b16 %v6573, %v6569
    %v7182 = vpack.c.b16 %v6574, %v6570
    %v7183 = vpack.c.b16 %v6575, %v6571
    %v7184 = vpack.c.b16 %v6580, %v6576
    %v7185 = vpack.c.b16 %v6581, %v6577
    %v7186 = vpack.c.b16 %v6582, %v6578
    %v7187 = vpack.c.b16 %v6583, %v6579
    %v7188 = vpack.c.b16 %v6588, %v6584
    %v7189 = vpack.c.b16 %v6589, %v6585
    %v7190 = vpack.c.b16 %v6590, %v6586
    %v7191 = vpack.c.b16 %v6591, %v6587
    %v7192 = vpack.c.b16 %v6596, %v6592
    %v7193 = vpack.c.b16 %v6597, %v6593
    %v7194 = vpack.c.b16 %v6598, %v6594
    %v7195 = vpack.c.b16 %v6599, %v6595
    %v7196 = vpack.c.b16 %v6604, %v6600
    %v7197 = vpack.c.b16 %v6605, %v6601
    %v7198 = vpack.c.b16 %v6606, %v6602
    %v7199 = vpack.c.b16 %v6607, %v6603
    %v7200 = vpack.c.b16 %v6612, %v6608
    %v7201 = vpack.c.b16 %v6613, %v6609
    %v7202 = vpack.c.b16 %v6614, %v6610
    %v7203 = vpack.c.b16 %v6615, %v6611
    %v7204 = vpack.c.b16 %v6620, %v6616
    %v7205 = vpack.c.b16 %v6621, %v6617
    %v7206 = vpack.c.b16 %v6622, %v6618
    %v7207 = vpack.c.b16 %v6623, %v6619
    %v7208 = vpack.c.b16 %v6628, %v6624
    %v7209 = vpack.c.b16 %v6629, %v6625
    %v7210 = vpack.c.b16 %v6630, %v6626
    %v7211 = vpack.c.b16 %v6631, %v6627
    %v7212 = vpack.c.b16 %v6636, %v6632
    %v7213 = vpack.c.b16 %v6637, %v6633
    %v7214 = vpack.c.b16 %v6638, %v6634
    %v7215 = vpack.c.b16 %v6639, %v6635
    %v7216 = vpack.c.b16 %v6644, %v6640
    %v7217 = vpack.c.b16 %v6645, %v6641
    %v7218 = vpack.c.b16 %v6646, %v6642
    %v7219 = vpack.c.b16 %v6647, %v6643
    %v7220 = vpack.c.b16 %v6652, %v6648
    %v7221 = vpack.c.b16 %v6653, %v6649
    %v7222 = vpack.c.b16 %v6654, %v6650
    %v7223 = vpack.c.b16 %v6655, %v6651
    %v7224 = vpack.c.b16 %v6660, %v6656
    %v7225 = vpack.c.b16 %v6661, %v6657
    %v7226 = vpack.c.b16 %v6662, %v6658
    %v7227 = vpack.c.b16 %v6663, %v6659
    %v7228 = vpack.c.b16 %v6668, %v6664
    %v7229 = vpack.c.b16 %v6669, %v6665
    %v7230 = vpack.c.b16 %v6670, %v6666
    %v7231 = vpack.c.b16 %v6671, %v6667
    %v7232 = vpack.c.b16 %v6676, %v6672
    %v7233 = vpack.c.b16 %v6677, %v6673
    %v7234 = vpack.c.b16 %v6678, %v6674
    %v7235 = vpack.c.b16 %v6679, %v6675
    %v7236 = vpack.c.b16 %v6684, %v6680
    %v7237 = vpack.c.b16 %v6685, %v6681
    %v7238 = vpack.c.b16 %v6686, %v6682
    %v7239 = vpack.c.b16 %v6687, %v6683
    %v7240 = vpack.c.b16 %v6692, %v6688
    %v7241 = vpack.c.b16 %v6693, %v6689
    %v7242 = vpack.c.b16 %v6694, %v6690
    %v7243 = vpack.c.b16 %v6695, %v6691
    %v7244 = vpack.c.b16 %v6700, %v6696
    %v7245 = vpack.c.b16 %v6701, %v6697
    %v7246 = vpack.c.b16 %v6702, %v6698
    %v7247 = vpack.c.b16 %v6703, %v6699
    %v7248 = vpack.c.b16 %v6708, %v6704
    %v7249 = vpack.c.b16 %v6709, %v6705
    %v7250 = vpack.c.b16 %v6710, %v6706
    %v7251 = vpack.c.b16 %v6711, %v6707
    %v7252 = vpack.c.b16 %v6716, %v6712
    %v7253 = vpack.c.b16 %v6717, %v6713
    %v7254 = vpack.c.b16 %v6718, %v6714
    %v7255 = vpack.c.b16 %v6719, %v6715
    %v7256 = vpack.c.b16 %v6724, %v6720
    %v7257 = vpack.c.b16 %v6725, %v6721
    %v7258 = vpack.c.b16 %v6726, %v6722
    %v7259 = vpack.c.b16 %v6727, %v6723
    %v7260 = vpack.c.b16 %v6732, %v6728
    %v7261 = vpack.c.b16 %v6733, %v6729
    %v7262 = vpack.c.b16 %v6734, %v6730
    %v7263 = vpack.c.b16 %v6735, %v6731
    %v7264 = vpack.c.b16 %v6740, %v6736
    %v7265 = vpack.c.b16 %v6741, %v6737
    %v7266 = vpack.c.b16 %v6742, %v6738
    %v7267 = vpack.c.b16 %v6743, %v6739
    %v7268 = vpack.c.b16 %v6748, %v6744
    %v7269 = vpack.c.b16 %v6749, %v6745
    %v7270 = vpack.c.b16 %v6750, %v6746
    %v7271 = vpack.c.b16 %v6751, %v6747
    %v7272 = vpack.c.b16 %v6756, %v6752
    %v7273 = vpack.c.b16 %v6757, %v6753
    %v7274 = vpack.c.b16 %v6758, %v6754
    %v7275 = vpack.c.b16 %v6759, %v6755
    %v7276 = vpack.c.b16 %v6764, %v6760
    %v7277 = vpack.c.b16 %v6765, %v6761
    %v7278 = vpack.c.b16 %v6766, %v6762
    %v7279 = vpack.c.b16 %v6767, %v6763
    %v7280 = vpack.c.b16 %v6772, %v6768
    %v7281 = vpack.c.b16 %v6773, %v6769
    %v7282 = vpack.c.b16 %v6774, %v6770
    %v7283 = vpack.c.b16 %v6775, %v6771
    %v7284 = vpack.c.b16 %v6780, %v6776
    %v7285 = vpack.c.b16 %v6781, %v6777
    %v7286 = vpack.c.b16 %v6782, %v6778
    %v7287 = vpack.c.b16 %v6783, %v6779
    %v7288 = vpack.c.b16 %v6788, %v6784
    %v7289 = vpack.c.b16 %v6789, %v6785
    %v7290 = vpack.c.b16 %v6790, %v6786
    %v7291 = vpack.c.b16 %v6791, %v6787
    %v7292 = vpack.c.b16 %v6796, %v6792
    %v7293 = vpack.c.b16 %v6797, %v6793
    %v7294 = vpack.c.b16 %v6798, %v6794
    %v7295 = vpack.c.b16 %v6799, %v6795
    %v7296 = vpack.c.b16 %v6804, %v6800
    %v7297 = vpack.c.b16 %v6805, %v6801
    %v7298 = vpack.c.b16 %v6806, %v6802
    %v7299 = vpack.c.b16 %v6807, %v6803
    %v7300 = vpack.c.b16 %v6812, %v6808
    %v7301 = vpack.c.b16 %v6813, %v6809
    %v7302 = vpack.c.b16 %v6814, %v6810
    %v7303 = vpack.c.b16 %v6815, %v6811
    %v7304 = vpack.c.b16 %v6820, %v6816
    %v7305 = vpack.c.b16 %v6821, %v6817
    %v7306 = vpack.c.b16 %v6822, %v6818
    %v7307 = vpack.c.b16 %v6823, %v6819
    %v7308 = vpack.c.b16 %v6828, %v6824
    %v7309 = vpack.c.b16 %v6829, %v6825
    %v7310 = vpack.c.b16 %v6830, %v6826
    %v7311 = vpack.c.b16 %v6831, %v6827
    %v7312 = vpack.c.b16 %v6836, %v6832
    %v7313 = vpack.c.b16 %v6837, %v6833
    %v7314 = vpack.c.b16 %v6838, %v6834
    %v7315 = vpack.c.b16 %v6839, %v6835
    %v7316 = vpack.c.b16 %v6844, %v6840
    %v7317 = vpack.c.b16 %v6845, %v6841
    %v7318 = vpack.c.b16 %v6846, %v6842
    %v7319 = vpack.c.b16 %v6847, %v6843
    %v7320 = vpack.c.b16 %v6852, %v6848
    %v7321 = vpack.c.b16 %v6853, %v6849
    %v7322 = vpack.c.b16 %v6854, %v6850
    %v7323 = vpack.c.b16 %v6855, %v6851
    %v7324 = vpack.c.b16 %v6860, %v6856
    %v7325 = vpack.c.b16 %v6861, %v6857
    %v7326 = vpack.c.b16 %v6862, %v6858
    %v7327 = vpack.c.b16 %v6863, %v6859
    %v7328 = vpack.c.b16 %v6868, %v6864
    %v7329 = vpack.c.b16 %v6869, %v6865
    %v7330 = vpack.c.b16 %v6870, %v6866
    %v7331 = vpack.c.b16 %v6871, %v6867
    %v7332 = vpack.c.b16 %v6876, %v6872
    %v7333 = vpack.c.b16 %v6877, %v6873
    %v7334 = vpack.c.b16 %v6878, %v6874
    %v7335 = vpack.c.b16 %v6879, %v6875
    %v7336 = vpack.c.b16 %v6884, %v6880
    %v7337 = vpack.c.b16 %v6885, %v6881
    %v7338 = vpack.c.b16 %v6886, %v6882
    %v7339 = vpack.c.b16 %v6887, %v6883
    %v7340 = vpack.c.b16 %v6892, %v6888
    %v7341 = vpack.c.b16 %v6893, %v6889
    %v7342 = vpack.c.b16 %v6894, %v6890
    %v7343 = vpack.c.b16 %v6895, %v6891
    %v7344 = vpack.c.b16 %v6900, %v6896
    %v7345 = vpack.c.b16 %v6901, %v6897
    %v7346 = vpack.c.b16 %v6902, %v6898
    %v7347 = vpack.c.b16 %v6903, %v6899
    %v7348 = vpack.c.b16 %v6908, %v6904
    %v7349 = vpack.c.b16 %v6909, %v6905
    %v7350 = vpack.c.b16 %v6910, %v6906
    %v7351 = vpack.c.b16 %v6911, %v6907
    %v7352 = vpack.c.b16 %v6916, %v6912
    %v7353 = vpack.c.b16 %v6917, %v6913
    %v7354 = vpack.c.b16 %v6918, %v6914
    %v7355 = vpack.c.b16 %v6919, %v6915
    %v7356 = vpack.c.b16 %v6924, %v6920
    %v7357 = vpack.c.b16 %v6925, %v6921
    %v7358 = vpack.c.b16 %v6926, %v6922
    %v7359 = vpack.c.b16 %v6927, %v6923
    %v7360 = vpack.c.b16 %v6932, %v6928
    %v7361 = vpack.c.b16 %v6933, %v6929
    %v7362 = vpack.c.b16 %v6934, %v6930
    %v7363 = vpack.c.b16 %v6935, %v6931
    %v7364 = vpack.c.b16 %v6940, %v6936
    %v7365 = vpack.c.b16 %v6941, %v6937
    %v7366 = vpack.c.b16 %v6942, %v6938
    %v7367 = vpack.c.b16 %v6943, %v6939
    %v7368 = vpack.c.b16 %v6948, %v6944
    %v7369 = vpack.c.b16 %v6949, %v6945
    %v7370 = vpack.c.b16 %v6950, %v6946
    %v7371 = vpack.c.b16 %v6951, %v6947
    %v7372 = vpack.c.b16 %v6956, %v6952
    %v7373 = vpack.c.b16 %v6957, %v6953
    %v7374 = vpack.c.b16 %v6958, %v6954
    %v7375 = vpack.c.b16 %v6959, %v6955
    %7792 = vmatprep.subr.bf16.mxu0 %v6989
    %7793 = vmatpush1.bf16.msra.mxu0 %v6988
    %7794 = vmatprep.subr.bf16.mxu0 %v6985
    %7795 = vmatpush1.bf16.msra.mxu0 %v6984
    %7796 = vmatprep.subr.bf16.mxu0 %v6981
    %7797 = vmatpush1.bf16.msra.mxu0 %v6980
    %7798 = vmatprep.subr.bf16.mxu0 %v6977
    %7799 = vmatpush1.bf16.msra.mxu0 %v6976
    %7800 = vmatprep.subr.bf16.mxu0 %v6973
    %7801 = vmatpush1.bf16.msra.mxu0 %v6972
    %7802 = vmatprep.subr.bf16.mxu0 %v6969
    %7803 = vmatpush1.bf16.msra.mxu0 %v6968
    %7804 = vmatprep.subr.bf16.mxu0 %v6965
    %7805 = vmatpush1.bf16.msra.mxu0 %v6964
    %7806 = vmatprep.subr.bf16.mxu0 %v6961
    %7807 = vmatpush1.bf16.msra.mxu0 %v6960
    %7808 = vmatprep.subr.bf16.mxu0 %v7021
    %7809 = vmatpush2.bf16.msra.mxu0 %v7020
    %7810 = vmatprep.subr.bf16.mxu0 %v7017
    %7811 = vmatpush2.bf16.msra.mxu0 %v7016
    %7812 = vmatprep.subr.bf16.mxu0 %v7013
    %7813 = vmatpush2.bf16.msra.mxu0 %v7012
    %7814 = vmatprep.subr.bf16.mxu0 %v7009
    %7815 = vmatpush2.bf16.msra.mxu0 %v7008
    %7816 = vmatprep.subr.bf16.mxu0 %v7005
    %7817 = vmatpush2.bf16.msra.mxu0 %v7004
    %7818 = vmatprep.subr.bf16.mxu0 %v7001
    %7819 = vmatpush2.bf16.msra.mxu0 %v7000
    %7820 = vmatprep.subr.bf16.mxu0 %v6997
    %7821 = vmatpush2.bf16.msra.mxu0 %v6996
    %7822 = vmatprep.subr.bf16.mxu0 %v6993
    %7823 = vmatpush2.bf16.msra.mxu0 %v6992
    %7824 = vmatprep.mubr.bf16.mxu0 %v5150
    %7825 = vmatmul.mubr.bf16.gmra.mxu0 %v5149
    %v7826 = vpop.f32.mrf.mxu0
    %v7827 = vadd.f32 %v5665, %v7826
    %v7828 = vpop.f32.mrf.mxu0
    %v7829 = vadd.f32 %v5667, %v7828
    %v7830 = vpop.f32.mrf.mxu0
    %v7831 = vpop.f32.mrf.mxu0
    %7832 = vdwg.mxu0
    %7833 = vmatprep.subr.bf16.mxu0 %v7053
    %7834 = vmatpush1.bf16.msra.mxu0 %v7052
    %7835 = vmatprep.subr.bf16.mxu0 %v7049
    %7836 = vmatpush1.bf16.msra.mxu0 %v7048
    %7837 = vmatprep.subr.bf16.mxu0 %v7045
    %7838 = vmatpush1.bf16.msra.mxu0 %v7044
    %7839 = vmatprep.subr.bf16.mxu0 %v7041
    %7840 = vmatpush1.bf16.msra.mxu0 %v7040
    %7841 = vmatprep.subr.bf16.mxu0 %v7037
    %7842 = vmatpush1.bf16.msra.mxu0 %v7036
    %7843 = vmatprep.subr.bf16.mxu0 %v7033
    %7844 = vmatpush1.bf16.msra.mxu0 %v7032
    %7845 = vmatprep.subr.bf16.mxu0 %v7029
    %7846 = vmatpush1.bf16.msra.mxu0 %v7028
    %7847 = vmatprep.subr.bf16.mxu0 %v7025
    %7848 = vmatpush1.bf16.msra.mxu0 %v7024
    %7849 = vmatprep.subr.bf16.mxu0 %v7085
    %7850 = vmatpush2.bf16.msra.mxu0 %v7084
    %7851 = vmatprep.subr.bf16.mxu0 %v7081
    %7852 = vmatpush2.bf16.msra.mxu0 %v7080
    %7853 = vmatprep.subr.bf16.mxu0 %v7077
    %7854 = vmatpush2.bf16.msra.mxu0 %v7076
    %7855 = vmatprep.subr.bf16.mxu0 %v7073
    %7856 = vmatpush2.bf16.msra.mxu0 %v7072
    %7857 = vmatprep.subr.bf16.mxu0 %v7069
    %7858 = vmatpush2.bf16.msra.mxu0 %v7068
    %7859 = vmatprep.subr.bf16.mxu0 %v7065
    %7860 = vmatpush2.bf16.msra.mxu0 %v7064
    %7861 = vmatprep.subr.bf16.mxu0 %v7061
    %7862 = vmatpush2.bf16.msra.mxu0 %v7060
    %7863 = vmatprep.subr.bf16.mxu0 %v7057
    %7864 = vmatpush2.bf16.msra.mxu0 %v7056
    %7865 = vmatprep.mubr.bf16.mxu0 %v5152
    %7866 = vmatmul.mubr.bf16.gmra.mxu0 %v5151
    %v7867 = vpop.f32.mrf.mxu0
    %v7868 = vadd.f32 %v7827, %v7867
    %v7869 = vpop.f32.mrf.mxu0
    %v7870 = vadd.f32 %v7829, %v7869
    %v7871 = vpop.f32.mrf.mxu0
    %v7872 = vpop.f32.mrf.mxu0
    %7873 = vdwg.mxu0
    %7874 = vmatprep.subr.bf16.mxu0 %v7117
    %7875 = vmatpush1.bf16.msra.mxu0 %v7116
    %7876 = vmatprep.subr.bf16.mxu0 %v7113
    %7877 = vmatpush1.bf16.msra.mxu0 %v7112
    %7878 = vmatprep.subr.bf16.mxu0 %v7109
    %7879 = vmatpush1.bf16.msra.mxu0 %v7108
    %7880 = vmatprep.subr.bf16.mxu0 %v7105
    %7881 = vmatpush1.bf16.msra.mxu0 %v7104
    %7882 = vmatprep.subr.bf16.mxu0 %v7101
    %7883 = vmatpush1.bf16.msra.mxu0 %v7100
    %7884 = vmatprep.subr.bf16.mxu0 %v7097
    %7885 = vmatpush1.bf16.msra.mxu0 %v7096
    %7886 = vmatprep.subr.bf16.mxu0 %v7093
    %7887 = vmatpush1.bf16.msra.mxu0 %v7092
    %7888 = vmatprep.subr.bf16.mxu0 %v7089
    %7889 = vmatpush1.bf16.msra.mxu0 %v7088
    %7890 = vmatprep.subr.bf16.mxu0 %v7149
    %7891 = vmatpush2.bf16.msra.mxu0 %v7148
    %7892 = vmatprep.subr.bf16.mxu0 %v7145
    %7893 = vmatpush2.bf16.msra.mxu0 %v7144
    %7894 = vmatprep.subr.bf16.mxu0 %v7141
    %7895 = vmatpush2.bf16.msra.mxu0 %v7140
    %7896 = vmatprep.subr.bf16.mxu0 %v7137
    %7897 = vmatpush2.bf16.msra.mxu0 %v7136
    %7898 = vmatprep.subr.bf16.mxu0 %v7133
    %7899 = vmatpush2.bf16.msra.mxu0 %v7132
    %7900 = vmatprep.subr.bf16.mxu0 %v7129
    %7901 = vmatpush2.bf16.msra.mxu0 %v7128
    %7902 = vmatprep.subr.bf16.mxu0 %v7125
    %7903 = vmatpush2.bf16.msra.mxu0 %v7124
    %7904 = vmatprep.subr.bf16.mxu0 %v7121
    %7905 = vmatpush2.bf16.msra.mxu0 %v7120
    %7906 = vmatprep.mubr.bf16.mxu0 %v5154
    %7907 = vmatmul.mubr.bf16.gmra.mxu0 %v5153
    %v7908 = vpop.f32.mrf.mxu0
    %v7909 = vadd.f32 %v7868, %v7908
    %v7910 = vpop.f32.mrf.mxu0
    %v7911 = vadd.f32 %v7870, %v7910
    %v7912 = vpop.f32.mrf.mxu0
    %v7913 = vpop.f32.mrf.mxu0
    %7914 = vdwg.mxu0
    %7915 = vmatprep.subr.bf16.mxu0 %v7181
    %7916 = vmatpush1.bf16.msra.mxu0 %v7180
    %7917 = vmatprep.subr.bf16.mxu0 %v7177
    %7918 = vmatpush1.bf16.msra.mxu0 %v7176
    %7919 = vmatprep.subr.bf16.mxu0 %v7173
    %7920 = vmatpush1.bf16.msra.mxu0 %v7172
    %7921 = vmatprep.subr.bf16.mxu0 %v7169
    %7922 = vmatpush1.bf16.msra.mxu0 %v7168
    %7923 = vmatprep.subr.bf16.mxu0 %v7165
    %7924 = vmatpush1.bf16.msra.mxu0 %v7164
    %7925 = vmatprep.subr.bf16.mxu0 %v7161
    %7926 = vmatpush1.bf16.msra.mxu0 %v7160
    %7927 = vmatprep.subr.bf16.mxu0 %v7157
    %7928 = vmatpush1.bf16.msra.mxu0 %v7156
    %7929 = vmatprep.subr.bf16.mxu0 %v7153
    %7930 = vmatpush1.bf16.msra.mxu0 %v7152
    %7931 = vmatprep.subr.bf16.mxu0 %v7213
    %7932 = vmatpush2.bf16.msra.mxu0 %v7212
    %7933 = vmatprep.subr.bf16.mxu0 %v7209
    %7934 = vmatpush2.bf16.msra.mxu0 %v7208
    %7935 = vmatprep.subr.bf16.mxu0 %v7205
    %7936 = vmatpush2.bf16.msra.mxu0 %v7204
    %7937 = vmatprep.subr.bf16.mxu0 %v7201
    %7938 = vmatpush2.bf16.msra.mxu0 %v7200
    %7939 = vmatprep.subr.bf16.mxu0 %v7197
    %7940 = vmatpush2.bf16.msra.mxu0 %v7196
    %7941 = vmatprep.subr.bf16.mxu0 %v7193
    %7942 = vmatpush2.bf16.msra.mxu0 %v7192
    %7943 = vmatprep.subr.bf16.mxu0 %v7189
    %7944 = vmatpush2.bf16.msra.mxu0 %v7188
    %7945 = vmatprep.subr.bf16.mxu0 %v7185
    %7946 = vmatpush2.bf16.msra.mxu0 %v7184
    %7947 = vmatprep.mubr.bf16.mxu0 %v5156
    %7948 = vmatmul.mubr.bf16.gmra.mxu0 %v5155
    %v7949 = vpop.f32.mrf.mxu0
    %v7950 = vadd.f32 %v7909, %v7949
    %v7951 = vpop.f32.mrf.mxu0
    %v7952 = vadd.f32 %v7911, %v7951
    %v7953 = vpop.f32.mrf.mxu0
    %v7954 = vpop.f32.mrf.mxu0
    %7955 = vdwg.mxu0
    %7956 = vmatprep.subr.bf16.mxu0 %v7245
    %7957 = vmatpush1.bf16.msra.mxu0 %v7244
    %7958 = vmatprep.subr.bf16.mxu0 %v7241
    %7959 = vmatpush1.bf16.msra.mxu0 %v7240
    %7960 = vmatprep.subr.bf16.mxu0 %v7237
    %7961 = vmatpush1.bf16.msra.mxu0 %v7236
    %7962 = vmatprep.subr.bf16.mxu0 %v7233
    %7963 = vmatpush1.bf16.msra.mxu0 %v7232
    %7964 = vmatprep.subr.bf16.mxu0 %v7229
    %7965 = vmatpush1.bf16.msra.mxu0 %v7228
    %7966 = vmatprep.subr.bf16.mxu0 %v7225
    %7967 = vmatpush1.bf16.msra.mxu0 %v7224
    %7968 = vmatprep.subr.bf16.mxu0 %v7221
    %7969 = vmatpush1.bf16.msra.mxu0 %v7220
    %7970 = vmatprep.subr.bf16.mxu0 %v7217
    %7971 = vmatpush1.bf16.msra.mxu0 %v7216
    %7972 = vmatprep.subr.bf16.mxu0 %v7277
    %7973 = vmatpush2.bf16.msra.mxu0 %v7276
    %7974 = vmatprep.subr.bf16.mxu0 %v7273
    %7975 = vmatpush2.bf16.msra.mxu0 %v7272
    %7976 = vmatprep.subr.bf16.mxu0 %v7269
    %7977 = vmatpush2.bf16.msra.mxu0 %v7268
    %7978 = vmatprep.subr.bf16.mxu0 %v7265
    %7979 = vmatpush2.bf16.msra.mxu0 %v7264
    %7980 = vmatprep.subr.bf16.mxu0 %v7261
    %7981 = vmatpush2.bf16.msra.mxu0 %v7260
    %7982 = vmatprep.subr.bf16.mxu0 %v7257
    %7983 = vmatpush2.bf16.msra.mxu0 %v7256
    %7984 = vmatprep.subr.bf16.mxu0 %v7253
    %7985 = vmatpush2.bf16.msra.mxu0 %v7252
    %7986 = vmatprep.subr.bf16.mxu0 %v7249
    %7987 = vmatpush2.bf16.msra.mxu0 %v7248
    %7988 = vmatprep.mubr.bf16.mxu0 %v5158
    %7989 = vmatmul.mubr.bf16.gmra.mxu0 %v5157
    %v7990 = vpop.f32.mrf.mxu0
    %v7991 = vadd.f32 %v7950, %v7990
    %v7992 = vpop.f32.mrf.mxu0
    %v7993 = vadd.f32 %v7952, %v7992
    %v7994 = vpop.f32.mrf.mxu0
    %v7995 = vpop.f32.mrf.mxu0
    %7996 = vdwg.mxu0
    %7997 = vmatprep.subr.bf16.mxu0 %v7309
    %7998 = vmatpush1.bf16.msra.mxu0 %v7308
    %7999 = vmatprep.subr.bf16.mxu0 %v7305
    %8000 = vmatpush1.bf16.msra.mxu0 %v7304
    %8001 = vmatprep.subr.bf16.mxu0 %v7301
    %8002 = vmatpush1.bf16.msra.mxu0 %v7300
    %8003 = vmatprep.subr.bf16.mxu0 %v7297
    %8004 = vmatpush1.bf16.msra.mxu0 %v7296
    %8005 = vmatprep.subr.bf16.mxu0 %v7293
    %8006 = vmatpush1.bf16.msra.mxu0 %v7292
    %8007 = vmatprep.subr.bf16.mxu0 %v7289
    %8008 = vmatpush1.bf16.msra.mxu0 %v7288
    %8009 = vmatprep.subr.bf16.mxu0 %v7285
    %8010 = vmatpush1.bf16.msra.mxu0 %v7284
    %8011 = vmatprep.subr.bf16.mxu0 %v7281
    %8012 = vmatpush1.bf16.msra.mxu0 %v7280
    %8013 = vmatprep.subr.bf16.mxu0 %v7341
    %8014 = vmatpush2.bf16.msra.mxu0 %v7340
    %8015 = vmatprep.subr.bf16.mxu0 %v7337
    %8016 = vmatpush2.bf16.msra.mxu0 %v7336
    %8017 = vmatprep.subr.bf16.mxu0 %v7333
    %8018 = vmatpush2.bf16.msra.mxu0 %v7332
    %8019 = vmatprep.subr.bf16.mxu0 %v7329
    %8020 = vmatpush2.bf16.msra.mxu0 %v7328
    %8021 = vmatprep.subr.bf16.mxu0 %v7325
    %8022 = vmatpush2.bf16.msra.mxu0 %v7324
    %8023 = vmatprep.subr.bf16.mxu0 %v7321
    %8024 = vmatpush2.bf16.msra.mxu0 %v7320
    %8025 = vmatprep.subr.bf16.mxu0 %v7317
    %8026 = vmatpush2.bf16.msra.mxu0 %v7316
    %8027 = vmatprep.subr.bf16.mxu0 %v7313
    %8028 = vmatpush2.bf16.msra.mxu0 %v7312
    %8029 = vmatprep.mubr.bf16.mxu0 %v5160
    %8030 = vmatmul.mubr.bf16.gmra.mxu0 %v5159
    %v8031 = vpop.f32.mrf.mxu0
    %v8032 = vadd.f32 %v7991, %v8031
    %v8033 = vpop.f32.mrf.mxu0
    %v8034 = vadd.f32 %v7993, %v8033
    %v8035 = vpop.f32.mrf.mxu0
    %v8036 = vpop.f32.mrf.mxu0
    %8037 = vdwg.mxu0
    %8038 = vmatprep.subr.bf16.mxu0 %v7373
    %8039 = vmatpush1.bf16.msra.mxu0 %v7372
    %8040 = vmatprep.subr.bf16.mxu0 %v7369
    %8041 = vmatpush1.bf16.msra.mxu0 %v7368
    %8042 = vmatprep.subr.bf16.mxu0 %v7365
    %8043 = vmatpush1.bf16.msra.mxu0 %v7364
    %8044 = vmatprep.subr.bf16.mxu0 %v7361
    %8045 = vmatpush1.bf16.msra.mxu0 %v7360
    %8046 = vmatprep.subr.bf16.mxu0 %v7357
    %8047 = vmatpush1.bf16.msra.mxu0 %v7356
    %8048 = vmatprep.subr.bf16.mxu0 %v7353
    %8049 = vmatpush1.bf16.msra.mxu0 %v7352
    %8050 = vmatprep.subr.bf16.mxu0 %v7349
    %8051 = vmatpush1.bf16.msra.mxu0 %v7348
    %8052 = vmatprep.subr.bf16.mxu0 %v7345
    %8053 = vmatpush1.bf16.msra.mxu0 %v7344
    %8054 = vmatprep.subr.bf16.mxu0 0
    %8055 = vmatpush2.bf16.msra.mxu0 0
    %8056 = vmatprep.subr.bf16.mxu0 0
    %8057 = vmatpush2.bf16.msra.mxu0 0
    %8058 = vmatprep.subr.bf16.mxu0 0
    %8059 = vmatpush2.bf16.msra.mxu0 0
    %8060 = vmatprep.subr.bf16.mxu0 0
    %8061 = vmatpush2.bf16.msra.mxu0 0
    %8062 = vmatprep.subr.bf16.mxu0 0
    %8063 = vmatpush2.bf16.msra.mxu0 0
    %8064 = vmatprep.subr.bf16.mxu0 0
    %8065 = vmatpush2.bf16.msra.mxu0 0
    %8066 = vmatprep.subr.bf16.mxu0 0
    %8067 = vmatpush2.bf16.msra.mxu0 0
    %8068 = vmatprep.subr.bf16.mxu0 0
    %8069 = vmatpush2.bf16.msra.mxu0 0
    %8070 = vmatprep.mubr.bf16.mxu0 0
    %8071 = vmatmul.mubr.bf16.gmra.mxu0 %v5161
    %v8072 = vpop.f32.mrf.mxu0
    %v8073 = vadd.f32 %v8032, %v8072
    %v8074 = vpop.f32.mrf.mxu0
    %v8075 = vadd.f32 %v8034, %v8074
    %v8076 = vpop.f32.mrf.mxu0
    %v8077 = vpop.f32.mrf.mxu0
    %8078 = vdwg.mxu0
    %8079 = vmatprep.subr.bf16.mxu0 %v6991
    %8080 = vmatpush1.bf16.msra.mxu0 %v6990
    %8081 = vmatprep.subr.bf16.mxu0 %v6987
    %8082 = vmatpush1.bf16.msra.mxu0 %v6986
    %8083 = vmatprep.subr.bf16.mxu0 %v6983
    %8084 = vmatpush1.bf16.msra.mxu0 %v6982
    %8085 = vmatprep.subr.bf16.mxu0 %v6979
    %8086 = vmatpush1.bf16.msra.mxu0 %v6978
    %8087 = vmatprep.subr.bf16.mxu0 %v6975
    %8088 = vmatpush1.bf16.msra.mxu0 %v6974
    %8089 = vmatprep.subr.bf16.mxu0 %v6971
    %8090 = vmatpush1.bf16.msra.mxu0 %v6970
    %8091 = vmatprep.subr.bf16.mxu0 %v6967
    %8092 = vmatpush1.bf16.msra.mxu0 %v6966
    %8093 = vmatprep.subr.bf16.mxu0 %v6963
    %8094 = vmatpush1.bf16.msra.mxu0 %v6962
    %8095 = vmatprep.subr.bf16.mxu0 %v7023
    %8096 = vmatpush2.bf16.msra.mxu0 %v7022
    %8097 = vmatprep.subr.bf16.mxu0 %v7019
    %8098 = vmatpush2.bf16.msra.mxu0 %v7018
    %8099 = vmatprep.subr.bf16.mxu0 %v7015
    %8100 = vmatpush2.bf16.msra.mxu0 %v7014
    %8101 = vmatprep.subr.bf16.mxu0 %v7011
    %8102 = vmatpush2.bf16.msra.mxu0 %v7010
    %8103 = vmatprep.subr.bf16.mxu0 %v7007
    %8104 = vmatpush2.bf16.msra.mxu0 %v7006
    %8105 = vmatprep.subr.bf16.mxu0 %v7003
    %8106 = vmatpush2.bf16.msra.mxu0 %v7002
    %8107 = vmatprep.subr.bf16.mxu0 %v6999
    %8108 = vmatpush2.bf16.msra.mxu0 %v6998
    %8109 = vmatprep.subr.bf16.mxu0 %v6995
    %8110 = vmatpush2.bf16.msra.mxu0 %v6994
    %8111 = vmatprep.mubr.bf16.mxu0 %v5150
    %8112 = vmatmul.mubr.bf16.gmra.mxu0 %v5149
    %v8113 = vpop.f32.mrf.mxu0
    %v8114 = vadd.f32 %v5706, %v8113
    %v8115 = vpop.f32.mrf.mxu0
    %v8116 = vadd.f32 %v5708, %v8115
    %v8117 = vpop.f32.mrf.mxu0
    %v8118 = vpop.f32.mrf.mxu0
    %8119 = vdwg.mxu0
    %8120 = vmatprep.subr.bf16.mxu0 %v7055
    %8121 = vmatpush1.bf16.msra.mxu0 %v7054
    %8122 = vmatprep.subr.bf16.mxu0 %v7051
    %8123 = vmatpush1.bf16.msra.mxu0 %v7050
    %8124 = vmatprep.subr.bf16.mxu0 %v7047
    %8125 = vmatpush1.bf16.msra.mxu0 %v7046
    %8126 = vmatprep.subr.bf16.mxu0 %v7043
    %8127 = vmatpush1.bf16.msra.mxu0 %v7042
    %8128 = vmatprep.subr.bf16.mxu0 %v7039
    %8129 = vmatpush1.bf16.msra.mxu0 %v7038
    %8130 = vmatprep.subr.bf16.mxu0 %v7035
    %8131 = vmatpush1.bf16.msra.mxu0 %v7034
    %8132 = vmatprep.subr.bf16.mxu0 %v7031
    %8133 = vmatpush1.bf16.msra.mxu0 %v7030
    %8134 = vmatprep.subr.bf16.mxu0 %v7027
    %8135 = vmatpush1.bf16.msra.mxu0 %v7026
    %8136 = vmatprep.subr.bf16.mxu0 %v7087
    %8137 = vmatpush2.bf16.msra.mxu0 %v7086
    %8138 = vmatprep.subr.bf16.mxu0 %v7083
    %8139 = vmatpush2.bf16.msra.mxu0 %v7082
    %8140 = vmatprep.subr.bf16.mxu0 %v7079
    %8141 = vmatpush2.bf16.msra.mxu0 %v7078
    %8142 = vmatprep.subr.bf16.mxu0 %v7075
    %8143 = vmatpush2.bf16.msra.mxu0 %v7074
    %8144 = vmatprep.subr.bf16.mxu0 %v7071
    %8145 = vmatpush2.bf16.msra.mxu0 %v7070
    %8146 = vmatprep.subr.bf16.mxu0 %v7067
    %8147 = vmatpush2.bf16.msra.mxu0 %v7066
    %8148 = vmatprep.subr.bf16.mxu0 %v7063
    %8149 = vmatpush2.bf16.msra.mxu0 %v7062
    %8150 = vmatprep.subr.bf16.mxu0 %v7059
    %8151 = vmatpush2.bf16.msra.mxu0 %v7058
    %8152 = vmatprep.mubr.bf16.mxu0 %v5152
    %8153 = vmatmul.mubr.bf16.gmra.mxu0 %v5151
    %v8154 = vpop.f32.mrf.mxu0
    %v8155 = vadd.f32 %v8114, %v8154
    %v8156 = vpop.f32.mrf.mxu0
    %v8157 = vadd.f32 %v8116, %v8156
    %v8158 = vpop.f32.mrf.mxu0
    %v8159 = vpop.f32.mrf.mxu0
    %8160 = vdwg.mxu0
    %8161 = vmatprep.subr.bf16.mxu0 %v7119
    %8162 = vmatpush1.bf16.msra.mxu0 %v7118
    %8163 = vmatprep.subr.bf16.mxu0 %v7115
    %8164 = vmatpush1.bf16.msra.mxu0 %v7114
    %8165 = vmatprep.subr.bf16.mxu0 %v7111
    %8166 = vmatpush1.bf16.msra.mxu0 %v7110
    %8167 = vmatprep.subr.bf16.mxu0 %v7107
    %8168 = vmatpush1.bf16.msra.mxu0 %v7106
    %8169 = vmatprep.subr.bf16.mxu0 %v7103
    %8170 = vmatpush1.bf16.msra.mxu0 %v7102
    %8171 = vmatprep.subr.bf16.mxu0 %v7099
    %8172 = vmatpush1.bf16.msra.mxu0 %v7098
    %8173 = vmatprep.subr.bf16.mxu0 %v7095
    %8174 = vmatpush1.bf16.msra.mxu0 %v7094
    %8175 = vmatprep.subr.bf16.mxu0 %v7091
    %8176 = vmatpush1.bf16.msra.mxu0 %v7090
    %8177 = vmatprep.subr.bf16.mxu0 %v7151
    %8178 = vmatpush2.bf16.msra.mxu0 %v7150
    %8179 = vmatprep.subr.bf16.mxu0 %v7147
    %8180 = vmatpush2.bf16.msra.mxu0 %v7146
    %8181 = vmatprep.subr.bf16.mxu0 %v7143
    %8182 = vmatpush2.bf16.msra.mxu0 %v7142
    %8183 = vmatprep.subr.bf16.mxu0 %v7139
    %8184 = vmatpush2.bf16.msra.mxu0 %v7138
    %8185 = vmatprep.subr.bf16.mxu0 %v7135
    %8186 = vmatpush2.bf16.msra.mxu0 %v7134
    %8187 = vmatprep.subr.bf16.mxu0 %v7131
    %8188 = vmatpush2.bf16.msra.mxu0 %v7130
    %8189 = vmatprep.subr.bf16.mxu0 %v7127
    %8190 = vmatpush2.bf16.msra.mxu0 %v7126
    %8191 = vmatprep.subr.bf16.mxu0 %v7123
    %8192 = vmatpush2.bf16.msra.mxu0 %v7122
    %8193 = vmatprep.mubr.bf16.mxu0 %v5154
    %8194 = vmatmul.mubr.bf16.gmra.mxu0 %v5153
    %v8195 = vpop.f32.mrf.mxu0
    %v8196 = vadd.f32 %v8155, %v8195
    %v8197 = vpop.f32.mrf.mxu0
    %v8198 = vadd.f32 %v8157, %v8197
    %v8199 = vpop.f32.mrf.mxu0
    %v8200 = vpop.f32.mrf.mxu0
    %8201 = vdwg.mxu0
    %8202 = vmatprep.subr.bf16.mxu0 %v7183
    %8203 = vmatpush1.bf16.msra.mxu0 %v7182
    %8204 = vmatprep.subr.bf16.mxu0 %v7179
    %8205 = vmatpush1.bf16.msra.mxu0 %v7178
    %8206 = vmatprep.subr.bf16.mxu0 %v7175
    %8207 = vmatpush1.bf16.msra.mxu0 %v7174
    %8208 = vmatprep.subr.bf16.mxu0 %v7171
    %8209 = vmatpush1.bf16.msra.mxu0 %v7170
    %8210 = vmatprep.subr.bf16.mxu0 %v7167
    %8211 = vmatpush1.bf16.msra.mxu0 %v7166
    %8212 = vmatprep.subr.bf16.mxu0 %v7163
    %8213 = vmatpush1.bf16.msra.mxu0 %v7162
    %8214 = vmatprep.subr.bf16.mxu0 %v7159
    %8215 = vmatpush1.bf16.msra.mxu0 %v7158
    %8216 = vmatprep.subr.bf16.mxu0 %v7155
    %8217 = vmatpush1.bf16.msra.mxu0 %v7154
    %8218 = vmatprep.subr.bf16.mxu0 %v7215
    %8219 = vmatpush2.bf16.msra.mxu0 %v7214
    %8220 = vmatprep.subr.bf16.mxu0 %v7211
    %8221 = vmatpush2.bf16.msra.mxu0 %v7210
    %8222 = vmatprep.subr.bf16.mxu0 %v7207
    %8223 = vmatpush2.bf16.msra.mxu0 %v7206
    %8224 = vmatprep.subr.bf16.mxu0 %v7203
    %8225 = vmatpush2.bf16.msra.mxu0 %v7202
    %8226 = vmatprep.subr.bf16.mxu0 %v7199
    %8227 = vmatpush2.bf16.msra.mxu0 %v7198
    %8228 = vmatprep.subr.bf16.mxu0 %v7195
    %8229 = vmatpush2.bf16.msra.mxu0 %v7194
    %8230 = vmatprep.subr.bf16.mxu0 %v7191
    %8231 = vmatpush2.bf16.msra.mxu0 %v7190
    %8232 = vmatprep.subr.bf16.mxu0 %v7187
    %8233 = vmatpush2.bf16.msra.mxu0 %v7186
    %8234 = vmatprep.mubr.bf16.mxu0 %v5156
    %8235 = vmatmul.mubr.bf16.gmra.mxu0 %v5155
    %v8236 = vpop.f32.mrf.mxu0
    %v8237 = vadd.f32 %v8196, %v8236
    %v8238 = vpop.f32.mrf.mxu0
    %v8239 = vadd.f32 %v8198, %v8238
    %v8240 = vpop.f32.mrf.mxu0
    %v8241 = vpop.f32.mrf.mxu0
    %8242 = vdwg.mxu0
    %8243 = vmatprep.subr.bf16.mxu0 %v7247
    %8244 = vmatpush1.bf16.msra.mxu0 %v7246
    %8245 = vmatprep.subr.bf16.mxu0 %v7243
    %8246 = vmatpush1.bf16.msra.mxu0 %v7242
    %8247 = vmatprep.subr.bf16.mxu0 %v7239
    %8248 = vmatpush1.bf16.msra.mxu0 %v7238
    %8249 = vmatprep.subr.bf16.mxu0 %v7235
    %8250 = vmatpush1.bf16.msra.mxu0 %v7234
    %8251 = vmatprep.subr.bf16.mxu0 %v7231
    %8252 = vmatpush1.bf16.msra.mxu0 %v7230
    %8253 = vmatprep.subr.bf16.mxu0 %v7227
    %8254 = vmatpush1.bf16.msra.mxu0 %v7226
    %8255 = vmatprep.subr.bf16.mxu0 %v7223
    %8256 = vmatpush1.bf16.msra.mxu0 %v7222
    %8257 = vmatprep.subr.bf16.mxu0 %v7219
    %8258 = vmatpush1.bf16.msra.mxu0 %v7218
    %8259 = vmatprep.subr.bf16.mxu0 %v7279
    %8260 = vmatpush2.bf16.msra.mxu0 %v7278
    %8261 = vmatprep.subr.bf16.mxu0 %v7275
    %8262 = vmatpush2.bf16.msra.mxu0 %v7274
    %8263 = vmatprep.subr.bf16.mxu0 %v7271
    %8264 = vmatpush2.bf16.msra.mxu0 %v7270
    %8265 = vmatprep.subr.bf16.mxu0 %v7267
    %8266 = vmatpush2.bf16.msra.mxu0 %v7266
    %8267 = vmatprep.subr.bf16.mxu0 %v7263
    %8268 = vmatpush2.bf16.msra.mxu0 %v7262
    %8269 = vmatprep.subr.bf16.mxu0 %v7259
    %8270 = vmatpush2.bf16.msra.mxu0 %v7258
    %8271 = vmatprep.subr.bf16.mxu0 %v7255
    %8272 = vmatpush2.bf16.msra.mxu0 %v7254
    %8273 = vmatprep.subr.bf16.mxu0 %v7251
    %8274 = vmatpush2.bf16.msra.mxu0 %v7250
    %8275 = vmatprep.mubr.bf16.mxu0 %v5158
    %8276 = vmatmul.mubr.bf16.gmra.mxu0 %v5157
    %v8277 = vpop.f32.mrf.mxu0
    %v8278 = vadd.f32 %v8237, %v8277
    %v8279 = vpop.f32.mrf.mxu0
    %v8280 = vadd.f32 %v8239, %v8279
    %v8281 = vpop.f32.mrf.mxu0
    %v8282 = vpop.f32.mrf.mxu0
    %8283 = vdwg.mxu0
    %8284 = vmatprep.subr.bf16.mxu0 %v7311
    %8285 = vmatpush1.bf16.msra.mxu0 %v7310
    %8286 = vmatprep.subr.bf16.mxu0 %v7307
    %8287 = vmatpush1.bf16.msra.mxu0 %v7306
    %8288 = vmatprep.subr.bf16.mxu0 %v7303
    %8289 = vmatpush1.bf16.msra.mxu0 %v7302
    %8290 = vmatprep.subr.bf16.mxu0 %v7299
    %8291 = vmatpush1.bf16.msra.mxu0 %v7298
    %8292 = vmatprep.subr.bf16.mxu0 %v7295
    %8293 = vmatpush1.bf16.msra.mxu0 %v7294
    %8294 = vmatprep.subr.bf16.mxu0 %v7291
    %8295 = vmatpush1.bf16.msra.mxu0 %v7290
    %8296 = vmatprep.subr.bf16.mxu0 %v7287
    %8297 = vmatpush1.bf16.msra.mxu0 %v7286
    %8298 = vmatprep.subr.bf16.mxu0 %v7283
    %8299 = vmatpush1.bf16.msra.mxu0 %v7282
    %8300 = vmatprep.subr.bf16.mxu0 %v7343
    %8301 = vmatpush2.bf16.msra.mxu0 %v7342
    %8302 = vmatprep.subr.bf16.mxu0 %v7339
    %8303 = vmatpush2.bf16.msra.mxu0 %v7338
    %8304 = vmatprep.subr.bf16.mxu0 %v7335
    %8305 = vmatpush2.bf16.msra.mxu0 %v7334
    %8306 = vmatprep.subr.bf16.mxu0 %v7331
    %8307 = vmatpush2.bf16.msra.mxu0 %v7330
    %8308 = vmatprep.subr.bf16.mxu0 %v7327
    %8309 = vmatpush2.bf16.msra.mxu0 %v7326
    %8310 = vmatprep.subr.bf16.mxu0 %v7323
    %8311 = vmatpush2.bf16.msra.mxu0 %v7322
    %8312 = vmatprep.subr.bf16.mxu0 %v7319
    %8313 = vmatpush2.bf16.msra.mxu0 %v7318
    %8314 = vmatprep.subr.bf16.mxu0 %v7315
    %8315 = vmatpush2.bf16.msra.mxu0 %v7314
    %8316 = vmatprep.mubr.bf16.mxu0 %v5160
    %8317 = vmatmul.mubr.bf16.gmra.mxu0 %v5159
    %v8318 = vpop.f32.mrf.mxu0
    %v8319 = vadd.f32 %v8278, %v8318
    %v8320 = vpop.f32.mrf.mxu0
    %v8321 = vadd.f32 %v8280, %v8320
    %v8322 = vpop.f32.mrf.mxu0
    %v8323 = vpop.f32.mrf.mxu0
    %8324 = vdwg.mxu0
    %8325 = vmatprep.subr.bf16.mxu0 %v7375
    %8326 = vmatpush1.bf16.msra.mxu0 %v7374
    %8327 = vmatprep.subr.bf16.mxu0 %v7371
    %8328 = vmatpush1.bf16.msra.mxu0 %v7370
    %8329 = vmatprep.subr.bf16.mxu0 %v7367
    %8330 = vmatpush1.bf16.msra.mxu0 %v7366
    %8331 = vmatprep.subr.bf16.mxu0 %v7363
    %8332 = vmatpush1.bf16.msra.mxu0 %v7362
    %8333 = vmatprep.subr.bf16.mxu0 %v7359
    %8334 = vmatpush1.bf16.msra.mxu0 %v7358
    %8335 = vmatprep.subr.bf16.mxu0 %v7355
    %8336 = vmatpush1.bf16.msra.mxu0 %v7354
    %8337 = vmatprep.subr.bf16.mxu0 %v7351
    %8338 = vmatpush1.bf16.msra.mxu0 %v7350
    %8339 = vmatprep.subr.bf16.mxu0 %v7347
    %8340 = vmatpush1.bf16.msra.mxu0 %v7346
    %8341 = vmatprep.subr.bf16.mxu0 0
    %8342 = vmatpush2.bf16.msra.mxu0 0
    %8343 = vmatprep.subr.bf16.mxu0 0
    %8344 = vmatpush2.bf16.msra.mxu0 0
    %8345 = vmatprep.subr.bf16.mxu0 0
    %8346 = vmatpush2.bf16.msra.mxu0 0
    %8347 = vmatprep.subr.bf16.mxu0 0
    %8348 = vmatpush2.bf16.msra.mxu0 0
    %8349 = vmatprep.subr.bf16.mxu0 0
    %8350 = vmatpush2.bf16.msra.mxu0 0
    %8351 = vmatprep.subr.bf16.mxu0 0
    %8352 = vmatpush2.bf16.msra.mxu0 0
    %8353 = vmatprep.subr.bf16.mxu0 0
    %8354 = vmatpush2.bf16.msra.mxu0 0
    %8355 = vmatprep.subr.bf16.mxu0 0
    %8356 = vmatpush2.bf16.msra.mxu0 0
    %8357 = vmatprep.mubr.bf16.mxu0 0
    %8358 = vmatmul.mubr.bf16.gmra.mxu0 %v5161
    %v8359 = vpop.f32.mrf.mxu0
    %v8360 = vadd.f32 %v8319, %v8359
    %v8361 = vpop.f32.mrf.mxu0
    %v8362 = vadd.f32 %v8321, %v8361
    %v8363 = vpop.f32.mrf.mxu0
    %v8364 = vpop.f32.mrf.mxu0
    %8365 = vdwg.mxu0
    %v8366 = vld [vmem:[%s20] sm:$0xf]
    %v8368 = vlaneseq
    %v8369 = vshrl.u32 %v8368, 7
    %v8370 = vsub.s32 0, %v8369
    %v8371 = vrot.slane %v8366, %v8370
    %v8372 = vlaneseq
    %v8373 = vshrl.u32 %v8372, 7
    %v8374 = vsub.s32 1, %v8373
    %v8375 = vrot.slane %v8366, %v8374
    %v8376 = vlaneseq
    %v8377 = vshrl.u32 %v8376, 7
    %v8378 = vsub.s32 2, %v8377
    %v8379 = vrot.slane %v8366, %v8378
    %v8380 = vlaneseq
    %v8381 = vshrl.u32 %v8380, 7
    %v8382 = vsub.s32 3, %v8381
    %v8383 = vrot.slane %v8366, %v8382
    %v8388 = vadd.f32 %v8073, %v8371
    %v8389 = vadd.f32 %v8075, %v8375
    %v8390 = vadd.f32 %v8360, %v8379
    %v8391 = vadd.f32 %v8362, %v8383
    %v8392 = vmax.f32 %v8388, 0.0
    %v8393 = vmax.f32 %v8389, 0.0
    %v8394 = vmax.f32 %v8390, 0.0
    %v8395 = vmax.f32 %v8391, 0.0
    %v8396 = vpack.c.bf16 %v8392, %v8392
    %v8397 = vpack.c.bf16 %v8393, %v8393
    %v8398 = vpack.c.bf16 %v8394, %v8394
    %v8399 = vpack.c.bf16 %v8395, %v8395
    %v8400 = vld [vmem:[%s21] sm:$0xf]
    %v8401 = vld [vmem:[%s21 + $0x4] sm:$0xf]
    %v8402 = vld [vmem:[%s21 + $0x8] sm:$0xf]
    %v8403 = vld [vmem:[%s21 + $0xc] sm:$0xf]
    %v8404 = vld [vmem:[%s21 + $0x10] sm:$0xf]
    %v8405 = vld [vmem:[%s21 + $0x14] sm:$0xf]
    %v8406 = vld [vmem:[%s21 + $0x18] sm:$0xf]
    %v8407 = vld [vmem:[%s21 + $0x1c] sm:$0xf]
    %v8408 = vld [vmem:[%s21 + $0x20] sm:$0xf]
    %v8409 = vld [vmem:[%s21 + $0x24] sm:$0xf]
    %v8410 = vld [vmem:[%s21 + $0x28] sm:$0xf]
    %v8411 = vld [vmem:[%s21 + $0x2c] sm:$0xf]
    %v8412 = vld [vmem:[%s21 + $0x30] sm:$0xf]
    %v8413 = vld [vmem:[%s21 + $0x34] sm:$0xf]
    %v8414 = vld [vmem:[%s21 + $0x38] sm:$0xf]
    %v8415 = vld [vmem:[%s21 + $0x3c] sm:$0xf]
    %v8416 = vld [vmem:[%s21 + $0x40] sm:$0xf]
    %v8417 = vld [vmem:[%s21 + $0x44] sm:$0xf]
    %v8418 = vld [vmem:[%s21 + $0x48] sm:$0xf]
    %v8419 = vld [vmem:[%s21 + $0x4c] sm:$0xf]
    %v8420 = vld [vmem:[%s21 + $0x50] sm:$0xf]
    %v8421 = vld [vmem:[%s21 + $0x54] sm:$0xf]
    %v8422 = vld [vmem:[%s21 + $0x58] sm:$0xf]
    %v8423 = vld [vmem:[%s21 + $0x5c] sm:$0xf]
    %v8424 = vld [vmem:[%s21 + $0x60] sm:$0xf]
    %v8425 = vld [vmem:[%s21 + $0x64] sm:$0xf]
    %v8426 = vld [vmem:[%s21 + $0x68] sm:$0xf]
    %v8427 = vld [vmem:[%s21 + $0x6c] sm:$0xf]
    %v8428 = vld [vmem:[%s21 + $0x70] sm:$0xf]
    %v8429 = vld [vmem:[%s21 + $0x74] sm:$0xf]
    %v8430 = vld [vmem:[%s21 + $0x78] sm:$0xf]
    %v8431 = vld [vmem:[%s21 + $0x7c] sm:$0xf]
    %v8432 = vld [vmem:[%s21 + $0x80] sm:$0xf]
    %v8433 = vld [vmem:[%s21 + $0x84] sm:$0xf]
    %v8434 = vld [vmem:[%s21 + $0x88] sm:$0xf]
    %v8435 = vld [vmem:[%s21 + $0x8c] sm:$0xf]
    %v8436 = vld [vmem:[%s21 + $0x90] sm:$0xf]
    %v8437 = vld [vmem:[%s21 + $0x94] sm:$0xf]
    %v8438 = vld [vmem:[%s21 + $0x98] sm:$0xf]
    %v8439 = vld [vmem:[%s21 + $0x9c] sm:$0xf]
    %v8440 = vld [vmem:[%s21 + $0xa0] sm:$0xf]
    %v8441 = vld [vmem:[%s21 + $0xa4] sm:$0xf]
    %v8442 = vld [vmem:[%s21 + $0xa8] sm:$0xf]
    %v8443 = vld [vmem:[%s21 + $0xac] sm:$0xf]
    %v8444 = vld [vmem:[%s21 + $0xb0] sm:$0xf]
    %v8445 = vld [vmem:[%s21 + $0xb4] sm:$0xf]
    %v8446 = vld [vmem:[%s21 + $0xb8] sm:$0xf]
    %v8447 = vld [vmem:[%s21 + $0xbc] sm:$0xf]
    %v8448 = vld [vmem:[%s21 + $0xc0] sm:$0xf]
    %v8449 = vld [vmem:[%s21 + $0xc4] sm:$0xf]
    %v8450 = vld [vmem:[%s21 + $0xc8] sm:$0xf]
    %v8451 = vld [vmem:[%s21 + $0xcc] sm:$0xf]
    %v8452 = vld [vmem:[%s21 + $0xd0] sm:$0xf]
    %v8453 = vld [vmem:[%s21 + $0xd4] sm:$0xf]
    %v8454 = vld [vmem:[%s21 + $0xd8] sm:$0xf]
    %v8455 = vld [vmem:[%s21 + $0xdc] sm:$0xf]
    %v8456 = vld [vmem:[%s21 + $0xe0] sm:$0xf]
    %v8457 = vld [vmem:[%s21 + $0xe4] sm:$0xf]
    %v8458 = vld [vmem:[%s21 + $0xe8] sm:$0xf]
    %v8459 = vld [vmem:[%s21 + $0xec] sm:$0xf]
    %v8460 = vld [vmem:[%s21 + $0xf0] sm:$0xf]
    %v8461 = vld [vmem:[%s21 + $0xf4] sm:$0xf]
    %v8462 = vld [vmem:[%s21 + $0xf8] sm:$0xf]
    %v8463 = vld [vmem:[%s21 + $0xfc] sm:$0xf]
    %v8464 = vld [vmem:[%s22] sm:$0x1]
    %v8466 = vlaneseq
    %v8467 = vshrl.u32 %v8466, 7
    %v8468 = vsub.s32 0, %v8467
    %v8469 = vrot.slane %v8464, %v8468
    %v8535 = vunpack.c.l.b16 %v8400
    %v8536 = vunpack.c.l.b16 %v8401
    %v8537 = vunpack.c.l.b16 %v8402
    %v8538 = vunpack.c.l.b16 %v8403
    %v8539 = vunpack.c.l.b16 %v8404
    %v8540 = vunpack.c.l.b16 %v8405
    %v8541 = vunpack.c.l.b16 %v8406
    %v8542 = vunpack.c.l.b16 %v8407
    %v8543 = vunpack.c.l.b16 %v8408
    %v8544 = vunpack.c.l.b16 %v8409
    %v8545 = vunpack.c.l.b16 %v8410
    %v8546 = vunpack.c.l.b16 %v8411
    %v8547 = vunpack.c.l.b16 %v8412
    %v8548 = vunpack.c.l.b16 %v8413
    %v8549 = vunpack.c.l.b16 %v8414
    %v8550 = vunpack.c.l.b16 %v8415
    %v8551 = vunpack.c.l.b16 %v8416
    %v8552 = vunpack.c.l.b16 %v8417
    %v8553 = vunpack.c.l.b16 %v8418
    %v8554 = vunpack.c.l.b16 %v8419
    %v8555 = vunpack.c.l.b16 %v8420
    %v8556 = vunpack.c.l.b16 %v8421
    %v8557 = vunpack.c.l.b16 %v8422
    %v8558 = vunpack.c.l.b16 %v8423
    %v8559 = vunpack.c.l.b16 %v8424
    %v8560 = vunpack.c.l.b16 %v8425
    %v8561 = vunpack.c.l.b16 %v8426
    %v8562 = vunpack.c.l.b16 %v8427
    %v8563 = vunpack.c.l.b16 %v8428
    %v8564 = vunpack.c.l.b16 %v8429
    %v8565 = vunpack.c.l.b16 %v8430
    %v8566 = vunpack.c.l.b16 %v8431
    %v8567 = vunpack.c.l.b16 %v8432
    %v8568 = vunpack.c.l.b16 %v8433
    %v8569 = vunpack.c.l.b16 %v8434
    %v8570 = vunpack.c.l.b16 %v8435
    %v8571 = vunpack.c.l.b16 %v8436
    %v8572 = vunpack.c.l.b16 %v8437
    %v8573 = vunpack.c.l.b16 %v8438
    %v8574 = vunpack.c.l.b16 %v8439
    %v8575 = vunpack.c.l.b16 %v8440
    %v8576 = vunpack.c.l.b16 %v8441
    %v8577 = vunpack.c.l.b16 %v8442
    %v8578 = vunpack.c.l.b16 %v8443
    %v8579 = vunpack.c.l.b16 %v8444
    %v8580 = vunpack.c.l.b16 %v8445
    %v8581 = vunpack.c.l.b16 %v8446
    %v8582 = vunpack.c.l.b16 %v8447
    %v8583 = vunpack.c.l.b16 %v8448
    %v8584 = vunpack.c.l.b16 %v8449
    %v8585 = vunpack.c.l.b16 %v8450
    %v8586 = vunpack.c.l.b16 %v8451
    %v8587 = vunpack.c.l.b16 %v8452
    %v8588 = vunpack.c.l.b16 %v8453
    %v8589 = vunpack.c.l.b16 %v8454
    %v8590 = vunpack.c.l.b16 %v8455
    %v8591 = vunpack.c.l.b16 %v8456
    %v8592 = vunpack.c.l.b16 %v8457
    %v8593 = vunpack.c.l.b16 %v8458
    %v8594 = vunpack.c.l.b16 %v8459
    %v8595 = vunpack.c.l.b16 %v8460
    %v8596 = vunpack.c.l.b16 %v8461
    %v8597 = vunpack.c.l.b16 %v8462
    %v8598 = vunpack.c.l.b16 %v8463
    %v8599 = vpack.c.b16 %v8536, %v8535
    %v8600 = vpack.c.b16 %v8538, %v8537
    %v8601 = vpack.c.b16 %v8540, %v8539
    %v8602 = vpack.c.b16 %v8542, %v8541
    %v8603 = vpack.c.b16 %v8544, %v8543
    %v8604 = vpack.c.b16 %v8546, %v8545
    %v8605 = vpack.c.b16 %v8548, %v8547
    %v8606 = vpack.c.b16 %v8550, %v8549
    %v8607 = vpack.c.b16 %v8552, %v8551
    %v8608 = vpack.c.b16 %v8554, %v8553
    %v8609 = vpack.c.b16 %v8556, %v8555
    %v8610 = vpack.c.b16 %v8558, %v8557
    %v8611 = vpack.c.b16 %v8560, %v8559
    %v8612 = vpack.c.b16 %v8562, %v8561
    %v8613 = vpack.c.b16 %v8564, %v8563
    %v8614 = vpack.c.b16 %v8566, %v8565
    %v8615 = vpack.c.b16 %v8568, %v8567
    %v8616 = vpack.c.b16 %v8570, %v8569
    %v8617 = vpack.c.b16 %v8572, %v8571
    %v8618 = vpack.c.b16 %v8574, %v8573
    %v8619 = vpack.c.b16 %v8576, %v8575
    %v8620 = vpack.c.b16 %v8578, %v8577
    %v8621 = vpack.c.b16 %v8580, %v8579
    %v8622 = vpack.c.b16 %v8582, %v8581
    %v8623 = vpack.c.b16 %v8584, %v8583
    %v8624 = vpack.c.b16 %v8586, %v8585
    %v8625 = vpack.c.b16 %v8588, %v8587
    %v8626 = vpack.c.b16 %v8590, %v8589
    %v8627 = vpack.c.b16 %v8592, %v8591
    %v8628 = vpack.c.b16 %v8594, %v8593
    %v8629 = vpack.c.b16 %v8596, %v8595
    %v8630 = vpack.c.b16 %v8598, %v8597
    %8663 = vmatprep.subr.bf16.mxu0 0
    %8664 = vmatpush1.bf16.msra.mxu0 %v8606
    %8665 = vmatprep.subr.bf16.mxu0 0
    %8666 = vmatpush1.bf16.msra.mxu0 %v8605
    %8667 = vmatprep.subr.bf16.mxu0 0
    %8668 = vmatpush1.bf16.msra.mxu0 %v8604
    %8669 = vmatprep.subr.bf16.mxu0 0
    %8670 = vmatpush1.bf16.msra.mxu0 %v8603
    %8671 = vmatprep.subr.bf16.mxu0 0
    %8672 = vmatpush1.bf16.msra.mxu0 %v8602
    %8673 = vmatprep.subr.bf16.mxu0 0
    %8674 = vmatpush1.bf16.msra.mxu0 %v8601
    %8675 = vmatprep.subr.bf16.mxu0 0
    %8676 = vmatpush1.bf16.msra.mxu0 %v8600
    %8677 = vmatprep.subr.bf16.mxu0 0
    %8678 = vmatpush1.bf16.msra.mxu0 %v8599
    %8679 = vmatprep.subr.bf16.mxu0 0
    %8680 = vmatpush2.bf16.msra.mxu0 %v8614
    %8681 = vmatprep.subr.bf16.mxu0 0
    %8682 = vmatpush2.bf16.msra.mxu0 %v8613
    %8683 = vmatprep.subr.bf16.mxu0 0
    %8684 = vmatpush2.bf16.msra.mxu0 %v8612
    %8685 = vmatprep.subr.bf16.mxu0 0
    %8686 = vmatpush2.bf16.msra.mxu0 %v8611
    %8687 = vmatprep.subr.bf16.mxu0 0
    %8688 = vmatpush2.bf16.msra.mxu0 %v8610
    %8689 = vmatprep.subr.bf16.mxu0 0
    %8690 = vmatpush2.bf16.msra.mxu0 %v8609
    %8691 = vmatprep.subr.bf16.mxu0 0
    %8692 = vmatpush2.bf16.msra.mxu0 %v8608
    %8693 = vmatprep.subr.bf16.mxu0 0
    %8694 = vmatpush2.bf16.msra.mxu0 %v8607
    %8695 = vmatprep.mubr.bf16.mxu0 %v8397
    %8696 = vmatmul.mubr.bf16.gmra.mxu0 %v8396
    %v8697 = vpop.f32.mrf.mxu0
    %v8698 = vadd.f32 %v8469, %v8697
    %v8699 = vpop.f32.mrf.mxu0
    %v8700 = vpop.f32.mrf.mxu0
    %v8701 = vpop.f32.mrf.mxu0
    %8702 = vdwg.mxu0
    %8703 = vmatprep.subr.bf16.mxu0 0
    %8704 = vmatpush1.bf16.msra.mxu0 %v8622
    %8705 = vmatprep.subr.bf16.mxu0 0
    %8706 = vmatpush1.bf16.msra.mxu0 %v8621
    %8707 = vmatprep.subr.bf16.mxu0 0
    %8708 = vmatpush1.bf16.msra.mxu0 %v8620
    %8709 = vmatprep.subr.bf16.mxu0 0
    %8710 = vmatpush1.bf16.msra.mxu0 %v8619
    %8711 = vmatprep.subr.bf16.mxu0 0
    %8712 = vmatpush1.bf16.msra.mxu0 %v8618
    %8713 = vmatprep.subr.bf16.mxu0 0
    %8714 = vmatpush1.bf16.msra.mxu0 %v8617
    %8715 = vmatprep.subr.bf16.mxu0 0
    %8716 = vmatpush1.bf16.msra.mxu0 %v8616
    %8717 = vmatprep.subr.bf16.mxu0 0
    %8718 = vmatpush1.bf16.msra.mxu0 %v8615
    %8719 = vmatprep.subr.bf16.mxu0 0
    %8720 = vmatpush2.bf16.msra.mxu0 %v8630
    %8721 = vmatprep.subr.bf16.mxu0 0
    %8722 = vmatpush2.bf16.msra.mxu0 %v8629
    %8723 = vmatprep.subr.bf16.mxu0 0
    %8724 = vmatpush2.bf16.msra.mxu0 %v8628
    %8725 = vmatprep.subr.bf16.mxu0 0
    %8726 = vmatpush2.bf16.msra.mxu0 %v8627
    %8727 = vmatprep.subr.bf16.mxu0 0
    %8728 = vmatpush2.bf16.msra.mxu0 %v8626
    %8729 = vmatprep.subr.bf16.mxu0 0
    %8730 = vmatpush2.bf16.msra.mxu0 %v8625
    %8731 = vmatprep.subr.bf16.mxu0 0
    %8732 = vmatpush2.bf16.msra.mxu0 %v8624
    %8733 = vmatprep.subr.bf16.mxu0 0
    %8734 = vmatpush2.bf16.msra.mxu0 %v8623
    %8735 = vmatprep.mubr.bf16.mxu0 %v8399
    %8736 = vmatmul.mubr.bf16.gmra.mxu0 %v8398
    %v8737 = vpop.f32.mrf.mxu0
    %v8738 = vadd.f32 %v8698, %v8737
    %v8739 = vpop.f32.mrf.mxu0
    %v8740 = vpop.f32.mrf.mxu0
    %v8741 = vpop.f32.mrf.mxu0
    %8742 = vdwg.mxu0
    %vm8743 = vcmask 17408
    %8744 = vst.msk [vmem:[#allocation5] sm:$0x3] %vm8743, %v8738
    // Predicated region
    $region98: #{dual_transfer_forward.1} parent=1 // pred_check
      _
    $region99: #{dual_transfer_forward.1} parent=1 // pred_check_branch
      %8746 = sbr.rel (0) target = $region101
    $region100: #{dual_transfer_forward.1} parent=1 // pred_region
      %s8748 = ssub.s32 32, 32
      %8749 = vsyncadd [#allocation4], %s8748
      %s8751 = sshll.u32 [#allocation5], 4
      %s8752 = int_to_ptr.vmem [resolvable:$true] %s8751
      %8754 = dma.vmem_to_hbm [thread:$0]  %s8752, 32, %s23, [#allocation4]
    $region101: #{dual_transfer_forward.1} parent=1 // pred_fallthru
      _
    // Predicated region
    $region102: #{dual_transfer_forward.1} parent=1 // pred_check
      _
    $region103: #{dual_transfer_forward.1} parent=1 // pred_check_branch
      %8756 = sbr.rel (0) target = $region105
    $region104: #{dual_transfer_forward.1} parent=1 // pred_region
      %8757 = dma.done [#allocation4], 32
    $region105: #{dual_transfer_forward.1} parent=1 // pred_fallthru
      _
    %8758 = vsyncpa [#allocation3], 1
    %8759 = vsyncpa [#allocation4], 1

</llo_original>
